<compile_context>
chip_gen: v7x
topology: tpu7x:2x2x1
jax: 0.10.0
libtpu: 0.0.40
codegen_flags: <defaults>
</compile_context>

<pallas_src>
import functools

import numpy as np

import jax
import jax.numpy as jnp
from jax.experimental import pallas as pl
from jax.experimental.pallas import tpu as pltpu

VMEM_LIMIT = 32 * 1024 * 1024
LN_EPS = 1e-5


# ----------------------------------------------------------------------------
# In-kernel helpers
# ----------------------------------------------------------------------------
def _sigmoid(x):
    # One EUP op (tanh) instead of exp + divide; exact identity.
    return 0.5 * jnp.tanh(0.5 * x) + 0.5


def _att_softmax_agg(att_vals, f_t):
    # Per-element softmax over the attention-list axis, then weighted sum.
    # Exact division on the recurrence path (feeds c_new / m_new).
    prods = [a * f_t for a in att_vals]
    mx = prods[0]
    for p in prods[1:]:
        mx = jnp.maximum(mx, p)
    exps = [jnp.exp(p - mx) for p in prods]
    denom = exps[0]
    for e in exps[1:]:
        denom = denom + e
    num = exps[0] * att_vals[0]
    for e, a in zip(exps[1:], att_vals[1:]):
        num = num + e * a
    return num / denom


# ----------------------------------------------------------------------------
# Fully fused STAMCell kernel (one grid step per batch row)
# ----------------------------------------------------------------------------
def _stam_fused_kernel(*refs, nh, cin_x, n_c, n_m, taps, S, off):
    ntaps = len(taps)
    i = 0
    x_ref, h_ref, m_ref = refs[i:i + 3]; i += 3
    c_refs = refs[i:i + n_c]; i += n_c
    m_refs = refs[i:i + n_m]; i += n_m
    (w_x, b_x, g_x, be_x,
     w_h, b_h, g_h, be_h,
     w_m, b_m, g_m, be_m,
     w_oc, w_om, b_o, g_o, be_o, msk) = refs[i:i + 18]; i += 18
    hnew_o, cnew_o, mnew_o, gates_o = refs[i:i + 4]; i += 4
    padbuf, slab, xc_s, hc_s, mc_s = refs[i:i + 5]

    # Zero the staging buffer once; the borders (lanes [0, off) and
    # [off+S, end)) stay zero for the rest of the kernel.
    padbuf[...] = jnp.zeros_like(padbuf)

    def conv(val_f32, cin, w_ref):
        """Same-padded 3-D conv of one (cin, S) slab as a single MXU matmul."""
        # Aligned store of the data region (off is a multiple of 128).
        padbuf[0:cin, off:off + S] = val_f32
        xp = padbuf[0:cin, :]                       # aligned full-width load
        for k, (delta, mj) in enumerate(taps):
            # Register-value lane shift + H/W boundary mask = im2col row block.
            slab[k * cin:(k + 1) * cin, :] = (
                xp[:, off + delta:off + delta + S] * msk[mj:mj + 1, :])
        sl = slab[0:ntaps * cin, :].astype(jnp.bfloat16)
        return jnp.dot(w_ref[...], sl, preferred_element_type=jnp.float32)

    def layer_norm(y, g_ref, be_ref):
        mu = jnp.mean(y)
        yc = y - mu
        var = jnp.mean(yc * yc)
        return yc * jax.lax.rsqrt(var + LN_EPS) * g_ref[...] + be_ref[...]

    # ---- conv_x / conv_h / conv_m (+ per-sample LayerNorm), kept in VMEM ----
    xc_s[...] = layer_norm(conv(x_ref[0], cin_x, w_x) + b_x[...], g_x, be_x)
    hc_s[...] = layer_norm(conv(h_ref[0], nh, w_h) + b_h[...], g_h, be_h)
    mc_s[...] = layer_norm(conv(m_ref[0], nh, w_m) + b_m[...], g_m, be_m)

    def ch(ref, k):                                  # sublane-aligned row group
        return ref[k * nh:(k + 1) * nh, :]

    # ---- gates + attention softmax ------------------------------------------
    i_t = _sigmoid(ch(xc_s, 0) + ch(hc_s, 0))
    f_t = _sigmoid(ch(xc_s, 1) + ch(hc_s, 1) + 1.0)   # forget bias = 1.0
    g_t = jnp.tanh(ch(xc_s, 2) + ch(hc_s, 2))
    c_new = i_t * g_t + f_t * _att_softmax_agg([r[0] for r in c_refs], f_t)

    i_tp = _sigmoid(ch(xc_s, 3) + ch(mc_s, 0))
    f_tp = _sigmoid(ch(xc_s, 4) + ch(mc_s, 1) + 1.0)
    g_tp = jnp.tanh(ch(xc_s, 5) + ch(mc_s, 2))
    m_new = i_tp * g_tp + f_tp * _att_softmax_agg([r[0] for r in m_refs], f_tp)

    # Diagnostic gate outputs coalesced into one lane-dense slab.
    gates_o[0, 0 * nh:1 * nh, :] = i_t
    gates_o[0, 1 * nh:2 * nh, :] = f_t
    gates_o[0, 2 * nh:3 * nh, :] = g_t
    gates_o[0, 3 * nh:4 * nh, :] = i_tp
    gates_o[0, 4 * nh:5 * nh, :] = f_tp
    gates_o[0, 5 * nh:6 * nh, :] = g_tp
    cnew_o[0] = c_new
    mnew_o[0] = m_new

    # ---- fused conv_o(+LN) + conv_last + output gate -------------------------
    # c-half / m-half matmuls accumulate -> no [c_new, m_new] concatenate.
    y = conv(c_new, nh, w_oc) + conv(m_new, nh, w_om) + b_o[...]
    conv_o_y = y[0:nh, :]
    conv_last_y = y[nh:2 * nh, :]
    ln_o = layer_norm(conv_o_y, g_o, be_o)
    o_t = _sigmoid(ch(xc_s, 6) + ch(hc_s, 3) + ln_o)   # o_x + o_h + LN(conv_o)
    gates_o[0, 6 * nh:7 * nh, :] = o_t
    hnew_o[0] = o_t * jnp.tanh(conv_last_y)


# ----------------------------------------------------------------------------
# Wrapper glue (only reshapes and weight folding; no pads, no transposed copies)
# ----------------------------------------------------------------------------
def _make_taps(filter_size, H, W):
    kt, kh, kw = filter_size
    taps = []
    for dt in range(kt):
        for dh in range(kh):
            for dw in range(kw):
                at, ah, aw = dt - kt // 2, dh - kh // 2, dw - kw // 2
                taps.append((at * H * W + ah * W + aw, dh * kw + dw))
    return tuple(taps)


def _make_masks(filter_size, T, H, W):
    # 0/1 masks killing cross-row/column contamination of the flat lane shift.
    # The T-axis boundary is handled by the zero border in the VMEM staging
    # buffer (out-of-range T with in-range H/W always lands in the border).
    kt, kh, kw = filter_size
    S = T * H * W
    h_idx = (np.arange(S) // W) % H
    w_idx = np.arange(S) % W
    rows = []
    for dh in range(kh):
        ah = dh - kh // 2
        for dw in range(kw):
            aw = dw - kw // 2
            ok = ((h_idx + ah >= 0) & (h_idx + ah < H) &
                  (w_idx + aw >= 0) & (w_idx + aw < W))
            rows.append(ok.astype(np.float32))
    return jnp.asarray(np.stack(rows), dtype=jnp.float32)   # (kh*kw, S)


def stam_cell_forward(params, x_t, h_t, c_t, m_t, c_att, m_att,
                      num_hidden, filter_size):
    del c_t                                   # unused in the reference forward
    B, cin_x, T, H, W = x_t.shape
    nh = num_hidden
    kt, kh, kw = filter_size
    S = T * H * W
    ntaps = kt * kh * kw
    pad = (kt // 2) * H * W + (kh // 2) * W + (kw // 2)
    assert nh % 8 == 0, "num_hidden must be a multiple of 8 (sublane tiling)"
    assert cin_x % 8 == 0, "in_channel must be a multiple of 8 (sublane tiling)"
    assert S % 128 == 0, "T*H*W must be a multiple of 128 (lane tiling)"
    off = ((pad + 127) // 128) * 128           # 128-aligned data offset
    c_max = ((max(cin_x, nh) + 7) // 8) * 8
    taps = _make_taps(filter_size, H, W)
    masks = _make_masks(filter_size, T, H, W)

    # ---- fold conv weights: (Cout, Cin, kt,kh,kw) -> (Cout, ntaps*Cin) bf16 --
    def fold_w(w):
        co, ci = w.shape[:2]
        return (jnp.transpose(w.reshape(co, ci, ntaps), (0, 2, 1))
                .reshape(co, ntaps * ci).astype(jnp.bfloat16))

    w_x = fold_w(params["conv_x_w"]); b_x = params["conv_x_b"].reshape(-1, 1)
    w_h = fold_w(params["conv_h_w"]); b_h = params["conv_h_b"].reshape(-1, 1)
    w_m = fold_w(params["conv_m_w"]); b_m = params["conv_m_b"].reshape(-1, 1)

    # conv_last (1x1x1) folded into the conv_o matmul as extra output rows
    # (centre-tap columns only), then split along Cin into c-half / m-half.
    w_o5 = params["conv_o_w"]                          # (nh, 2nh, kt, kh, kw)
    w_last5 = params["conv_last_w"]                    # (nh, 2nh, 1, 1, 1)
    w_last_emb = jnp.zeros_like(w_o5).at[:, :, kt // 2, kh // 2, kw // 2].set(
        w_last5[:, :, 0, 0, 0])
    w_out = jnp.concatenate([w_o5, w_last_emb], axis=0)   # (2nh, 2nh, kt,kh,kw)
    w_oc = fold_w(w_out[:, :nh])
    w_om = fold_w(w_out[:, nh:])
    b_o = jnp.concatenate([params["conv_o_b"],
                           params["conv_last_b"]]).reshape(-1, 1)

    g_x = params["ln_x_g"].reshape(7 * nh, S); be_x = params["ln_x_b"].reshape(7 * nh, S)
    g_h = params["ln_h_g"].reshape(4 * nh, S); be_h = params["ln_h_b"].reshape(4 * nh, S)
    g_m = params["ln_m_g"].reshape(3 * nh, S); be_m = params["ln_m_b"].reshape(3 * nh, S)
    g_o = params["ln_o_g"].reshape(nh, S);     be_o = params["ln_o_b"].reshape(nh, S)

    # ---- flat channel-first data inputs (pure reshapes) ----------------------
    x_f = x_t.reshape(B, cin_x, S)
    h_f = h_t.reshape(B, nh, S)
    m_f = m_t.reshape(B, nh, S)
    c_att_f = [a.reshape(B, nh, S) for a in c_att]
    m_att_f = [a.reshape(B, nh, S) for a in m_att]
    n_c, n_m = len(c_att_f), len(m_att_f)

    def row_spec(c):
        return pl.BlockSpec((1, c, S), lambda b: (b, 0, 0))

    def const_spec(arr):
        return pl.BlockSpec(arr.shape, lambda b, n=arr.ndim: (0,) * n)

    data_in = [x_f, h_f, m_f, *c_att_f, *m_att_f]
    data_specs = ([row_spec(cin_x), row_spec(nh), row_spec(nh)]
                  + [row_spec(nh)] * (n_c + n_m))

    param_in = [w_x, b_x, g_x, be_x,
                w_h, b_h, g_h, be_h,
                w_m, b_m, g_m, be_m,
                w_oc, w_om, b_o, g_o, be_o, masks]
    param_specs = [const_spec(a) for a in param_in]

    kern = functools.partial(_stam_fused_kernel, nh=nh, cin_x=cin_x,
                             n_c=n_c, n_m=n_m, taps=taps, S=S, off=off)

    out_shapes = (jax.ShapeDtypeStruct((B, nh, S), jnp.float32),      # h_new
                  jax.ShapeDtypeStruct((B, nh, S), jnp.float32),      # c_new
                  jax.ShapeDtypeStruct((B, nh, S), jnp.float32),      # m_new
                  jax.ShapeDtypeStruct((B, 7 * nh, S), jnp.float32))  # gates

    h_new_f, c_new_f, m_new_f, gates_f = pl.pallas_call(
        kern,
        out_shape=out_shapes,
        grid=(B,),
        in_specs=data_specs + param_specs,
        out_specs=(row_spec(nh), row_spec(nh), row_spec(nh), row_spec(7 * nh)),
        scratch_shapes=[
            pltpu.VMEM((c_max, 2 * off + S), jnp.float32),          # staging
            pltpu.VMEM((ntaps * c_max, S), jnp.float32),            # im2col slab
            pltpu.VMEM((7 * nh, S), jnp.float32),                   # xc
            pltpu.VMEM((4 * nh, S), jnp.float32),                   # hc
            pltpu.VMEM((3 * nh, S), jnp.float32),                   # mc
        ],
        compiler_params=pltpu.CompilerParams(
            dimension_semantics=("parallel",),
            vmem_limit_bytes=VMEM_LIMIT),
    )(*data_in, *param_in)

    def unflat(a):
        return a.reshape(B, nh, T, H, W)

    h_new = unflat(h_new_f)
    c_new = unflat(c_new_f)
    m_new = unflat(m_new_f)
    g7 = gates_f.reshape(B, 7, nh, T, H, W)
    gates = [g7[:, k] for k in range(7)]
    return h_new, c_new, m_new, gates


# ----------------------------------------------------------------------------
# Pure-JAX reference (bf16-matched conv operands) for validation
# ----------------------------------------------------------------------------
def _bf16_round(x):
    return x.astype(jnp.bfloat16).astype(jnp.float32)


def _conv3d_ref(x, w, b, ksize):
    padding = [(k // 2, k // 2) for k in ksize]
    out = jax.lax.conv_general_dilated(
        _bf16_round(x), _bf16_round(w), window_strides=(1, 1, 1),
        padding=padding, dimension_numbers=("NCDHW", "OIDHW", "NCDHW"),
        precision=jax.lax.Precision.HIGHEST)
    return out + b.reshape(1, -1, 1, 1, 1)


def _ln_ref(x, g, b):
    mu = jnp.mean(x, axis=(1, 2, 3, 4), keepdims=True)
    var = jnp.mean((x - mu) ** 2, axis=(1, 2, 3, 4), keepdims=True)
    return (x - mu) * jax.lax.rsqrt(var + LN_EPS) * g[None] + b[None]


def _stam_reference(params, x_t, h_t, c_t, m_t, c_att, m_att, nh, ksize):
    del c_t
    B = x_t.shape[0]
    xc = _ln_ref(_conv3d_ref(x_t, params["conv_x_w"], params["conv_x_b"], ksize),
                 params["ln_x_g"], params["ln_x_b"])
    hc = _ln_ref(_conv3d_ref(h_t, params["conv_h_w"], params["conv_h_b"], ksize),
                 params["ln_h_g"], params["ln_h_b"])
    mc = _ln_ref(_conv3d_ref(m_t, params["conv_m_w"], params["conv_m_b"], ksize),
                 params["ln_m_g"], params["ln_m_b"])

    def sp(t, n):
        return [t[:, k * nh:(k + 1) * nh] for k in range(n)]

    i_x, f_x, g_x, i_xp, f_xp, g_xp, o_x = sp(xc, 7)
    i_h, f_h, g_h, o_h = sp(hc, 4)
    i_m, f_m, g_m = sp(mc, 3)

    i_t = jax.nn.sigmoid(i_x + i_h)
    f_t = jax.nn.sigmoid(f_x + f_h + 1.0)
    g_t = jnp.tanh(g_x + g_h)
    c_stack = jnp.stack(c_att, axis=1)
    cf = jax.nn.softmax((c_stack * f_t[:, None]).reshape(B, len(c_att), -1), axis=1)
    eafig_c = (cf * c_stack.reshape(B, len(c_att), -1)).sum(axis=1).reshape(f_t.shape)
    c_new = i_t * g_t + f_t * eafig_c

    i_tp = jax.nn.sigmoid(i_xp + i_m)
    f_tp = jax.nn.sigmoid(f_xp + f_m + 1.0)
    g_tp = jnp.tanh(g_xp + g_m)
    m_stack = jnp.stack(m_att, axis=1)
    mf = jax.nn.softmax((m_stack * f_tp[:, None]).reshape(B, len(m_att), -1), axis=1)
    eafig_m = (mf * m_stack.reshape(B, len(m_att), -1)).sum(axis=1).reshape(f_tp.shape)
    m_new = i_tp * g_tp + f_tp * eafig_m

    mem = jnp.concatenate([c_new, m_new], axis=1)
    conv_o_out = _ln_ref(_conv3d_ref(mem, params["conv_o_w"], params["conv_o_b"], ksize),
                         params["ln_o_g"], params["ln_o_b"])
    o_t = jax.nn.sigmoid(o_x + o_h + conv_o_out)
    last = _conv3d_ref(mem, params["conv_last_w"], params["conv_last_b"], (1, 1, 1))
    h_new = o_t * jnp.tanh(last)
    return h_new, c_new, m_new, [i_t, f_t, g_t, i_tp, f_tp, g_tp, o_t]


# ----------------------------------------------------------------------------
# Deterministic parameter / input construction and a single run
# ----------------------------------------------------------------------------
def _conv_params(key, cout, cin, ksz):
    kw_, kb = jax.random.split(key)
    fan_in = cin * ksz[0] * ksz[1] * ksz[2]
    w = jax.random.normal(kw_, (cout, cin) + ksz, jnp.float32) / jnp.sqrt(float(fan_in))
    b = 0.01 * jax.random.normal(kb, (cout,), jnp.float32)
    return w, b


def _ln_params(key, c, t, h, w):
    kg, kb = jax.random.split(key)
    g = 1.0 + 0.05 * jax.random.normal(kg, (c, t, h, w), jnp.float32)
    b = 0.05 * jax.random.normal(kb, (c, t, h, w), jnp.float32)
    return g, b


if __name__ == "__main__":
    B, IN_CH, NH, T, H, W = 2, 8, 8, 4, 8, 8
    FILTER = (3, 3, 3)
    N_ATT = 3

    keys = jax.random.split(jax.random.PRNGKey(0), 32)
    ki = iter(range(32))

    params = {}
    params["conv_x_w"], params["conv_x_b"] = _conv_params(keys[next(ki)], NH * 7, IN_CH, FILTER)
    params["ln_x_g"], params["ln_x_b"] = _ln_params(keys[next(ki)], NH * 7, T, H, W)
    params["conv_h_w"], params["conv_h_b"] = _conv_params(keys[next(ki)], NH * 4, NH, FILTER)
    params["ln_h_g"], params["ln_h_b"] = _ln_params(keys[next(ki)], NH * 4, T, H, W)
    params["conv_m_w"], params["conv_m_b"] = _conv_params(keys[next(ki)], NH * 3, NH, FILTER)
    params["ln_m_g"], params["ln_m_b"] = _ln_params(keys[next(ki)], NH * 3, T, H, W)
    params["conv_o_w"], params["conv_o_b"] = _conv_params(keys[next(ki)], NH, NH * 2, FILTER)
    params["ln_o_g"], params["ln_o_b"] = _ln_params(keys[next(ki)], NH, T, H, W)
    params["conv_last_w"], params["conv_last_b"] = _conv_params(keys[next(ki)], NH, NH * 2, (1, 1, 1))

    x_t = jax.random.normal(keys[next(ki)], (B, IN_CH, T, H, W), jnp.float32)
    h_t = jax.random.normal(keys[next(ki)], (B, NH, T, H, W), jnp.float32)
    c_t = jax.random.normal(keys[next(ki)], (B, NH, T, H, W), jnp.float32)
    m_t = jax.random.normal(keys[next(ki)], (B, NH, T, H, W), jnp.float32)
    c_att = tuple(jax.random.normal(keys[next(ki)], (B, NH, T, H, W), jnp.float32)
                  for _ in range(N_ATT))
    m_att = tuple(jax.random.normal(keys[next(ki)], (B, NH, T, H, W), jnp.float32)
                  for _ in range(N_ATT))

    fwd = jax.jit(functools.partial(stam_cell_forward,
                                    num_hidden=NH, filter_size=FILTER))
    h_new, c_new, m_new, gates = fwd(params, x_t, h_t, c_t, m_t, c_att, m_att)
    jax.block_until_ready((h_new, c_new, m_new, gates))

    assert h_new.shape == (B, NH, T, H, W)
    assert c_new.shape == (B, NH, T, H, W)
    assert m_new.shape == (B, NH, T, H, W)
    assert len(gates) == 7

    # Validate against a pure-JAX reference (bf16-matched conv operands).
    rh, rc, rm, rgates = _stam_reference(params, x_t, h_t, c_t, m_t,
                                         c_att, m_att, NH, FILTER)
    max_err = 0.0
    for got, ref in zip([h_new, c_new, m_new] + list(gates),
                        [rh, rc, rm] + list(rgates)):
        max_err = max(max_err, float(jnp.max(jnp.abs(got - ref))))
    assert max_err < 8e-2, f"numerical mismatch vs reference: max|diff|={max_err:.3e}"

    print("KERNEL_OK")
</pallas_src>

<mosaic_0001>
module attributes {stable_mosaic.version = 11 : i64} {
  func.func @_stam_fused_kernel(%arg0: i32, %arg1: memref<1x8x256xf32, #tpu.memory_space<vmem>>, %arg2: memref<1x8x256xf32, #tpu.memory_space<vmem>>, %arg3: memref<1x8x256xf32, #tpu.memory_space<vmem>>, %arg4: memref<1x8x256xf32, #tpu.memory_space<vmem>>, %arg5: memref<1x8x256xf32, #tpu.memory_space<vmem>>, %arg6: memref<1x8x256xf32, #tpu.memory_space<vmem>>, %arg7: memref<1x8x256xf32, #tpu.memory_space<vmem>>, %arg8: memref<1x8x256xf32, #tpu.memory_space<vmem>>, %arg9: memref<1x8x256xf32, #tpu.memory_space<vmem>>, %arg10: memref<56x216xbf16, #tpu.memory_space<vmem>>, %arg11: memref<56x1xf32, #tpu.memory_space<vmem>>, %arg12: memref<56x256xf32, #tpu.memory_space<vmem>>, %arg13: memref<56x256xf32, #tpu.memory_space<vmem>>, %arg14: memref<32x216xbf16, #tpu.memory_space<vmem>>, %arg15: memref<32x1xf32, #tpu.memory_space<vmem>>, %arg16: memref<32x256xf32, #tpu.memory_space<vmem>>, %arg17: memref<32x256xf32, #tpu.memory_space<vmem>>, %arg18: memref<24x216xbf16, #tpu.memory_space<vmem>>, %arg19: memref<24x1xf32, #tpu.memory_space<vmem>>, %arg20: memref<24x256xf32, #tpu.memory_space<vmem>>, %arg21: memref<24x256xf32, #tpu.memory_space<vmem>>, %arg22: memref<16x216xbf16, #tpu.memory_space<vmem>>, %arg23: memref<16x216xbf16, #tpu.memory_space<vmem>>, %arg24: memref<16x1xf32, #tpu.memory_space<vmem>>, %arg25: memref<8x256xf32, #tpu.memory_space<vmem>>, %arg26: memref<8x256xf32, #tpu.memory_space<vmem>>, %arg27: memref<9x256xf32, #tpu.memory_space<vmem>>, %arg28: memref<1x8x256xf32, #tpu.memory_space<vmem>>, %arg29: memref<1x8x256xf32, #tpu.memory_space<vmem>>, %arg30: memref<1x8x256xf32, #tpu.memory_space<vmem>>, %arg31: memref<1x56x256xf32, #tpu.memory_space<vmem>>, %arg32: memref<8x512xf32, #tpu.memory_space<vmem>>, %arg33: memref<216x256xf32, #tpu.memory_space<vmem>>, %arg34: memref<56x256xf32, #tpu.memory_space<vmem>>, %arg35: memref<32x256xf32, #tpu.memory_space<vmem>>, %arg36: memref<24x256xf32, #tpu.memory_space<vmem>>) attributes {dimension_semantics = [#tpu.dimension_semantics<parallel>], iteration_bounds = array<i64: 2>, scalar_prefetch = 0 : i64, scratch_operands = 5 : i64, tpu.core_type = #tpu.core_type<tc>, window_params = [{transform_indices = @transform_0, window_bounds = array<i64: 1, 8, 256>}, {transform_indices = @transform_1, window_bounds = array<i64: 1, 8, 256>}, {transform_indices = @transform_2, window_bounds = array<i64: 1, 8, 256>}, {transform_indices = @transform_3, window_bounds = array<i64: 1, 8, 256>}, {transform_indices = @transform_4, window_bounds = array<i64: 1, 8, 256>}, {transform_indices = @transform_5, window_bounds = array<i64: 1, 8, 256>}, {transform_indices = @transform_6, window_bounds = array<i64: 1, 8, 256>}, {transform_indices = @transform_7, window_bounds = array<i64: 1, 8, 256>}, {transform_indices = @transform_8, window_bounds = array<i64: 1, 8, 256>}, {pipeline_mode = #tpu.pipeline_mode<synchronous>, transform_indices = @transform_9, window_bounds = array<i64: 56, 216>}, {pipeline_mode = #tpu.pipeline_mode<synchronous>, transform_indices = @transform_10, window_bounds = array<i64: 56, 1>}, {pipeline_mode = #tpu.pipeline_mode<synchronous>, transform_indices = @transform_11, window_bounds = array<i64: 56, 256>}, {pipeline_mode = #tpu.pipeline_mode<synchronous>, transform_indices = @transform_12, window_bounds = array<i64: 56, 256>}, {pipeline_mode = #tpu.pipeline_mode<synchronous>, transform_indices = @transform_13, window_bounds = array<i64: 32, 216>}, {pipeline_mode = #tpu.pipeline_mode<synchronous>, transform_indices = @transform_14, window_bounds = array<i64: 32, 1>}, {pipeline_mode = #tpu.pipeline_mode<synchronous>, transform_indices = @transform_15, window_bounds = array<i64: 32, 256>}, {pipeline_mode = #tpu.pipeline_mode<synchronous>, transform_indices = @transform_16, window_bounds = array<i64: 32, 256>}, {pipeline_mode = #tpu.pipeline_mode<synchronous>, transform_indices = @transform_17, window_bounds = array<i64: 24, 216>}, {pipeline_mode = #tpu.pipeline_mode<synchronous>, transform_indices = @transform_18, window_bounds = array<i64: 24, 1>}, {pipeline_mode = #tpu.pipeline_mode<synchronous>, transform_indices = @transform_19, window_bounds = array<i64: 24, 256>}, {pipeline_mode = #tpu.pipeline_mode<synchronous>, transform_indices = @transform_20, window_bounds = array<i64: 24, 256>}, {pipeline_mode = #tpu.pipeline_mode<synchronous>, transform_indices = @transform_21, window_bounds = array<i64: 16, 216>}, {pipeline_mode = #tpu.pipeline_mode<synchronous>, transform_indices = @transform_22, window_bounds = array<i64: 16, 216>}, {pipeline_mode = #tpu.pipeline_mode<synchronous>, transform_indices = @transform_23, window_bounds = array<i64: 16, 1>}, {pipeline_mode = #tpu.pipeline_mode<synchronous>, transform_indices = @transform_24, window_bounds = array<i64: 8, 256>}, {pipeline_mode = #tpu.pipeline_mode<synchronous>, transform_indices = @transform_25, window_bounds = array<i64: 8, 256>}, {pipeline_mode = #tpu.pipeline_mode<synchronous>, transform_indices = @transform_26, window_bounds = array<i64: 9, 256>}, {transform_indices = @transform_27, window_bounds = array<i64: 1, 8, 256>}, {transform_indices = @transform_28, window_bounds = array<i64: 1, 8, 256>}, {transform_indices = @transform_29, window_bounds = array<i64: 1, 8, 256>}, {transform_indices = @transform_30, window_bounds = array<i64: 1, 56, 256>}]} {
    %cst = arith.constant 0.000000e+00 : f32
    %0 = vector.broadcast %cst : f32 to vector<8x512xf32>
    %c0 = arith.constant 0 : index
    %c0_0 = arith.constant 0 : index
    %1 = vector.load %arg32[%c0, %c0_0] : memref<8x512xf32, #tpu.memory_space<vmem>>, vector<8x512xf32>
    tpu.vector_store %arg32[%c0, %c0_0], %0 {strides = array<i32>} : memref<8x512xf32, #tpu.memory_space<vmem>>, vector<8x512xf32>,
    %c0_1 = arith.constant 0 : index
    %c0_2 = arith.constant 0 : index
    %c0_3 = arith.constant 0 : index
    %2 = vector.load %arg1[%c0_1, %c0_2, %c0_3] : memref<1x8x256xf32, #tpu.memory_space<vmem>>, vector<1x8x256xf32>
    %3 = vector.shape_cast %2 : vector<1x8x256xf32> to vector<8x256xf32>
    %c0_4 = arith.constant 0 : index
    %c128 = arith.constant 128 : index
    %4 = vector.load %arg32[%c0_4, %c128] : memref<8x512xf32, #tpu.memory_space<vmem>>, vector<8x256xf32>
    tpu.vector_store %arg32[%c0_4, %c128], %3 {strides = array<i32>} : memref<8x512xf32, #tpu.memory_space<vmem>>, vector<8x256xf32>,
    %c0_5 = arith.constant 0 : index
    %c0_6 = arith.constant 0 : index
    %5 = vector.load %arg32[%c0_5, %c0_6] : memref<8x512xf32, #tpu.memory_space<vmem>>, vector<8x512xf32>
    %6 = vector.extract_strided_slice %5 {offsets = [0, 55], sizes = [8, 256], strides = [1, 1]} : vector<8x512xf32> to vector<8x256xf32>
    %c0_7 = arith.constant 0 : index
    %c0_8 = arith.constant 0 : index
    %7 = vector.load %arg27[%c0_7, %c0_8] : memref<9x256xf32, #tpu.memory_space<vmem>>, vector<1x256xf32>
    %8 = vector.broadcast %7 : vector<1x256xf32> to vector<8x256xf32>
    %9 = arith.mulf %6, %8 : vector<8x256xf32>
    %c0_9 = arith.constant 0 : index
    %c0_10 = arith.constant 0 : index
    %10 = vector.load %arg33[%c0_9, %c0_10] : memref<216x256xf32, #tpu.memory_space<vmem>>, vector<8x256xf32>
    tpu.vector_store %arg33[%c0_9, %c0_10], %9 {strides = array<i32>} : memref<216x256xf32, #tpu.memory_space<vmem>>, vector<8x256xf32>,
    %11 = vector.extract_strided_slice %5 {offsets = [0, 56], sizes = [8, 256], strides = [1, 1]} : vector<8x512xf32> to vector<8x256xf32>
    %c1 = arith.constant 1 : index
    %c0_11 = arith.constant 0 : index
    %12 = vector.load %arg27[%c1, %c0_11] : memref<9x256xf32, #tpu.memory_space<vmem>>, vector<1x256xf32>
    %13 = vector.broadcast %12 : vector<1x256xf32> to vector<8x256xf32>
    %14 = arith.mulf %11, %13 : vector<8x256xf32>
    %c8 = arith.constant 8 : index
    %c0_12 = arith.constant 0 : index
    %15 = vector.load %arg33[%c8, %c0_12] : memref<216x256xf32, #tpu.memory_space<vmem>>, vector<8x256xf32>
    tpu.vector_store %arg33[%c8, %c0_12], %14 {strides = array<i32>} : memref<216x256xf32, #tpu.memory_space<vmem>>, vector<8x256xf32>,
    %16 = vector.extract_strided_slice %5 {offsets = [0, 57], sizes = [8, 256], strides = [1, 1]} : vector<8x512xf32> to vector<8x256xf32>
    %c2 = arith.constant 2 : index
    %c0_13 = arith.constant 0 : index
    %17 = vector.load %arg27[%c2, %c0_13] : memref<9x256xf32, #tpu.memory_space<vmem>>, vector<1x256xf32>
    %18 = vector.broadcast %17 : vector<1x256xf32> to vector<8x256xf32>
    %19 = arith.mulf %16, %18 : vector<8x256xf32>
    %c16 = arith.constant 16 : index
    %c0_14 = arith.constant 0 : index
    %20 = vector.load %arg33[%c16, %c0_14] : memref<216x256xf32, #tpu.memory_space<vmem>>, vector<8x256xf32>
    tpu.vector_store %arg33[%c16, %c0_14], %19 {strides = array<i32>} : memref<216x256xf32, #tpu.memory_space<vmem>>, vector<8x256xf32>,
    %21 = vector.extract_strided_slice %5 {offsets = [0, 63], sizes = [8, 256], strides = [1, 1]} : vector<8x512xf32> to vector<8x256xf32>
    %c3 = arith.constant 3 : index
    %c0_15 = arith.constant 0 : index
    %22 = vector.load %arg27[%c3, %c0_15] : memref<9x256xf32, #tpu.memory_space<vmem>>, vector<1x256xf32>
    %23 = vector.broadcast %22 : vector<1x256xf32> to vector<8x256xf32>
    %24 = arith.mulf %21, %23 : vector<8x256xf32>
    %c24 = arith.constant 24 : index
    %c0_16 = arith.constant 0 : index
    %25 = vector.load %arg33[%c24, %c0_16] : memref<216x256xf32, #tpu.memory_space<vmem>>, vector<8x256xf32>
    tpu.vector_store %arg33[%c24, %c0_16], %24 {strides = array<i32>} : memref<216x256xf32, #tpu.memory_space<vmem>>, vector<8x256xf32>,
    %26 = vector.extract_strided_slice %5 {offsets = [0, 64], sizes = [8, 256], strides = [1, 1]} : vector<8x512xf32> to vector<8x256xf32>
    %c4 = arith.constant 4 : index
    %c0_17 = arith.constant 0 : index
    %27 = vector.load %arg27[%c4, %c0_17] : memref<9x256xf32, #tpu.memory_space<vmem>>, vector<1x256xf32>
    %28 = vector.broadcast %27 : vector<1x256xf32> to vector<8x256xf32>
    %29 = arith.mulf %26, %28 : vector<8x256xf32>
    %c32 = arith.constant 32 : index
    %c0_18 = arith.constant 0 : index
    %30 = vector.load %arg33[%c32, %c0_18] : memref<216x256xf32, #tpu.memory_space<vmem>>, vector<8x256xf32>
    tpu.vector_store %arg33[%c32, %c0_18], %29 {strides = array<i32>} : memref<216x256xf32, #tpu.memory_space<vmem>>, vector<8x256xf32>,
    %31 = vector.extract_strided_slice %5 {offsets = [0, 65], sizes = [8, 256], strides = [1, 1]} : vector<8x512xf32> to vector<8x256xf32>
    %c5 = arith.constant 5 : index
    %c0_19 = arith.constant 0 : index
    %32 = vector.load %arg27[%c5, %c0_19] : memref<9x256xf32, #tpu.memory_space<vmem>>, vector<1x256xf32>
    %33 = vector.broadcast %32 : vector<1x256xf32> to vector<8x256xf32>
    %34 = arith.mulf %31, %33 : vector<8x256xf32>
    %c40 = arith.constant 40 : index
    %c0_20 = arith.constant 0 : index
    %35 = vector.load %arg33[%c40, %c0_20] : memref<216x256xf32, #tpu.memory_space<vmem>>, vector<8x256xf32>
    tpu.vector_store %arg33[%c40, %c0_20], %34 {strides = array<i32>} : memref<216x256xf32, #tpu.memory_space<vmem>>, vector<8x256xf32>,
    %36 = vector.extract_strided_slice %5 {offsets = [0, 71], sizes = [8, 256], strides = [1, 1]} : vector<8x512xf32> to vector<8x256xf32>
    %c6 = arith.constant 6 : index
    %c0_21 = arith.constant 0 : index
    %37 = vector.load %arg27[%c6, %c0_21] : memref<9x256xf32, #tpu.memory_space<vmem>>, vector<1x256xf32>
    %38 = vector.broadcast %37 : vector<1x256xf32> to vector<8x256xf32>
    %39 = arith.mulf %36, %38 : vector<8x256xf32>
    %c48 = arith.constant 48 : index
    %c0_22 = arith.constant 0 : index
    %40 = vector.load %arg33[%c48, %c0_22] : memref<216x256xf32, #tpu.memory_space<vmem>>, vector<8x256xf32>
    tpu.vector_store %arg33[%c48, %c0_22], %39 {strides = array<i32>} : memref<216x256xf32, #tpu.memory_space<vmem>>, vector<8x256xf32>,
    %41 = vector.extract_strided_slice %5 {offsets = [0, 72], sizes = [8, 256], strides = [1, 1]} : vector<8x512xf32> to vector<8x256xf32>
    %c7 = arith.constant 7 : index
    %c0_23 = arith.constant 0 : index
    %42 = vector.load %arg27[%c7, %c0_23] : memref<9x256xf32, #tpu.memory_space<vmem>>, vector<1x256xf32>
    %43 = vector.broadcast %42 : vector<1x256xf32> to vector<8x256xf32>
    %44 = arith.mulf %41, %43 : vector<8x256xf32>
    %c56 = arith.constant 56 : index
    %c0_24 = arith.constant 0 : index
    %45 = vector.load %arg33[%c56, %c0_24] : memref<216x256xf32, #tpu.memory_space<vmem>>, vector<8x256xf32>
    tpu.vector_store %arg33[%c56, %c0_24], %44 {strides = array<i32>} : memref<216x256xf32, #tpu.memory_space<vmem>>, vector<8x256xf32>,
    %46 = vector.extract_strided_slice %5 {offsets = [0, 73], sizes = [8, 256], strides = [1, 1]} : vector<8x512xf32> to vector<8x256xf32>
    %c8_25 = arith.constant 8 : index
    %c0_26 = arith.constant 0 : index
    %47 = vector.load %arg27[%c8_25, %c0_26] : memref<9x256xf32, #tpu.memory_space<vmem>>, vector<1x256xf32>
    %48 = vector.broadcast %47 : vector<1x256xf32> to vector<8x256xf32>
    %49 = arith.mulf %46, %48 : vector<8x256xf32>
    %c64 = arith.constant 64 : index
    %c0_27 = arith.constant 0 : index
    %50 = vector.load %arg33[%c64, %c0_27] : memref<216x256xf32, #tpu.memory_space<vmem>>, vector<8x256xf32>
    tpu.vector_store %arg33[%c64, %c0_27], %49 {strides = array<i32>} : memref<216x256xf32, #tpu.memory_space<vmem>>, vector<8x256xf32>,
    %51 = vector.extract_strided_slice %5 {offsets = [0, 119], sizes = [8, 256], strides = [1, 1]} : vector<8x512xf32> to vector<8x256xf32>
    %c0_28 = arith.constant 0 : index
    %c0_29 = arith.constant 0 : index
    %52 = vector.load %arg27[%c0_28, %c0_29] : memref<9x256xf32, #tpu.memory_space<vmem>>, vector<1x256xf32>
    %53 = vector.broadcast %52 : vector<1x256xf32> to vector<8x256xf32>
    %54 = arith.mulf %51, %53 : vector<8x256xf32>
    %c72 = arith.constant 72 : index
    %c0_30 = arith.constant 0 : index
    %55 = vector.load %arg33[%c72, %c0_30] : memref<216x256xf32, #tpu.memory_space<vmem>>, vector<8x256xf32>
    tpu.vector_store %arg33[%c72, %c0_30], %54 {strides = array<i32>} : memref<216x256xf32, #tpu.memory_space<vmem>>, vector<8x256xf32>,
    %56 = vector.extract_strided_slice %5 {offsets = [0, 120], sizes = [8, 256], strides = [1, 1]} : vector<8x512xf32> to vector<8x256xf32>
    %c1_31 = arith.constant 1 : index
    %c0_32 = arith.constant 0 : index
    %57 = vector.load %arg27[%c1_31, %c0_32] : memref<9x256xf32, #tpu.memory_space<vmem>>, vector<1x256xf32>
    %58 = vector.broadcast %57 : vector<1x256xf32> to vector<8x256xf32>
    %59 = arith.mulf %56, %58 : vector<8x256xf32>
    %c80 = arith.constant 80 : index
    %c0_33 = arith.constant 0 : index
    %60 = vector.load %arg33[%c80, %c0_33] : memref<216x256xf32, #tpu.memory_space<vmem>>, vector<8x256xf32>
    tpu.vector_store %arg33[%c80, %c0_33], %59 {strides = array<i32>} : memref<216x256xf32, #tpu.memory_space<vmem>>, vector<8x256xf32>,
    %61 = vector.extract_strided_slice %5 {offsets = [0, 121], sizes = [8, 256], strides = [1, 1]} : vector<8x512xf32> to vector<8x256xf32>
    %c2_34 = arith.constant 2 : index
    %c0_35 = arith.constant 0 : index
    %62 = vector.load %arg27[%c2_34, %c0_35] : memref<9x256xf32, #tpu.memory_space<vmem>>, vector<1x256xf32>
    %63 = vector.broadcast %62 : vector<1x256xf32> to vector<8x256xf32>
    %64 = arith.mulf %61, %63 : vector<8x256xf32>
    %c88 = arith.constant 88 : index
    %c0_36 = arith.constant 0 : index
    %65 = vector.load %arg33[%c88, %c0_36] : memref<216x256xf32, #tpu.memory_space<vmem>>, vector<8x256xf32>
    tpu.vector_store %arg33[%c88, %c0_36], %64 {strides = array<i32>} : memref<216x256xf32, #tpu.memory_space<vmem>>, vector<8x256xf32>,
    %66 = vector.extract_strided_slice %5 {offsets = [0, 127], sizes = [8, 256], strides = [1, 1]} : vector<8x512xf32> to vector<8x256xf32>
    %c3_37 = arith.constant 3 : index
    %c0_38 = arith.constant 0 : index
    %67 = vector.load %arg27[%c3_37, %c0_38] : memref<9x256xf32, #tpu.memory_space<vmem>>, vector<1x256xf32>
    %68 = vector.broadcast %67 : vector<1x256xf32> to vector<8x256xf32>
    %69 = arith.mulf %66, %68 : vector<8x256xf32>
    %c96 = arith.constant 96 : index
    %c0_39 = arith.constant 0 : index
    %70 = vector.load %arg33[%c96, %c0_39] : memref<216x256xf32, #tpu.memory_space<vmem>>, vector<8x256xf32>
    tpu.vector_store %arg33[%c96, %c0_39], %69 {strides = array<i32>} : memref<216x256xf32, #tpu.memory_space<vmem>>, vector<8x256xf32>,
    %71 = vector.extract_strided_slice %5 {offsets = [0, 128], sizes = [8, 256], strides = [1, 1]} : vector<8x512xf32> to vector<8x256xf32>
    %c4_40 = arith.constant 4 : index
    %c0_41 = arith.constant 0 : index
    %72 = vector.load %arg27[%c4_40, %c0_41] : memref<9x256xf32, #tpu.memory_space<vmem>>, vector<1x256xf32>
    %73 = vector.broadcast %72 : vector<1x256xf32> to vector<8x256xf32>
    %74 = arith.mulf %71, %73 : vector<8x256xf32>
    %c104 = arith.constant 104 : index
    %c0_42 = arith.constant 0 : index
    %75 = vector.load %arg33[%c104, %c0_42] : memref<216x256xf32, #tpu.memory_space<vmem>>, vector<8x256xf32>
    tpu.vector_store %arg33[%c104, %c0_42], %74 {strides = array<i32>} : memref<216x256xf32, #tpu.memory_space<vmem>>, vector<8x256xf32>,
    %76 = vector.extract_strided_slice %5 {offsets = [0, 129], sizes = [8, 256], strides = [1, 1]} : vector<8x512xf32> to vector<8x256xf32>
    %c5_43 = arith.constant 5 : index
    %c0_44 = arith.constant 0 : index
    %77 = vector.load %arg27[%c5_43, %c0_44] : memref<9x256xf32, #tpu.memory_space<vmem>>, vector<1x256xf32>
    %78 = vector.broadcast %77 : vector<1x256xf32> to vector<8x256xf32>
    %79 = arith.mulf %76, %78 : vector<8x256xf32>
    %c112 = arith.constant 112 : index
    %c0_45 = arith.constant 0 : index
    %80 = vector.load %arg33[%c112, %c0_45] : memref<216x256xf32, #tpu.memory_space<vmem>>, vector<8x256xf32>
    tpu.vector_store %arg33[%c112, %c0_45], %79 {strides = array<i32>} : memref<216x256xf32, #tpu.memory_space<vmem>>, vector<8x256xf32>,
    %81 = vector.extract_strided_slice %5 {offsets = [0, 135], sizes = [8, 256], strides = [1, 1]} : vector<8x512xf32> to vector<8x256xf32>
    %c6_46 = arith.constant 6 : index
    %c0_47 = arith.constant 0 : index
    %82 = vector.load %arg27[%c6_46, %c0_47] : memref<9x256xf32, #tpu.memory_space<vmem>>, vector<1x256xf32>
    %83 = vector.broadcast %82 : vector<1x256xf32> to vector<8x256xf32>
    %84 = arith.mulf %81, %83 : vector<8x256xf32>
    %c120 = arith.constant 120 : index
    %c0_48 = arith.constant 0 : index
    %85 = vector.load %arg33[%c120, %c0_48] : memref<216x256xf32, #tpu.memory_space<vmem>>, vector<8x256xf32>
    tpu.vector_store %arg33[%c120, %c0_48], %84 {strides = array<i32>} : memref<216x256xf32, #tpu.memory_space<vmem>>, vector<8x256xf32>,
    %86 = vector.extract_strided_slice %5 {offsets = [0, 136], sizes = [8, 256], strides = [1, 1]} : vector<8x512xf32> to vector<8x256xf32>
    %c7_49 = arith.constant 7 : index
    %c0_50 = arith.constant 0 : index
    %87 = vector.load %arg27[%c7_49, %c0_50] : memref<9x256xf32, #tpu.memory_space<vmem>>, vector<1x256xf32>
    %88 = vector.broadcast %87 : vector<1x256xf32> to vector<8x256xf32>
    %89 = arith.mulf %86, %88 : vector<8x256xf32>
    %c128_51 = arith.constant 128 : index
    %c0_52 = arith.constant 0 : index
    %90 = vector.load %arg33[%c128_51, %c0_52] : memref<216x256xf32, #tpu.memory_space<vmem>>, vector<8x256xf32>
    tpu.vector_store %arg33[%c128_51, %c0_52], %89 {strides = array<i32>} : memref<216x256xf32, #tpu.memory_space<vmem>>, vector<8x256xf32>,
    %91 = vector.extract_strided_slice %5 {offsets = [0, 137], sizes = [8, 256], strides = [1, 1]} : vector<8x512xf32> to vector<8x256xf32>
    %c8_53 = arith.constant 8 : index
    %c0_54 = arith.constant 0 : index
    %92 = vector.load %arg27[%c8_53, %c0_54] : memref<9x256xf32, #tpu.memory_space<vmem>>, vector<1x256xf32>
    %93 = vector.broadcast %92 : vector<1x256xf32> to vector<8x256xf32>
    %94 = arith.mulf %91, %93 : vector<8x256xf32>
    %c136 = arith.constant 136 : index
    %c0_55 = arith.constant 0 : index
    %95 = vector.load %arg33[%c136, %c0_55] : memref<216x256xf32, #tpu.memory_space<vmem>>, vector<8x256xf32>
    tpu.vector_store %arg33[%c136, %c0_55], %94 {strides = array<i32>} : memref<216x256xf32, #tpu.memory_space<vmem>>, vector<8x256xf32>,
    %96 = vector.extract_strided_slice %5 {offsets = [0, 183], sizes = [8, 256], strides = [1, 1]} : vector<8x512xf32> to vector<8x256xf32>
    %c0_56 = arith.constant 0 : index
    %c0_57 = arith.constant 0 : index
    %97 = vector.load %arg27[%c0_56, %c0_57] : memref<9x256xf32, #tpu.memory_space<vmem>>, vector<1x256xf32>
    %98 = vector.broadcast %97 : vector<1x256xf32> to vector<8x256xf32>
    %99 = arith.mulf %96, %98 : vector<8x256xf32>
    %c144 = arith.constant 144 : index
    %c0_58 = arith.constant 0 : index
    %100 = vector.load %arg33[%c144, %c0_58] : memref<216x256xf32, #tpu.memory_space<vmem>>, vector<8x256xf32>
    tpu.vector_store %arg33[%c144, %c0_58], %99 {strides = array<i32>} : memref<216x256xf32, #tpu.memory_space<vmem>>, vector<8x256xf32>,
    %101 = vector.extract_strided_slice %5 {offsets = [0, 184], sizes = [8, 256], strides = [1, 1]} : vector<8x512xf32> to vector<8x256xf32>
    %c1_59 = arith.constant 1 : index
    %c0_60 = arith.constant 0 : index
    %102 = vector.load %arg27[%c1_59, %c0_60] : memref<9x256xf32, #tpu.memory_space<vmem>>, vector<1x256xf32>
    %103 = vector.broadcast %102 : vector<1x256xf32> to vector<8x256xf32>
    %104 = arith.mulf %101, %103 : vector<8x256xf32>
    %c152 = arith.constant 152 : index
    %c0_61 = arith.constant 0 : index
    %105 = vector.load %arg33[%c152, %c0_61] : memref<216x256xf32, #tpu.memory_space<vmem>>, vector<8x256xf32>
    tpu.vector_store %arg33[%c152, %c0_61], %104 {strides = array<i32>} : memref<216x256xf32, #tpu.memory_space<vmem>>, vector<8x256xf32>,
    %106 = vector.extract_strided_slice %5 {offsets = [0, 185], sizes = [8, 256], strides = [1, 1]} : vector<8x512xf32> to vector<8x256xf32>
    %c2_62 = arith.constant 2 : index
    %c0_63 = arith.constant 0 : index
    %107 = vector.load %arg27[%c2_62, %c0_63] : memref<9x256xf32, #tpu.memory_space<vmem>>, vector<1x256xf32>
    %108 = vector.broadcast %107 : vector<1x256xf32> to vector<8x256xf32>
    %109 = arith.mulf %106, %108 : vector<8x256xf32>
    %c160 = arith.constant 160 : index
    %c0_64 = arith.constant 0 : index
    %110 = vector.load %arg33[%c160, %c0_64] : memref<216x256xf32, #tpu.memory_space<vmem>>, vector<8x256xf32>
    tpu.vector_store %arg33[%c160, %c0_64], %109 {strides = array<i32>} : memref<216x256xf32, #tpu.memory_space<vmem>>, vector<8x256xf32>,
    %111 = vector.extract_strided_slice %5 {offsets = [0, 191], sizes = [8, 256], strides = [1, 1]} : vector<8x512xf32> to vector<8x256xf32>
    %c3_65 = arith.constant 3 : index
    %c0_66 = arith.constant 0 : index
    %112 = vector.load %arg27[%c3_65, %c0_66] : memref<9x256xf32, #tpu.memory_space<vmem>>, vector<1x256xf32>
    %113 = vector.broadcast %112 : vector<1x256xf32> to vector<8x256xf32>
    %114 = arith.mulf %111, %113 : vector<8x256xf32>
    %c168 = arith.constant 168 : index
    %c0_67 = arith.constant 0 : index
    %115 = vector.load %arg33[%c168, %c0_67] : memref<216x256xf32, #tpu.memory_space<vmem>>, vector<8x256xf32>
    tpu.vector_store %arg33[%c168, %c0_67], %114 {strides = array<i32>} : memref<216x256xf32, #tpu.memory_space<vmem>>, vector<8x256xf32>,
    %116 = vector.extract_strided_slice %5 {offsets = [0, 192], sizes = [8, 256], strides = [1, 1]} : vector<8x512xf32> to vector<8x256xf32>
    %c4_68 = arith.constant 4 : index
    %c0_69 = arith.constant 0 : index
    %117 = vector.load %arg27[%c4_68, %c0_69] : memref<9x256xf32, #tpu.memory_space<vmem>>, vector<1x256xf32>
    %118 = vector.broadcast %117 : vector<1x256xf32> to vector<8x256xf32>
    %119 = arith.mulf %116, %118 : vector<8x256xf32>
    %c176 = arith.constant 176 : index
    %c0_70 = arith.constant 0 : index
    %120 = vector.load %arg33[%c176, %c0_70] : memref<216x256xf32, #tpu.memory_space<vmem>>, vector<8x256xf32>
    tpu.vector_store %arg33[%c176, %c0_70], %119 {strides = array<i32>} : memref<216x256xf32, #tpu.memory_space<vmem>>, vector<8x256xf32>,
    %121 = vector.extract_strided_slice %5 {offsets = [0, 193], sizes = [8, 256], strides = [1, 1]} : vector<8x512xf32> to vector<8x256xf32>
    %c5_71 = arith.constant 5 : index
    %c0_72 = arith.constant 0 : index
    %122 = vector.load %arg27[%c5_71, %c0_72] : memref<9x256xf32, #tpu.memory_space<vmem>>, vector<1x256xf32>
    %123 = vector.broadcast %122 : vector<1x256xf32> to vector<8x256xf32>
    %124 = arith.mulf %121, %123 : vector<8x256xf32>
    %c184 = arith.constant 184 : index
    %c0_73 = arith.constant 0 : index
    %125 = vector.load %arg33[%c184, %c0_73] : memref<216x256xf32, #tpu.memory_space<vmem>>, vector<8x256xf32>
    tpu.vector_store %arg33[%c184, %c0_73], %124 {strides = array<i32>} : memref<216x256xf32, #tpu.memory_space<vmem>>, vector<8x256xf32>,
    %126 = vector.extract_strided_slice %5 {offsets = [0, 199], sizes = [8, 256], strides = [1, 1]} : vector<8x512xf32> to vector<8x256xf32>
    %c6_74 = arith.constant 6 : index
    %c0_75 = arith.constant 0 : index
    %127 = vector.load %arg27[%c6_74, %c0_75] : memref<9x256xf32, #tpu.memory_space<vmem>>, vector<1x256xf32>
    %128 = vector.broadcast %127 : vector<1x256xf32> to vector<8x256xf32>
    %129 = arith.mulf %126, %128 : vector<8x256xf32>
    %c192 = arith.constant 192 : index
    %c0_76 = arith.constant 0 : index
    %130 = vector.load %arg33[%c192, %c0_76] : memref<216x256xf32, #tpu.memory_space<vmem>>, vector<8x256xf32>
    tpu.vector_store %arg33[%c192, %c0_76], %129 {strides = array<i32>} : memref<216x256xf32, #tpu.memory_space<vmem>>, vector<8x256xf32>,
    %131 = vector.extract_strided_slice %5 {offsets = [0, 200], sizes = [8, 256], strides = [1, 1]} : vector<8x512xf32> to vector<8x256xf32>
    %c7_77 = arith.constant 7 : index
    %c0_78 = arith.constant 0 : index
    %132 = vector.load %arg27[%c7_77, %c0_78] : memref<9x256xf32, #tpu.memory_space<vmem>>, vector<1x256xf32>
    %133 = vector.broadcast %132 : vector<1x256xf32> to vector<8x256xf32>
    %134 = arith.mulf %131, %133 : vector<8x256xf32>
    %c200 = arith.constant 200 : index
    %c0_79 = arith.constant 0 : index
    %135 = vector.load %arg33[%c200, %c0_79] : memref<216x256xf32, #tpu.memory_space<vmem>>, vector<8x256xf32>
    tpu.vector_store %arg33[%c200, %c0_79], %134 {strides = array<i32>} : memref<216x256xf32, #tpu.memory_space<vmem>>, vector<8x256xf32>,
    %136 = vector.extract_strided_slice %5 {offsets = [0, 201], sizes = [8, 256], strides = [1, 1]} : vector<8x512xf32> to vector<8x256xf32>
    %c8_80 = arith.constant 8 : index
    %c0_81 = arith.constant 0 : index
    %137 = vector.load %arg27[%c8_80, %c0_81] : memref<9x256xf32, #tpu.memory_space<vmem>>, vector<1x256xf32>
    %138 = vector.broadcast %137 : vector<1x256xf32> to vector<8x256xf32>
    %139 = arith.mulf %136, %138 : vector<8x256xf32>
    %c208 = arith.constant 208 : index
    %c0_82 = arith.constant 0 : index
    %140 = vector.load %arg33[%c208, %c0_82] : memref<216x256xf32, #tpu.memory_space<vmem>>, vector<8x256xf32>
    tpu.vector_store %arg33[%c208, %c0_82], %139 {strides = array<i32>} : memref<216x256xf32, #tpu.memory_space<vmem>>, vector<8x256xf32>,
    %c0_83 = arith.constant 0 : index
    %c0_84 = arith.constant 0 : index
    %141 = vector.load %arg33[%c0_83, %c0_84] : memref<216x256xf32, #tpu.memory_space<vmem>>, vector<216x256xf32>
    %142 = arith.truncf %141 : vector<216x256xf32> to vector<216x256xbf16>
    %c0_85 = arith.constant 0 : index
    %c0_86 = arith.constant 0 : index
    %143 = vector.load %arg10[%c0_85, %c0_86] : memref<56x216xbf16, #tpu.memory_space<vmem>>, vector<56x216xbf16>
    %cst_87 = arith.constant dense<0.000000e+00> : vector<56x256xf32>
    %144 = tpu.matmul %143, %142, %cst_87 {dimension_numbers = #tpu.dot_dimension_numbers<[1], [0], [0], [1], [0, 0, 1, 1], [], []>} : vector<56x216xbf16>, vector<216x256xbf16>, vector<56x256xf32> -> vector<56x256xf32>
    %c0_88 = arith.constant 0 : index
    %c0_89 = arith.constant 0 : index
    %145 = vector.load %arg11[%c0_88, %c0_89] : memref<56x1xf32, #tpu.memory_space<vmem>>, vector<56x1xf32>
    %146 = vector.broadcast %145 : vector<56x1xf32> to vector<56x256xf32>
    %147 = arith.addf %144, %146 : vector<56x256xf32>
    %148 = vector.shape_cast %147 : vector<56x256xf32> to vector<1x56x256xf32>
    %cst_90 = arith.constant dense<0.000000e+00> : vector<1xf32>
    %149 = vector.multi_reduction <add>, %148, %cst_90 [1, 2] : vector<1x56x256xf32> to vector<1xf32>
    %150 = vector.shape_cast %149 : vector<1xf32> to vector<1x1x1xf32>
    %151 = vector.extract %150[0, 0, 0] : f32 from vector<1x1x1xf32>
    %cst_91 = arith.constant 1.433600e+04 : f32
    %152 = arith.divf %151, %cst_91 : f32
    %153 = vector.broadcast %152 : f32 to vector<56x256xf32>
    %154 = arith.subf %147, %153 : vector<56x256xf32>
    %155 = arith.mulf %154, %154 : vector<56x256xf32>
    %156 = vector.shape_cast %155 : vector<56x256xf32> to vector<1x56x256xf32>
    %cst_92 = arith.constant dense<0.000000e+00> : vector<1xf32>
    %157 = vector.multi_reduction <add>, %156, %cst_92 [1, 2] : vector<1x56x256xf32> to vector<1xf32>
    %158 = vector.shape_cast %157 : vector<1xf32> to vector<1x1x1xf32>
    %159 = vector.extract %158[0, 0, 0] : f32 from vector<1x1x1xf32>
    %cst_93 = arith.constant 1.433600e+04 : f32
    %160 = arith.divf %159, %cst_93 : f32
    %cst_94 = arith.constant 9.99999974E-6 : f32
    %161 = arith.addf %160, %cst_94 : f32
    %162 = math.rsqrt %161 : f32
    %163 = vector.broadcast %162 : f32 to vector<56x256xf32>
    %164 = arith.mulf %154, %163 : vector<56x256xf32>
    %c0_95 = arith.constant 0 : index
    %c0_96 = arith.constant 0 : index
    %165 = vector.load %arg12[%c0_95, %c0_96] : memref<56x256xf32, #tpu.memory_space<vmem>>, vector<56x256xf32>
    %166 = arith.mulf %164, %165 : vector<56x256xf32>
    %c0_97 = arith.constant 0 : index
    %c0_98 = arith.constant 0 : index
    %167 = vector.load %arg13[%c0_97, %c0_98] : memref<56x256xf32, #tpu.memory_space<vmem>>, vector<56x256xf32>
    %168 = arith.addf %166, %167 : vector<56x256xf32>
    %c0_99 = arith.constant 0 : index
    %c0_100 = arith.constant 0 : index
    %169 = vector.load %arg34[%c0_99, %c0_100] : memref<56x256xf32, #tpu.memory_space<vmem>>, vector<56x256xf32>
    tpu.vector_store %arg34[%c0_99, %c0_100], %168 {strides = array<i32>} : memref<56x256xf32, #tpu.memory_space<vmem>>, vector<56x256xf32>,
    %c0_101 = arith.constant 0 : index
    %c0_102 = arith.constant 0 : index
    %c0_103 = arith.constant 0 : index
    %170 = vector.load %arg2[%c0_101, %c0_102, %c0_103] : memref<1x8x256xf32, #tpu.memory_space<vmem>>, vector<1x8x256xf32>
    %171 = vector.shape_cast %170 : vector<1x8x256xf32> to vector<8x256xf32>
    %c0_104 = arith.constant 0 : index
    %c128_105 = arith.constant 128 : index
    %172 = vector.load %arg32[%c0_104, %c128_105] : memref<8x512xf32, #tpu.memory_space<vmem>>, vector<8x256xf32>
    tpu.vector_store %arg32[%c0_104, %c128_105], %171 {strides = array<i32>} : memref<8x512xf32, #tpu.memory_space<vmem>>, vector<8x256xf32>,
    %c0_106 = arith.constant 0 : index
    %c0_107 = arith.constant 0 : index
    %173 = vector.load %arg32[%c0_106, %c0_107] : memref<8x512xf32, #tpu.memory_space<vmem>>, vector<8x512xf32>
    %174 = vector.extract_strided_slice %173 {offsets = [0, 55], sizes = [8, 256], strides = [1, 1]} : vector<8x512xf32> to vector<8x256xf32>
    %c0_108 = arith.constant 0 : index
    %c0_109 = arith.constant 0 : index
    %175 = vector.load %arg27[%c0_108, %c0_109] : memref<9x256xf32, #tpu.memory_space<vmem>>, vector<1x256xf32>
    %176 = vector.broadcast %175 : vector<1x256xf32> to vector<8x256xf32>
    %177 = arith.mulf %174, %176 : vector<8x256xf32>
    %c0_110 = arith.constant 0 : index
    %c0_111 = arith.constant 0 : index
    %178 = vector.load %arg33[%c0_110, %c0_111] : memref<216x256xf32, #tpu.memory_space<vmem>>, vector<8x256xf32>
    tpu.vector_store %arg33[%c0_110, %c0_111], %177 {strides = array<i32>} : memref<216x256xf32, #tpu.memory_space<vmem>>, vector<8x256xf32>,
    %179 = vector.extract_strided_slice %173 {offsets = [0, 56], sizes = [8, 256], strides = [1, 1]} : vector<8x512xf32> to vector<8x256xf32>
    %c1_112 = arith.constant 1 : index
    %c0_113 = arith.constant 0 : index
    %180 = vector.load %arg27[%c1_112, %c0_113] : memref<9x256xf32, #tpu.memory_space<vmem>>, vector<1x256xf32>
    %181 = vector.broadcast %180 : vector<1x256xf32> to vector<8x256xf32>
    %182 = arith.mulf %179, %181 : vector<8x256xf32>
    %c8_114 = arith.constant 8 : index
    %c0_115 = arith.constant 0 : index
    %183 = vector.load %arg33[%c8_114, %c0_115] : memref<216x256xf32, #tpu.memory_space<vmem>>, vector<8x256xf32>
    tpu.vector_store %arg33[%c8_114, %c0_115], %182 {strides = array<i32>} : memref<216x256xf32, #tpu.memory_space<vmem>>, vector<8x256xf32>,
    %184 = vector.extract_strided_slice %173 {offsets = [0, 57], sizes = [8, 256], strides = [1, 1]} : vector<8x512xf32> to vector<8x256xf32>
    %c2_116 = arith.constant 2 : index
    %c0_117 = arith.constant 0 : index
    %185 = vector.load %arg27[%c2_116, %c0_117] : memref<9x256xf32, #tpu.memory_space<vmem>>, vector<1x256xf32>
    %186 = vector.broadcast %185 : vector<1x256xf32> to vector<8x256xf32>
    %187 = arith.mulf %184, %186 : vector<8x256xf32>
    %c16_118 = arith.constant 16 : index
    %c0_119 = arith.constant 0 : index
    %188 = vector.load %arg33[%c16_118, %c0_119] : memref<216x256xf32, #tpu.memory_space<vmem>>, vector<8x256xf32>
    tpu.vector_store %arg33[%c16_118, %c0_119], %187 {strides = array<i32>} : memref<216x256xf32, #tpu.memory_space<vmem>>, vector<8x256xf32>,
    %189 = vector.extract_strided_slice %173 {offsets = [0, 63], sizes = [8, 256], strides = [1, 1]} : vector<8x512xf32> to vector<8x256xf32>
    %c3_120 = arith.constant 3 : index
    %c0_121 = arith.constant 0 : index
    %190 = vector.load %arg27[%c3_120, %c0_121] : memref<9x256xf32, #tpu.memory_space<vmem>>, vector<1x256xf32>
    %191 = vector.broadcast %190 : vector<1x256xf32> to vector<8x256xf32>
    %192 = arith.mulf %189, %191 : vector<8x256xf32>
    %c24_122 = arith.constant 24 : index
    %c0_123 = arith.constant 0 : index
    %193 = vector.load %arg33[%c24_122, %c0_123] : memref<216x256xf32, #tpu.memory_space<vmem>>, vector<8x256xf32>
    tpu.vector_store %arg33[%c24_122, %c0_123], %192 {strides = array<i32>} : memref<216x256xf32, #tpu.memory_space<vmem>>, vector<8x256xf32>,
    %194 = vector.extract_strided_slice %173 {offsets = [0, 64], sizes = [8, 256], strides = [1, 1]} : vector<8x512xf32> to vector<8x256xf32>
    %c4_124 = arith.constant 4 : index
    %c0_125 = arith.constant 0 : index
    %195 = vector.load %arg27[%c4_124, %c0_125] : memref<9x256xf32, #tpu.memory_space<vmem>>, vector<1x256xf32>
    %196 = vector.broadcast %195 : vector<1x256xf32> to vector<8x256xf32>
    %197 = arith.mulf %194, %196 : vector<8x256xf32>
    %c32_126 = arith.constant 32 : index
    %c0_127 = arith.constant 0 : index
    %198 = vector.load %arg33[%c32_126, %c0_127] : memref<216x256xf32, #tpu.memory_space<vmem>>, vector<8x256xf32>
    tpu.vector_store %arg33[%c32_126, %c0_127], %197 {strides = array<i32>} : memref<216x256xf32, #tpu.memory_space<vmem>>, vector<8x256xf32>,
    %199 = vector.extract_strided_slice %173 {offsets = [0, 65], sizes = [8, 256], strides = [1, 1]} : vector<8x512xf32> to vector<8x256xf32>
    %c5_128 = arith.constant 5 : index
    %c0_129 = arith.constant 0 : index
    %200 = vector.load %arg27[%c5_128, %c0_129] : memref<9x256xf32, #tpu.memory_space<vmem>>, vector<1x256xf32>
    %201 = vector.broadcast %200 : vector<1x256xf32> to vector<8x256xf32>
    %202 = arith.mulf %199, %201 : vector<8x256xf32>
    %c40_130 = arith.constant 40 : index
    %c0_131 = arith.constant 0 : index
    %203 = vector.load %arg33[%c40_130, %c0_131] : memref<216x256xf32, #tpu.memory_space<vmem>>, vector<8x256xf32>
    tpu.vector_store %arg33[%c40_130, %c0_131], %202 {strides = array<i32>} : memref<216x256xf32, #tpu.memory_space<vmem>>, vector<8x256xf32>,
    %204 = vector.extract_strided_slice %173 {offsets = [0, 71], sizes = [8, 256], strides = [1, 1]} : vector<8x512xf32> to vector<8x256xf32>
    %c6_132 = arith.constant 6 : index
    %c0_133 = arith.constant 0 : index
    %205 = vector.load %arg27[%c6_132, %c0_133] : memref<9x256xf32, #tpu.memory_space<vmem>>, vector<1x256xf32>
    %206 = vector.broadcast %205 : vector<1x256xf32> to vector<8x256xf32>
    %207 = arith.mulf %204, %206 : vector<8x256xf32>
    %c48_134 = arith.constant 48 : index
    %c0_135 = arith.constant 0 : index
    %208 = vector.load %arg33[%c48_134, %c0_135] : memref<216x256xf32, #tpu.memory_space<vmem>>, vector<8x256xf32>
    tpu.vector_store %arg33[%c48_134, %c0_135], %207 {strides = array<i32>} : memref<216x256xf32, #tpu.memory_space<vmem>>, vector<8x256xf32>,
    %209 = vector.extract_strided_slice %173 {offsets = [0, 72], sizes = [8, 256], strides = [1, 1]} : vector<8x512xf32> to vector<8x256xf32>
    %c7_136 = arith.constant 7 : index
    %c0_137 = arith.constant 0 : index
    %210 = vector.load %arg27[%c7_136, %c0_137] : memref<9x256xf32, #tpu.memory_space<vmem>>, vector<1x256xf32>
    %211 = vector.broadcast %210 : vector<1x256xf32> to vector<8x256xf32>
    %212 = arith.mulf %209, %211 : vector<8x256xf32>
    %c56_138 = arith.constant 56 : index
    %c0_139 = arith.constant 0 : index
    %213 = vector.load %arg33[%c56_138, %c0_139] : memref<216x256xf32, #tpu.memory_space<vmem>>, vector<8x256xf32>
    tpu.vector_store %arg33[%c56_138, %c0_139], %212 {strides = array<i32>} : memref<216x256xf32, #tpu.memory_space<vmem>>, vector<8x256xf32>,
    %214 = vector.extract_strided_slice %173 {offsets = [0, 73], sizes = [8, 256], strides = [1, 1]} : vector<8x512xf32> to vector<8x256xf32>
    %c8_140 = arith.constant 8 : index
    %c0_141 = arith.constant 0 : index
    %215 = vector.load %arg27[%c8_140, %c0_141] : memref<9x256xf32, #tpu.memory_space<vmem>>, vector<1x256xf32>
    %216 = vector.broadcast %215 : vector<1x256xf32> to vector<8x256xf32>
    %217 = arith.mulf %214, %216 : vector<8x256xf32>
    %c64_142 = arith.constant 64 : index
    %c0_143 = arith.constant 0 : index
    %218 = vector.load %arg33[%c64_142, %c0_143] : memref<216x256xf32, #tpu.memory_space<vmem>>, vector<8x256xf32>
    tpu.vector_store %arg33[%c64_142, %c0_143], %217 {strides = array<i32>} : memref<216x256xf32, #tpu.memory_space<vmem>>, vector<8x256xf32>,
    %219 = vector.extract_strided_slice %173 {offsets = [0, 119], sizes = [8, 256], strides = [1, 1]} : vector<8x512xf32> to vector<8x256xf32>
    %c0_144 = arith.constant 0 : index
    %c0_145 = arith.constant 0 : index
    %220 = vector.load %arg27[%c0_144, %c0_145] : memref<9x256xf32, #tpu.memory_space<vmem>>, vector<1x256xf32>
    %221 = vector.broadcast %220 : vector<1x256xf32> to vector<8x256xf32>
    %222 = arith.mulf %219, %221 : vector<8x256xf32>
    %c72_146 = arith.constant 72 : index
    %c0_147 = arith.constant 0 : index
    %223 = vector.load %arg33[%c72_146, %c0_147] : memref<216x256xf32, #tpu.memory_space<vmem>>, vector<8x256xf32>
    tpu.vector_store %arg33[%c72_146, %c0_147], %222 {strides = array<i32>} : memref<216x256xf32, #tpu.memory_space<vmem>>, vector<8x256xf32>,
    %224 = vector.extract_strided_slice %173 {offsets = [0, 120], sizes = [8, 256], strides = [1, 1]} : vector<8x512xf32> to vector<8x256xf32>
    %c1_148 = arith.constant 1 : index
    %c0_149 = arith.constant 0 : index
    %225 = vector.load %arg27[%c1_148, %c0_149] : memref<9x256xf32, #tpu.memory_space<vmem>>, vector<1x256xf32>
    %226 = vector.broadcast %225 : vector<1x256xf32> to vector<8x256xf32>
    %227 = arith.mulf %224, %226 : vector<8x256xf32>
    %c80_150 = arith.constant 80 : index
    %c0_151 = arith.constant 0 : index
    %228 = vector.load %arg33[%c80_150, %c0_151] : memref<216x256xf32, #tpu.memory_space<vmem>>, vector<8x256xf32>
    tpu.vector_store %arg33[%c80_150, %c0_151], %227 {strides = array<i32>} : memref<216x256xf32, #tpu.memory_space<vmem>>, vector<8x256xf32>,
    %229 = vector.extract_strided_slice %173 {offsets = [0, 121], sizes = [8, 256], strides = [1, 1]} : vector<8x512xf32> to vector<8x256xf32>
    %c2_152 = arith.constant 2 : index
    %c0_153 = arith.constant 0 : index
    %230 = vector.load %arg27[%c2_152, %c0_153] : memref<9x256xf32, #tpu.memory_space<vmem>>, vector<1x256xf32>
    %231 = vector.broadcast %230 : vector<1x256xf32> to vector<8x256xf32>
    %232 = arith.mulf %229, %231 : vector<8x256xf32>
    %c88_154 = arith.constant 88 : index
    %c0_155 = arith.constant 0 : index
    %233 = vector.load %arg33[%c88_154, %c0_155] : memref<216x256xf32, #tpu.memory_space<vmem>>, vector<8x256xf32>
    tpu.vector_store %arg33[%c88_154, %c0_155], %232 {strides = array<i32>} : memref<216x256xf32, #tpu.memory_space<vmem>>, vector<8x256xf32>,
    %234 = vector.extract_strided_slice %173 {offsets = [0, 127], sizes = [8, 256], strides = [1, 1]} : vector<8x512xf32> to vector<8x256xf32>
    %c3_156 = arith.constant 3 : index
    %c0_157 = arith.constant 0 : index
    %235 = vector.load %arg27[%c3_156, %c0_157] : memref<9x256xf32, #tpu.memory_space<vmem>>, vector<1x256xf32>
    %236 = vector.broadcast %235 : vector<1x256xf32> to vector<8x256xf32>
    %237 = arith.mulf %234, %236 : vector<8x256xf32>
    %c96_158 = arith.constant 96 : index
    %c0_159 = arith.constant 0 : index
    %238 = vector.load %arg33[%c96_158, %c0_159] : memref<216x256xf32, #tpu.memory_space<vmem>>, vector<8x256xf32>
    tpu.vector_store %arg33[%c96_158, %c0_159], %237 {strides = array<i32>} : memref<216x256xf32, #tpu.memory_space<vmem>>, vector<8x256xf32>,
    %239 = vector.extract_strided_slice %173 {offsets = [0, 128], sizes = [8, 256], strides = [1, 1]} : vector<8x512xf32> to vector<8x256xf32>
    %c4_160 = arith.constant 4 : index
    %c0_161 = arith.constant 0 : index
    %240 = vector.load %arg27[%c4_160, %c0_161] : memref<9x256xf32, #tpu.memory_space<vmem>>, vector<1x256xf32>
    %241 = vector.broadcast %240 : vector<1x256xf32> to vector<8x256xf32>
    %242 = arith.mulf %239, %241 : vector<8x256xf32>
    %c104_162 = arith.constant 104 : index
    %c0_163 = arith.constant 0 : index
    %243 = vector.load %arg33[%c104_162, %c0_163] : memref<216x256xf32, #tpu.memory_space<vmem>>, vector<8x256xf32>
    tpu.vector_store %arg33[%c104_162, %c0_163], %242 {strides = array<i32>} : memref<216x256xf32, #tpu.memory_space<vmem>>, vector<8x256xf32>,
    %244 = vector.extract_strided_slice %173 {offsets = [0, 129], sizes = [8, 256], strides = [1, 1]} : vector<8x512xf32> to vector<8x256xf32>
    %c5_164 = arith.constant 5 : index
    %c0_165 = arith.constant 0 : index
    %245 = vector.load %arg27[%c5_164, %c0_165] : memref<9x256xf32, #tpu.memory_space<vmem>>, vector<1x256xf32>
    %246 = vector.broadcast %245 : vector<1x256xf32> to vector<8x256xf32>
    %247 = arith.mulf %244, %246 : vector<8x256xf32>
    %c112_166 = arith.constant 112 : index
    %c0_167 = arith.constant 0 : index
    %248 = vector.load %arg33[%c112_166, %c0_167] : memref<216x256xf32, #tpu.memory_space<vmem>>, vector<8x256xf32>
    tpu.vector_store %arg33[%c112_166, %c0_167], %247 {strides = array<i32>} : memref<216x256xf32, #tpu.memory_space<vmem>>, vector<8x256xf32>,
    %249 = vector.extract_strided_slice %173 {offsets = [0, 135], sizes = [8, 256], strides = [1, 1]} : vector<8x512xf32> to vector<8x256xf32>
    %c6_168 = arith.constant 6 : index
    %c0_169 = arith.constant 0 : index
    %250 = vector.load %arg27[%c6_168, %c0_169] : memref<9x256xf32, #tpu.memory_space<vmem>>, vector<1x256xf32>
    %251 = vector.broadcast %250 : vector<1x256xf32> to vector<8x256xf32>
    %252 = arith.mulf %249, %251 : vector<8x256xf32>
    %c120_170 = arith.constant 120 : index
    %c0_171 = arith.constant 0 : index
    %253 = vector.load %arg33[%c120_170, %c0_171] : memref<216x256xf32, #tpu.memory_space<vmem>>, vector<8x256xf32>
    tpu.vector_store %arg33[%c120_170, %c0_171], %252 {strides = array<i32>} : memref<216x256xf32, #tpu.memory_space<vmem>>, vector<8x256xf32>,
    %254 = vector.extract_strided_slice %173 {offsets = [0, 136], sizes = [8, 256], strides = [1, 1]} : vector<8x512xf32> to vector<8x256xf32>
    %c7_172 = arith.constant 7 : index
    %c0_173 = arith.constant 0 : index
    %255 = vector.load %arg27[%c7_172, %c0_173] : memref<9x256xf32, #tpu.memory_space<vmem>>, vector<1x256xf32>
    %256 = vector.broadcast %255 : vector<1x256xf32> to vector<8x256xf32>
    %257 = arith.mulf %254, %256 : vector<8x256xf32>
    %c128_174 = arith.constant 128 : index
    %c0_175 = arith.constant 0 : index
    %258 = vector.load %arg33[%c128_174, %c0_175] : memref<216x256xf32, #tpu.memory_space<vmem>>, vector<8x256xf32>
    tpu.vector_store %arg33[%c128_174, %c0_175], %257 {strides = array<i32>} : memref<216x256xf32, #tpu.memory_space<vmem>>, vector<8x256xf32>,
    %259 = vector.extract_strided_slice %173 {offsets = [0, 137], sizes = [8, 256], strides = [1, 1]} : vector<8x512xf32> to vector<8x256xf32>
    %c8_176 = arith.constant 8 : index
    %c0_177 = arith.constant 0 : index
    %260 = vector.load %arg27[%c8_176, %c0_177] : memref<9x256xf32, #tpu.memory_space<vmem>>, vector<1x256xf32>
    %261 = vector.broadcast %260 : vector<1x256xf32> to vector<8x256xf32>
    %262 = arith.mulf %259, %261 : vector<8x256xf32>
    %c136_178 = arith.constant 136 : index
    %c0_179 = arith.constant 0 : index
    %263 = vector.load %arg33[%c136_178, %c0_179] : memref<216x256xf32, #tpu.memory_space<vmem>>, vector<8x256xf32>
    tpu.vector_store %arg33[%c136_178, %c0_179], %262 {strides = array<i32>} : memref<216x256xf32, #tpu.memory_space<vmem>>, vector<8x256xf32>,
    %264 = vector.extract_strided_slice %173 {offsets = [0, 183], sizes = [8, 256], strides = [1, 1]} : vector<8x512xf32> to vector<8x256xf32>
    %c0_180 = arith.constant 0 : index
    %c0_181 = arith.constant 0 : index
    %265 = vector.load %arg27[%c0_180, %c0_181] : memref<9x256xf32, #tpu.memory_space<vmem>>, vector<1x256xf32>
    %266 = vector.broadcast %265 : vector<1x256xf32> to vector<8x256xf32>
    %267 = arith.mulf %264, %266 : vector<8x256xf32>
    %c144_182 = arith.constant 144 : index
    %c0_183 = arith.constant 0 : index
    %268 = vector.load %arg33[%c144_182, %c0_183] : memref<216x256xf32, #tpu.memory_space<vmem>>, vector<8x256xf32>
    tpu.vector_store %arg33[%c144_182, %c0_183], %267 {strides = array<i32>} : memref<216x256xf32, #tpu.memory_space<vmem>>, vector<8x256xf32>,
    %269 = vector.extract_strided_slice %173 {offsets = [0, 184], sizes = [8, 256], strides = [1, 1]} : vector<8x512xf32> to vector<8x256xf32>
    %c1_184 = arith.constant 1 : index
    %c0_185 = arith.constant 0 : index
    %270 = vector.load %arg27[%c1_184, %c0_185] : memref<9x256xf32, #tpu.memory_space<vmem>>, vector<1x256xf32>
    %271 = vector.broadcast %270 : vector<1x256xf32> to vector<8x256xf32>
    %272 = arith.mulf %269, %271 : vector<8x256xf32>
    %c152_186 = arith.constant 152 : index
    %c0_187 = arith.constant 0 : index
    %273 = vector.load %arg33[%c152_186, %c0_187] : memref<216x256xf32, #tpu.memory_space<vmem>>, vector<8x256xf32>
    tpu.vector_store %arg33[%c152_186, %c0_187], %272 {strides = array<i32>} : memref<216x256xf32, #tpu.memory_space<vmem>>, vector<8x256xf32>,
    %274 = vector.extract_strided_slice %173 {offsets = [0, 185], sizes = [8, 256], strides = [1, 1]} : vector<8x512xf32> to vector<8x256xf32>
    %c2_188 = arith.constant 2 : index
    %c0_189 = arith.constant 0 : index
    %275 = vector.load %arg27[%c2_188, %c0_189] : memref<9x256xf32, #tpu.memory_space<vmem>>, vector<1x256xf32>
    %276 = vector.broadcast %275 : vector<1x256xf32> to vector<8x256xf32>
    %277 = arith.mulf %274, %276 : vector<8x256xf32>
    %c160_190 = arith.constant 160 : index
    %c0_191 = arith.constant 0 : index
    %278 = vector.load %arg33[%c160_190, %c0_191] : memref<216x256xf32, #tpu.memory_space<vmem>>, vector<8x256xf32>
    tpu.vector_store %arg33[%c160_190, %c0_191], %277 {strides = array<i32>} : memref<216x256xf32, #tpu.memory_space<vmem>>, vector<8x256xf32>,
    %279 = vector.extract_strided_slice %173 {offsets = [0, 191], sizes = [8, 256], strides = [1, 1]} : vector<8x512xf32> to vector<8x256xf32>
    %c3_192 = arith.constant 3 : index
    %c0_193 = arith.constant 0 : index
    %280 = vector.load %arg27[%c3_192, %c0_193] : memref<9x256xf32, #tpu.memory_space<vmem>>, vector<1x256xf32>
    %281 = vector.broadcast %280 : vector<1x256xf32> to vector<8x256xf32>
    %282 = arith.mulf %279, %281 : vector<8x256xf32>
    %c168_194 = arith.constant 168 : index
    %c0_195 = arith.constant 0 : index
    %283 = vector.load %arg33[%c168_194, %c0_195] : memref<216x256xf32, #tpu.memory_space<vmem>>, vector<8x256xf32>
    tpu.vector_store %arg33[%c168_194, %c0_195], %282 {strides = array<i32>} : memref<216x256xf32, #tpu.memory_space<vmem>>, vector<8x256xf32>,
    %284 = vector.extract_strided_slice %173 {offsets = [0, 192], sizes = [8, 256], strides = [1, 1]} : vector<8x512xf32> to vector<8x256xf32>
    %c4_196 = arith.constant 4 : index
    %c0_197 = arith.constant 0 : index
    %285 = vector.load %arg27[%c4_196, %c0_197] : memref<9x256xf32, #tpu.memory_space<vmem>>, vector<1x256xf32>
    %286 = vector.broadcast %285 : vector<1x256xf32> to vector<8x256xf32>
    %287 = arith.mulf %284, %286 : vector<8x256xf32>
    %c176_198 = arith.constant 176 : index
    %c0_199 = arith.constant 0 : index
    %288 = vector.load %arg33[%c176_198, %c0_199] : memref<216x256xf32, #tpu.memory_space<vmem>>, vector<8x256xf32>
    tpu.vector_store %arg33[%c176_198, %c0_199], %287 {strides = array<i32>} : memref<216x256xf32, #tpu.memory_space<vmem>>, vector<8x256xf32>,
    %289 = vector.extract_strided_slice %173 {offsets = [0, 193], sizes = [8, 256], strides = [1, 1]} : vector<8x512xf32> to vector<8x256xf32>
    %c5_200 = arith.constant 5 : index
    %c0_201 = arith.constant 0 : index
    %290 = vector.load %arg27[%c5_200, %c0_201] : memref<9x256xf32, #tpu.memory_space<vmem>>, vector<1x256xf32>
    %291 = vector.broadcast %290 : vector<1x256xf32> to vector<8x256xf32>
    %292 = arith.mulf %289, %291 : vector<8x256xf32>
    %c184_202 = arith.constant 184 : index
    %c0_203 = arith.constant 0 : index
    %293 = vector.load %arg33[%c184_202, %c0_203] : memref<216x256xf32, #tpu.memory_space<vmem>>, vector<8x256xf32>
    tpu.vector_store %arg33[%c184_202, %c0_203], %292 {strides = array<i32>} : memref<216x256xf32, #tpu.memory_space<vmem>>, vector<8x256xf32>,
    %294 = vector.extract_strided_slice %173 {offsets = [0, 199], sizes = [8, 256], strides = [1, 1]} : vector<8x512xf32> to vector<8x256xf32>
    %c6_204 = arith.constant 6 : index
    %c0_205 = arith.constant 0 : index
    %295 = vector.load %arg27[%c6_204, %c0_205] : memref<9x256xf32, #tpu.memory_space<vmem>>, vector<1x256xf32>
    %296 = vector.broadcast %295 : vector<1x256xf32> to vector<8x256xf32>
    %297 = arith.mulf %294, %296 : vector<8x256xf32>
    %c192_206 = arith.constant 192 : index
    %c0_207 = arith.constant 0 : index
    %298 = vector.load %arg33[%c192_206, %c0_207] : memref<216x256xf32, #tpu.memory_space<vmem>>, vector<8x256xf32>
    tpu.vector_store %arg33[%c192_206, %c0_207], %297 {strides = array<i32>} : memref<216x256xf32, #tpu.memory_space<vmem>>, vector<8x256xf32>,
    %299 = vector.extract_strided_slice %173 {offsets = [0, 200], sizes = [8, 256], strides = [1, 1]} : vector<8x512xf32> to vector<8x256xf32>
    %c7_208 = arith.constant 7 : index
    %c0_209 = arith.constant 0 : index
    %300 = vector.load %arg27[%c7_208, %c0_209] : memref<9x256xf32, #tpu.memory_space<vmem>>, vector<1x256xf32>
    %301 = vector.broadcast %300 : vector<1x256xf32> to vector<8x256xf32>
    %302 = arith.mulf %299, %301 : vector<8x256xf32>
    %c200_210 = arith.constant 200 : index
    %c0_211 = arith.constant 0 : index
    %303 = vector.load %arg33[%c200_210, %c0_211] : memref<216x256xf32, #tpu.memory_space<vmem>>, vector<8x256xf32>
    tpu.vector_store %arg33[%c200_210, %c0_211], %302 {strides = array<i32>} : memref<216x256xf32, #tpu.memory_space<vmem>>, vector<8x256xf32>,
    %304 = vector.extract_strided_slice %173 {offsets = [0, 201], sizes = [8, 256], strides = [1, 1]} : vector<8x512xf32> to vector<8x256xf32>
    %c8_212 = arith.constant 8 : index
    %c0_213 = arith.constant 0 : index
    %305 = vector.load %arg27[%c8_212, %c0_213] : memref<9x256xf32, #tpu.memory_space<vmem>>, vector<1x256xf32>
    %306 = vector.broadcast %305 : vector<1x256xf32> to vector<8x256xf32>
    %307 = arith.mulf %304, %306 : vector<8x256xf32>
    %c208_214 = arith.constant 208 : index
    %c0_215 = arith.constant 0 : index
    %308 = vector.load %arg33[%c208_214, %c0_215] : memref<216x256xf32, #tpu.memory_space<vmem>>, vector<8x256xf32>
    tpu.vector_store %arg33[%c208_214, %c0_215], %307 {strides = array<i32>} : memref<216x256xf32, #tpu.memory_space<vmem>>, vector<8x256xf32>,
    %c0_216 = arith.constant 0 : index
    %c0_217 = arith.constant 0 : index
    %309 = vector.load %arg33[%c0_216, %c0_217] : memref<216x256xf32, #tpu.memory_space<vmem>>, vector<216x256xf32>
    %310 = arith.truncf %309 : vector<216x256xf32> to vector<216x256xbf16>
    %c0_218 = arith.constant 0 : index
    %c0_219 = arith.constant 0 : index
    %311 = vector.load %arg14[%c0_218, %c0_219] : memref<32x216xbf16, #tpu.memory_space<vmem>>, vector<32x216xbf16>
    %cst_220 = arith.constant dense<0.000000e+00> : vector<32x256xf32>
    %312 = tpu.matmul %311, %310, %cst_220 {dimension_numbers = #tpu.dot_dimension_numbers<[1], [0], [0], [1], [0, 0, 1, 1], [], []>} : vector<32x216xbf16>, vector<216x256xbf16>, vector<32x256xf32> -> vector<32x256xf32>
    %c0_221 = arith.constant 0 : index
    %c0_222 = arith.constant 0 : index
    %313 = vector.load %arg15[%c0_221, %c0_222] : memref<32x1xf32, #tpu.memory_space<vmem>>, vector<32x1xf32>
    %314 = vector.broadcast %313 : vector<32x1xf32> to vector<32x256xf32>
    %315 = arith.addf %312, %314 : vector<32x256xf32>
    %316 = vector.shape_cast %315 : vector<32x256xf32> to vector<1x32x256xf32>
    %cst_223 = arith.constant dense<0.000000e+00> : vector<1xf32>
    %317 = vector.multi_reduction <add>, %316, %cst_223 [1, 2] : vector<1x32x256xf32> to vector<1xf32>
    %318 = vector.shape_cast %317 : vector<1xf32> to vector<1x1x1xf32>
    %319 = vector.extract %318[0, 0, 0] : f32 from vector<1x1x1xf32>
    %cst_224 = arith.constant 8.192000e+03 : f32
    %320 = arith.divf %319, %cst_224 : f32
    %321 = vector.broadcast %320 : f32 to vector<32x256xf32>
    %322 = arith.subf %315, %321 : vector<32x256xf32>
    %323 = arith.mulf %322, %322 : vector<32x256xf32>
    %324 = vector.shape_cast %323 : vector<32x256xf32> to vector<1x32x256xf32>
    %cst_225 = arith.constant dense<0.000000e+00> : vector<1xf32>
    %325 = vector.multi_reduction <add>, %324, %cst_225 [1, 2] : vector<1x32x256xf32> to vector<1xf32>
    %326 = vector.shape_cast %325 : vector<1xf32> to vector<1x1x1xf32>
    %327 = vector.extract %326[0, 0, 0] : f32 from vector<1x1x1xf32>
    %cst_226 = arith.constant 8.192000e+03 : f32
    %328 = arith.divf %327, %cst_226 : f32
    %cst_227 = arith.constant 9.99999974E-6 : f32
    %329 = arith.addf %328, %cst_227 : f32
    %330 = math.rsqrt %329 : f32
    %331 = vector.broadcast %330 : f32 to vector<32x256xf32>
    %332 = arith.mulf %322, %331 : vector<32x256xf32>
    %c0_228 = arith.constant 0 : index
    %c0_229 = arith.constant 0 : index
    %333 = vector.load %arg16[%c0_228, %c0_229] : memref<32x256xf32, #tpu.memory_space<vmem>>, vector<32x256xf32>
    %334 = arith.mulf %332, %333 : vector<32x256xf32>
    %c0_230 = arith.constant 0 : index
    %c0_231 = arith.constant 0 : index
    %335 = vector.load %arg17[%c0_230, %c0_231] : memref<32x256xf32, #tpu.memory_space<vmem>>, vector<32x256xf32>
    %336 = arith.addf %334, %335 : vector<32x256xf32>
    %c0_232 = arith.constant 0 : index
    %c0_233 = arith.constant 0 : index
    %337 = vector.load %arg35[%c0_232, %c0_233] : memref<32x256xf32, #tpu.memory_space<vmem>>, vector<32x256xf32>
    tpu.vector_store %arg35[%c0_232, %c0_233], %336 {strides = array<i32>} : memref<32x256xf32, #tpu.memory_space<vmem>>, vector<32x256xf32>,
    %c0_234 = arith.constant 0 : index
    %c0_235 = arith.constant 0 : index
    %c0_236 = arith.constant 0 : index
    %338 = vector.load %arg3[%c0_234, %c0_235, %c0_236] : memref<1x8x256xf32, #tpu.memory_space<vmem>>, vector<1x8x256xf32>
    %339 = vector.shape_cast %338 : vector<1x8x256xf32> to vector<8x256xf32>
    %c0_237 = arith.constant 0 : index
    %c128_238 = arith.constant 128 : index
    %340 = vector.load %arg32[%c0_237, %c128_238] : memref<8x512xf32, #tpu.memory_space<vmem>>, vector<8x256xf32>
    tpu.vector_store %arg32[%c0_237, %c128_238], %339 {strides = array<i32>} : memref<8x512xf32, #tpu.memory_space<vmem>>, vector<8x256xf32>,
    %c0_239 = arith.constant 0 : index
    %c0_240 = arith.constant 0 : index
    %341 = vector.load %arg32[%c0_239, %c0_240] : memref<8x512xf32, #tpu.memory_space<vmem>>, vector<8x512xf32>
    %342 = vector.extract_strided_slice %341 {offsets = [0, 55], sizes = [8, 256], strides = [1, 1]} : vector<8x512xf32> to vector<8x256xf32>
    %c0_241 = arith.constant 0 : index
    %c0_242 = arith.constant 0 : index
    %343 = vector.load %arg27[%c0_241, %c0_242] : memref<9x256xf32, #tpu.memory_space<vmem>>, vector<1x256xf32>
    %344 = vector.broadcast %343 : vector<1x256xf32> to vector<8x256xf32>
    %345 = arith.mulf %342, %344 : vector<8x256xf32>
    %c0_243 = arith.constant 0 : index
    %c0_244 = arith.constant 0 : index
    %346 = vector.load %arg33[%c0_243, %c0_244] : memref<216x256xf32, #tpu.memory_space<vmem>>, vector<8x256xf32>
    tpu.vector_store %arg33[%c0_243, %c0_244], %345 {strides = array<i32>} : memref<216x256xf32, #tpu.memory_space<vmem>>, vector<8x256xf32>,
    %347 = vector.extract_strided_slice %341 {offsets = [0, 56], sizes = [8, 256], strides = [1, 1]} : vector<8x512xf32> to vector<8x256xf32>
    %c1_245 = arith.constant 1 : index
    %c0_246 = arith.constant 0 : index
    %348 = vector.load %arg27[%c1_245, %c0_246] : memref<9x256xf32, #tpu.memory_space<vmem>>, vector<1x256xf32>
    %349 = vector.broadcast %348 : vector<1x256xf32> to vector<8x256xf32>
    %350 = arith.mulf %347, %349 : vector<8x256xf32>
    %c8_247 = arith.constant 8 : index
    %c0_248 = arith.constant 0 : index
    %351 = vector.load %arg33[%c8_247, %c0_248] : memref<216x256xf32, #tpu.memory_space<vmem>>, vector<8x256xf32>
    tpu.vector_store %arg33[%c8_247, %c0_248], %350 {strides = array<i32>} : memref<216x256xf32, #tpu.memory_space<vmem>>, vector<8x256xf32>,
    %352 = vector.extract_strided_slice %341 {offsets = [0, 57], sizes = [8, 256], strides = [1, 1]} : vector<8x512xf32> to vector<8x256xf32>
    %c2_249 = arith.constant 2 : index
    %c0_250 = arith.constant 0 : index
    %353 = vector.load %arg27[%c2_249, %c0_250] : memref<9x256xf32, #tpu.memory_space<vmem>>, vector<1x256xf32>
    %354 = vector.broadcast %353 : vector<1x256xf32> to vector<8x256xf32>
    %355 = arith.mulf %352, %354 : vector<8x256xf32>
    %c16_251 = arith.constant 16 : index
    %c0_252 = arith.constant 0 : index
    %356 = vector.load %arg33[%c16_251, %c0_252] : memref<216x256xf32, #tpu.memory_space<vmem>>, vector<8x256xf32>
    tpu.vector_store %arg33[%c16_251, %c0_252], %355 {strides = array<i32>} : memref<216x256xf32, #tpu.memory_space<vmem>>, vector<8x256xf32>,
    %357 = vector.extract_strided_slice %341 {offsets = [0, 63], sizes = [8, 256], strides = [1, 1]} : vector<8x512xf32> to vector<8x256xf32>
    %c3_253 = arith.constant 3 : index
    %c0_254 = arith.constant 0 : index
    %358 = vector.load %arg27[%c3_253, %c0_254] : memref<9x256xf32, #tpu.memory_space<vmem>>, vector<1x256xf32>
    %359 = vector.broadcast %358 : vector<1x256xf32> to vector<8x256xf32>
    %360 = arith.mulf %357, %359 : vector<8x256xf32>
    %c24_255 = arith.constant 24 : index
    %c0_256 = arith.constant 0 : index
    %361 = vector.load %arg33[%c24_255, %c0_256] : memref<216x256xf32, #tpu.memory_space<vmem>>, vector<8x256xf32>
    tpu.vector_store %arg33[%c24_255, %c0_256], %360 {strides = array<i32>} : memref<216x256xf32, #tpu.memory_space<vmem>>, vector<8x256xf32>,
    %362 = vector.extract_strided_slice %341 {offsets = [0, 64], sizes = [8, 256], strides = [1, 1]} : vector<8x512xf32> to vector<8x256xf32>
    %c4_257 = arith.constant 4 : index
    %c0_258 = arith.constant 0 : index
    %363 = vector.load %arg27[%c4_257, %c0_258] : memref<9x256xf32, #tpu.memory_space<vmem>>, vector<1x256xf32>
    %364 = vector.broadcast %363 : vector<1x256xf32> to vector<8x256xf32>
    %365 = arith.mulf %362, %364 : vector<8x256xf32>
    %c32_259 = arith.constant 32 : index
    %c0_260 = arith.constant 0 : index
    %366 = vector.load %arg33[%c32_259, %c0_260] : memref<216x256xf32, #tpu.memory_space<vmem>>, vector<8x256xf32>
    tpu.vector_store %arg33[%c32_259, %c0_260], %365 {strides = array<i32>} : memref<216x256xf32, #tpu.memory_space<vmem>>, vector<8x256xf32>,
    %367 = vector.extract_strided_slice %341 {offsets = [0, 65], sizes = [8, 256], strides = [1, 1]} : vector<8x512xf32> to vector<8x256xf32>
    %c5_261 = arith.constant 5 : index
    %c0_262 = arith.constant 0 : index
    %368 = vector.load %arg27[%c5_261, %c0_262] : memref<9x256xf32, #tpu.memory_space<vmem>>, vector<1x256xf32>
    %369 = vector.broadcast %368 : vector<1x256xf32> to vector<8x256xf32>
    %370 = arith.mulf %367, %369 : vector<8x256xf32>
    %c40_263 = arith.constant 40 : index
    %c0_264 = arith.constant 0 : index
    %371 = vector.load %arg33[%c40_263, %c0_264] : memref<216x256xf32, #tpu.memory_space<vmem>>, vector<8x256xf32>
    tpu.vector_store %arg33[%c40_263, %c0_264], %370 {strides = array<i32>} : memref<216x256xf32, #tpu.memory_space<vmem>>, vector<8x256xf32>,
    %372 = vector.extract_strided_slice %341 {offsets = [0, 71], sizes = [8, 256], strides = [1, 1]} : vector<8x512xf32> to vector<8x256xf32>
    %c6_265 = arith.constant 6 : index
    %c0_266 = arith.constant 0 : index
    %373 = vector.load %arg27[%c6_265, %c0_266] : memref<9x256xf32, #tpu.memory_space<vmem>>, vector<1x256xf32>
    %374 = vector.broadcast %373 : vector<1x256xf32> to vector<8x256xf32>
    %375 = arith.mulf %372, %374 : vector<8x256xf32>
    %c48_267 = arith.constant 48 : index
    %c0_268 = arith.constant 0 : index
    %376 = vector.load %arg33[%c48_267, %c0_268] : memref<216x256xf32, #tpu.memory_space<vmem>>, vector<8x256xf32>
    tpu.vector_store %arg33[%c48_267, %c0_268], %375 {strides = array<i32>} : memref<216x256xf32, #tpu.memory_space<vmem>>, vector<8x256xf32>,
    %377 = vector.extract_strided_slice %341 {offsets = [0, 72], sizes = [8, 256], strides = [1, 1]} : vector<8x512xf32> to vector<8x256xf32>
    %c7_269 = arith.constant 7 : index
    %c0_270 = arith.constant 0 : index
    %378 = vector.load %arg27[%c7_269, %c0_270] : memref<9x256xf32, #tpu.memory_space<vmem>>, vector<1x256xf32>
    %379 = vector.broadcast %378 : vector<1x256xf32> to vector<8x256xf32>
    %380 = arith.mulf %377, %379 : vector<8x256xf32>
    %c56_271 = arith.constant 56 : index
    %c0_272 = arith.constant 0 : index
    %381 = vector.load %arg33[%c56_271, %c0_272] : memref<216x256xf32, #tpu.memory_space<vmem>>, vector<8x256xf32>
    tpu.vector_store %arg33[%c56_271, %c0_272], %380 {strides = array<i32>} : memref<216x256xf32, #tpu.memory_space<vmem>>, vector<8x256xf32>,
    %382 = vector.extract_strided_slice %341 {offsets = [0, 73], sizes = [8, 256], strides = [1, 1]} : vector<8x512xf32> to vector<8x256xf32>
    %c8_273 = arith.constant 8 : index
    %c0_274 = arith.constant 0 : index
    %383 = vector.load %arg27[%c8_273, %c0_274] : memref<9x256xf32, #tpu.memory_space<vmem>>, vector<1x256xf32>
    %384 = vector.broadcast %383 : vector<1x256xf32> to vector<8x256xf32>
    %385 = arith.mulf %382, %384 : vector<8x256xf32>
    %c64_275 = arith.constant 64 : index
    %c0_276 = arith.constant 0 : index
    %386 = vector.load %arg33[%c64_275, %c0_276] : memref<216x256xf32, #tpu.memory_space<vmem>>, vector<8x256xf32>
    tpu.vector_store %arg33[%c64_275, %c0_276], %385 {strides = array<i32>} : memref<216x256xf32, #tpu.memory_space<vmem>>, vector<8x256xf32>,
    %387 = vector.extract_strided_slice %341 {offsets = [0, 119], sizes = [8, 256], strides = [1, 1]} : vector<8x512xf32> to vector<8x256xf32>
    %c0_277 = arith.constant 0 : index
    %c0_278 = arith.constant 0 : index
    %388 = vector.load %arg27[%c0_277, %c0_278] : memref<9x256xf32, #tpu.memory_space<vmem>>, vector<1x256xf32>
    %389 = vector.broadcast %388 : vector<1x256xf32> to vector<8x256xf32>
    %390 = arith.mulf %387, %389 : vector<8x256xf32>
    %c72_279 = arith.constant 72 : index
    %c0_280 = arith.constant 0 : index
    %391 = vector.load %arg33[%c72_279, %c0_280] : memref<216x256xf32, #tpu.memory_space<vmem>>, vector<8x256xf32>
    tpu.vector_store %arg33[%c72_279, %c0_280], %390 {strides = array<i32>} : memref<216x256xf32, #tpu.memory_space<vmem>>, vector<8x256xf32>,
    %392 = vector.extract_strided_slice %341 {offsets = [0, 120], sizes = [8, 256], strides = [1, 1]} : vector<8x512xf32> to vector<8x256xf32>
    %c1_281 = arith.constant 1 : index
    %c0_282 = arith.constant 0 : index
    %393 = vector.load %arg27[%c1_281, %c0_282] : memref<9x256xf32, #tpu.memory_space<vmem>>, vector<1x256xf32>
    %394 = vector.broadcast %393 : vector<1x256xf32> to vector<8x256xf32>
    %395 = arith.mulf %392, %394 : vector<8x256xf32>
    %c80_283 = arith.constant 80 : index
    %c0_284 = arith.constant 0 : index
    %396 = vector.load %arg33[%c80_283, %c0_284] : memref<216x256xf32, #tpu.memory_space<vmem>>, vector<8x256xf32>
    tpu.vector_store %arg33[%c80_283, %c0_284], %395 {strides = array<i32>} : memref<216x256xf32, #tpu.memory_space<vmem>>, vector<8x256xf32>,
    %397 = vector.extract_strided_slice %341 {offsets = [0, 121], sizes = [8, 256], strides = [1, 1]} : vector<8x512xf32> to vector<8x256xf32>
    %c2_285 = arith.constant 2 : index
    %c0_286 = arith.constant 0 : index
    %398 = vector.load %arg27[%c2_285, %c0_286] : memref<9x256xf32, #tpu.memory_space<vmem>>, vector<1x256xf32>
    %399 = vector.broadcast %398 : vector<1x256xf32> to vector<8x256xf32>
    %400 = arith.mulf %397, %399 : vector<8x256xf32>
    %c88_287 = arith.constant 88 : index
    %c0_288 = arith.constant 0 : index
    %401 = vector.load %arg33[%c88_287, %c0_288] : memref<216x256xf32, #tpu.memory_space<vmem>>, vector<8x256xf32>
    tpu.vector_store %arg33[%c88_287, %c0_288], %400 {strides = array<i32>} : memref<216x256xf32, #tpu.memory_space<vmem>>, vector<8x256xf32>,
    %402 = vector.extract_strided_slice %341 {offsets = [0, 127], sizes = [8, 256], strides = [1, 1]} : vector<8x512xf32> to vector<8x256xf32>
    %c3_289 = arith.constant 3 : index
    %c0_290 = arith.constant 0 : index
    %403 = vector.load %arg27[%c3_289, %c0_290] : memref<9x256xf32, #tpu.memory_space<vmem>>, vector<1x256xf32>
    %404 = vector.broadcast %403 : vector<1x256xf32> to vector<8x256xf32>
    %405 = arith.mulf %402, %404 : vector<8x256xf32>
    %c96_291 = arith.constant 96 : index
    %c0_292 = arith.constant 0 : index
    %406 = vector.load %arg33[%c96_291, %c0_292] : memref<216x256xf32, #tpu.memory_space<vmem>>, vector<8x256xf32>
    tpu.vector_store %arg33[%c96_291, %c0_292], %405 {strides = array<i32>} : memref<216x256xf32, #tpu.memory_space<vmem>>, vector<8x256xf32>,
    %407 = vector.extract_strided_slice %341 {offsets = [0, 128], sizes = [8, 256], strides = [1, 1]} : vector<8x512xf32> to vector<8x256xf32>
    %c4_293 = arith.constant 4 : index
    %c0_294 = arith.constant 0 : index
    %408 = vector.load %arg27[%c4_293, %c0_294] : memref<9x256xf32, #tpu.memory_space<vmem>>, vector<1x256xf32>
    %409 = vector.broadcast %408 : vector<1x256xf32> to vector<8x256xf32>
    %410 = arith.mulf %407, %409 : vector<8x256xf32>
    %c104_295 = arith.constant 104 : index
    %c0_296 = arith.constant 0 : index
    %411 = vector.load %arg33[%c104_295, %c0_296] : memref<216x256xf32, #tpu.memory_space<vmem>>, vector<8x256xf32>
    tpu.vector_store %arg33[%c104_295, %c0_296], %410 {strides = array<i32>} : memref<216x256xf32, #tpu.memory_space<vmem>>, vector<8x256xf32>,
    %412 = vector.extract_strided_slice %341 {offsets = [0, 129], sizes = [8, 256], strides = [1, 1]} : vector<8x512xf32> to vector<8x256xf32>
    %c5_297 = arith.constant 5 : index
    %c0_298 = arith.constant 0 : index
    %413 = vector.load %arg27[%c5_297, %c0_298] : memref<9x256xf32, #tpu.memory_space<vmem>>, vector<1x256xf32>
    %414 = vector.broadcast %413 : vector<1x256xf32> to vector<8x256xf32>
    %415 = arith.mulf %412, %414 : vector<8x256xf32>
    %c112_299 = arith.constant 112 : index
    %c0_300 = arith.constant 0 : index
    %416 = vector.load %arg33[%c112_299, %c0_300] : memref<216x256xf32, #tpu.memory_space<vmem>>, vector<8x256xf32>
    tpu.vector_store %arg33[%c112_299, %c0_300], %415 {strides = array<i32>} : memref<216x256xf32, #tpu.memory_space<vmem>>, vector<8x256xf32>,
    %417 = vector.extract_strided_slice %341 {offsets = [0, 135], sizes = [8, 256], strides = [1, 1]} : vector<8x512xf32> to vector<8x256xf32>
    %c6_301 = arith.constant 6 : index
    %c0_302 = arith.constant 0 : index
    %418 = vector.load %arg27[%c6_301, %c0_302] : memref<9x256xf32, #tpu.memory_space<vmem>>, vector<1x256xf32>
    %419 = vector.broadcast %418 : vector<1x256xf32> to vector<8x256xf32>
    %420 = arith.mulf %417, %419 : vector<8x256xf32>
    %c120_303 = arith.constant 120 : index
    %c0_304 = arith.constant 0 : index
    %421 = vector.load %arg33[%c120_303, %c0_304] : memref<216x256xf32, #tpu.memory_space<vmem>>, vector<8x256xf32>
    tpu.vector_store %arg33[%c120_303, %c0_304], %420 {strides = array<i32>} : memref<216x256xf32, #tpu.memory_space<vmem>>, vector<8x256xf32>,
    %422 = vector.extract_strided_slice %341 {offsets = [0, 136], sizes = [8, 256], strides = [1, 1]} : vector<8x512xf32> to vector<8x256xf32>
    %c7_305 = arith.constant 7 : index
    %c0_306 = arith.constant 0 : index
    %423 = vector.load %arg27[%c7_305, %c0_306] : memref<9x256xf32, #tpu.memory_space<vmem>>, vector<1x256xf32>
    %424 = vector.broadcast %423 : vector<1x256xf32> to vector<8x256xf32>
    %425 = arith.mulf %422, %424 : vector<8x256xf32>
    %c128_307 = arith.constant 128 : index
    %c0_308 = arith.constant 0 : index
    %426 = vector.load %arg33[%c128_307, %c0_308] : memref<216x256xf32, #tpu.memory_space<vmem>>, vector<8x256xf32>
    tpu.vector_store %arg33[%c128_307, %c0_308], %425 {strides = array<i32>} : memref<216x256xf32, #tpu.memory_space<vmem>>, vector<8x256xf32>,
    %427 = vector.extract_strided_slice %341 {offsets = [0, 137], sizes = [8, 256], strides = [1, 1]} : vector<8x512xf32> to vector<8x256xf32>
    %c8_309 = arith.constant 8 : index
    %c0_310 = arith.constant 0 : index
    %428 = vector.load %arg27[%c8_309, %c0_310] : memref<9x256xf32, #tpu.memory_space<vmem>>, vector<1x256xf32>
    %429 = vector.broadcast %428 : vector<1x256xf32> to vector<8x256xf32>
    %430 = arith.mulf %427, %429 : vector<8x256xf32>
    %c136_311 = arith.constant 136 : index
    %c0_312 = arith.constant 0 : index
    %431 = vector.load %arg33[%c136_311, %c0_312] : memref<216x256xf32, #tpu.memory_space<vmem>>, vector<8x256xf32>
    tpu.vector_store %arg33[%c136_311, %c0_312], %430 {strides = array<i32>} : memref<216x256xf32, #tpu.memory_space<vmem>>, vector<8x256xf32>,
    %432 = vector.extract_strided_slice %341 {offsets = [0, 183], sizes = [8, 256], strides = [1, 1]} : vector<8x512xf32> to vector<8x256xf32>
    %c0_313 = arith.constant 0 : index
    %c0_314 = arith.constant 0 : index
    %433 = vector.load %arg27[%c0_313, %c0_314] : memref<9x256xf32, #tpu.memory_space<vmem>>, vector<1x256xf32>
    %434 = vector.broadcast %433 : vector<1x256xf32> to vector<8x256xf32>
    %435 = arith.mulf %432, %434 : vector<8x256xf32>
    %c144_315 = arith.constant 144 : index
    %c0_316 = arith.constant 0 : index
    %436 = vector.load %arg33[%c144_315, %c0_316] : memref<216x256xf32, #tpu.memory_space<vmem>>, vector<8x256xf32>
    tpu.vector_store %arg33[%c144_315, %c0_316], %435 {strides = array<i32>} : memref<216x256xf32, #tpu.memory_space<vmem>>, vector<8x256xf32>,
    %437 = vector.extract_strided_slice %341 {offsets = [0, 184], sizes = [8, 256], strides = [1, 1]} : vector<8x512xf32> to vector<8x256xf32>
    %c1_317 = arith.constant 1 : index
    %c0_318 = arith.constant 0 : index
    %438 = vector.load %arg27[%c1_317, %c0_318] : memref<9x256xf32, #tpu.memory_space<vmem>>, vector<1x256xf32>
    %439 = vector.broadcast %438 : vector<1x256xf32> to vector<8x256xf32>
    %440 = arith.mulf %437, %439 : vector<8x256xf32>
    %c152_319 = arith.constant 152 : index
    %c0_320 = arith.constant 0 : index
    %441 = vector.load %arg33[%c152_319, %c0_320] : memref<216x256xf32, #tpu.memory_space<vmem>>, vector<8x256xf32>
    tpu.vector_store %arg33[%c152_319, %c0_320], %440 {strides = array<i32>} : memref<216x256xf32, #tpu.memory_space<vmem>>, vector<8x256xf32>,
    %442 = vector.extract_strided_slice %341 {offsets = [0, 185], sizes = [8, 256], strides = [1, 1]} : vector<8x512xf32> to vector<8x256xf32>
    %c2_321 = arith.constant 2 : index
    %c0_322 = arith.constant 0 : index
    %443 = vector.load %arg27[%c2_321, %c0_322] : memref<9x256xf32, #tpu.memory_space<vmem>>, vector<1x256xf32>
    %444 = vector.broadcast %443 : vector<1x256xf32> to vector<8x256xf32>
    %445 = arith.mulf %442, %444 : vector<8x256xf32>
    %c160_323 = arith.constant 160 : index
    %c0_324 = arith.constant 0 : index
    %446 = vector.load %arg33[%c160_323, %c0_324] : memref<216x256xf32, #tpu.memory_space<vmem>>, vector<8x256xf32>
    tpu.vector_store %arg33[%c160_323, %c0_324], %445 {strides = array<i32>} : memref<216x256xf32, #tpu.memory_space<vmem>>, vector<8x256xf32>,
    %447 = vector.extract_strided_slice %341 {offsets = [0, 191], sizes = [8, 256], strides = [1, 1]} : vector<8x512xf32> to vector<8x256xf32>
    %c3_325 = arith.constant 3 : index
    %c0_326 = arith.constant 0 : index
    %448 = vector.load %arg27[%c3_325, %c0_326] : memref<9x256xf32, #tpu.memory_space<vmem>>, vector<1x256xf32>
    %449 = vector.broadcast %448 : vector<1x256xf32> to vector<8x256xf32>
    %450 = arith.mulf %447, %449 : vector<8x256xf32>
    %c168_327 = arith.constant 168 : index
    %c0_328 = arith.constant 0 : index
    %451 = vector.load %arg33[%c168_327, %c0_328] : memref<216x256xf32, #tpu.memory_space<vmem>>, vector<8x256xf32>
    tpu.vector_store %arg33[%c168_327, %c0_328], %450 {strides = array<i32>} : memref<216x256xf32, #tpu.memory_space<vmem>>, vector<8x256xf32>,
    %452 = vector.extract_strided_slice %341 {offsets = [0, 192], sizes = [8, 256], strides = [1, 1]} : vector<8x512xf32> to vector<8x256xf32>
    %c4_329 = arith.constant 4 : index
    %c0_330 = arith.constant 0 : index
    %453 = vector.load %arg27[%c4_329, %c0_330] : memref<9x256xf32, #tpu.memory_space<vmem>>, vector<1x256xf32>
    %454 = vector.broadcast %453 : vector<1x256xf32> to vector<8x256xf32>
    %455 = arith.mulf %452, %454 : vector<8x256xf32>
    %c176_331 = arith.constant 176 : index
    %c0_332 = arith.constant 0 : index
    %456 = vector.load %arg33[%c176_331, %c0_332] : memref<216x256xf32, #tpu.memory_space<vmem>>, vector<8x256xf32>
    tpu.vector_store %arg33[%c176_331, %c0_332], %455 {strides = array<i32>} : memref<216x256xf32, #tpu.memory_space<vmem>>, vector<8x256xf32>,
    %457 = vector.extract_strided_slice %341 {offsets = [0, 193], sizes = [8, 256], strides = [1, 1]} : vector<8x512xf32> to vector<8x256xf32>
    %c5_333 = arith.constant 5 : index
    %c0_334 = arith.constant 0 : index
    %458 = vector.load %arg27[%c5_333, %c0_334] : memref<9x256xf32, #tpu.memory_space<vmem>>, vector<1x256xf32>
    %459 = vector.broadcast %458 : vector<1x256xf32> to vector<8x256xf32>
    %460 = arith.mulf %457, %459 : vector<8x256xf32>
    %c184_335 = arith.constant 184 : index
    %c0_336 = arith.constant 0 : index
    %461 = vector.load %arg33[%c184_335, %c0_336] : memref<216x256xf32, #tpu.memory_space<vmem>>, vector<8x256xf32>
    tpu.vector_store %arg33[%c184_335, %c0_336], %460 {strides = array<i32>} : memref<216x256xf32, #tpu.memory_space<vmem>>, vector<8x256xf32>,
    %462 = vector.extract_strided_slice %341 {offsets = [0, 199], sizes = [8, 256], strides = [1, 1]} : vector<8x512xf32> to vector<8x256xf32>
    %c6_337 = arith.constant 6 : index
    %c0_338 = arith.constant 0 : index
    %463 = vector.load %arg27[%c6_337, %c0_338] : memref<9x256xf32, #tpu.memory_space<vmem>>, vector<1x256xf32>
    %464 = vector.broadcast %463 : vector<1x256xf32> to vector<8x256xf32>
    %465 = arith.mulf %462, %464 : vector<8x256xf32>
    %c192_339 = arith.constant 192 : index
    %c0_340 = arith.constant 0 : index
    %466 = vector.load %arg33[%c192_339, %c0_340] : memref<216x256xf32, #tpu.memory_space<vmem>>, vector<8x256xf32>
    tpu.vector_store %arg33[%c192_339, %c0_340], %465 {strides = array<i32>} : memref<216x256xf32, #tpu.memory_space<vmem>>, vector<8x256xf32>,
    %467 = vector.extract_strided_slice %341 {offsets = [0, 200], sizes = [8, 256], strides = [1, 1]} : vector<8x512xf32> to vector<8x256xf32>
    %c7_341 = arith.constant 7 : index
    %c0_342 = arith.constant 0 : index
    %468 = vector.load %arg27[%c7_341, %c0_342] : memref<9x256xf32, #tpu.memory_space<vmem>>, vector<1x256xf32>
    %469 = vector.broadcast %468 : vector<1x256xf32> to vector<8x256xf32>
    %470 = arith.mulf %467, %469 : vector<8x256xf32>
    %c200_343 = arith.constant 200 : index
    %c0_344 = arith.constant 0 : index
    %471 = vector.load %arg33[%c200_343, %c0_344] : memref<216x256xf32, #tpu.memory_space<vmem>>, vector<8x256xf32>
    tpu.vector_store %arg33[%c200_343, %c0_344], %470 {strides = array<i32>} : memref<216x256xf32, #tpu.memory_space<vmem>>, vector<8x256xf32>,
    %472 = vector.extract_strided_slice %341 {offsets = [0, 201], sizes = [8, 256], strides = [1, 1]} : vector<8x512xf32> to vector<8x256xf32>
    %c8_345 = arith.constant 8 : index
    %c0_346 = arith.constant 0 : index
    %473 = vector.load %arg27[%c8_345, %c0_346] : memref<9x256xf32, #tpu.memory_space<vmem>>, vector<1x256xf32>
    %474 = vector.broadcast %473 : vector<1x256xf32> to vector<8x256xf32>
    %475 = arith.mulf %472, %474 : vector<8x256xf32>
    %c208_347 = arith.constant 208 : index
    %c0_348 = arith.constant 0 : index
    %476 = vector.load %arg33[%c208_347, %c0_348] : memref<216x256xf32, #tpu.memory_space<vmem>>, vector<8x256xf32>
    tpu.vector_store %arg33[%c208_347, %c0_348], %475 {strides = array<i32>} : memref<216x256xf32, #tpu.memory_space<vmem>>, vector<8x256xf32>,
    %c0_349 = arith.constant 0 : index
    %c0_350 = arith.constant 0 : index
    %477 = vector.load %arg33[%c0_349, %c0_350] : memref<216x256xf32, #tpu.memory_space<vmem>>, vector<216x256xf32>
    %478 = arith.truncf %477 : vector<216x256xf32> to vector<216x256xbf16>
    %c0_351 = arith.constant 0 : index
    %c0_352 = arith.constant 0 : index
    %479 = vector.load %arg18[%c0_351, %c0_352] : memref<24x216xbf16, #tpu.memory_space<vmem>>, vector<24x216xbf16>
    %cst_353 = arith.constant dense<0.000000e+00> : vector<24x256xf32>
    %480 = tpu.matmul %479, %478, %cst_353 {dimension_numbers = #tpu.dot_dimension_numbers<[1], [0], [0], [1], [0, 0, 1, 1], [], []>} : vector<24x216xbf16>, vector<216x256xbf16>, vector<24x256xf32> -> vector<24x256xf32>
    %c0_354 = arith.constant 0 : index
    %c0_355 = arith.constant 0 : index
    %481 = vector.load %arg19[%c0_354, %c0_355] : memref<24x1xf32, #tpu.memory_space<vmem>>, vector<24x1xf32>
    %482 = vector.broadcast %481 : vector<24x1xf32> to vector<24x256xf32>
    %483 = arith.addf %480, %482 : vector<24x256xf32>
    %484 = vector.shape_cast %483 : vector<24x256xf32> to vector<1x24x256xf32>
    %cst_356 = arith.constant dense<0.000000e+00> : vector<1xf32>
    %485 = vector.multi_reduction <add>, %484, %cst_356 [1, 2] : vector<1x24x256xf32> to vector<1xf32>
    %486 = vector.shape_cast %485 : vector<1xf32> to vector<1x1x1xf32>
    %487 = vector.extract %486[0, 0, 0] : f32 from vector<1x1x1xf32>
    %cst_357 = arith.constant 6.144000e+03 : f32
    %488 = arith.divf %487, %cst_357 : f32
    %489 = vector.broadcast %488 : f32 to vector<24x256xf32>
    %490 = arith.subf %483, %489 : vector<24x256xf32>
    %491 = arith.mulf %490, %490 : vector<24x256xf32>
    %492 = vector.shape_cast %491 : vector<24x256xf32> to vector<1x24x256xf32>
    %cst_358 = arith.constant dense<0.000000e+00> : vector<1xf32>
    %493 = vector.multi_reduction <add>, %492, %cst_358 [1, 2] : vector<1x24x256xf32> to vector<1xf32>
    %494 = vector.shape_cast %493 : vector<1xf32> to vector<1x1x1xf32>
    %495 = vector.extract %494[0, 0, 0] : f32 from vector<1x1x1xf32>
    %cst_359 = arith.constant 6.144000e+03 : f32
    %496 = arith.divf %495, %cst_359 : f32
    %cst_360 = arith.constant 9.99999974E-6 : f32
    %497 = arith.addf %496, %cst_360 : f32
    %498 = math.rsqrt %497 : f32
    %499 = vector.broadcast %498 : f32 to vector<24x256xf32>
    %500 = arith.mulf %490, %499 : vector<24x256xf32>
    %c0_361 = arith.constant 0 : index
    %c0_362 = arith.constant 0 : index
    %501 = vector.load %arg20[%c0_361, %c0_362] : memref<24x256xf32, #tpu.memory_space<vmem>>, vector<24x256xf32>
    %502 = arith.mulf %500, %501 : vector<24x256xf32>
    %c0_363 = arith.constant 0 : index
    %c0_364 = arith.constant 0 : index
    %503 = vector.load %arg21[%c0_363, %c0_364] : memref<24x256xf32, #tpu.memory_space<vmem>>, vector<24x256xf32>
    %504 = arith.addf %502, %503 : vector<24x256xf32>
    %c0_365 = arith.constant 0 : index
    %c0_366 = arith.constant 0 : index
    %505 = vector.load %arg36[%c0_365, %c0_366] : memref<24x256xf32, #tpu.memory_space<vmem>>, vector<24x256xf32>
    tpu.vector_store %arg36[%c0_365, %c0_366], %504 {strides = array<i32>} : memref<24x256xf32, #tpu.memory_space<vmem>>, vector<24x256xf32>,
    %c0_367 = arith.constant 0 : index
    %c0_368 = arith.constant 0 : index
    %506 = vector.load %arg34[%c0_367, %c0_368] : memref<56x256xf32, #tpu.memory_space<vmem>>, vector<8x256xf32>
    %c0_369 = arith.constant 0 : index
    %c0_370 = arith.constant 0 : index
    %507 = vector.load %arg35[%c0_369, %c0_370] : memref<32x256xf32, #tpu.memory_space<vmem>>, vector<8x256xf32>
    %508 = arith.addf %506, %507 : vector<8x256xf32>
    %cst_371 = arith.constant 5.000000e-01 : f32
    %509 = vector.broadcast %cst_371 : f32 to vector<8x256xf32>
    %510 = arith.mulf %509, %508 : vector<8x256xf32>
    %511 = math.tanh %510 : vector<8x256xf32>
    %cst_372 = arith.constant 5.000000e-01 : f32
    %512 = vector.broadcast %cst_372 : f32 to vector<8x256xf32>
    %513 = arith.mulf %512, %511 : vector<8x256xf32>
    %cst_373 = arith.constant 5.000000e-01 : f32
    %514 = vector.broadcast %cst_373 : f32 to vector<8x256xf32>
    %515 = arith.addf %513, %514 : vector<8x256xf32>
    %c8_374 = arith.constant 8 : index
    %c0_375 = arith.constant 0 : index
    %516 = vector.load %arg34[%c8_374, %c0_375] : memref<56x256xf32, #tpu.memory_space<vmem>>, vector<8x256xf32>
    %c8_376 = arith.constant 8 : index
    %c0_377 = arith.constant 0 : index
    %517 = vector.load %arg35[%c8_376, %c0_377] : memref<32x256xf32, #tpu.memory_space<vmem>>, vector<8x256xf32>
    %518 = arith.addf %516, %517 : vector<8x256xf32>
    %cst_378 = arith.constant 1.000000e+00 : f32
    %519 = vector.broadcast %cst_378 : f32 to vector<8x256xf32>
    %520 = arith.addf %518, %519 : vector<8x256xf32>
    %cst_379 = arith.constant 5.000000e-01 : f32
    %521 = vector.broadcast %cst_379 : f32 to vector<8x256xf32>
    %522 = arith.mulf %521, %520 : vector<8x256xf32>
    %523 = math.tanh %522 : vector<8x256xf32>
    %cst_380 = arith.constant 5.000000e-01 : f32
    %524 = vector.broadcast %cst_380 : f32 to vector<8x256xf32>
    %525 = arith.mulf %524, %523 : vector<8x256xf32>
    %cst_381 = arith.constant 5.000000e-01 : f32
    %526 = vector.broadcast %cst_381 : f32 to vector<8x256xf32>
    %527 = arith.addf %525, %526 : vector<8x256xf32>
    %c16_382 = arith.constant 16 : index
    %c0_383 = arith.constant 0 : index
    %528 = vector.load %arg34[%c16_382, %c0_383] : memref<56x256xf32, #tpu.memory_space<vmem>>, vector<8x256xf32>
    %c16_384 = arith.constant 16 : index
    %c0_385 = arith.constant 0 : index
    %529 = vector.load %arg35[%c16_384, %c0_385] : memref<32x256xf32, #tpu.memory_space<vmem>>, vector<8x256xf32>
    %530 = arith.addf %528, %529 : vector<8x256xf32>
    %531 = math.tanh %530 : vector<8x256xf32>
    %532 = arith.mulf %515, %531 : vector<8x256xf32>
    %c0_386 = arith.constant 0 : index
    %c0_387 = arith.constant 0 : index
    %c0_388 = arith.constant 0 : index
    %533 = vector.load %arg4[%c0_386, %c0_387, %c0_388] : memref<1x8x256xf32, #tpu.memory_space<vmem>>, vector<1x8x256xf32>
    %534 = vector.shape_cast %533 : vector<1x8x256xf32> to vector<8x256xf32>
    %c0_389 = arith.constant 0 : index
    %c0_390 = arith.constant 0 : index
    %c0_391 = arith.constant 0 : index
    %535 = vector.load %arg5[%c0_389, %c0_390, %c0_391] : memref<1x8x256xf32, #tpu.memory_space<vmem>>, vector<1x8x256xf32>
    %536 = vector.shape_cast %535 : vector<1x8x256xf32> to vector<8x256xf32>
    %c0_392 = arith.constant 0 : index
    %c0_393 = arith.constant 0 : index
    %c0_394 = arith.constant 0 : index
    %537 = vector.load %arg6[%c0_392, %c0_393, %c0_394] : memref<1x8x256xf32, #tpu.memory_space<vmem>>, vector<1x8x256xf32>
    %538 = vector.shape_cast %537 : vector<1x8x256xf32> to vector<8x256xf32>
    %539 = arith.mulf %534, %527 : vector<8x256xf32>
    %540 = arith.mulf %536, %527 : vector<8x256xf32>
    %541 = arith.mulf %538, %527 : vector<8x256xf32>
    %542 = arith.maximumf %539, %540 : vector<8x256xf32>
    %543 = arith.maximumf %542, %541 : vector<8x256xf32>
    %544 = arith.subf %539, %543 : vector<8x256xf32>
    %545 = math.exp %544 : vector<8x256xf32>
    %546 = arith.subf %540, %543 : vector<8x256xf32>
    %547 = math.exp %546 : vector<8x256xf32>
    %548 = arith.subf %541, %543 : vector<8x256xf32>
    %549 = math.exp %548 : vector<8x256xf32>
    %550 = arith.addf %545, %547 : vector<8x256xf32>
    %551 = arith.addf %550, %549 : vector<8x256xf32>
    %552 = arith.mulf %545, %534 : vector<8x256xf32>
    %553 = arith.mulf %547, %536 : vector<8x256xf32>
    %554 = arith.addf %552, %553 : vector<8x256xf32>
    %555 = arith.mulf %549, %538 : vector<8x256xf32>
    %556 = arith.addf %554, %555 : vector<8x256xf32>
    %557 = arith.divf %556, %551 : vector<8x256xf32>
    %558 = arith.mulf %527, %557 : vector<8x256xf32>
    %559 = arith.addf %532, %558 : vector<8x256xf32>
    %c24_395 = arith.constant 24 : index
    %c0_396 = arith.constant 0 : index
    %560 = vector.load %arg34[%c24_395, %c0_396] : memref<56x256xf32, #tpu.memory_space<vmem>>, vector<8x256xf32>
    %c0_397 = arith.constant 0 : index
    %c0_398 = arith.constant 0 : index
    %561 = vector.load %arg36[%c0_397, %c0_398] : memref<24x256xf32, #tpu.memory_space<vmem>>, vector<8x256xf32>
    %562 = arith.addf %560, %561 : vector<8x256xf32>
    %cst_399 = arith.constant 5.000000e-01 : f32
    %563 = vector.broadcast %cst_399 : f32 to vector<8x256xf32>
    %564 = arith.mulf %563, %562 : vector<8x256xf32>
    %565 = math.tanh %564 : vector<8x256xf32>
    %cst_400 = arith.constant 5.000000e-01 : f32
    %566 = vector.broadcast %cst_400 : f32 to vector<8x256xf32>
    %567 = arith.mulf %566, %565 : vector<8x256xf32>
    %cst_401 = arith.constant 5.000000e-01 : f32
    %568 = vector.broadcast %cst_401 : f32 to vector<8x256xf32>
    %569 = arith.addf %567, %568 : vector<8x256xf32>
    %c32_402 = arith.constant 32 : index
    %c0_403 = arith.constant 0 : index
    %570 = vector.load %arg34[%c32_402, %c0_403] : memref<56x256xf32, #tpu.memory_space<vmem>>, vector<8x256xf32>
    %c8_404 = arith.constant 8 : index
    %c0_405 = arith.constant 0 : index
    %571 = vector.load %arg36[%c8_404, %c0_405] : memref<24x256xf32, #tpu.memory_space<vmem>>, vector<8x256xf32>
    %572 = arith.addf %570, %571 : vector<8x256xf32>
    %cst_406 = arith.constant 1.000000e+00 : f32
    %573 = vector.broadcast %cst_406 : f32 to vector<8x256xf32>
    %574 = arith.addf %572, %573 : vector<8x256xf32>
    %cst_407 = arith.constant 5.000000e-01 : f32
    %575 = vector.broadcast %cst_407 : f32 to vector<8x256xf32>
    %576 = arith.mulf %575, %574 : vector<8x256xf32>
    %577 = math.tanh %576 : vector<8x256xf32>
    %cst_408 = arith.constant 5.000000e-01 : f32
    %578 = vector.broadcast %cst_408 : f32 to vector<8x256xf32>
    %579 = arith.mulf %578, %577 : vector<8x256xf32>
    %cst_409 = arith.constant 5.000000e-01 : f32
    %580 = vector.broadcast %cst_409 : f32 to vector<8x256xf32>
    %581 = arith.addf %579, %580 : vector<8x256xf32>
    %c40_410 = arith.constant 40 : index
    %c0_411 = arith.constant 0 : index
    %582 = vector.load %arg34[%c40_410, %c0_411] : memref<56x256xf32, #tpu.memory_space<vmem>>, vector<8x256xf32>
    %c16_412 = arith.constant 16 : index
    %c0_413 = arith.constant 0 : index
    %583 = vector.load %arg36[%c16_412, %c0_413] : memref<24x256xf32, #tpu.memory_space<vmem>>, vector<8x256xf32>
    %584 = arith.addf %582, %583 : vector<8x256xf32>
    %585 = math.tanh %584 : vector<8x256xf32>
    %586 = arith.mulf %569, %585 : vector<8x256xf32>
    %c0_414 = arith.constant 0 : index
    %c0_415 = arith.constant 0 : index
    %c0_416 = arith.constant 0 : index
    %587 = vector.load %arg7[%c0_414, %c0_415, %c0_416] : memref<1x8x256xf32, #tpu.memory_space<vmem>>, vector<1x8x256xf32>
    %588 = vector.shape_cast %587 : vector<1x8x256xf32> to vector<8x256xf32>
    %c0_417 = arith.constant 0 : index
    %c0_418 = arith.constant 0 : index
    %c0_419 = arith.constant 0 : index
    %589 = vector.load %arg8[%c0_417, %c0_418, %c0_419] : memref<1x8x256xf32, #tpu.memory_space<vmem>>, vector<1x8x256xf32>
    %590 = vector.shape_cast %589 : vector<1x8x256xf32> to vector<8x256xf32>
    %c0_420 = arith.constant 0 : index
    %c0_421 = arith.constant 0 : index
    %c0_422 = arith.constant 0 : index
    %591 = vector.load %arg9[%c0_420, %c0_421, %c0_422] : memref<1x8x256xf32, #tpu.memory_space<vmem>>, vector<1x8x256xf32>
    %592 = vector.shape_cast %591 : vector<1x8x256xf32> to vector<8x256xf32>
    %593 = arith.mulf %588, %581 : vector<8x256xf32>
    %594 = arith.mulf %590, %581 : vector<8x256xf32>
    %595 = arith.mulf %592, %581 : vector<8x256xf32>
    %596 = arith.maximumf %593, %594 : vector<8x256xf32>
    %597 = arith.maximumf %596, %595 : vector<8x256xf32>
    %598 = arith.subf %593, %597 : vector<8x256xf32>
    %599 = math.exp %598 : vector<8x256xf32>
    %600 = arith.subf %594, %597 : vector<8x256xf32>
    %601 = math.exp %600 : vector<8x256xf32>
    %602 = arith.subf %595, %597 : vector<8x256xf32>
    %603 = math.exp %602 : vector<8x256xf32>
    %604 = arith.addf %599, %601 : vector<8x256xf32>
    %605 = arith.addf %604, %603 : vector<8x256xf32>
    %606 = arith.mulf %599, %588 : vector<8x256xf32>
    %607 = arith.mulf %601, %590 : vector<8x256xf32>
    %608 = arith.addf %606, %607 : vector<8x256xf32>
    %609 = arith.mulf %603, %592 : vector<8x256xf32>
    %610 = arith.addf %608, %609 : vector<8x256xf32>
    %611 = arith.divf %610, %605 : vector<8x256xf32>
    %612 = arith.mulf %581, %611 : vector<8x256xf32>
    %613 = arith.addf %586, %612 : vector<8x256xf32>
    %c0_423 = arith.constant 0 : index
    %c0_424 = arith.constant 0 : index
    %c0_425 = arith.constant 0 : index
    %614 = vector.load %arg31[%c0_423, %c0_424, %c0_425] : memref<1x56x256xf32, #tpu.memory_space<vmem>>, vector<1x8x256xf32>
    %615 = vector.shape_cast %614 : vector<1x8x256xf32> to vector<8x256xf32>
    %616 = vector.shape_cast %515 : vector<8x256xf32> to vector<1x8x256xf32>
    tpu.vector_store %arg31[%c0_423, %c0_424, %c0_425], %616 {strides = array<i32>} : memref<1x56x256xf32, #tpu.memory_space<vmem>>, vector<1x8x256xf32>,
    %c0_426 = arith.constant 0 : index
    %c8_427 = arith.constant 8 : index
    %c0_428 = arith.constant 0 : index
    %617 = vector.load %arg31[%c0_426, %c8_427, %c0_428] : memref<1x56x256xf32, #tpu.memory_space<vmem>>, vector<1x8x256xf32>
    %618 = vector.shape_cast %617 : vector<1x8x256xf32> to vector<8x256xf32>
    %619 = vector.shape_cast %527 : vector<8x256xf32> to vector<1x8x256xf32>
    tpu.vector_store %arg31[%c0_426, %c8_427, %c0_428], %619 {strides = array<i32>} : memref<1x56x256xf32, #tpu.memory_space<vmem>>, vector<1x8x256xf32>,
    %c0_429 = arith.constant 0 : index
    %c16_430 = arith.constant 16 : index
    %c0_431 = arith.constant 0 : index
    %620 = vector.load %arg31[%c0_429, %c16_430, %c0_431] : memref<1x56x256xf32, #tpu.memory_space<vmem>>, vector<1x8x256xf32>
    %621 = vector.shape_cast %620 : vector<1x8x256xf32> to vector<8x256xf32>
    %622 = vector.shape_cast %531 : vector<8x256xf32> to vector<1x8x256xf32>
    tpu.vector_store %arg31[%c0_429, %c16_430, %c0_431], %622 {strides = array<i32>} : memref<1x56x256xf32, #tpu.memory_space<vmem>>, vector<1x8x256xf32>,
    %c0_432 = arith.constant 0 : index
    %c24_433 = arith.constant 24 : index
    %c0_434 = arith.constant 0 : index
    %623 = vector.load %arg31[%c0_432, %c24_433, %c0_434] : memref<1x56x256xf32, #tpu.memory_space<vmem>>, vector<1x8x256xf32>
    %624 = vector.shape_cast %623 : vector<1x8x256xf32> to vector<8x256xf32>
    %625 = vector.shape_cast %569 : vector<8x256xf32> to vector<1x8x256xf32>
    tpu.vector_store %arg31[%c0_432, %c24_433, %c0_434], %625 {strides = array<i32>} : memref<1x56x256xf32, #tpu.memory_space<vmem>>, vector<1x8x256xf32>,
    %c0_435 = arith.constant 0 : index
    %c32_436 = arith.constant 32 : index
    %c0_437 = arith.constant 0 : index
    %626 = vector.load %arg31[%c0_435, %c32_436, %c0_437] : memref<1x56x256xf32, #tpu.memory_space<vmem>>, vector<1x8x256xf32>
    %627 = vector.shape_cast %626 : vector<1x8x256xf32> to vector<8x256xf32>
    %628 = vector.shape_cast %581 : vector<8x256xf32> to vector<1x8x256xf32>
    tpu.vector_store %arg31[%c0_435, %c32_436, %c0_437], %628 {strides = array<i32>} : memref<1x56x256xf32, #tpu.memory_space<vmem>>, vector<1x8x256xf32>,
    %c0_438 = arith.constant 0 : index
    %c40_439 = arith.constant 40 : index
    %c0_440 = arith.constant 0 : index
    %629 = vector.load %arg31[%c0_438, %c40_439, %c0_440] : memref<1x56x256xf32, #tpu.memory_space<vmem>>, vector<1x8x256xf32>
    %630 = vector.shape_cast %629 : vector<1x8x256xf32> to vector<8x256xf32>
    %631 = vector.shape_cast %585 : vector<8x256xf32> to vector<1x8x256xf32>
    tpu.vector_store %arg31[%c0_438, %c40_439, %c0_440], %631 {strides = array<i32>} : memref<1x56x256xf32, #tpu.memory_space<vmem>>, vector<1x8x256xf32>,
    %c0_441 = arith.constant 0 : index
    %c0_442 = arith.constant 0 : index
    %c0_443 = arith.constant 0 : index
    %632 = vector.load %arg29[%c0_441, %c0_442, %c0_443] : memref<1x8x256xf32, #tpu.memory_space<vmem>>, vector<1x8x256xf32>
    %633 = vector.shape_cast %632 : vector<1x8x256xf32> to vector<8x256xf32>
    %634 = vector.shape_cast %559 : vector<8x256xf32> to vector<1x8x256xf32>
    tpu.vector_store %arg29[%c0_441, %c0_442, %c0_443], %634 {strides = array<i32>} : memref<1x8x256xf32, #tpu.memory_space<vmem>>, vector<1x8x256xf32>,
    %c0_444 = arith.constant 0 : index
    %c0_445 = arith.constant 0 : index
    %c0_446 = arith.constant 0 : index
    %635 = vector.load %arg30[%c0_444, %c0_445, %c0_446] : memref<1x8x256xf32, #tpu.memory_space<vmem>>, vector<1x8x256xf32>
    %636 = vector.shape_cast %635 : vector<1x8x256xf32> to vector<8x256xf32>
    %637 = vector.shape_cast %613 : vector<8x256xf32> to vector<1x8x256xf32>
    tpu.vector_store %arg30[%c0_444, %c0_445, %c0_446], %637 {strides = array<i32>} : memref<1x8x256xf32, #tpu.memory_space<vmem>>, vector<1x8x256xf32>,
    %c0_447 = arith.constant 0 : index
    %c128_448 = arith.constant 128 : index
    %638 = vector.load %arg32[%c0_447, %c128_448] : memref<8x512xf32, #tpu.memory_space<vmem>>, vector<8x256xf32>
    tpu.vector_store %arg32[%c0_447, %c128_448], %559 {strides = array<i32>} : memref<8x512xf32, #tpu.memory_space<vmem>>, vector<8x256xf32>,
    %c0_449 = arith.constant 0 : index
    %c0_450 = arith.constant 0 : index
    %639 = vector.load %arg32[%c0_449, %c0_450] : memref<8x512xf32, #tpu.memory_space<vmem>>, vector<8x512xf32>
    %640 = vector.extract_strided_slice %639 {offsets = [0, 55], sizes = [8, 256], strides = [1, 1]} : vector<8x512xf32> to vector<8x256xf32>
    %c0_451 = arith.constant 0 : index
    %c0_452 = arith.constant 0 : index
    %641 = vector.load %arg27[%c0_451, %c0_452] : memref<9x256xf32, #tpu.memory_space<vmem>>, vector<1x256xf32>
    %642 = vector.broadcast %641 : vector<1x256xf32> to vector<8x256xf32>
    %643 = arith.mulf %640, %642 : vector<8x256xf32>
    %c0_453 = arith.constant 0 : index
    %c0_454 = arith.constant 0 : index
    %644 = vector.load %arg33[%c0_453, %c0_454] : memref<216x256xf32, #tpu.memory_space<vmem>>, vector<8x256xf32>
    tpu.vector_store %arg33[%c0_453, %c0_454], %643 {strides = array<i32>} : memref<216x256xf32, #tpu.memory_space<vmem>>, vector<8x256xf32>,
    %645 = vector.extract_strided_slice %639 {offsets = [0, 56], sizes = [8, 256], strides = [1, 1]} : vector<8x512xf32> to vector<8x256xf32>
    %c1_455 = arith.constant 1 : index
    %c0_456 = arith.constant 0 : index
    %646 = vector.load %arg27[%c1_455, %c0_456] : memref<9x256xf32, #tpu.memory_space<vmem>>, vector<1x256xf32>
    %647 = vector.broadcast %646 : vector<1x256xf32> to vector<8x256xf32>
    %648 = arith.mulf %645, %647 : vector<8x256xf32>
    %c8_457 = arith.constant 8 : index
    %c0_458 = arith.constant 0 : index
    %649 = vector.load %arg33[%c8_457, %c0_458] : memref<216x256xf32, #tpu.memory_space<vmem>>, vector<8x256xf32>
    tpu.vector_store %arg33[%c8_457, %c0_458], %648 {strides = array<i32>} : memref<216x256xf32, #tpu.memory_space<vmem>>, vector<8x256xf32>,
    %650 = vector.extract_strided_slice %639 {offsets = [0, 57], sizes = [8, 256], strides = [1, 1]} : vector<8x512xf32> to vector<8x256xf32>
    %c2_459 = arith.constant 2 : index
    %c0_460 = arith.constant 0 : index
    %651 = vector.load %arg27[%c2_459, %c0_460] : memref<9x256xf32, #tpu.memory_space<vmem>>, vector<1x256xf32>
    %652 = vector.broadcast %651 : vector<1x256xf32> to vector<8x256xf32>
    %653 = arith.mulf %650, %652 : vector<8x256xf32>
    %c16_461 = arith.constant 16 : index
    %c0_462 = arith.constant 0 : index
    %654 = vector.load %arg33[%c16_461, %c0_462] : memref<216x256xf32, #tpu.memory_space<vmem>>, vector<8x256xf32>
    tpu.vector_store %arg33[%c16_461, %c0_462], %653 {strides = array<i32>} : memref<216x256xf32, #tpu.memory_space<vmem>>, vector<8x256xf32>,
    %655 = vector.extract_strided_slice %639 {offsets = [0, 63], sizes = [8, 256], strides = [1, 1]} : vector<8x512xf32> to vector<8x256xf32>
    %c3_463 = arith.constant 3 : index
    %c0_464 = arith.constant 0 : index
    %656 = vector.load %arg27[%c3_463, %c0_464] : memref<9x256xf32, #tpu.memory_space<vmem>>, vector<1x256xf32>
    %657 = vector.broadcast %656 : vector<1x256xf32> to vector<8x256xf32>
    %658 = arith.mulf %655, %657 : vector<8x256xf32>
    %c24_465 = arith.constant 24 : index
    %c0_466 = arith.constant 0 : index
    %659 = vector.load %arg33[%c24_465, %c0_466] : memref<216x256xf32, #tpu.memory_space<vmem>>, vector<8x256xf32>
    tpu.vector_store %arg33[%c24_465, %c0_466], %658 {strides = array<i32>} : memref<216x256xf32, #tpu.memory_space<vmem>>, vector<8x256xf32>,
    %660 = vector.extract_strided_slice %639 {offsets = [0, 64], sizes = [8, 256], strides = [1, 1]} : vector<8x512xf32> to vector<8x256xf32>
    %c4_467 = arith.constant 4 : index
    %c0_468 = arith.constant 0 : index
    %661 = vector.load %arg27[%c4_467, %c0_468] : memref<9x256xf32, #tpu.memory_space<vmem>>, vector<1x256xf32>
    %662 = vector.broadcast %661 : vector<1x256xf32> to vector<8x256xf32>
    %663 = arith.mulf %660, %662 : vector<8x256xf32>
    %c32_469 = arith.constant 32 : index
    %c0_470 = arith.constant 0 : index
    %664 = vector.load %arg33[%c32_469, %c0_470] : memref<216x256xf32, #tpu.memory_space<vmem>>, vector<8x256xf32>
    tpu.vector_store %arg33[%c32_469, %c0_470], %663 {strides = array<i32>} : memref<216x256xf32, #tpu.memory_space<vmem>>, vector<8x256xf32>,
    %665 = vector.extract_strided_slice %639 {offsets = [0, 65], sizes = [8, 256], strides = [1, 1]} : vector<8x512xf32> to vector<8x256xf32>
    %c5_471 = arith.constant 5 : index
    %c0_472 = arith.constant 0 : index
    %666 = vector.load %arg27[%c5_471, %c0_472] : memref<9x256xf32, #tpu.memory_space<vmem>>, vector<1x256xf32>
    %667 = vector.broadcast %666 : vector<1x256xf32> to vector<8x256xf32>
    %668 = arith.mulf %665, %667 : vector<8x256xf32>
    %c40_473 = arith.constant 40 : index
    %c0_474 = arith.constant 0 : index
    %669 = vector.load %arg33[%c40_473, %c0_474] : memref<216x256xf32, #tpu.memory_space<vmem>>, vector<8x256xf32>
    tpu.vector_store %arg33[%c40_473, %c0_474], %668 {strides = array<i32>} : memref<216x256xf32, #tpu.memory_space<vmem>>, vector<8x256xf32>,
    %670 = vector.extract_strided_slice %639 {offsets = [0, 71], sizes = [8, 256], strides = [1, 1]} : vector<8x512xf32> to vector<8x256xf32>
    %c6_475 = arith.constant 6 : index
    %c0_476 = arith.constant 0 : index
    %671 = vector.load %arg27[%c6_475, %c0_476] : memref<9x256xf32, #tpu.memory_space<vmem>>, vector<1x256xf32>
    %672 = vector.broadcast %671 : vector<1x256xf32> to vector<8x256xf32>
    %673 = arith.mulf %670, %672 : vector<8x256xf32>
    %c48_477 = arith.constant 48 : index
    %c0_478 = arith.constant 0 : index
    %674 = vector.load %arg33[%c48_477, %c0_478] : memref<216x256xf32, #tpu.memory_space<vmem>>, vector<8x256xf32>
    tpu.vector_store %arg33[%c48_477, %c0_478], %673 {strides = array<i32>} : memref<216x256xf32, #tpu.memory_space<vmem>>, vector<8x256xf32>,
    %675 = vector.extract_strided_slice %639 {offsets = [0, 72], sizes = [8, 256], strides = [1, 1]} : vector<8x512xf32> to vector<8x256xf32>
    %c7_479 = arith.constant 7 : index
    %c0_480 = arith.constant 0 : index
    %676 = vector.load %arg27[%c7_479, %c0_480] : memref<9x256xf32, #tpu.memory_space<vmem>>, vector<1x256xf32>
    %677 = vector.broadcast %676 : vector<1x256xf32> to vector<8x256xf32>
    %678 = arith.mulf %675, %677 : vector<8x256xf32>
    %c56_481 = arith.constant 56 : index
    %c0_482 = arith.constant 0 : index
    %679 = vector.load %arg33[%c56_481, %c0_482] : memref<216x256xf32, #tpu.memory_space<vmem>>, vector<8x256xf32>
    tpu.vector_store %arg33[%c56_481, %c0_482], %678 {strides = array<i32>} : memref<216x256xf32, #tpu.memory_space<vmem>>, vector<8x256xf32>,
    %680 = vector.extract_strided_slice %639 {offsets = [0, 73], sizes = [8, 256], strides = [1, 1]} : vector<8x512xf32> to vector<8x256xf32>
    %c8_483 = arith.constant 8 : index
    %c0_484 = arith.constant 0 : index
    %681 = vector.load %arg27[%c8_483, %c0_484] : memref<9x256xf32, #tpu.memory_space<vmem>>, vector<1x256xf32>
    %682 = vector.broadcast %681 : vector<1x256xf32> to vector<8x256xf32>
    %683 = arith.mulf %680, %682 : vector<8x256xf32>
    %c64_485 = arith.constant 64 : index
    %c0_486 = arith.constant 0 : index
    %684 = vector.load %arg33[%c64_485, %c0_486] : memref<216x256xf32, #tpu.memory_space<vmem>>, vector<8x256xf32>
    tpu.vector_store %arg33[%c64_485, %c0_486], %683 {strides = array<i32>} : memref<216x256xf32, #tpu.memory_space<vmem>>, vector<8x256xf32>,
    %685 = vector.extract_strided_slice %639 {offsets = [0, 119], sizes = [8, 256], strides = [1, 1]} : vector<8x512xf32> to vector<8x256xf32>
    %c0_487 = arith.constant 0 : index
    %c0_488 = arith.constant 0 : index
    %686 = vector.load %arg27[%c0_487, %c0_488] : memref<9x256xf32, #tpu.memory_space<vmem>>, vector<1x256xf32>
    %687 = vector.broadcast %686 : vector<1x256xf32> to vector<8x256xf32>
    %688 = arith.mulf %685, %687 : vector<8x256xf32>
    %c72_489 = arith.constant 72 : index
    %c0_490 = arith.constant 0 : index
    %689 = vector.load %arg33[%c72_489, %c0_490] : memref<216x256xf32, #tpu.memory_space<vmem>>, vector<8x256xf32>
    tpu.vector_store %arg33[%c72_489, %c0_490], %688 {strides = array<i32>} : memref<216x256xf32, #tpu.memory_space<vmem>>, vector<8x256xf32>,
    %690 = vector.extract_strided_slice %639 {offsets = [0, 120], sizes = [8, 256], strides = [1, 1]} : vector<8x512xf32> to vector<8x256xf32>
    %c1_491 = arith.constant 1 : index
    %c0_492 = arith.constant 0 : index
    %691 = vector.load %arg27[%c1_491, %c0_492] : memref<9x256xf32, #tpu.memory_space<vmem>>, vector<1x256xf32>
    %692 = vector.broadcast %691 : vector<1x256xf32> to vector<8x256xf32>
    %693 = arith.mulf %690, %692 : vector<8x256xf32>
    %c80_493 = arith.constant 80 : index
    %c0_494 = arith.constant 0 : index
    %694 = vector.load %arg33[%c80_493, %c0_494] : memref<216x256xf32, #tpu.memory_space<vmem>>, vector<8x256xf32>
    tpu.vector_store %arg33[%c80_493, %c0_494], %693 {strides = array<i32>} : memref<216x256xf32, #tpu.memory_space<vmem>>, vector<8x256xf32>,
    %695 = vector.extract_strided_slice %639 {offsets = [0, 121], sizes = [8, 256], strides = [1, 1]} : vector<8x512xf32> to vector<8x256xf32>
    %c2_495 = arith.constant 2 : index
    %c0_496 = arith.constant 0 : index
    %696 = vector.load %arg27[%c2_495, %c0_496] : memref<9x256xf32, #tpu.memory_space<vmem>>, vector<1x256xf32>
    %697 = vector.broadcast %696 : vector<1x256xf32> to vector<8x256xf32>
    %698 = arith.mulf %695, %697 : vector<8x256xf32>
    %c88_497 = arith.constant 88 : index
    %c0_498 = arith.constant 0 : index
    %699 = vector.load %arg33[%c88_497, %c0_498] : memref<216x256xf32, #tpu.memory_space<vmem>>, vector<8x256xf32>
    tpu.vector_store %arg33[%c88_497, %c0_498], %698 {strides = array<i32>} : memref<216x256xf32, #tpu.memory_space<vmem>>, vector<8x256xf32>,
    %700 = vector.extract_strided_slice %639 {offsets = [0, 127], sizes = [8, 256], strides = [1, 1]} : vector<8x512xf32> to vector<8x256xf32>
    %c3_499 = arith.constant 3 : index
    %c0_500 = arith.constant 0 : index
    %701 = vector.load %arg27[%c3_499, %c0_500] : memref<9x256xf32, #tpu.memory_space<vmem>>, vector<1x256xf32>
    %702 = vector.broadcast %701 : vector<1x256xf32> to vector<8x256xf32>
    %703 = arith.mulf %700, %702 : vector<8x256xf32>
    %c96_501 = arith.constant 96 : index
    %c0_502 = arith.constant 0 : index
    %704 = vector.load %arg33[%c96_501, %c0_502] : memref<216x256xf32, #tpu.memory_space<vmem>>, vector<8x256xf32>
    tpu.vector_store %arg33[%c96_501, %c0_502], %703 {strides = array<i32>} : memref<216x256xf32, #tpu.memory_space<vmem>>, vector<8x256xf32>,
    %705 = vector.extract_strided_slice %639 {offsets = [0, 128], sizes = [8, 256], strides = [1, 1]} : vector<8x512xf32> to vector<8x256xf32>
    %c4_503 = arith.constant 4 : index
    %c0_504 = arith.constant 0 : index
    %706 = vector.load %arg27[%c4_503, %c0_504] : memref<9x256xf32, #tpu.memory_space<vmem>>, vector<1x256xf32>
    %707 = vector.broadcast %706 : vector<1x256xf32> to vector<8x256xf32>
    %708 = arith.mulf %705, %707 : vector<8x256xf32>
    %c104_505 = arith.constant 104 : index
    %c0_506 = arith.constant 0 : index
    %709 = vector.load %arg33[%c104_505, %c0_506] : memref<216x256xf32, #tpu.memory_space<vmem>>, vector<8x256xf32>
    tpu.vector_store %arg33[%c104_505, %c0_506], %708 {strides = array<i32>} : memref<216x256xf32, #tpu.memory_space<vmem>>, vector<8x256xf32>,
    %710 = vector.extract_strided_slice %639 {offsets = [0, 129], sizes = [8, 256], strides = [1, 1]} : vector<8x512xf32> to vector<8x256xf32>
    %c5_507 = arith.constant 5 : index
    %c0_508 = arith.constant 0 : index
    %711 = vector.load %arg27[%c5_507, %c0_508] : memref<9x256xf32, #tpu.memory_space<vmem>>, vector<1x256xf32>
    %712 = vector.broadcast %711 : vector<1x256xf32> to vector<8x256xf32>
    %713 = arith.mulf %710, %712 : vector<8x256xf32>
    %c112_509 = arith.constant 112 : index
    %c0_510 = arith.constant 0 : index
    %714 = vector.load %arg33[%c112_509, %c0_510] : memref<216x256xf32, #tpu.memory_space<vmem>>, vector<8x256xf32>
    tpu.vector_store %arg33[%c112_509, %c0_510], %713 {strides = array<i32>} : memref<216x256xf32, #tpu.memory_space<vmem>>, vector<8x256xf32>,
    %715 = vector.extract_strided_slice %639 {offsets = [0, 135], sizes = [8, 256], strides = [1, 1]} : vector<8x512xf32> to vector<8x256xf32>
    %c6_511 = arith.constant 6 : index
    %c0_512 = arith.constant 0 : index
    %716 = vector.load %arg27[%c6_511, %c0_512] : memref<9x256xf32, #tpu.memory_space<vmem>>, vector<1x256xf32>
    %717 = vector.broadcast %716 : vector<1x256xf32> to vector<8x256xf32>
    %718 = arith.mulf %715, %717 : vector<8x256xf32>
    %c120_513 = arith.constant 120 : index
    %c0_514 = arith.constant 0 : index
    %719 = vector.load %arg33[%c120_513, %c0_514] : memref<216x256xf32, #tpu.memory_space<vmem>>, vector<8x256xf32>
    tpu.vector_store %arg33[%c120_513, %c0_514], %718 {strides = array<i32>} : memref<216x256xf32, #tpu.memory_space<vmem>>, vector<8x256xf32>,
    %720 = vector.extract_strided_slice %639 {offsets = [0, 136], sizes = [8, 256], strides = [1, 1]} : vector<8x512xf32> to vector<8x256xf32>
    %c7_515 = arith.constant 7 : index
    %c0_516 = arith.constant 0 : index
    %721 = vector.load %arg27[%c7_515, %c0_516] : memref<9x256xf32, #tpu.memory_space<vmem>>, vector<1x256xf32>
    %722 = vector.broadcast %721 : vector<1x256xf32> to vector<8x256xf32>
    %723 = arith.mulf %720, %722 : vector<8x256xf32>
    %c128_517 = arith.constant 128 : index
    %c0_518 = arith.constant 0 : index
    %724 = vector.load %arg33[%c128_517, %c0_518] : memref<216x256xf32, #tpu.memory_space<vmem>>, vector<8x256xf32>
    tpu.vector_store %arg33[%c128_517, %c0_518], %723 {strides = array<i32>} : memref<216x256xf32, #tpu.memory_space<vmem>>, vector<8x256xf32>,
    %725 = vector.extract_strided_slice %639 {offsets = [0, 137], sizes = [8, 256], strides = [1, 1]} : vector<8x512xf32> to vector<8x256xf32>
    %c8_519 = arith.constant 8 : index
    %c0_520 = arith.constant 0 : index
    %726 = vector.load %arg27[%c8_519, %c0_520] : memref<9x256xf32, #tpu.memory_space<vmem>>, vector<1x256xf32>
    %727 = vector.broadcast %726 : vector<1x256xf32> to vector<8x256xf32>
    %728 = arith.mulf %725, %727 : vector<8x256xf32>
    %c136_521 = arith.constant 136 : index
    %c0_522 = arith.constant 0 : index
    %729 = vector.load %arg33[%c136_521, %c0_522] : memref<216x256xf32, #tpu.memory_space<vmem>>, vector<8x256xf32>
    tpu.vector_store %arg33[%c136_521, %c0_522], %728 {strides = array<i32>} : memref<216x256xf32, #tpu.memory_space<vmem>>, vector<8x256xf32>,
    %730 = vector.extract_strided_slice %639 {offsets = [0, 183], sizes = [8, 256], strides = [1, 1]} : vector<8x512xf32> to vector<8x256xf32>
    %c0_523 = arith.constant 0 : index
    %c0_524 = arith.constant 0 : index
    %731 = vector.load %arg27[%c0_523, %c0_524] : memref<9x256xf32, #tpu.memory_space<vmem>>, vector<1x256xf32>
    %732 = vector.broadcast %731 : vector<1x256xf32> to vector<8x256xf32>
    %733 = arith.mulf %730, %732 : vector<8x256xf32>
    %c144_525 = arith.constant 144 : index
    %c0_526 = arith.constant 0 : index
    %734 = vector.load %arg33[%c144_525, %c0_526] : memref<216x256xf32, #tpu.memory_space<vmem>>, vector<8x256xf32>
    tpu.vector_store %arg33[%c144_525, %c0_526], %733 {strides = array<i32>} : memref<216x256xf32, #tpu.memory_space<vmem>>, vector<8x256xf32>,
    %735 = vector.extract_strided_slice %639 {offsets = [0, 184], sizes = [8, 256], strides = [1, 1]} : vector<8x512xf32> to vector<8x256xf32>
    %c1_527 = arith.constant 1 : index
    %c0_528 = arith.constant 0 : index
    %736 = vector.load %arg27[%c1_527, %c0_528] : memref<9x256xf32, #tpu.memory_space<vmem>>, vector<1x256xf32>
    %737 = vector.broadcast %736 : vector<1x256xf32> to vector<8x256xf32>
    %738 = arith.mulf %735, %737 : vector<8x256xf32>
    %c152_529 = arith.constant 152 : index
    %c0_530 = arith.constant 0 : index
    %739 = vector.load %arg33[%c152_529, %c0_530] : memref<216x256xf32, #tpu.memory_space<vmem>>, vector<8x256xf32>
    tpu.vector_store %arg33[%c152_529, %c0_530], %738 {strides = array<i32>} : memref<216x256xf32, #tpu.memory_space<vmem>>, vector<8x256xf32>,
    %740 = vector.extract_strided_slice %639 {offsets = [0, 185], sizes = [8, 256], strides = [1, 1]} : vector<8x512xf32> to vector<8x256xf32>
    %c2_531 = arith.constant 2 : index
    %c0_532 = arith.constant 0 : index
    %741 = vector.load %arg27[%c2_531, %c0_532] : memref<9x256xf32, #tpu.memory_space<vmem>>, vector<1x256xf32>
    %742 = vector.broadcast %741 : vector<1x256xf32> to vector<8x256xf32>
    %743 = arith.mulf %740, %742 : vector<8x256xf32>
    %c160_533 = arith.constant 160 : index
    %c0_534 = arith.constant 0 : index
    %744 = vector.load %arg33[%c160_533, %c0_534] : memref<216x256xf32, #tpu.memory_space<vmem>>, vector<8x256xf32>
    tpu.vector_store %arg33[%c160_533, %c0_534], %743 {strides = array<i32>} : memref<216x256xf32, #tpu.memory_space<vmem>>, vector<8x256xf32>,
    %745 = vector.extract_strided_slice %639 {offsets = [0, 191], sizes = [8, 256], strides = [1, 1]} : vector<8x512xf32> to vector<8x256xf32>
    %c3_535 = arith.constant 3 : index
    %c0_536 = arith.constant 0 : index
    %746 = vector.load %arg27[%c3_535, %c0_536] : memref<9x256xf32, #tpu.memory_space<vmem>>, vector<1x256xf32>
    %747 = vector.broadcast %746 : vector<1x256xf32> to vector<8x256xf32>
    %748 = arith.mulf %745, %747 : vector<8x256xf32>
    %c168_537 = arith.constant 168 : index
    %c0_538 = arith.constant 0 : index
    %749 = vector.load %arg33[%c168_537, %c0_538] : memref<216x256xf32, #tpu.memory_space<vmem>>, vector<8x256xf32>
    tpu.vector_store %arg33[%c168_537, %c0_538], %748 {strides = array<i32>} : memref<216x256xf32, #tpu.memory_space<vmem>>, vector<8x256xf32>,
    %750 = vector.extract_strided_slice %639 {offsets = [0, 192], sizes = [8, 256], strides = [1, 1]} : vector<8x512xf32> to vector<8x256xf32>
    %c4_539 = arith.constant 4 : index
    %c0_540 = arith.constant 0 : index
    %751 = vector.load %arg27[%c4_539, %c0_540] : memref<9x256xf32, #tpu.memory_space<vmem>>, vector<1x256xf32>
    %752 = vector.broadcast %751 : vector<1x256xf32> to vector<8x256xf32>
    %753 = arith.mulf %750, %752 : vector<8x256xf32>
    %c176_541 = arith.constant 176 : index
    %c0_542 = arith.constant 0 : index
    %754 = vector.load %arg33[%c176_541, %c0_542] : memref<216x256xf32, #tpu.memory_space<vmem>>, vector<8x256xf32>
    tpu.vector_store %arg33[%c176_541, %c0_542], %753 {strides = array<i32>} : memref<216x256xf32, #tpu.memory_space<vmem>>, vector<8x256xf32>,
    %755 = vector.extract_strided_slice %639 {offsets = [0, 193], sizes = [8, 256], strides = [1, 1]} : vector<8x512xf32> to vector<8x256xf32>
    %c5_543 = arith.constant 5 : index
    %c0_544 = arith.constant 0 : index
    %756 = vector.load %arg27[%c5_543, %c0_544] : memref<9x256xf32, #tpu.memory_space<vmem>>, vector<1x256xf32>
    %757 = vector.broadcast %756 : vector<1x256xf32> to vector<8x256xf32>
    %758 = arith.mulf %755, %757 : vector<8x256xf32>
    %c184_545 = arith.constant 184 : index
    %c0_546 = arith.constant 0 : index
    %759 = vector.load %arg33[%c184_545, %c0_546] : memref<216x256xf32, #tpu.memory_space<vmem>>, vector<8x256xf32>
    tpu.vector_store %arg33[%c184_545, %c0_546], %758 {strides = array<i32>} : memref<216x256xf32, #tpu.memory_space<vmem>>, vector<8x256xf32>,
    %760 = vector.extract_strided_slice %639 {offsets = [0, 199], sizes = [8, 256], strides = [1, 1]} : vector<8x512xf32> to vector<8x256xf32>
    %c6_547 = arith.constant 6 : index
    %c0_548 = arith.constant 0 : index
    %761 = vector.load %arg27[%c6_547, %c0_548] : memref<9x256xf32, #tpu.memory_space<vmem>>, vector<1x256xf32>
    %762 = vector.broadcast %761 : vector<1x256xf32> to vector<8x256xf32>
    %763 = arith.mulf %760, %762 : vector<8x256xf32>
    %c192_549 = arith.constant 192 : index
    %c0_550 = arith.constant 0 : index
    %764 = vector.load %arg33[%c192_549, %c0_550] : memref<216x256xf32, #tpu.memory_space<vmem>>, vector<8x256xf32>
    tpu.vector_store %arg33[%c192_549, %c0_550], %763 {strides = array<i32>} : memref<216x256xf32, #tpu.memory_space<vmem>>, vector<8x256xf32>,
    %765 = vector.extract_strided_slice %639 {offsets = [0, 200], sizes = [8, 256], strides = [1, 1]} : vector<8x512xf32> to vector<8x256xf32>
    %c7_551 = arith.constant 7 : index
    %c0_552 = arith.constant 0 : index
    %766 = vector.load %arg27[%c7_551, %c0_552] : memref<9x256xf32, #tpu.memory_space<vmem>>, vector<1x256xf32>
    %767 = vector.broadcast %766 : vector<1x256xf32> to vector<8x256xf32>
    %768 = arith.mulf %765, %767 : vector<8x256xf32>
    %c200_553 = arith.constant 200 : index
    %c0_554 = arith.constant 0 : index
    %769 = vector.load %arg33[%c200_553, %c0_554] : memref<216x256xf32, #tpu.memory_space<vmem>>, vector<8x256xf32>
    tpu.vector_store %arg33[%c200_553, %c0_554], %768 {strides = array<i32>} : memref<216x256xf32, #tpu.memory_space<vmem>>, vector<8x256xf32>,
    %770 = vector.extract_strided_slice %639 {offsets = [0, 201], sizes = [8, 256], strides = [1, 1]} : vector<8x512xf32> to vector<8x256xf32>
    %c8_555 = arith.constant 8 : index
    %c0_556 = arith.constant 0 : index
    %771 = vector.load %arg27[%c8_555, %c0_556] : memref<9x256xf32, #tpu.memory_space<vmem>>, vector<1x256xf32>
    %772 = vector.broadcast %771 : vector<1x256xf32> to vector<8x256xf32>
    %773 = arith.mulf %770, %772 : vector<8x256xf32>
    %c208_557 = arith.constant 208 : index
    %c0_558 = arith.constant 0 : index
    %774 = vector.load %arg33[%c208_557, %c0_558] : memref<216x256xf32, #tpu.memory_space<vmem>>, vector<8x256xf32>
    tpu.vector_store %arg33[%c208_557, %c0_558], %773 {strides = array<i32>} : memref<216x256xf32, #tpu.memory_space<vmem>>, vector<8x256xf32>,
    %c0_559 = arith.constant 0 : index
    %c0_560 = arith.constant 0 : index
    %775 = vector.load %arg33[%c0_559, %c0_560] : memref<216x256xf32, #tpu.memory_space<vmem>>, vector<216x256xf32>
    %776 = arith.truncf %775 : vector<216x256xf32> to vector<216x256xbf16>
    %c0_561 = arith.constant 0 : index
    %c0_562 = arith.constant 0 : index
    %777 = vector.load %arg22[%c0_561, %c0_562] : memref<16x216xbf16, #tpu.memory_space<vmem>>, vector<16x216xbf16>
    %cst_563 = arith.constant dense<0.000000e+00> : vector<16x256xf32>
    %778 = tpu.matmul %777, %776, %cst_563 {dimension_numbers = #tpu.dot_dimension_numbers<[1], [0], [0], [1], [0, 0, 1, 1], [], []>} : vector<16x216xbf16>, vector<216x256xbf16>, vector<16x256xf32> -> vector<16x256xf32>
    %c0_564 = arith.constant 0 : index
    %c128_565 = arith.constant 128 : index
    %779 = vector.load %arg32[%c0_564, %c128_565] : memref<8x512xf32, #tpu.memory_space<vmem>>, vector<8x256xf32>
    tpu.vector_store %arg32[%c0_564, %c128_565], %613 {strides = array<i32>} : memref<8x512xf32, #tpu.memory_space<vmem>>, vector<8x256xf32>,
    %c0_566 = arith.constant 0 : index
    %c0_567 = arith.constant 0 : index
    %780 = vector.load %arg32[%c0_566, %c0_567] : memref<8x512xf32, #tpu.memory_space<vmem>>, vector<8x512xf32>
    %781 = vector.extract_strided_slice %780 {offsets = [0, 55], sizes = [8, 256], strides = [1, 1]} : vector<8x512xf32> to vector<8x256xf32>
    %c0_568 = arith.constant 0 : index
    %c0_569 = arith.constant 0 : index
    %782 = vector.load %arg27[%c0_568, %c0_569] : memref<9x256xf32, #tpu.memory_space<vmem>>, vector<1x256xf32>
    %783 = vector.broadcast %782 : vector<1x256xf32> to vector<8x256xf32>
    %784 = arith.mulf %781, %783 : vector<8x256xf32>
    %c0_570 = arith.constant 0 : index
    %c0_571 = arith.constant 0 : index
    %785 = vector.load %arg33[%c0_570, %c0_571] : memref<216x256xf32, #tpu.memory_space<vmem>>, vector<8x256xf32>
    tpu.vector_store %arg33[%c0_570, %c0_571], %784 {strides = array<i32>} : memref<216x256xf32, #tpu.memory_space<vmem>>, vector<8x256xf32>,
    %786 = vector.extract_strided_slice %780 {offsets = [0, 56], sizes = [8, 256], strides = [1, 1]} : vector<8x512xf32> to vector<8x256xf32>
    %c1_572 = arith.constant 1 : index
    %c0_573 = arith.constant 0 : index
    %787 = vector.load %arg27[%c1_572, %c0_573] : memref<9x256xf32, #tpu.memory_space<vmem>>, vector<1x256xf32>
    %788 = vector.broadcast %787 : vector<1x256xf32> to vector<8x256xf32>
    %789 = arith.mulf %786, %788 : vector<8x256xf32>
    %c8_574 = arith.constant 8 : index
    %c0_575 = arith.constant 0 : index
    %790 = vector.load %arg33[%c8_574, %c0_575] : memref<216x256xf32, #tpu.memory_space<vmem>>, vector<8x256xf32>
    tpu.vector_store %arg33[%c8_574, %c0_575], %789 {strides = array<i32>} : memref<216x256xf32, #tpu.memory_space<vmem>>, vector<8x256xf32>,
    %791 = vector.extract_strided_slice %780 {offsets = [0, 57], sizes = [8, 256], strides = [1, 1]} : vector<8x512xf32> to vector<8x256xf32>
    %c2_576 = arith.constant 2 : index
    %c0_577 = arith.constant 0 : index
    %792 = vector.load %arg27[%c2_576, %c0_577] : memref<9x256xf32, #tpu.memory_space<vmem>>, vector<1x256xf32>
    %793 = vector.broadcast %792 : vector<1x256xf32> to vector<8x256xf32>
    %794 = arith.mulf %791, %793 : vector<8x256xf32>
    %c16_578 = arith.constant 16 : index
    %c0_579 = arith.constant 0 : index
    %795 = vector.load %arg33[%c16_578, %c0_579] : memref<216x256xf32, #tpu.memory_space<vmem>>, vector<8x256xf32>
    tpu.vector_store %arg33[%c16_578, %c0_579], %794 {strides = array<i32>} : memref<216x256xf32, #tpu.memory_space<vmem>>, vector<8x256xf32>,
    %796 = vector.extract_strided_slice %780 {offsets = [0, 63], sizes = [8, 256], strides = [1, 1]} : vector<8x512xf32> to vector<8x256xf32>
    %c3_580 = arith.constant 3 : index
    %c0_581 = arith.constant 0 : index
    %797 = vector.load %arg27[%c3_580, %c0_581] : memref<9x256xf32, #tpu.memory_space<vmem>>, vector<1x256xf32>
    %798 = vector.broadcast %797 : vector<1x256xf32> to vector<8x256xf32>
    %799 = arith.mulf %796, %798 : vector<8x256xf32>
    %c24_582 = arith.constant 24 : index
    %c0_583 = arith.constant 0 : index
    %800 = vector.load %arg33[%c24_582, %c0_583] : memref<216x256xf32, #tpu.memory_space<vmem>>, vector<8x256xf32>
    tpu.vector_store %arg33[%c24_582, %c0_583], %799 {strides = array<i32>} : memref<216x256xf32, #tpu.memory_space<vmem>>, vector<8x256xf32>,
    %801 = vector.extract_strided_slice %780 {offsets = [0, 64], sizes = [8, 256], strides = [1, 1]} : vector<8x512xf32> to vector<8x256xf32>
    %c4_584 = arith.constant 4 : index
    %c0_585 = arith.constant 0 : index
    %802 = vector.load %arg27[%c4_584, %c0_585] : memref<9x256xf32, #tpu.memory_space<vmem>>, vector<1x256xf32>
    %803 = vector.broadcast %802 : vector<1x256xf32> to vector<8x256xf32>
    %804 = arith.mulf %801, %803 : vector<8x256xf32>
    %c32_586 = arith.constant 32 : index
    %c0_587 = arith.constant 0 : index
    %805 = vector.load %arg33[%c32_586, %c0_587] : memref<216x256xf32, #tpu.memory_space<vmem>>, vector<8x256xf32>
    tpu.vector_store %arg33[%c32_586, %c0_587], %804 {strides = array<i32>} : memref<216x256xf32, #tpu.memory_space<vmem>>, vector<8x256xf32>,
    %806 = vector.extract_strided_slice %780 {offsets = [0, 65], sizes = [8, 256], strides = [1, 1]} : vector<8x512xf32> to vector<8x256xf32>
    %c5_588 = arith.constant 5 : index
    %c0_589 = arith.constant 0 : index
    %807 = vector.load %arg27[%c5_588, %c0_589] : memref<9x256xf32, #tpu.memory_space<vmem>>, vector<1x256xf32>
    %808 = vector.broadcast %807 : vector<1x256xf32> to vector<8x256xf32>
    %809 = arith.mulf %806, %808 : vector<8x256xf32>
    %c40_590 = arith.constant 40 : index
    %c0_591 = arith.constant 0 : index
    %810 = vector.load %arg33[%c40_590, %c0_591] : memref<216x256xf32, #tpu.memory_space<vmem>>, vector<8x256xf32>
    tpu.vector_store %arg33[%c40_590, %c0_591], %809 {strides = array<i32>} : memref<216x256xf32, #tpu.memory_space<vmem>>, vector<8x256xf32>,
    %811 = vector.extract_strided_slice %780 {offsets = [0, 71], sizes = [8, 256], strides = [1, 1]} : vector<8x512xf32> to vector<8x256xf32>
    %c6_592 = arith.constant 6 : index
    %c0_593 = arith.constant 0 : index
    %812 = vector.load %arg27[%c6_592, %c0_593] : memref<9x256xf32, #tpu.memory_space<vmem>>, vector<1x256xf32>
    %813 = vector.broadcast %812 : vector<1x256xf32> to vector<8x256xf32>
    %814 = arith.mulf %811, %813 : vector<8x256xf32>
    %c48_594 = arith.constant 48 : index
    %c0_595 = arith.constant 0 : index
    %815 = vector.load %arg33[%c48_594, %c0_595] : memref<216x256xf32, #tpu.memory_space<vmem>>, vector<8x256xf32>
    tpu.vector_store %arg33[%c48_594, %c0_595], %814 {strides = array<i32>} : memref<216x256xf32, #tpu.memory_space<vmem>>, vector<8x256xf32>,
    %816 = vector.extract_strided_slice %780 {offsets = [0, 72], sizes = [8, 256], strides = [1, 1]} : vector<8x512xf32> to vector<8x256xf32>
    %c7_596 = arith.constant 7 : index
    %c0_597 = arith.constant 0 : index
    %817 = vector.load %arg27[%c7_596, %c0_597] : memref<9x256xf32, #tpu.memory_space<vmem>>, vector<1x256xf32>
    %818 = vector.broadcast %817 : vector<1x256xf32> to vector<8x256xf32>
    %819 = arith.mulf %816, %818 : vector<8x256xf32>
    %c56_598 = arith.constant 56 : index
    %c0_599 = arith.constant 0 : index
    %820 = vector.load %arg33[%c56_598, %c0_599] : memref<216x256xf32, #tpu.memory_space<vmem>>, vector<8x256xf32>
    tpu.vector_store %arg33[%c56_598, %c0_599], %819 {strides = array<i32>} : memref<216x256xf32, #tpu.memory_space<vmem>>, vector<8x256xf32>,
    %821 = vector.extract_strided_slice %780 {offsets = [0, 73], sizes = [8, 256], strides = [1, 1]} : vector<8x512xf32> to vector<8x256xf32>
    %c8_600 = arith.constant 8 : index
    %c0_601 = arith.constant 0 : index
    %822 = vector.load %arg27[%c8_600, %c0_601] : memref<9x256xf32, #tpu.memory_space<vmem>>, vector<1x256xf32>
    %823 = vector.broadcast %822 : vector<1x256xf32> to vector<8x256xf32>
    %824 = arith.mulf %821, %823 : vector<8x256xf32>
    %c64_602 = arith.constant 64 : index
    %c0_603 = arith.constant 0 : index
    %825 = vector.load %arg33[%c64_602, %c0_603] : memref<216x256xf32, #tpu.memory_space<vmem>>, vector<8x256xf32>
    tpu.vector_store %arg33[%c64_602, %c0_603], %824 {strides = array<i32>} : memref<216x256xf32, #tpu.memory_space<vmem>>, vector<8x256xf32>,
    %826 = vector.extract_strided_slice %780 {offsets = [0, 119], sizes = [8, 256], strides = [1, 1]} : vector<8x512xf32> to vector<8x256xf32>
    %c0_604 = arith.constant 0 : index
    %c0_605 = arith.constant 0 : index
    %827 = vector.load %arg27[%c0_604, %c0_605] : memref<9x256xf32, #tpu.memory_space<vmem>>, vector<1x256xf32>
    %828 = vector.broadcast %827 : vector<1x256xf32> to vector<8x256xf32>
    %829 = arith.mulf %826, %828 : vector<8x256xf32>
    %c72_606 = arith.constant 72 : index
    %c0_607 = arith.constant 0 : index
    %830 = vector.load %arg33[%c72_606, %c0_607] : memref<216x256xf32, #tpu.memory_space<vmem>>, vector<8x256xf32>
    tpu.vector_store %arg33[%c72_606, %c0_607], %829 {strides = array<i32>} : memref<216x256xf32, #tpu.memory_space<vmem>>, vector<8x256xf32>,
    %831 = vector.extract_strided_slice %780 {offsets = [0, 120], sizes = [8, 256], strides = [1, 1]} : vector<8x512xf32> to vector<8x256xf32>
    %c1_608 = arith.constant 1 : index
    %c0_609 = arith.constant 0 : index
    %832 = vector.load %arg27[%c1_608, %c0_609] : memref<9x256xf32, #tpu.memory_space<vmem>>, vector<1x256xf32>
    %833 = vector.broadcast %832 : vector<1x256xf32> to vector<8x256xf32>
    %834 = arith.mulf %831, %833 : vector<8x256xf32>
    %c80_610 = arith.constant 80 : index
    %c0_611 = arith.constant 0 : index
    %835 = vector.load %arg33[%c80_610, %c0_611] : memref<216x256xf32, #tpu.memory_space<vmem>>, vector<8x256xf32>
    tpu.vector_store %arg33[%c80_610, %c0_611], %834 {strides = array<i32>} : memref<216x256xf32, #tpu.memory_space<vmem>>, vector<8x256xf32>,
    %836 = vector.extract_strided_slice %780 {offsets = [0, 121], sizes = [8, 256], strides = [1, 1]} : vector<8x512xf32> to vector<8x256xf32>
    %c2_612 = arith.constant 2 : index
    %c0_613 = arith.constant 0 : index
    %837 = vector.load %arg27[%c2_612, %c0_613] : memref<9x256xf32, #tpu.memory_space<vmem>>, vector<1x256xf32>
    %838 = vector.broadcast %837 : vector<1x256xf32> to vector<8x256xf32>
    %839 = arith.mulf %836, %838 : vector<8x256xf32>
    %c88_614 = arith.constant 88 : index
    %c0_615 = arith.constant 0 : index
    %840 = vector.load %arg33[%c88_614, %c0_615] : memref<216x256xf32, #tpu.memory_space<vmem>>, vector<8x256xf32>
    tpu.vector_store %arg33[%c88_614, %c0_615], %839 {strides = array<i32>} : memref<216x256xf32, #tpu.memory_space<vmem>>, vector<8x256xf32>,
    %841 = vector.extract_strided_slice %780 {offsets = [0, 127], sizes = [8, 256], strides = [1, 1]} : vector<8x512xf32> to vector<8x256xf32>
    %c3_616 = arith.constant 3 : index
    %c0_617 = arith.constant 0 : index
    %842 = vector.load %arg27[%c3_616, %c0_617] : memref<9x256xf32, #tpu.memory_space<vmem>>, vector<1x256xf32>
    %843 = vector.broadcast %842 : vector<1x256xf32> to vector<8x256xf32>
    %844 = arith.mulf %841, %843 : vector<8x256xf32>
    %c96_618 = arith.constant 96 : index
    %c0_619 = arith.constant 0 : index
    %845 = vector.load %arg33[%c96_618, %c0_619] : memref<216x256xf32, #tpu.memory_space<vmem>>, vector<8x256xf32>
    tpu.vector_store %arg33[%c96_618, %c0_619], %844 {strides = array<i32>} : memref<216x256xf32, #tpu.memory_space<vmem>>, vector<8x256xf32>,
    %846 = vector.extract_strided_slice %780 {offsets = [0, 128], sizes = [8, 256], strides = [1, 1]} : vector<8x512xf32> to vector<8x256xf32>
    %c4_620 = arith.constant 4 : index
    %c0_621 = arith.constant 0 : index
    %847 = vector.load %arg27[%c4_620, %c0_621] : memref<9x256xf32, #tpu.memory_space<vmem>>, vector<1x256xf32>
    %848 = vector.broadcast %847 : vector<1x256xf32> to vector<8x256xf32>
    %849 = arith.mulf %846, %848 : vector<8x256xf32>
    %c104_622 = arith.constant 104 : index
    %c0_623 = arith.constant 0 : index
    %850 = vector.load %arg33[%c104_622, %c0_623] : memref<216x256xf32, #tpu.memory_space<vmem>>, vector<8x256xf32>
    tpu.vector_store %arg33[%c104_622, %c0_623], %849 {strides = array<i32>} : memref<216x256xf32, #tpu.memory_space<vmem>>, vector<8x256xf32>,
    %851 = vector.extract_strided_slice %780 {offsets = [0, 129], sizes = [8, 256], strides = [1, 1]} : vector<8x512xf32> to vector<8x256xf32>
    %c5_624 = arith.constant 5 : index
    %c0_625 = arith.constant 0 : index
    %852 = vector.load %arg27[%c5_624, %c0_625] : memref<9x256xf32, #tpu.memory_space<vmem>>, vector<1x256xf32>
    %853 = vector.broadcast %852 : vector<1x256xf32> to vector<8x256xf32>
    %854 = arith.mulf %851, %853 : vector<8x256xf32>
    %c112_626 = arith.constant 112 : index
    %c0_627 = arith.constant 0 : index
    %855 = vector.load %arg33[%c112_626, %c0_627] : memref<216x256xf32, #tpu.memory_space<vmem>>, vector<8x256xf32>
    tpu.vector_store %arg33[%c112_626, %c0_627], %854 {strides = array<i32>} : memref<216x256xf32, #tpu.memory_space<vmem>>, vector<8x256xf32>,
    %856 = vector.extract_strided_slice %780 {offsets = [0, 135], sizes = [8, 256], strides = [1, 1]} : vector<8x512xf32> to vector<8x256xf32>
    %c6_628 = arith.constant 6 : index
    %c0_629 = arith.constant 0 : index
    %857 = vector.load %arg27[%c6_628, %c0_629] : memref<9x256xf32, #tpu.memory_space<vmem>>, vector<1x256xf32>
    %858 = vector.broadcast %857 : vector<1x256xf32> to vector<8x256xf32>
    %859 = arith.mulf %856, %858 : vector<8x256xf32>
    %c120_630 = arith.constant 120 : index
    %c0_631 = arith.constant 0 : index
    %860 = vector.load %arg33[%c120_630, %c0_631] : memref<216x256xf32, #tpu.memory_space<vmem>>, vector<8x256xf32>
    tpu.vector_store %arg33[%c120_630, %c0_631], %859 {strides = array<i32>} : memref<216x256xf32, #tpu.memory_space<vmem>>, vector<8x256xf32>,
    %861 = vector.extract_strided_slice %780 {offsets = [0, 136], sizes = [8, 256], strides = [1, 1]} : vector<8x512xf32> to vector<8x256xf32>
    %c7_632 = arith.constant 7 : index
    %c0_633 = arith.constant 0 : index
    %862 = vector.load %arg27[%c7_632, %c0_633] : memref<9x256xf32, #tpu.memory_space<vmem>>, vector<1x256xf32>
    %863 = vector.broadcast %862 : vector<1x256xf32> to vector<8x256xf32>
    %864 = arith.mulf %861, %863 : vector<8x256xf32>
    %c128_634 = arith.constant 128 : index
    %c0_635 = arith.constant 0 : index
    %865 = vector.load %arg33[%c128_634, %c0_635] : memref<216x256xf32, #tpu.memory_space<vmem>>, vector<8x256xf32>
    tpu.vector_store %arg33[%c128_634, %c0_635], %864 {strides = array<i32>} : memref<216x256xf32, #tpu.memory_space<vmem>>, vector<8x256xf32>,
    %866 = vector.extract_strided_slice %780 {offsets = [0, 137], sizes = [8, 256], strides = [1, 1]} : vector<8x512xf32> to vector<8x256xf32>
    %c8_636 = arith.constant 8 : index
    %c0_637 = arith.constant 0 : index
    %867 = vector.load %arg27[%c8_636, %c0_637] : memref<9x256xf32, #tpu.memory_space<vmem>>, vector<1x256xf32>
    %868 = vector.broadcast %867 : vector<1x256xf32> to vector<8x256xf32>
    %869 = arith.mulf %866, %868 : vector<8x256xf32>
    %c136_638 = arith.constant 136 : index
    %c0_639 = arith.constant 0 : index
    %870 = vector.load %arg33[%c136_638, %c0_639] : memref<216x256xf32, #tpu.memory_space<vmem>>, vector<8x256xf32>
    tpu.vector_store %arg33[%c136_638, %c0_639], %869 {strides = array<i32>} : memref<216x256xf32, #tpu.memory_space<vmem>>, vector<8x256xf32>,
    %871 = vector.extract_strided_slice %780 {offsets = [0, 183], sizes = [8, 256], strides = [1, 1]} : vector<8x512xf32> to vector<8x256xf32>
    %c0_640 = arith.constant 0 : index
    %c0_641 = arith.constant 0 : index
    %872 = vector.load %arg27[%c0_640, %c0_641] : memref<9x256xf32, #tpu.memory_space<vmem>>, vector<1x256xf32>
    %873 = vector.broadcast %872 : vector<1x256xf32> to vector<8x256xf32>
    %874 = arith.mulf %871, %873 : vector<8x256xf32>
    %c144_642 = arith.constant 144 : index
    %c0_643 = arith.constant 0 : index
    %875 = vector.load %arg33[%c144_642, %c0_643] : memref<216x256xf32, #tpu.memory_space<vmem>>, vector<8x256xf32>
    tpu.vector_store %arg33[%c144_642, %c0_643], %874 {strides = array<i32>} : memref<216x256xf32, #tpu.memory_space<vmem>>, vector<8x256xf32>,
    %876 = vector.extract_strided_slice %780 {offsets = [0, 184], sizes = [8, 256], strides = [1, 1]} : vector<8x512xf32> to vector<8x256xf32>
    %c1_644 = arith.constant 1 : index
    %c0_645 = arith.constant 0 : index
    %877 = vector.load %arg27[%c1_644, %c0_645] : memref<9x256xf32, #tpu.memory_space<vmem>>, vector<1x256xf32>
    %878 = vector.broadcast %877 : vector<1x256xf32> to vector<8x256xf32>
    %879 = arith.mulf %876, %878 : vector<8x256xf32>
    %c152_646 = arith.constant 152 : index
    %c0_647 = arith.constant 0 : index
    %880 = vector.load %arg33[%c152_646, %c0_647] : memref<216x256xf32, #tpu.memory_space<vmem>>, vector<8x256xf32>
    tpu.vector_store %arg33[%c152_646, %c0_647], %879 {strides = array<i32>} : memref<216x256xf32, #tpu.memory_space<vmem>>, vector<8x256xf32>,
    %881 = vector.extract_strided_slice %780 {offsets = [0, 185], sizes = [8, 256], strides = [1, 1]} : vector<8x512xf32> to vector<8x256xf32>
    %c2_648 = arith.constant 2 : index
    %c0_649 = arith.constant 0 : index
    %882 = vector.load %arg27[%c2_648, %c0_649] : memref<9x256xf32, #tpu.memory_space<vmem>>, vector<1x256xf32>
    %883 = vector.broadcast %882 : vector<1x256xf32> to vector<8x256xf32>
    %884 = arith.mulf %881, %883 : vector<8x256xf32>
    %c160_650 = arith.constant 160 : index
    %c0_651 = arith.constant 0 : index
    %885 = vector.load %arg33[%c160_650, %c0_651] : memref<216x256xf32, #tpu.memory_space<vmem>>, vector<8x256xf32>
    tpu.vector_store %arg33[%c160_650, %c0_651], %884 {strides = array<i32>} : memref<216x256xf32, #tpu.memory_space<vmem>>, vector<8x256xf32>,
    %886 = vector.extract_strided_slice %780 {offsets = [0, 191], sizes = [8, 256], strides = [1, 1]} : vector<8x512xf32> to vector<8x256xf32>
    %c3_652 = arith.constant 3 : index
    %c0_653 = arith.constant 0 : index
    %887 = vector.load %arg27[%c3_652, %c0_653] : memref<9x256xf32, #tpu.memory_space<vmem>>, vector<1x256xf32>
    %888 = vector.broadcast %887 : vector<1x256xf32> to vector<8x256xf32>
    %889 = arith.mulf %886, %888 : vector<8x256xf32>
    %c168_654 = arith.constant 168 : index
    %c0_655 = arith.constant 0 : index
    %890 = vector.load %arg33[%c168_654, %c0_655] : memref<216x256xf32, #tpu.memory_space<vmem>>, vector<8x256xf32>
    tpu.vector_store %arg33[%c168_654, %c0_655], %889 {strides = array<i32>} : memref<216x256xf32, #tpu.memory_space<vmem>>, vector<8x256xf32>,
    %891 = vector.extract_strided_slice %780 {offsets = [0, 192], sizes = [8, 256], strides = [1, 1]} : vector<8x512xf32> to vector<8x256xf32>
    %c4_656 = arith.constant 4 : index
    %c0_657 = arith.constant 0 : index
    %892 = vector.load %arg27[%c4_656, %c0_657] : memref<9x256xf32, #tpu.memory_space<vmem>>, vector<1x256xf32>
    %893 = vector.broadcast %892 : vector<1x256xf32> to vector<8x256xf32>
    %894 = arith.mulf %891, %893 : vector<8x256xf32>
    %c176_658 = arith.constant 176 : index
    %c0_659 = arith.constant 0 : index
    %895 = vector.load %arg33[%c176_658, %c0_659] : memref<216x256xf32, #tpu.memory_space<vmem>>, vector<8x256xf32>
    tpu.vector_store %arg33[%c176_658, %c0_659], %894 {strides = array<i32>} : memref<216x256xf32, #tpu.memory_space<vmem>>, vector<8x256xf32>,
    %896 = vector.extract_strided_slice %780 {offsets = [0, 193], sizes = [8, 256], strides = [1, 1]} : vector<8x512xf32> to vector<8x256xf32>
    %c5_660 = arith.constant 5 : index
    %c0_661 = arith.constant 0 : index
    %897 = vector.load %arg27[%c5_660, %c0_661] : memref<9x256xf32, #tpu.memory_space<vmem>>, vector<1x256xf32>
    %898 = vector.broadcast %897 : vector<1x256xf32> to vector<8x256xf32>
    %899 = arith.mulf %896, %898 : vector<8x256xf32>
    %c184_662 = arith.constant 184 : index
    %c0_663 = arith.constant 0 : index
    %900 = vector.load %arg33[%c184_662, %c0_663] : memref<216x256xf32, #tpu.memory_space<vmem>>, vector<8x256xf32>
    tpu.vector_store %arg33[%c184_662, %c0_663], %899 {strides = array<i32>} : memref<216x256xf32, #tpu.memory_space<vmem>>, vector<8x256xf32>,
    %901 = vector.extract_strided_slice %780 {offsets = [0, 199], sizes = [8, 256], strides = [1, 1]} : vector<8x512xf32> to vector<8x256xf32>
    %c6_664 = arith.constant 6 : index
    %c0_665 = arith.constant 0 : index
    %902 = vector.load %arg27[%c6_664, %c0_665] : memref<9x256xf32, #tpu.memory_space<vmem>>, vector<1x256xf32>
    %903 = vector.broadcast %902 : vector<1x256xf32> to vector<8x256xf32>
    %904 = arith.mulf %901, %903 : vector<8x256xf32>
    %c192_666 = arith.constant 192 : index
    %c0_667 = arith.constant 0 : index
    %905 = vector.load %arg33[%c192_666, %c0_667] : memref<216x256xf32, #tpu.memory_space<vmem>>, vector<8x256xf32>
    tpu.vector_store %arg33[%c192_666, %c0_667], %904 {strides = array<i32>} : memref<216x256xf32, #tpu.memory_space<vmem>>, vector<8x256xf32>,
    %906 = vector.extract_strided_slice %780 {offsets = [0, 200], sizes = [8, 256], strides = [1, 1]} : vector<8x512xf32> to vector<8x256xf32>
    %c7_668 = arith.constant 7 : index
    %c0_669 = arith.constant 0 : index
    %907 = vector.load %arg27[%c7_668, %c0_669] : memref<9x256xf32, #tpu.memory_space<vmem>>, vector<1x256xf32>
    %908 = vector.broadcast %907 : vector<1x256xf32> to vector<8x256xf32>
    %909 = arith.mulf %906, %908 : vector<8x256xf32>
    %c200_670 = arith.constant 200 : index
    %c0_671 = arith.constant 0 : index
    %910 = vector.load %arg33[%c200_670, %c0_671] : memref<216x256xf32, #tpu.memory_space<vmem>>, vector<8x256xf32>
    tpu.vector_store %arg33[%c200_670, %c0_671], %909 {strides = array<i32>} : memref<216x256xf32, #tpu.memory_space<vmem>>, vector<8x256xf32>,
    %911 = vector.extract_strided_slice %780 {offsets = [0, 201], sizes = [8, 256], strides = [1, 1]} : vector<8x512xf32> to vector<8x256xf32>
    %c8_672 = arith.constant 8 : index
    %c0_673 = arith.constant 0 : index
    %912 = vector.load %arg27[%c8_672, %c0_673] : memref<9x256xf32, #tpu.memory_space<vmem>>, vector<1x256xf32>
    %913 = vector.broadcast %912 : vector<1x256xf32> to vector<8x256xf32>
    %914 = arith.mulf %911, %913 : vector<8x256xf32>
    %c208_674 = arith.constant 208 : index
    %c0_675 = arith.constant 0 : index
    %915 = vector.load %arg33[%c208_674, %c0_675] : memref<216x256xf32, #tpu.memory_space<vmem>>, vector<8x256xf32>
    tpu.vector_store %arg33[%c208_674, %c0_675], %914 {strides = array<i32>} : memref<216x256xf32, #tpu.memory_space<vmem>>, vector<8x256xf32>,
    %c0_676 = arith.constant 0 : index
    %c0_677 = arith.constant 0 : index
    %916 = vector.load %arg33[%c0_676, %c0_677] : memref<216x256xf32, #tpu.memory_space<vmem>>, vector<216x256xf32>
    %917 = arith.truncf %916 : vector<216x256xf32> to vector<216x256xbf16>
    %c0_678 = arith.constant 0 : index
    %c0_679 = arith.constant 0 : index
    %918 = vector.load %arg23[%c0_678, %c0_679] : memref<16x216xbf16, #tpu.memory_space<vmem>>, vector<16x216xbf16>
    %cst_680 = arith.constant dense<0.000000e+00> : vector<16x256xf32>
    %919 = tpu.matmul %918, %917, %cst_680 {dimension_numbers = #tpu.dot_dimension_numbers<[1], [0], [0], [1], [0, 0, 1, 1], [], []>} : vector<16x216xbf16>, vector<216x256xbf16>, vector<16x256xf32> -> vector<16x256xf32>
    %920 = arith.addf %778, %919 : vector<16x256xf32>
    %c0_681 = arith.constant 0 : index
    %c0_682 = arith.constant 0 : index
    %921 = vector.load %arg24[%c0_681, %c0_682] : memref<16x1xf32, #tpu.memory_space<vmem>>, vector<16x1xf32>
    %922 = vector.broadcast %921 : vector<16x1xf32> to vector<16x256xf32>
    %923 = arith.addf %920, %922 : vector<16x256xf32>
    %924 = vector.extract_strided_slice %923 {offsets = [0, 0], sizes = [8, 256], strides = [1, 1]} : vector<16x256xf32> to vector<8x256xf32>
    %925 = vector.extract_strided_slice %923 {offsets = [8, 0], sizes = [8, 256], strides = [1, 1]} : vector<16x256xf32> to vector<8x256xf32>
    %926 = vector.shape_cast %924 : vector<8x256xf32> to vector<1x8x256xf32>
    %cst_683 = arith.constant dense<0.000000e+00> : vector<1xf32>
    %927 = vector.multi_reduction <add>, %926, %cst_683 [1, 2] : vector<1x8x256xf32> to vector<1xf32>
    %928 = vector.shape_cast %927 : vector<1xf32> to vector<1x1x1xf32>
    %929 = vector.extract %928[0, 0, 0] : f32 from vector<1x1x1xf32>
    %cst_684 = arith.constant 2.048000e+03 : f32
    %930 = arith.divf %929, %cst_684 : f32
    %931 = vector.broadcast %930 : f32 to vector<8x256xf32>
    %932 = arith.subf %924, %931 : vector<8x256xf32>
    %933 = arith.mulf %932, %932 : vector<8x256xf32>
    %934 = vector.shape_cast %933 : vector<8x256xf32> to vector<1x8x256xf32>
    %cst_685 = arith.constant dense<0.000000e+00> : vector<1xf32>
    %935 = vector.multi_reduction <add>, %934, %cst_685 [1, 2] : vector<1x8x256xf32> to vector<1xf32>
    %936 = vector.shape_cast %935 : vector<1xf32> to vector<1x1x1xf32>
    %937 = vector.extract %936[0, 0, 0] : f32 from vector<1x1x1xf32>
    %cst_686 = arith.constant 2.048000e+03 : f32
    %938 = arith.divf %937, %cst_686 : f32
    %cst_687 = arith.constant 9.99999974E-6 : f32
    %939 = arith.addf %938, %cst_687 : f32
    %940 = math.rsqrt %939 : f32
    %941 = vector.broadcast %940 : f32 to vector<8x256xf32>
    %942 = arith.mulf %932, %941 : vector<8x256xf32>
    %c0_688 = arith.constant 0 : index
    %c0_689 = arith.constant 0 : index
    %943 = vector.load %arg25[%c0_688, %c0_689] : memref<8x256xf32, #tpu.memory_space<vmem>>, vector<8x256xf32>
    %944 = arith.mulf %942, %943 : vector<8x256xf32>
    %c0_690 = arith.constant 0 : index
    %c0_691 = arith.constant 0 : index
    %945 = vector.load %arg26[%c0_690, %c0_691] : memref<8x256xf32, #tpu.memory_space<vmem>>, vector<8x256xf32>
    %946 = arith.addf %944, %945 : vector<8x256xf32>
    %c48_692 = arith.constant 48 : index
    %c0_693 = arith.constant 0 : index
    %947 = vector.load %arg34[%c48_692, %c0_693] : memref<56x256xf32, #tpu.memory_space<vmem>>, vector<8x256xf32>
    %c24_694 = arith.constant 24 : index
    %c0_695 = arith.constant 0 : index
    %948 = vector.load %arg35[%c24_694, %c0_695] : memref<32x256xf32, #tpu.memory_space<vmem>>, vector<8x256xf32>
    %949 = arith.addf %947, %948 : vector<8x256xf32>
    %950 = arith.addf %949, %946 : vector<8x256xf32>
    %cst_696 = arith.constant 5.000000e-01 : f32
    %951 = vector.broadcast %cst_696 : f32 to vector<8x256xf32>
    %952 = arith.mulf %951, %950 : vector<8x256xf32>
    %953 = math.tanh %952 : vector<8x256xf32>
    %cst_697 = arith.constant 5.000000e-01 : f32
    %954 = vector.broadcast %cst_697 : f32 to vector<8x256xf32>
    %955 = arith.mulf %954, %953 : vector<8x256xf32>
    %cst_698 = arith.constant 5.000000e-01 : f32
    %956 = vector.broadcast %cst_698 : f32 to vector<8x256xf32>
    %957 = arith.addf %955, %956 : vector<8x256xf32>
    %c0_699 = arith.constant 0 : index
    %c48_700 = arith.constant 48 : index
    %c0_701 = arith.constant 0 : index
    %958 = vector.load %arg31[%c0_699, %c48_700, %c0_701] : memref<1x56x256xf32, #tpu.memory_space<vmem>>, vector<1x8x256xf32>
    %959 = vector.shape_cast %958 : vector<1x8x256xf32> to vector<8x256xf32>
    %960 = vector.shape_cast %957 : vector<8x256xf32> to vector<1x8x256xf32>
    tpu.vector_store %arg31[%c0_699, %c48_700, %c0_701], %960 {strides = array<i32>} : memref<1x56x256xf32, #tpu.memory_space<vmem>>, vector<1x8x256xf32>,
    %961 = math.tanh %925 : vector<8x256xf32>
    %962 = arith.mulf %957, %961 : vector<8x256xf32>
    %c0_702 = arith.constant 0 : index
    %c0_703 = arith.constant 0 : index
    %c0_704 = arith.constant 0 : index
    %963 = vector.load %arg28[%c0_702, %c0_703, %c0_704] : memref<1x8x256xf32, #tpu.memory_space<vmem>>, vector<1x8x256xf32>
    %964 = vector.shape_cast %963 : vector<1x8x256xf32> to vector<8x256xf32>
    %965 = vector.shape_cast %962 : vector<8x256xf32> to vector<1x8x256xf32>
    tpu.vector_store %arg28[%c0_702, %c0_703, %c0_704], %965 {strides = array<i32>} : memref<1x8x256xf32, #tpu.memory_space<vmem>>, vector<1x8x256xf32>,
    return
  }
  func.func @transform_0(%arg0: i32) -> (i32, i32, i32) {
    %c0_i32 = arith.constant 0 : i32
    %c0_i32_0 = arith.constant 0 : i32
    %c0_i32_1 = arith.constant 0 : i32
    return %arg0, %c0_i32, %c0_i32_0 : i32, i32, i32
  }
  func.func @transform_1(%arg0: i32) -> (i32, i32, i32) {
    %c0_i32 = arith.constant 0 : i32
    %c0_i32_0 = arith.constant 0 : i32
    %c0_i32_1 = arith.constant 0 : i32
    return %arg0, %c0_i32, %c0_i32_0 : i32, i32, i32
  }
  func.func @transform_2(%arg0: i32) -> (i32, i32, i32) {
    %c0_i32 = arith.constant 0 : i32
    %c0_i32_0 = arith.constant 0 : i32
    %c0_i32_1 = arith.constant 0 : i32
    return %arg0, %c0_i32, %c0_i32_0 : i32, i32, i32
  }
  func.func @transform_3(%arg0: i32) -> (i32, i32, i32) {
    %c0_i32 = arith.constant 0 : i32
    %c0_i32_0 = arith.constant 0 : i32
    %c0_i32_1 = arith.constant 0 : i32
    return %arg0, %c0_i32, %c0_i32_0 : i32, i32, i32
  }
  func.func @transform_4(%arg0: i32) -> (i32, i32, i32) {
    %c0_i32 = arith.constant 0 : i32
    %c0_i32_0 = arith.constant 0 : i32
    %c0_i32_1 = arith.constant 0 : i32
    return %arg0, %c0_i32, %c0_i32_0 : i32, i32, i32
  }
  func.func @transform_5(%arg0: i32) -> (i32, i32, i32) {
    %c0_i32 = arith.constant 0 : i32
    %c0_i32_0 = arith.constant 0 : i32
    %c0_i32_1 = arith.constant 0 : i32
    return %arg0, %c0_i32, %c0_i32_0 : i32, i32, i32
  }
  func.func @transform_6(%arg0: i32) -> (i32, i32, i32) {
    %c0_i32 = arith.constant 0 : i32
    %c0_i32_0 = arith.constant 0 : i32
    %c0_i32_1 = arith.constant 0 : i32
    return %arg0, %c0_i32, %c0_i32_0 : i32, i32, i32
  }
  func.func @transform_7(%arg0: i32) -> (i32, i32, i32) {
    %c0_i32 = arith.constant 0 : i32
    %c0_i32_0 = arith.constant 0 : i32
    %c0_i32_1 = arith.constant 0 : i32
    return %arg0, %c0_i32, %c0_i32_0 : i32, i32, i32
  }
  func.func @transform_8(%arg0: i32) -> (i32, i32, i32) {
    %c0_i32 = arith.constant 0 : i32
    %c0_i32_0 = arith.constant 0 : i32
    %c0_i32_1 = arith.constant 0 : i32
    return %arg0, %c0_i32, %c0_i32_0 : i32, i32, i32
  }
  func.func @transform_9(%arg0: i32) -> (i32, i32) {
    %c0_i32 = arith.constant 0 : i32
    %c0_i32_0 = arith.constant 0 : i32
    %c0_i32_1 = arith.constant 0 : i32
    return %c0_i32, %c0_i32_0 : i32, i32
  }
  func.func @transform_10(%arg0: i32) -> (i32, i32) {
    %c0_i32 = arith.constant 0 : i32
    %c0_i32_0 = arith.constant 0 : i32
    %c0_i32_1 = arith.constant 0 : i32
    return %c0_i32, %c0_i32_0 : i32, i32
  }
  func.func @transform_11(%arg0: i32) -> (i32, i32) {
    %c0_i32 = arith.constant 0 : i32
    %c0_i32_0 = arith.constant 0 : i32
    %c0_i32_1 = arith.constant 0 : i32
    return %c0_i32, %c0_i32_0 : i32, i32
  }
  func.func @transform_12(%arg0: i32) -> (i32, i32) {
    %c0_i32 = arith.constant 0 : i32
    %c0_i32_0 = arith.constant 0 : i32
    %c0_i32_1 = arith.constant 0 : i32
    return %c0_i32, %c0_i32_0 : i32, i32
  }
  func.func @transform_13(%arg0: i32) -> (i32, i32) {
    %c0_i32 = arith.constant 0 : i32
    %c0_i32_0 = arith.constant 0 : i32
    %c0_i32_1 = arith.constant 0 : i32
    return %c0_i32, %c0_i32_0 : i32, i32
  }
  func.func @transform_14(%arg0: i32) -> (i32, i32) {
    %c0_i32 = arith.constant 0 : i32
    %c0_i32_0 = arith.constant 0 : i32
    %c0_i32_1 = arith.constant 0 : i32
    return %c0_i32, %c0_i32_0 : i32, i32
  }
  func.func @transform_15(%arg0: i32) -> (i32, i32) {
    %c0_i32 = arith.constant 0 : i32
    %c0_i32_0 = arith.constant 0 : i32
    %c0_i32_1 = arith.constant 0 : i32
    return %c0_i32, %c0_i32_0 : i32, i32
  }
  func.func @transform_16(%arg0: i32) -> (i32, i32) {
    %c0_i32 = arith.constant 0 : i32
    %c0_i32_0 = arith.constant 0 : i32
    %c0_i32_1 = arith.constant 0 : i32
    return %c0_i32, %c0_i32_0 : i32, i32
  }
  func.func @transform_17(%arg0: i32) -> (i32, i32) {
    %c0_i32 = arith.constant 0 : i32
    %c0_i32_0 = arith.constant 0 : i32
    %c0_i32_1 = arith.constant 0 : i32
    return %c0_i32, %c0_i32_0 : i32, i32
  }
  func.func @transform_18(%arg0: i32) -> (i32, i32) {
    %c0_i32 = arith.constant 0 : i32
    %c0_i32_0 = arith.constant 0 : i32
    %c0_i32_1 = arith.constant 0 : i32
    return %c0_i32, %c0_i32_0 : i32, i32
  }
  func.func @transform_19(%arg0: i32) -> (i32, i32) {
    %c0_i32 = arith.constant 0 : i32
    %c0_i32_0 = arith.constant 0 : i32
    %c0_i32_1 = arith.constant 0 : i32
    return %c0_i32, %c0_i32_0 : i32, i32
  }
  func.func @transform_20(%arg0: i32) -> (i32, i32) {
    %c0_i32 = arith.constant 0 : i32
    %c0_i32_0 = arith.constant 0 : i32
    %c0_i32_1 = arith.constant 0 : i32
    return %c0_i32, %c0_i32_0 : i32, i32
  }
  func.func @transform_21(%arg0: i32) -> (i32, i32) {
    %c0_i32 = arith.constant 0 : i32
    %c0_i32_0 = arith.constant 0 : i32
    %c0_i32_1 = arith.constant 0 : i32
    return %c0_i32, %c0_i32_0 : i32, i32
  }
  func.func @transform_22(%arg0: i32) -> (i32, i32) {
    %c0_i32 = arith.constant 0 : i32
    %c0_i32_0 = arith.constant 0 : i32
    %c0_i32_1 = arith.constant 0 : i32
    return %c0_i32, %c0_i32_0 : i32, i32
  }
  func.func @transform_23(%arg0: i32) -> (i32, i32) {
    %c0_i32 = arith.constant 0 : i32
    %c0_i32_0 = arith.constant 0 : i32
    %c0_i32_1 = arith.constant 0 : i32
    return %c0_i32, %c0_i32_0 : i32, i32
  }
  func.func @transform_24(%arg0: i32) -> (i32, i32) {
    %c0_i32 = arith.constant 0 : i32
    %c0_i32_0 = arith.constant 0 : i32
    %c0_i32_1 = arith.constant 0 : i32
    return %c0_i32, %c0_i32_0 : i32, i32
  }
  func.func @transform_25(%arg0: i32) -> (i32, i32) {
    %c0_i32 = arith.constant 0 : i32
    %c0_i32_0 = arith.constant 0 : i32
    %c0_i32_1 = arith.constant 0 : i32
    return %c0_i32, %c0_i32_0 : i32, i32
  }
  func.func @transform_26(%arg0: i32) -> (i32, i32) {
    %c0_i32 = arith.constant 0 : i32
    %c0_i32_0 = arith.constant 0 : i32
    %c0_i32_1 = arith.constant 0 : i32
    return %c0_i32, %c0_i32_0 : i32, i32
  }
  func.func @transform_27(%arg0: i32) -> (i32, i32, i32) {
    %c0_i32 = arith.constant 0 : i32
    %c0_i32_0 = arith.constant 0 : i32
    %c0_i32_1 = arith.constant 0 : i32
    return %arg0, %c0_i32, %c0_i32_0 : i32, i32, i32
  }
  func.func @transform_28(%arg0: i32) -> (i32, i32, i32) {
    %c0_i32 = arith.constant 0 : i32
    %c0_i32_0 = arith.constant 0 : i32
    %c0_i32_1 = arith.constant 0 : i32
    return %arg0, %c0_i32, %c0_i32_0 : i32, i32, i32
  }
  func.func @transform_29(%arg0: i32) -> (i32, i32, i32) {
    %c0_i32 = arith.constant 0 : i32
    %c0_i32_0 = arith.constant 0 : i32
    %c0_i32_1 = arith.constant 0 : i32
    return %arg0, %c0_i32, %c0_i32_0 : i32, i32, i32
  }
  func.func @transform_30(%arg0: i32) -> (i32, i32, i32) {
    %c0_i32 = arith.constant 0 : i32
    %c0_i32_0 = arith.constant 0 : i32
    %c0_i32_1 = arith.constant 0 : i32
    return %arg0, %c0_i32, %c0_i32_0 : i32, i32, i32
  }
}

</mosaic_0001>

<llo_original>
// kernel: stam_cell_forward.1
$region0: #{stam_cell_forward.1}
  #allocation0 [shape = 'u32[]', space=smem, size = 0x4, offset = 0x4, fixed_abs, tag = 'smem constant byte address 0x4 - core index']
  #allocation1 [shape = 'u32[144,128]{1,0:T(1,128)}', space=vmem, size = 0x12000, scoped, tag = 'internal scratch']
  #allocation2 [shape = 'f32[8,512]{1,0:T(8,128)}', space=vmem, size = 0x4000, scoped, tag = 'scratch operand']
  #allocation3 [shape = 'f32[216,256]{1,0:T(8,128)}', space=vmem, size = 0x36000, scoped, tag = 'scratch operand']
  #allocation4 [shape = 'f32[56,256]{1,0:T(8,128)}', space=vmem, size = 0xe000, scoped, tag = 'scratch operand']
  #allocation5 [shape = 'f32[32,256]{1,0:T(8,128)}', space=vmem, size = 0x8000, scoped, tag = 'scratch operand']
  #allocation6 [shape = 'f32[24,256]{1,0:T(8,128)}', space=vmem, size = 0x6000, scoped, tag = 'scratch operand']
  %s0 = inlined_call_operand.smem [shape: u32[31], index: -1, kind: input, shape index: {}]
  %s1 = sld [smem:[%s0]]
  %s2 = scalar_lea.smem %s0, 1
  %s3 = sld [smem:[%s2]]
  %s4 = scalar_lea.smem %s0, 2
  %s5 = sld [smem:[%s4]]
  %s6 = scalar_lea.smem %s0, 3
  %s7 = sld [smem:[%s6]]
  %s8 = scalar_lea.smem %s0, 4
  %s9 = sld [smem:[%s8]]
  %s10 = scalar_lea.smem %s0, 5
  %s11 = sld [smem:[%s10]]
  %s12 = scalar_lea.smem %s0, 6
  %s13 = sld [smem:[%s12]]
  %s14 = scalar_lea.smem %s0, 7
  %s15 = sld [smem:[%s14]]
  %s16 = scalar_lea.smem %s0, 8
  %s17 = sld [smem:[%s16]]
  %s18 = scalar_lea.smem %s0, 9
  %s19 = sld [smem:[%s18]]
  %s20 = scalar_lea.smem %s0, 10
  %s21 = sld [smem:[%s20]]
  %s22 = scalar_lea.smem %s0, 11
  %s23 = sld [smem:[%s22]]
  %s24 = scalar_lea.smem %s0, 12
  %s25 = sld [smem:[%s24]]
  %s26 = scalar_lea.smem %s0, 13
  %s27 = sld [smem:[%s26]]
  %s28 = scalar_lea.smem %s0, 14
  %s29 = sld [smem:[%s28]]
  %s30 = scalar_lea.smem %s0, 15
  %s31 = sld [smem:[%s30]]
  %s32 = scalar_lea.smem %s0, 16
  %s33 = sld [smem:[%s32]]
  %s34 = scalar_lea.smem %s0, 17
  %s35 = sld [smem:[%s34]]
  %s36 = scalar_lea.smem %s0, 18
  %s37 = sld [smem:[%s36]]
  %s38 = scalar_lea.smem %s0, 19
  %s39 = sld [smem:[%s38]]
  %s40 = scalar_lea.smem %s0, 20
  %s41 = sld [smem:[%s40]]
  %s42 = scalar_lea.smem %s0, 21
  %s43 = sld [smem:[%s42]]
  %s44 = scalar_lea.smem %s0, 22
  %s45 = sld [smem:[%s44]]
  %s46 = scalar_lea.smem %s0, 23
  %s47 = sld [smem:[%s46]]
  %s48 = scalar_lea.smem %s0, 24
  %s49 = sld [smem:[%s48]]
  %s50 = scalar_lea.smem %s0, 25
  %s51 = sld [smem:[%s50]]
  %s52 = scalar_lea.smem %s0, 26
  %s53 = sld [smem:[%s52]]
  %s54 = scalar_lea.smem %s0, 27
  %s55 = sld [smem:[%s54]]
  %s56 = scalar_lea.smem %s0, 28
  %s57 = sld [smem:[%s56]]
  %s58 = scalar_lea.smem %s0, 29
  %s59 = sld [smem:[%s58]]
  %s60 = scalar_lea.smem %s0, 30
  %s61 = sld [smem:[%s60]]
  %62 = xla_tuple %s55, %s57, %s59, %s61
  %s63 = sld [smem:[#allocation0]]
  $region165: #{stam_cell_forward.1} parent=0
    _
  %s65 = ssub.s32 1, %s63
  %s66 = scalar_select 0, %s65, %s63
  loop: start=0, step=1, limit=4
  $region2: #{stam_cell_forward.1} parent=0 // loop_pre_header
    _
  $region3: #{stam_cell_forward.1} parent=0 // loop_header
    %s68 = sphi 0, %s72
    %p69 = scmp.ge.s32.totalorder %s68, 4
    %s78 = sphi 0, %s80
    %s81 = sphi 0, %s78
    %s82 = sphi 0, %s81
    %s98 = sphi 0, %s82
    %s104 = sphi 0, %s106
    %s107 = sphi 0, %s104
    %s108 = sphi 0, %s107
    %s124 = sphi 0, %s108
    %s130 = sphi 0, %s132
    %s133 = sphi 0, %s130
    %s134 = sphi 0, %s133
    %s150 = sphi 0, %s134
    %s156 = sphi 0, %s158
    %s159 = sphi 0, %s156
    %s160 = sphi 0, %s159
    %s176 = sphi 0, %s160
    %s182 = sphi 0, %s184
    %s185 = sphi 0, %s182
    %s186 = sphi 0, %s185
    %s202 = sphi 0, %s186
    %s208 = sphi 0, %s210
    %s211 = sphi 0, %s208
    %s212 = sphi 0, %s211
    %s228 = sphi 0, %s212
    %s234 = sphi 0, %s236
    %s237 = sphi 0, %s234
    %s238 = sphi 0, %s237
    %s254 = sphi 0, %s238
    %s260 = sphi 0, %s262
    %s263 = sphi 0, %s260
    %s264 = sphi 0, %s263
    %s280 = sphi 0, %s264
    %s286 = sphi 0, %s288
    %s289 = sphi 0, %s286
    %s290 = sphi 0, %s289
    %s306 = sphi 0, %s290
    %s310 = sphi 0, %s310
    %s312 = sphi 0, %s310
    %s313 = sphi 0, %s312
    %s327 = sphi 0, %s313
    %s331 = sphi 0, %s331
    %s333 = sphi 0, %s331
    %s334 = sphi 0, %s333
    %s348 = sphi 0, %s334
    %s352 = sphi 0, %s352
    %s354 = sphi 0, %s352
    %s355 = sphi 0, %s354
    %s369 = sphi 0, %s355
    %s373 = sphi 0, %s373
    %s375 = sphi 0, %s373
    %s376 = sphi 0, %s375
    %s390 = sphi 0, %s376
    %s394 = sphi 0, %s394
    %s396 = sphi 0, %s394
    %s397 = sphi 0, %s396
    %s411 = sphi 0, %s397
    %s415 = sphi 0, %s415
    %s417 = sphi 0, %s415
    %s418 = sphi 0, %s417
    %s432 = sphi 0, %s418
    %s436 = sphi 0, %s436
    %s438 = sphi 0, %s436
    %s439 = sphi 0, %s438
    %s453 = sphi 0, %s439
    %s457 = sphi 0, %s457
    %s459 = sphi 0, %s457
    %s460 = sphi 0, %s459
    %s474 = sphi 0, %s460
    %s478 = sphi 0, %s478
    %s480 = sphi 0, %s478
    %s481 = sphi 0, %s480
    %s495 = sphi 0, %s481
    %s499 = sphi 0, %s499
    %s501 = sphi 0, %s499
    %s502 = sphi 0, %s501
    %s516 = sphi 0, %s502
    %s520 = sphi 0, %s520
    %s522 = sphi 0, %s520
    %s523 = sphi 0, %s522
    %s537 = sphi 0, %s523
    %s541 = sphi 0, %s541
    %s543 = sphi 0, %s541
    %s544 = sphi 0, %s543
    %s558 = sphi 0, %s544
    %s562 = sphi 0, %s562
    %s564 = sphi 0, %s562
    %s565 = sphi 0, %s564
    %s579 = sphi 0, %s565
    %s583 = sphi 0, %s583
    %s585 = sphi 0, %s583
    %s586 = sphi 0, %s585
    %s600 = sphi 0, %s586
    %s604 = sphi 0, %s604
    %s606 = sphi 0, %s604
    %s607 = sphi 0, %s606
    %s621 = sphi 0, %s607
    %s625 = sphi 0, %s625
    %s627 = sphi 0, %s625
    %s628 = sphi 0, %s627
    %s642 = sphi 0, %s628
    %s646 = sphi 0, %s646
    %s648 = sphi 0, %s646
    %s649 = sphi 0, %s648
    %s663 = sphi 0, %s649
    %s667 = sphi 0, %s667
    %s669 = sphi 0, %s667
    %s670 = sphi 0, %s669
    %s684 = sphi 0, %s670
    %s690 = sphi 0, %s692
    %s693 = sphi 0, %s690
    %s694 = sphi 0, %s693
    %s710 = sphi 0, %s694
    %s716 = sphi 0, %s718
    %s719 = sphi 0, %s716
    %s720 = sphi 0, %s719
    %s736 = sphi 0, %s720
    %s742 = sphi 0, %s744
    %s745 = sphi 0, %s742
    %s746 = sphi 0, %s745
    %s762 = sphi 0, %s746
    %s768 = sphi 0, %s770
    %s771 = sphi 0, %s768
    %s772 = sphi 0, %s771
    %s788 = sphi 0, %s772
  $region4: #{stam_cell_forward.1} parent=0 // loop_header_branch
    %71 = sbr.rel (%p69) target = $region8
  $region5: #{stam_cell_forward.1} parent=0 // loop_body
    %s73 = ssub.s32 %s68, 1
    %s74 = ssub.s32 %s68, 2
    %s75 = sadd.s32 %s68, 1
    %s76 = ssub.s32 %s68, %s75
    %p77 = scmp.eq.s32.totalorder %s76, 0
    %s79 = sadd.s32 %s78, 1
    %s80 = scalar_select %p77, %s78, %s79
    %p83 = pneg %p77
    %p84 = scmp.eq.s32.totalorder %s68, 1
    %p85 = por %p83, %p84
    %p86 = scmp.ne.s32.totalorder %s78, %s81
    %p87 = scmp.eq.s32.totalorder %s68, 0
    %p88 = por %p86, %p87
    %p89 = scmp.ne.s32.totalorder %s78, %s81
    %p90 = scmp.eq.s32.totalorder %s73, 1
    %p91 = por %p89, %p90
    %p92 = scmp.ne.s32.totalorder %s81, %s82
    %p93 = scmp.eq.s32.totalorder %s73, 0
    %p94 = por %p92, %p93
    %p95 = scmp.ne.s32.totalorder %s81, %s82
    %p96 = scmp.eq.s32.totalorder %s74, 1
    %p97 = por %p95, %p96
    %p99 = scmp.ne.s32.totalorder %s82, %s98
    %p100 = scmp.eq.s32.totalorder %s74, 0
    %p101 = por %p99, %p100
    %s102 = ssub.s32 %s68, %s75
    %p103 = scmp.eq.s32.totalorder %s102, 0
    %s105 = sadd.s32 %s104, 1
    %s106 = scalar_select %p103, %s104, %s105
    %p109 = pneg %p103
    %p110 = scmp.eq.s32.totalorder %s68, 1
    %p111 = por %p109, %p110
    %p112 = scmp.ne.s32.totalorder %s104, %s107
    %p113 = scmp.eq.s32.totalorder %s68, 0
    %p114 = por %p112, %p113
    %p115 = scmp.ne.s32.totalorder %s104, %s107
    %p116 = scmp.eq.s32.totalorder %s73, 1
    %p117 = por %p115, %p116
    %p118 = scmp.ne.s32.totalorder %s107, %s108
    %p119 = scmp.eq.s32.totalorder %s73, 0
    %p120 = por %p118, %p119
    %p121 = scmp.ne.s32.totalorder %s107, %s108
    %p122 = scmp.eq.s32.totalorder %s74, 1
    %p123 = por %p121, %p122
    %p125 = scmp.ne.s32.totalorder %s108, %s124
    %p126 = scmp.eq.s32.totalorder %s74, 0
    %p127 = por %p125, %p126
    %s128 = ssub.s32 %s68, %s75
    %p129 = scmp.eq.s32.totalorder %s128, 0
    %s131 = sadd.s32 %s130, 1
    %s132 = scalar_select %p129, %s130, %s131
    %p135 = pneg %p129
    %p136 = scmp.eq.s32.totalorder %s68, 1
    %p137 = por %p135, %p136
    %p138 = scmp.ne.s32.totalorder %s130, %s133
    %p139 = scmp.eq.s32.totalorder %s68, 0
    %p140 = por %p138, %p139
    %p141 = scmp.ne.s32.totalorder %s130, %s133
    %p142 = scmp.eq.s32.totalorder %s73, 1
    %p143 = por %p141, %p142
    %p144 = scmp.ne.s32.totalorder %s133, %s134
    %p145 = scmp.eq.s32.totalorder %s73, 0
    %p146 = por %p144, %p145
    %p147 = scmp.ne.s32.totalorder %s133, %s134
    %p148 = scmp.eq.s32.totalorder %s74, 1
    %p149 = por %p147, %p148
    %p151 = scmp.ne.s32.totalorder %s134, %s150
    %p152 = scmp.eq.s32.totalorder %s74, 0
    %p153 = por %p151, %p152
    %s154 = ssub.s32 %s68, %s75
    %p155 = scmp.eq.s32.totalorder %s154, 0
    %s157 = sadd.s32 %s156, 1
    %s158 = scalar_select %p155, %s156, %s157
    %p161 = pneg %p155
    %p162 = scmp.eq.s32.totalorder %s68, 1
    %p163 = por %p161, %p162
    %p164 = scmp.ne.s32.totalorder %s156, %s159
    %p165 = scmp.eq.s32.totalorder %s68, 0
    %p166 = por %p164, %p165
    %p167 = scmp.ne.s32.totalorder %s156, %s159
    %p168 = scmp.eq.s32.totalorder %s73, 1
    %p169 = por %p167, %p168
    %p170 = scmp.ne.s32.totalorder %s159, %s160
    %p171 = scmp.eq.s32.totalorder %s73, 0
    %p172 = por %p170, %p171
    %p173 = scmp.ne.s32.totalorder %s159, %s160
    %p174 = scmp.eq.s32.totalorder %s74, 1
    %p175 = por %p173, %p174
    %p177 = scmp.ne.s32.totalorder %s160, %s176
    %p178 = scmp.eq.s32.totalorder %s74, 0
    %p179 = por %p177, %p178
    %s180 = ssub.s32 %s68, %s75
    %p181 = scmp.eq.s32.totalorder %s180, 0
    %s183 = sadd.s32 %s182, 1
    %s184 = scalar_select %p181, %s182, %s183
    %p187 = pneg %p181
    %p188 = scmp.eq.s32.totalorder %s68, 1
    %p189 = por %p187, %p188
    %p190 = scmp.ne.s32.totalorder %s182, %s185
    %p191 = scmp.eq.s32.totalorder %s68, 0
    %p192 = por %p190, %p191
    %p193 = scmp.ne.s32.totalorder %s182, %s185
    %p194 = scmp.eq.s32.totalorder %s73, 1
    %p195 = por %p193, %p194
    %p196 = scmp.ne.s32.totalorder %s185, %s186
    %p197 = scmp.eq.s32.totalorder %s73, 0
    %p198 = por %p196, %p197
    %p199 = scmp.ne.s32.totalorder %s185, %s186
    %p200 = scmp.eq.s32.totalorder %s74, 1
    %p201 = por %p199, %p200
    %p203 = scmp.ne.s32.totalorder %s186, %s202
    %p204 = scmp.eq.s32.totalorder %s74, 0
    %p205 = por %p203, %p204
    %s206 = ssub.s32 %s68, %s75
    %p207 = scmp.eq.s32.totalorder %s206, 0
    %s209 = sadd.s32 %s208, 1
    %s210 = scalar_select %p207, %s208, %s209
    %p213 = pneg %p207
    %p214 = scmp.eq.s32.totalorder %s68, 1
    %p215 = por %p213, %p214
    %p216 = scmp.ne.s32.totalorder %s208, %s211
    %p217 = scmp.eq.s32.totalorder %s68, 0
    %p218 = por %p216, %p217
    %p219 = scmp.ne.s32.totalorder %s208, %s211
    %p220 = scmp.eq.s32.totalorder %s73, 1
    %p221 = por %p219, %p220
    %p222 = scmp.ne.s32.totalorder %s211, %s212
    %p223 = scmp.eq.s32.totalorder %s73, 0
    %p224 = por %p222, %p223
    %p225 = scmp.ne.s32.totalorder %s211, %s212
    %p226 = scmp.eq.s32.totalorder %s74, 1
    %p227 = por %p225, %p226
    %p229 = scmp.ne.s32.totalorder %s212, %s228
    %p230 = scmp.eq.s32.totalorder %s74, 0
    %p231 = por %p229, %p230
    %s232 = ssub.s32 %s68, %s75
    %p233 = scmp.eq.s32.totalorder %s232, 0
    %s235 = sadd.s32 %s234, 1
    %s236 = scalar_select %p233, %s234, %s235
    %p239 = pneg %p233
    %p240 = scmp.eq.s32.totalorder %s68, 1
    %p241 = por %p239, %p240
    %p242 = scmp.ne.s32.totalorder %s234, %s237
    %p243 = scmp.eq.s32.totalorder %s68, 0
    %p244 = por %p242, %p243
    %p245 = scmp.ne.s32.totalorder %s234, %s237
    %p246 = scmp.eq.s32.totalorder %s73, 1
    %p247 = por %p245, %p246
    %p248 = scmp.ne.s32.totalorder %s237, %s238
    %p249 = scmp.eq.s32.totalorder %s73, 0
    %p250 = por %p248, %p249
    %p251 = scmp.ne.s32.totalorder %s237, %s238
    %p252 = scmp.eq.s32.totalorder %s74, 1
    %p253 = por %p251, %p252
    %p255 = scmp.ne.s32.totalorder %s238, %s254
    %p256 = scmp.eq.s32.totalorder %s74, 0
    %p257 = por %p255, %p256
    %s258 = ssub.s32 %s68, %s75
    %p259 = scmp.eq.s32.totalorder %s258, 0
    %s261 = sadd.s32 %s260, 1
    %s262 = scalar_select %p259, %s260, %s261
    %p265 = pneg %p259
    %p266 = scmp.eq.s32.totalorder %s68, 1
    %p267 = por %p265, %p266
    %p268 = scmp.ne.s32.totalorder %s260, %s263
    %p269 = scmp.eq.s32.totalorder %s68, 0
    %p270 = por %p268, %p269
    %p271 = scmp.ne.s32.totalorder %s260, %s263
    %p272 = scmp.eq.s32.totalorder %s73, 1
    %p273 = por %p271, %p272
    %p274 = scmp.ne.s32.totalorder %s263, %s264
    %p275 = scmp.eq.s32.totalorder %s73, 0
    %p276 = por %p274, %p275
    %p277 = scmp.ne.s32.totalorder %s263, %s264
    %p278 = scmp.eq.s32.totalorder %s74, 1
    %p279 = por %p277, %p278
    %p281 = scmp.ne.s32.totalorder %s264, %s280
    %p282 = scmp.eq.s32.totalorder %s74, 0
    %p283 = por %p281, %p282
    %s284 = ssub.s32 %s68, %s75
    %p285 = scmp.eq.s32.totalorder %s284, 0
    %s287 = sadd.s32 %s286, 1
    %s288 = scalar_select %p285, %s286, %s287
    %p291 = pneg %p285
    %p292 = scmp.eq.s32.totalorder %s68, 1
    %p293 = por %p291, %p292
    %p294 = scmp.ne.s32.totalorder %s286, %s289
    %p295 = scmp.eq.s32.totalorder %s68, 0
    %p296 = por %p294, %p295
    %p297 = scmp.ne.s32.totalorder %s286, %s289
    %p298 = scmp.eq.s32.totalorder %s73, 1
    %p299 = por %p297, %p298
    %p300 = scmp.ne.s32.totalorder %s289, %s290
    %p301 = scmp.eq.s32.totalorder %s73, 0
    %p302 = por %p300, %p301
    %p303 = scmp.ne.s32.totalorder %s289, %s290
    %p304 = scmp.eq.s32.totalorder %s74, 1
    %p305 = por %p303, %p304
    %p307 = scmp.ne.s32.totalorder %s290, %s306
    %p308 = scmp.eq.s32.totalorder %s74, 0
    %p309 = por %p307, %p308
    %s311 = sadd.s32 %s310, 1
    %p314 = scmp.eq.s32.totalorder %s68, 1
    %p315 = scmp.ne.s32.totalorder %s310, %s312
    %p316 = scmp.eq.s32.totalorder %s68, 0
    %p317 = por %p315, %p316
    %p318 = scmp.ne.s32.totalorder %s310, %s312
    %p319 = scmp.eq.s32.totalorder %s73, 1
    %p320 = por %p318, %p319
    %p321 = scmp.ne.s32.totalorder %s312, %s313
    %p322 = scmp.eq.s32.totalorder %s73, 0
    %p323 = por %p321, %p322
    %p324 = scmp.ne.s32.totalorder %s312, %s313
    %p325 = scmp.eq.s32.totalorder %s74, 1
    %p326 = por %p324, %p325
    %p328 = scmp.ne.s32.totalorder %s313, %s327
    %p329 = scmp.eq.s32.totalorder %s74, 0
    %p330 = por %p328, %p329
    %s332 = sadd.s32 %s331, 1
    %p335 = scmp.eq.s32.totalorder %s68, 1
    %p336 = scmp.ne.s32.totalorder %s331, %s333
    %p337 = scmp.eq.s32.totalorder %s68, 0
    %p338 = por %p336, %p337
    %p339 = scmp.ne.s32.totalorder %s331, %s333
    %p340 = scmp.eq.s32.totalorder %s73, 1
    %p341 = por %p339, %p340
    %p342 = scmp.ne.s32.totalorder %s333, %s334
    %p343 = scmp.eq.s32.totalorder %s73, 0
    %p344 = por %p342, %p343
    %p345 = scmp.ne.s32.totalorder %s333, %s334
    %p346 = scmp.eq.s32.totalorder %s74, 1
    %p347 = por %p345, %p346
    %p349 = scmp.ne.s32.totalorder %s334, %s348
    %p350 = scmp.eq.s32.totalorder %s74, 0
    %p351 = por %p349, %p350
    %s353 = sadd.s32 %s352, 1
    %p356 = scmp.eq.s32.totalorder %s68, 1
    %p357 = scmp.ne.s32.totalorder %s352, %s354
    %p358 = scmp.eq.s32.totalorder %s68, 0
    %p359 = por %p357, %p358
    %p360 = scmp.ne.s32.totalorder %s352, %s354
    %p361 = scmp.eq.s32.totalorder %s73, 1
    %p362 = por %p360, %p361
    %p363 = scmp.ne.s32.totalorder %s354, %s355
    %p364 = scmp.eq.s32.totalorder %s73, 0
    %p365 = por %p363, %p364
    %p366 = scmp.ne.s32.totalorder %s354, %s355
    %p367 = scmp.eq.s32.totalorder %s74, 1
    %p368 = por %p366, %p367
    %p370 = scmp.ne.s32.totalorder %s355, %s369
    %p371 = scmp.eq.s32.totalorder %s74, 0
    %p372 = por %p370, %p371
    %s374 = sadd.s32 %s373, 1
    %p377 = scmp.eq.s32.totalorder %s68, 1
    %p378 = scmp.ne.s32.totalorder %s373, %s375
    %p379 = scmp.eq.s32.totalorder %s68, 0
    %p380 = por %p378, %p379
    %p381 = scmp.ne.s32.totalorder %s373, %s375
    %p382 = scmp.eq.s32.totalorder %s73, 1
    %p383 = por %p381, %p382
    %p384 = scmp.ne.s32.totalorder %s375, %s376
    %p385 = scmp.eq.s32.totalorder %s73, 0
    %p386 = por %p384, %p385
    %p387 = scmp.ne.s32.totalorder %s375, %s376
    %p388 = scmp.eq.s32.totalorder %s74, 1
    %p389 = por %p387, %p388
    %p391 = scmp.ne.s32.totalorder %s376, %s390
    %p392 = scmp.eq.s32.totalorder %s74, 0
    %p393 = por %p391, %p392
    %s395 = sadd.s32 %s394, 1
    %p398 = scmp.eq.s32.totalorder %s68, 1
    %p399 = scmp.ne.s32.totalorder %s394, %s396
    %p400 = scmp.eq.s32.totalorder %s68, 0
    %p401 = por %p399, %p400
    %p402 = scmp.ne.s32.totalorder %s394, %s396
    %p403 = scmp.eq.s32.totalorder %s73, 1
    %p404 = por %p402, %p403
    %p405 = scmp.ne.s32.totalorder %s396, %s397
    %p406 = scmp.eq.s32.totalorder %s73, 0
    %p407 = por %p405, %p406
    %p408 = scmp.ne.s32.totalorder %s396, %s397
    %p409 = scmp.eq.s32.totalorder %s74, 1
    %p410 = por %p408, %p409
    %p412 = scmp.ne.s32.totalorder %s397, %s411
    %p413 = scmp.eq.s32.totalorder %s74, 0
    %p414 = por %p412, %p413
    %s416 = sadd.s32 %s415, 1
    %p419 = scmp.eq.s32.totalorder %s68, 1
    %p420 = scmp.ne.s32.totalorder %s415, %s417
    %p421 = scmp.eq.s32.totalorder %s68, 0
    %p422 = por %p420, %p421
    %p423 = scmp.ne.s32.totalorder %s415, %s417
    %p424 = scmp.eq.s32.totalorder %s73, 1
    %p425 = por %p423, %p424
    %p426 = scmp.ne.s32.totalorder %s417, %s418
    %p427 = scmp.eq.s32.totalorder %s73, 0
    %p428 = por %p426, %p427
    %p429 = scmp.ne.s32.totalorder %s417, %s418
    %p430 = scmp.eq.s32.totalorder %s74, 1
    %p431 = por %p429, %p430
    %p433 = scmp.ne.s32.totalorder %s418, %s432
    %p434 = scmp.eq.s32.totalorder %s74, 0
    %p435 = por %p433, %p434
    %s437 = sadd.s32 %s436, 1
    %p440 = scmp.eq.s32.totalorder %s68, 1
    %p441 = scmp.ne.s32.totalorder %s436, %s438
    %p442 = scmp.eq.s32.totalorder %s68, 0
    %p443 = por %p441, %p442
    %p444 = scmp.ne.s32.totalorder %s436, %s438
    %p445 = scmp.eq.s32.totalorder %s73, 1
    %p446 = por %p444, %p445
    %p447 = scmp.ne.s32.totalorder %s438, %s439
    %p448 = scmp.eq.s32.totalorder %s73, 0
    %p449 = por %p447, %p448
    %p450 = scmp.ne.s32.totalorder %s438, %s439
    %p451 = scmp.eq.s32.totalorder %s74, 1
    %p452 = por %p450, %p451
    %p454 = scmp.ne.s32.totalorder %s439, %s453
    %p455 = scmp.eq.s32.totalorder %s74, 0
    %p456 = por %p454, %p455
    %s458 = sadd.s32 %s457, 1
    %p461 = scmp.eq.s32.totalorder %s68, 1
    %p462 = scmp.ne.s32.totalorder %s457, %s459
    %p463 = scmp.eq.s32.totalorder %s68, 0
    %p464 = por %p462, %p463
    %p465 = scmp.ne.s32.totalorder %s457, %s459
    %p466 = scmp.eq.s32.totalorder %s73, 1
    %p467 = por %p465, %p466
    %p468 = scmp.ne.s32.totalorder %s459, %s460
    %p469 = scmp.eq.s32.totalorder %s73, 0
    %p470 = por %p468, %p469
    %p471 = scmp.ne.s32.totalorder %s459, %s460
    %p472 = scmp.eq.s32.totalorder %s74, 1
    %p473 = por %p471, %p472
    %p475 = scmp.ne.s32.totalorder %s460, %s474
    %p476 = scmp.eq.s32.totalorder %s74, 0
    %p477 = por %p475, %p476
    %s479 = sadd.s32 %s478, 1
    %p482 = scmp.eq.s32.totalorder %s68, 1
    %p483 = scmp.ne.s32.totalorder %s478, %s480
    %p484 = scmp.eq.s32.totalorder %s68, 0
    %p485 = por %p483, %p484
    %p486 = scmp.ne.s32.totalorder %s478, %s480
    %p487 = scmp.eq.s32.totalorder %s73, 1
    %p488 = por %p486, %p487
    %p489 = scmp.ne.s32.totalorder %s480, %s481
    %p490 = scmp.eq.s32.totalorder %s73, 0
    %p491 = por %p489, %p490
    %p492 = scmp.ne.s32.totalorder %s480, %s481
    %p493 = scmp.eq.s32.totalorder %s74, 1
    %p494 = por %p492, %p493
    %p496 = scmp.ne.s32.totalorder %s481, %s495
    %p497 = scmp.eq.s32.totalorder %s74, 0
    %p498 = por %p496, %p497
    %s500 = sadd.s32 %s499, 1
    %p503 = scmp.eq.s32.totalorder %s68, 1
    %p504 = scmp.ne.s32.totalorder %s499, %s501
    %p505 = scmp.eq.s32.totalorder %s68, 0
    %p506 = por %p504, %p505
    %p507 = scmp.ne.s32.totalorder %s499, %s501
    %p508 = scmp.eq.s32.totalorder %s73, 1
    %p509 = por %p507, %p508
    %p510 = scmp.ne.s32.totalorder %s501, %s502
    %p511 = scmp.eq.s32.totalorder %s73, 0
    %p512 = por %p510, %p511
    %p513 = scmp.ne.s32.totalorder %s501, %s502
    %p514 = scmp.eq.s32.totalorder %s74, 1
    %p515 = por %p513, %p514
    %p517 = scmp.ne.s32.totalorder %s502, %s516
    %p518 = scmp.eq.s32.totalorder %s74, 0
    %p519 = por %p517, %p518
    %s521 = sadd.s32 %s520, 1
    %p524 = scmp.eq.s32.totalorder %s68, 1
    %p525 = scmp.ne.s32.totalorder %s520, %s522
    %p526 = scmp.eq.s32.totalorder %s68, 0
    %p527 = por %p525, %p526
    %p528 = scmp.ne.s32.totalorder %s520, %s522
    %p529 = scmp.eq.s32.totalorder %s73, 1
    %p530 = por %p528, %p529
    %p531 = scmp.ne.s32.totalorder %s522, %s523
    %p532 = scmp.eq.s32.totalorder %s73, 0
    %p533 = por %p531, %p532
    %p534 = scmp.ne.s32.totalorder %s522, %s523
    %p535 = scmp.eq.s32.totalorder %s74, 1
    %p536 = por %p534, %p535
    %p538 = scmp.ne.s32.totalorder %s523, %s537
    %p539 = scmp.eq.s32.totalorder %s74, 0
    %p540 = por %p538, %p539
    %s542 = sadd.s32 %s541, 1
    %p545 = scmp.eq.s32.totalorder %s68, 1
    %p546 = scmp.ne.s32.totalorder %s541, %s543
    %p547 = scmp.eq.s32.totalorder %s68, 0
    %p548 = por %p546, %p547
    %p549 = scmp.ne.s32.totalorder %s541, %s543
    %p550 = scmp.eq.s32.totalorder %s73, 1
    %p551 = por %p549, %p550
    %p552 = scmp.ne.s32.totalorder %s543, %s544
    %p553 = scmp.eq.s32.totalorder %s73, 0
    %p554 = por %p552, %p553
    %p555 = scmp.ne.s32.totalorder %s543, %s544
    %p556 = scmp.eq.s32.totalorder %s74, 1
    %p557 = por %p555, %p556
    %p559 = scmp.ne.s32.totalorder %s544, %s558
    %p560 = scmp.eq.s32.totalorder %s74, 0
    %p561 = por %p559, %p560
    %s563 = sadd.s32 %s562, 1
    %p566 = scmp.eq.s32.totalorder %s68, 1
    %p567 = scmp.ne.s32.totalorder %s562, %s564
    %p568 = scmp.eq.s32.totalorder %s68, 0
    %p569 = por %p567, %p568
    %p570 = scmp.ne.s32.totalorder %s562, %s564
    %p571 = scmp.eq.s32.totalorder %s73, 1
    %p572 = por %p570, %p571
    %p573 = scmp.ne.s32.totalorder %s564, %s565
    %p574 = scmp.eq.s32.totalorder %s73, 0
    %p575 = por %p573, %p574
    %p576 = scmp.ne.s32.totalorder %s564, %s565
    %p577 = scmp.eq.s32.totalorder %s74, 1
    %p578 = por %p576, %p577
    %p580 = scmp.ne.s32.totalorder %s565, %s579
    %p581 = scmp.eq.s32.totalorder %s74, 0
    %p582 = por %p580, %p581
    %s584 = sadd.s32 %s583, 1
    %p587 = scmp.eq.s32.totalorder %s68, 1
    %p588 = scmp.ne.s32.totalorder %s583, %s585
    %p589 = scmp.eq.s32.totalorder %s68, 0
    %p590 = por %p588, %p589
    %p591 = scmp.ne.s32.totalorder %s583, %s585
    %p592 = scmp.eq.s32.totalorder %s73, 1
    %p593 = por %p591, %p592
    %p594 = scmp.ne.s32.totalorder %s585, %s586
    %p595 = scmp.eq.s32.totalorder %s73, 0
    %p596 = por %p594, %p595
    %p597 = scmp.ne.s32.totalorder %s585, %s586
    %p598 = scmp.eq.s32.totalorder %s74, 1
    %p599 = por %p597, %p598
    %p601 = scmp.ne.s32.totalorder %s586, %s600
    %p602 = scmp.eq.s32.totalorder %s74, 0
    %p603 = por %p601, %p602
    %s605 = sadd.s32 %s604, 1
    %p608 = scmp.eq.s32.totalorder %s68, 1
    %p609 = scmp.ne.s32.totalorder %s604, %s606
    %p610 = scmp.eq.s32.totalorder %s68, 0
    %p611 = por %p609, %p610
    %p612 = scmp.ne.s32.totalorder %s604, %s606
    %p613 = scmp.eq.s32.totalorder %s73, 1
    %p614 = por %p612, %p613
    %p615 = scmp.ne.s32.totalorder %s606, %s607
    %p616 = scmp.eq.s32.totalorder %s73, 0
    %p617 = por %p615, %p616
    %p618 = scmp.ne.s32.totalorder %s606, %s607
    %p619 = scmp.eq.s32.totalorder %s74, 1
    %p620 = por %p618, %p619
    %p622 = scmp.ne.s32.totalorder %s607, %s621
    %p623 = scmp.eq.s32.totalorder %s74, 0
    %p624 = por %p622, %p623
    %s626 = sadd.s32 %s625, 1
    %p629 = scmp.eq.s32.totalorder %s68, 1
    %p630 = scmp.ne.s32.totalorder %s625, %s627
    %p631 = scmp.eq.s32.totalorder %s68, 0
    %p632 = por %p630, %p631
    %p633 = scmp.ne.s32.totalorder %s625, %s627
    %p634 = scmp.eq.s32.totalorder %s73, 1
    %p635 = por %p633, %p634
    %p636 = scmp.ne.s32.totalorder %s627, %s628
    %p637 = scmp.eq.s32.totalorder %s73, 0
    %p638 = por %p636, %p637
    %p639 = scmp.ne.s32.totalorder %s627, %s628
    %p640 = scmp.eq.s32.totalorder %s74, 1
    %p641 = por %p639, %p640
    %p643 = scmp.ne.s32.totalorder %s628, %s642
    %p644 = scmp.eq.s32.totalorder %s74, 0
    %p645 = por %p643, %p644
    %s647 = sadd.s32 %s646, 1
    %p650 = scmp.eq.s32.totalorder %s68, 1
    %p651 = scmp.ne.s32.totalorder %s646, %s648
    %p652 = scmp.eq.s32.totalorder %s68, 0
    %p653 = por %p651, %p652
    %p654 = scmp.ne.s32.totalorder %s646, %s648
    %p655 = scmp.eq.s32.totalorder %s73, 1
    %p656 = por %p654, %p655
    %p657 = scmp.ne.s32.totalorder %s648, %s649
    %p658 = scmp.eq.s32.totalorder %s73, 0
    %p659 = por %p657, %p658
    %p660 = scmp.ne.s32.totalorder %s648, %s649
    %p661 = scmp.eq.s32.totalorder %s74, 1
    %p662 = por %p660, %p661
    %p664 = scmp.ne.s32.totalorder %s649, %s663
    %p665 = scmp.eq.s32.totalorder %s74, 0
    %p666 = por %p664, %p665
    %s668 = sadd.s32 %s667, 1
    %p671 = scmp.eq.s32.totalorder %s68, 1
    %p672 = scmp.ne.s32.totalorder %s667, %s669
    %p673 = scmp.eq.s32.totalorder %s68, 0
    %p674 = por %p672, %p673
    %p675 = scmp.ne.s32.totalorder %s667, %s669
    %p676 = scmp.eq.s32.totalorder %s73, 1
    %p677 = por %p675, %p676
    %p678 = scmp.ne.s32.totalorder %s669, %s670
    %p679 = scmp.eq.s32.totalorder %s73, 0
    %p680 = por %p678, %p679
    %p681 = scmp.ne.s32.totalorder %s669, %s670
    %p682 = scmp.eq.s32.totalorder %s74, 1
    %p683 = por %p681, %p682
    %p685 = scmp.ne.s32.totalorder %s670, %s684
    %p686 = scmp.eq.s32.totalorder %s74, 0
    %p687 = por %p685, %p686
    %s688 = ssub.s32 %s68, %s75
    %p689 = scmp.eq.s32.totalorder %s688, 0
    %s691 = sadd.s32 %s690, 1
    %s692 = scalar_select %p689, %s690, %s691
    %p695 = pneg %p689
    %p696 = scmp.eq.s32.totalorder %s68, 1
    %p697 = por %p695, %p696
    %p698 = scmp.ne.s32.totalorder %s690, %s693
    %p699 = scmp.eq.s32.totalorder %s68, 0
    %p700 = por %p698, %p699
    %p701 = scmp.ne.s32.totalorder %s690, %s693
    %p702 = scmp.eq.s32.totalorder %s73, 1
    %p703 = por %p701, %p702
    %p704 = scmp.ne.s32.totalorder %s693, %s694
    %p705 = scmp.eq.s32.totalorder %s73, 0
    %p706 = por %p704, %p705
    %p707 = scmp.ne.s32.totalorder %s693, %s694
    %p708 = scmp.eq.s32.totalorder %s74, 1
    %p709 = por %p707, %p708
    %p711 = scmp.ne.s32.totalorder %s694, %s710
    %p712 = scmp.eq.s32.totalorder %s74, 0
    %p713 = por %p711, %p712
    %s714 = ssub.s32 %s68, %s75
    %p715 = scmp.eq.s32.totalorder %s714, 0
    %s717 = sadd.s32 %s716, 1
    %s718 = scalar_select %p715, %s716, %s717
    %p721 = pneg %p715
    %p722 = scmp.eq.s32.totalorder %s68, 1
    %p723 = por %p721, %p722
    %p724 = scmp.ne.s32.totalorder %s716, %s719
    %p725 = scmp.eq.s32.totalorder %s68, 0
    %p726 = por %p724, %p725
    %p727 = scmp.ne.s32.totalorder %s716, %s719
    %p728 = scmp.eq.s32.totalorder %s73, 1
    %p729 = por %p727, %p728
    %p730 = scmp.ne.s32.totalorder %s719, %s720
    %p731 = scmp.eq.s32.totalorder %s73, 0
    %p732 = por %p730, %p731
    %p733 = scmp.ne.s32.totalorder %s719, %s720
    %p734 = scmp.eq.s32.totalorder %s74, 1
    %p735 = por %p733, %p734
    %p737 = scmp.ne.s32.totalorder %s720, %s736
    %p738 = scmp.eq.s32.totalorder %s74, 0
    %p739 = por %p737, %p738
    %s740 = ssub.s32 %s68, %s75
    %p741 = scmp.eq.s32.totalorder %s740, 0
    %s743 = sadd.s32 %s742, 1
    %s744 = scalar_select %p741, %s742, %s743
    %p747 = pneg %p741
    %p748 = scmp.eq.s32.totalorder %s68, 1
    %p749 = por %p747, %p748
    %p750 = scmp.ne.s32.totalorder %s742, %s745
    %p751 = scmp.eq.s32.totalorder %s68, 0
    %p752 = por %p750, %p751
    %p753 = scmp.ne.s32.totalorder %s742, %s745
    %p754 = scmp.eq.s32.totalorder %s73, 1
    %p755 = por %p753, %p754
    %p756 = scmp.ne.s32.totalorder %s745, %s746
    %p757 = scmp.eq.s32.totalorder %s73, 0
    %p758 = por %p756, %p757
    %p759 = scmp.ne.s32.totalorder %s745, %s746
    %p760 = scmp.eq.s32.totalorder %s74, 1
    %p761 = por %p759, %p760
    %p763 = scmp.ne.s32.totalorder %s746, %s762
    %p764 = scmp.eq.s32.totalorder %s74, 0
    %p765 = por %p763, %p764
    %s766 = ssub.s32 %s68, %s75
    %p767 = scmp.eq.s32.totalorder %s766, 0
    %s769 = sadd.s32 %s768, 1
    %s770 = scalar_select %p767, %s768, %s769
    %p773 = pneg %p767
    %p774 = scmp.eq.s32.totalorder %s68, 1
    %p775 = por %p773, %p774
    %p776 = scmp.ne.s32.totalorder %s768, %s771
    %p777 = scmp.eq.s32.totalorder %s68, 0
    %p778 = por %p776, %p777
    %p779 = scmp.ne.s32.totalorder %s768, %s771
    %p780 = scmp.eq.s32.totalorder %s73, 1
    %p781 = por %p779, %p780
    %p782 = scmp.ne.s32.totalorder %s771, %s772
    %p783 = scmp.eq.s32.totalorder %s73, 0
    %p784 = por %p782, %p783
    %p785 = scmp.ne.s32.totalorder %s771, %s772
    %p786 = scmp.eq.s32.totalorder %s74, 1
    %p787 = por %p785, %p786
    %p789 = scmp.ne.s32.totalorder %s772, %s788
    %p790 = scmp.eq.s32.totalorder %s74, 0
    %p791 = por %p789, %p790
    %p792 = scmp.le.s32.totalorder 1, %s68
    %p793 = scmp.lt.s32.totalorder %s68, 3
    %p794 = pnand %p792, %p793
    %p795 = pneg %p794
    // Predicated region
    $region9: #{stam_cell_forward.1} parent=5 // pred_check
      _
    $region10: #{stam_cell_forward.1} parent=5 // pred_check_branch
      %797 = sbr.rel (%p794) target = $region12
    $region11: #{stam_cell_forward.1} parent=5 // pred_region
      %s798 = ssub.s32 %s68, 1
      // Predicated region
      $region13: #{stam_cell_forward.1} parent=11 // pred_check
        %p799 = pneg %p323
      $region14: #{stam_cell_forward.1} parent=11 // pred_check_branch
        %801 = sbr.rel (%p799) target = $region16
      $region15: #{stam_cell_forward.1} parent=11 // pred_region
        _
      $region16: #{stam_cell_forward.1} parent=11 // pred_fallthru
        _
      // Predicated region
      $region17: #{stam_cell_forward.1} parent=11 // pred_check
        %p802 = pneg %p344
      $region18: #{stam_cell_forward.1} parent=11 // pred_check_branch
        %804 = sbr.rel (%p802) target = $region20
      $region19: #{stam_cell_forward.1} parent=11 // pred_region
        _
      $region20: #{stam_cell_forward.1} parent=11 // pred_fallthru
        _
      // Predicated region
      $region21: #{stam_cell_forward.1} parent=11 // pred_check
        %p805 = pneg %p365
      $region22: #{stam_cell_forward.1} parent=11 // pred_check_branch
        %807 = sbr.rel (%p805) target = $region24
      $region23: #{stam_cell_forward.1} parent=11 // pred_region
        _
      $region24: #{stam_cell_forward.1} parent=11 // pred_fallthru
        _
      // Predicated region
      $region25: #{stam_cell_forward.1} parent=11 // pred_check
        %p808 = pneg %p386
      $region26: #{stam_cell_forward.1} parent=11 // pred_check_branch
        %810 = sbr.rel (%p808) target = $region28
      $region27: #{stam_cell_forward.1} parent=11 // pred_region
        _
      $region28: #{stam_cell_forward.1} parent=11 // pred_fallthru
        _
      // Predicated region
      $region29: #{stam_cell_forward.1} parent=11 // pred_check
        %p811 = pneg %p407
      $region30: #{stam_cell_forward.1} parent=11 // pred_check_branch
        %813 = sbr.rel (%p811) target = $region32
      $region31: #{stam_cell_forward.1} parent=11 // pred_region
        _
      $region32: #{stam_cell_forward.1} parent=11 // pred_fallthru
        _
      // Predicated region
      $region33: #{stam_cell_forward.1} parent=11 // pred_check
        %p814 = pneg %p428
      $region34: #{stam_cell_forward.1} parent=11 // pred_check_branch
        %816 = sbr.rel (%p814) target = $region36
      $region35: #{stam_cell_forward.1} parent=11 // pred_region
        _
      $region36: #{stam_cell_forward.1} parent=11 // pred_fallthru
        _
      // Predicated region
      $region37: #{stam_cell_forward.1} parent=11 // pred_check
        %p817 = pneg %p449
      $region38: #{stam_cell_forward.1} parent=11 // pred_check_branch
        %819 = sbr.rel (%p817) target = $region40
      $region39: #{stam_cell_forward.1} parent=11 // pred_region
        _
      $region40: #{stam_cell_forward.1} parent=11 // pred_fallthru
        _
      // Predicated region
      $region41: #{stam_cell_forward.1} parent=11 // pred_check
        %p820 = pneg %p470
      $region42: #{stam_cell_forward.1} parent=11 // pred_check_branch
        %822 = sbr.rel (%p820) target = $region44
      $region43: #{stam_cell_forward.1} parent=11 // pred_region
        _
      $region44: #{stam_cell_forward.1} parent=11 // pred_fallthru
        _
      // Predicated region
      $region45: #{stam_cell_forward.1} parent=11 // pred_check
        %p823 = pneg %p491
      $region46: #{stam_cell_forward.1} parent=11 // pred_check_branch
        %825 = sbr.rel (%p823) target = $region48
      $region47: #{stam_cell_forward.1} parent=11 // pred_region
        _
      $region48: #{stam_cell_forward.1} parent=11 // pred_fallthru
        _
      // Predicated region
      $region49: #{stam_cell_forward.1} parent=11 // pred_check
        %p826 = pneg %p512
      $region50: #{stam_cell_forward.1} parent=11 // pred_check_branch
        %828 = sbr.rel (%p826) target = $region52
      $region51: #{stam_cell_forward.1} parent=11 // pred_region
        _
      $region52: #{stam_cell_forward.1} parent=11 // pred_fallthru
        _
      // Predicated region
      $region53: #{stam_cell_forward.1} parent=11 // pred_check
        %p829 = pneg %p533
      $region54: #{stam_cell_forward.1} parent=11 // pred_check_branch
        %831 = sbr.rel (%p829) target = $region56
      $region55: #{stam_cell_forward.1} parent=11 // pred_region
        _
      $region56: #{stam_cell_forward.1} parent=11 // pred_fallthru
        _
      // Predicated region
      $region57: #{stam_cell_forward.1} parent=11 // pred_check
        %p832 = pneg %p554
      $region58: #{stam_cell_forward.1} parent=11 // pred_check_branch
        %834 = sbr.rel (%p832) target = $region60
      $region59: #{stam_cell_forward.1} parent=11 // pred_region
        _
      $region60: #{stam_cell_forward.1} parent=11 // pred_fallthru
        _
      // Predicated region
      $region61: #{stam_cell_forward.1} parent=11 // pred_check
        %p835 = pneg %p575
      $region62: #{stam_cell_forward.1} parent=11 // pred_check_branch
        %837 = sbr.rel (%p835) target = $region64
      $region63: #{stam_cell_forward.1} parent=11 // pred_region
        _
      $region64: #{stam_cell_forward.1} parent=11 // pred_fallthru
        _
      // Predicated region
      $region65: #{stam_cell_forward.1} parent=11 // pred_check
        %p838 = pneg %p596
      $region66: #{stam_cell_forward.1} parent=11 // pred_check_branch
        %840 = sbr.rel (%p838) target = $region68
      $region67: #{stam_cell_forward.1} parent=11 // pred_region
        _
      $region68: #{stam_cell_forward.1} parent=11 // pred_fallthru
        _
      // Predicated region
      $region69: #{stam_cell_forward.1} parent=11 // pred_check
        %p841 = pneg %p617
      $region70: #{stam_cell_forward.1} parent=11 // pred_check_branch
        %843 = sbr.rel (%p841) target = $region72
      $region71: #{stam_cell_forward.1} parent=11 // pred_region
        _
      $region72: #{stam_cell_forward.1} parent=11 // pred_fallthru
        _
      // Predicated region
      $region73: #{stam_cell_forward.1} parent=11 // pred_check
        %p844 = pneg %p638
      $region74: #{stam_cell_forward.1} parent=11 // pred_check_branch
        %846 = sbr.rel (%p844) target = $region76
      $region75: #{stam_cell_forward.1} parent=11 // pred_region
        _
      $region76: #{stam_cell_forward.1} parent=11 // pred_fallthru
        _
      // Predicated region
      $region77: #{stam_cell_forward.1} parent=11 // pred_check
        %p847 = pneg %p659
      $region78: #{stam_cell_forward.1} parent=11 // pred_check_branch
        %849 = sbr.rel (%p847) target = $region80
      $region79: #{stam_cell_forward.1} parent=11 // pred_region
        _
      $region80: #{stam_cell_forward.1} parent=11 // pred_fallthru
        _
      // Predicated region
      $region81: #{stam_cell_forward.1} parent=11 // pred_check
        %p850 = pneg %p680
      $region82: #{stam_cell_forward.1} parent=11 // pred_check_branch
        %852 = sbr.rel (%p850) target = $region84
      $region83: #{stam_cell_forward.1} parent=11 // pred_region
        _
      $region84: #{stam_cell_forward.1} parent=11 // pred_fallthru
        _
    $region12: #{stam_cell_forward.1} parent=5 // pred_fallthru
      _
    %p853 = scmp.lt.s32.totalorder %s68, 2
    // Predicated region
    $region85: #{stam_cell_forward.1} parent=5 // pred_check
      %p854 = pneg %p853
    $region86: #{stam_cell_forward.1} parent=5 // pred_check_branch
      %856 = sbr.rel (%p854) target = $region88
    $region87: #{stam_cell_forward.1} parent=5 // pred_region
      // Predicated region
      $region89: #{stam_cell_forward.1} parent=87 // pred_check
        %p857 = pneg %p88
      $region90: #{stam_cell_forward.1} parent=87 // pred_check_branch
        %859 = sbr.rel (%p857) target = $region92
      $region91: #{stam_cell_forward.1} parent=87 // pred_region
        %p860 = scmp.lt.s32.totalorder %s68, 1
        %s861 = scalar_select %p860, %s68, 1
        %s862 = smul.addr %s861, 2
        %s863 = smul.addr %s862, 8
        %s864 = scalar_lea.vmem %s1, %s863
      $region92: #{stam_cell_forward.1} parent=87 // pred_fallthru
        _
      // Predicated region
      $region93: #{stam_cell_forward.1} parent=87 // pred_check
        %p865 = pneg %p114
      $region94: #{stam_cell_forward.1} parent=87 // pred_check_branch
        %867 = sbr.rel (%p865) target = $region96
      $region95: #{stam_cell_forward.1} parent=87 // pred_region
        %p868 = scmp.lt.s32.totalorder %s68, 1
        %s869 = scalar_select %p868, %s68, 1
        %s870 = smul.addr %s869, 2
        %s871 = smul.addr %s870, 8
        %s872 = scalar_lea.vmem %s3, %s871
      $region96: #{stam_cell_forward.1} parent=87 // pred_fallthru
        _
      // Predicated region
      $region97: #{stam_cell_forward.1} parent=87 // pred_check
        %p873 = pneg %p140
      $region98: #{stam_cell_forward.1} parent=87 // pred_check_branch
        %875 = sbr.rel (%p873) target = $region100
      $region99: #{stam_cell_forward.1} parent=87 // pred_region
        %p876 = scmp.lt.s32.totalorder %s68, 1
        %s877 = scalar_select %p876, %s68, 1
        %s878 = smul.addr %s877, 2
        %s879 = smul.addr %s878, 8
        %s880 = scalar_lea.vmem %s5, %s879
      $region100: #{stam_cell_forward.1} parent=87 // pred_fallthru
        _
      // Predicated region
      $region101: #{stam_cell_forward.1} parent=87 // pred_check
        %p881 = pneg %p166
      $region102: #{stam_cell_forward.1} parent=87 // pred_check_branch
        %883 = sbr.rel (%p881) target = $region104
      $region103: #{stam_cell_forward.1} parent=87 // pred_region
        %p884 = scmp.lt.s32.totalorder %s68, 1
        %s885 = scalar_select %p884, %s68, 1
        %s886 = smul.addr %s885, 2
        %s887 = smul.addr %s886, 8
        %s888 = scalar_lea.vmem %s7, %s887
      $region104: #{stam_cell_forward.1} parent=87 // pred_fallthru
        _
      // Predicated region
      $region105: #{stam_cell_forward.1} parent=87 // pred_check
        %p889 = pneg %p192
      $region106: #{stam_cell_forward.1} parent=87 // pred_check_branch
        %891 = sbr.rel (%p889) target = $region108
      $region107: #{stam_cell_forward.1} parent=87 // pred_region
        %p892 = scmp.lt.s32.totalorder %s68, 1
        %s893 = scalar_select %p892, %s68, 1
        %s894 = smul.addr %s893, 2
        %s895 = smul.addr %s894, 8
        %s896 = scalar_lea.vmem %s9, %s895
      $region108: #{stam_cell_forward.1} parent=87 // pred_fallthru
        _
      // Predicated region
      $region109: #{stam_cell_forward.1} parent=87 // pred_check
        %p897 = pneg %p218
      $region110: #{stam_cell_forward.1} parent=87 // pred_check_branch
        %899 = sbr.rel (%p897) target = $region112
      $region111: #{stam_cell_forward.1} parent=87 // pred_region
        %p900 = scmp.lt.s32.totalorder %s68, 1
        %s901 = scalar_select %p900, %s68, 1
        %s902 = smul.addr %s901, 2
        %s903 = smul.addr %s902, 8
        %s904 = scalar_lea.vmem %s11, %s903
      $region112: #{stam_cell_forward.1} parent=87 // pred_fallthru
        _
      // Predicated region
      $region113: #{stam_cell_forward.1} parent=87 // pred_check
        %p905 = pneg %p244
      $region114: #{stam_cell_forward.1} parent=87 // pred_check_branch
        %907 = sbr.rel (%p905) target = $region116
      $region115: #{stam_cell_forward.1} parent=87 // pred_region
        %p908 = scmp.lt.s32.totalorder %s68, 1
        %s909 = scalar_select %p908, %s68, 1
        %s910 = smul.addr %s909, 2
        %s911 = smul.addr %s910, 8
        %s912 = scalar_lea.vmem %s13, %s911
      $region116: #{stam_cell_forward.1} parent=87 // pred_fallthru
        _
      // Predicated region
      $region117: #{stam_cell_forward.1} parent=87 // pred_check
        %p913 = pneg %p270
      $region118: #{stam_cell_forward.1} parent=87 // pred_check_branch
        %915 = sbr.rel (%p913) target = $region120
      $region119: #{stam_cell_forward.1} parent=87 // pred_region
        %p916 = scmp.lt.s32.totalorder %s68, 1
        %s917 = scalar_select %p916, %s68, 1
        %s918 = smul.addr %s917, 2
        %s919 = smul.addr %s918, 8
        %s920 = scalar_lea.vmem %s15, %s919
      $region120: #{stam_cell_forward.1} parent=87 // pred_fallthru
        _
      // Predicated region
      $region121: #{stam_cell_forward.1} parent=87 // pred_check
        %p921 = pneg %p296
      $region122: #{stam_cell_forward.1} parent=87 // pred_check_branch
        %923 = sbr.rel (%p921) target = $region124
      $region123: #{stam_cell_forward.1} parent=87 // pred_region
        %p924 = scmp.lt.s32.totalorder %s68, 1
        %s925 = scalar_select %p924, %s68, 1
        %s926 = smul.addr %s925, 2
        %s927 = smul.addr %s926, 8
        %s928 = scalar_lea.vmem %s17, %s927
      $region124: #{stam_cell_forward.1} parent=87 // pred_fallthru
        _
    $region88: #{stam_cell_forward.1} parent=5 // pred_fallthru
      _
    %p929 = scmp.le.s32.totalorder 1, %s68
    %p930 = scmp.lt.s32.totalorder %s68, 3
    %p931 = pnand %p929, %p930
    %p932 = pneg %p931
    // Predicated region
    $region125: #{stam_cell_forward.1} parent=5 // pred_check
      _
    $region126: #{stam_cell_forward.1} parent=5 // pred_check_branch
      %934 = sbr.rel (%p931) target = $region128
    $region127: #{stam_cell_forward.1} parent=5 // pred_region
      %s935 = ssub.s32 %s68, 1
      %p936 = scmp.lt.s32.totalorder %s73, 1
      %s937 = scalar_select %p936, %s73, 1
      %s938 = smul.addr %s937, 2
      %s939 = smul.addr %s938, 8
      %s940 = scalar_lea.vmem %s1, %s939
      %p941 = pneg %p94
      %p942 = pneg %p91
      %p943 = scmp.lt.s32.totalorder %s73, 1
      %s944 = scalar_select %p943, %s73, 1
      %s945 = smul.addr %s944, 2
      %s946 = smul.addr %s945, 8
      %s947 = scalar_lea.vmem %s3, %s946
      %p948 = pneg %p120
      %p949 = pneg %p117
      %p950 = scmp.lt.s32.totalorder %s73, 1
      %s951 = scalar_select %p950, %s73, 1
      %s952 = smul.addr %s951, 2
      %s953 = smul.addr %s952, 8
      %s954 = scalar_lea.vmem %s5, %s953
      %p955 = pneg %p146
      %p956 = pneg %p143
      %p957 = scmp.lt.s32.totalorder %s73, 1
      %s958 = scalar_select %p957, %s73, 1
      %s959 = smul.addr %s958, 2
      %s960 = smul.addr %s959, 8
      %s961 = scalar_lea.vmem %s7, %s960
      %p962 = pneg %p172
      %p963 = pneg %p169
      %p964 = scmp.lt.s32.totalorder %s73, 1
      %s965 = scalar_select %p964, %s73, 1
      %s966 = smul.addr %s965, 2
      %s967 = smul.addr %s966, 8
      %s968 = scalar_lea.vmem %s9, %s967
      %p969 = pneg %p198
      %p970 = pneg %p195
      %p971 = scmp.lt.s32.totalorder %s73, 1
      %s972 = scalar_select %p971, %s73, 1
      %s973 = smul.addr %s972, 2
      %s974 = smul.addr %s973, 8
      %s975 = scalar_lea.vmem %s11, %s974
      %p976 = pneg %p224
      %p977 = pneg %p221
      %p978 = scmp.lt.s32.totalorder %s73, 1
      %s979 = scalar_select %p978, %s73, 1
      %s980 = smul.addr %s979, 2
      %s981 = smul.addr %s980, 8
      %s982 = scalar_lea.vmem %s13, %s981
      %p983 = pneg %p250
      %p984 = pneg %p247
      %p985 = scmp.lt.s32.totalorder %s73, 1
      %s986 = scalar_select %p985, %s73, 1
      %s987 = smul.addr %s986, 2
      %s988 = smul.addr %s987, 8
      %s989 = scalar_lea.vmem %s15, %s988
      %p990 = pneg %p276
      %p991 = pneg %p273
      %p992 = scmp.lt.s32.totalorder %s73, 1
      %s993 = scalar_select %p992, %s73, 1
      %s994 = smul.addr %s993, 2
      %s995 = smul.addr %s994, 8
      %s996 = scalar_lea.vmem %s17, %s995
      %p997 = pneg %p302
      %p998 = pneg %p299
      %p999 = pneg %p323
      %p1000 = pneg %p320
      %p1001 = pneg %p344
      %p1002 = pneg %p341
      %p1003 = pneg %p365
      %p1004 = pneg %p362
      %p1005 = pneg %p386
      %p1006 = pneg %p383
      %p1007 = pneg %p407
      %p1008 = pneg %p404
      %p1009 = pneg %p428
      %p1010 = pneg %p425
      %p1011 = pneg %p449
      %p1012 = pneg %p446
      %p1013 = pneg %p470
      %p1014 = pneg %p467
      %p1015 = pneg %p491
      %p1016 = pneg %p488
      %p1017 = pneg %p512
      %p1018 = pneg %p509
      %p1019 = pneg %p533
      %p1020 = pneg %p530
      %p1021 = pneg %p554
      %p1022 = pneg %p551
      %p1023 = pneg %p575
      %p1024 = pneg %p572
      %p1025 = pneg %p596
      %p1026 = pneg %p593
      %p1027 = pneg %p617
      %p1028 = pneg %p614
      %p1029 = pneg %p638
      %p1030 = pneg %p635
      %p1031 = pneg %p659
      %p1032 = pneg %p656
      %p1033 = pneg %p680
      %p1034 = pneg %p677
      %p1035 = pneg %p706
      %p1036 = pneg %p703
      %p1037 = scmp.lt.s32.totalorder %s73, 1
      %s1038 = scalar_select %p1037, %s73, 1
      %s1039 = smul.addr %s1038, 2
      %s1040 = smul.addr %s1039, 8
      %s1041 = scalar_lea.vmem %s55, %s1040
      %p1042 = pneg %p732
      %p1043 = pneg %p729
      %p1044 = scmp.lt.s32.totalorder %s73, 1
      %s1045 = scalar_select %p1044, %s73, 1
      %s1046 = smul.addr %s1045, 2
      %s1047 = smul.addr %s1046, 8
      %s1048 = scalar_lea.vmem %s57, %s1047
      %p1049 = pneg %p758
      %p1050 = pneg %p755
      %p1051 = scmp.lt.s32.totalorder %s73, 1
      %s1052 = scalar_select %p1051, %s73, 1
      %s1053 = smul.addr %s1052, 2
      %s1054 = smul.addr %s1053, 8
      %s1055 = scalar_lea.vmem %s59, %s1054
      %p1056 = pneg %p784
      %p1057 = pneg %p781
      %p1058 = scmp.lt.s32.totalorder %s73, 1
      %s1059 = scalar_select %p1058, %s73, 1
      %s1060 = smul.addr %s1059, 14
      %s1061 = smul.addr %s1060, 8
      %s1062 = scalar_lea.vmem %s61, %s1061
      %p1063 = scmp.lt.s32.totalorder %s73, 1
      %s1064 = scalar_select %p1063, %s73, 1
      %s1065 = smul.addr %s1064, 2
      %s1066 = smul.addr %s1065, 8
      %s1067 = scalar_lea.vmem %s1, %s1066
      %p1068 = scmp.lt.s32.totalorder %s73, 1
      %s1069 = scalar_select %p1068, %s73, 1
      %s1070 = smul.addr %s1069, 2
      %s1071 = smul.addr %s1070, 8
      %s1072 = scalar_lea.vmem %s3, %s1071
      %p1073 = scmp.lt.s32.totalorder %s73, 1
      %s1074 = scalar_select %p1073, %s73, 1
      %s1075 = smul.addr %s1074, 2
      %s1076 = smul.addr %s1075, 8
      %s1077 = scalar_lea.vmem %s5, %s1076
      %p1078 = scmp.lt.s32.totalorder %s73, 1
      %s1079 = scalar_select %p1078, %s73, 1
      %s1080 = smul.addr %s1079, 2
      %s1081 = smul.addr %s1080, 8
      %s1082 = scalar_lea.vmem %s7, %s1081
      %p1083 = scmp.lt.s32.totalorder %s73, 1
      %s1084 = scalar_select %p1083, %s73, 1
      %s1085 = smul.addr %s1084, 2
      %s1086 = smul.addr %s1085, 8
      %s1087 = scalar_lea.vmem %s9, %s1086
      %p1088 = scmp.lt.s32.totalorder %s73, 1
      %s1089 = scalar_select %p1088, %s73, 1
      %s1090 = smul.addr %s1089, 2
      %s1091 = smul.addr %s1090, 8
      %s1092 = scalar_lea.vmem %s11, %s1091
      %p1093 = scmp.lt.s32.totalorder %s73, 1
      %s1094 = scalar_select %p1093, %s73, 1
      %s1095 = smul.addr %s1094, 2
      %s1096 = smul.addr %s1095, 8
      %s1097 = scalar_lea.vmem %s13, %s1096
      %p1098 = scmp.lt.s32.totalorder %s73, 1
      %s1099 = scalar_select %p1098, %s73, 1
      %s1100 = smul.addr %s1099, 2
      %s1101 = smul.addr %s1100, 8
      %s1102 = scalar_lea.vmem %s15, %s1101
      %p1103 = scmp.lt.s32.totalorder %s73, 1
      %s1104 = scalar_select %p1103, %s73, 1
      %s1105 = smul.addr %s1104, 2
      %s1106 = smul.addr %s1105, 8
      %s1107 = scalar_lea.vmem %s17, %s1106
      %p1108 = scmp.lt.s32.totalorder %s73, 1
      %s1109 = scalar_select %p1108, %s73, 1
      %s1110 = smul.addr %s1109, 2
      %s1111 = smul.addr %s1110, 8
      %s1112 = scalar_lea.vmem %s55, %s1111
      %p1113 = scmp.lt.s32.totalorder %s73, 1
      %s1114 = scalar_select %p1113, %s73, 1
      %s1115 = smul.addr %s1114, 2
      %s1116 = smul.addr %s1115, 8
      %s1117 = scalar_lea.vmem %s57, %s1116
      %p1118 = scmp.lt.s32.totalorder %s73, 1
      %s1119 = scalar_select %p1118, %s73, 1
      %s1120 = smul.addr %s1119, 2
      %s1121 = smul.addr %s1120, 8
      %s1122 = scalar_lea.vmem %s59, %s1121
      %p1123 = scmp.lt.s32.totalorder %s73, 1
      %s1124 = scalar_select %p1123, %s73, 1
      %s1125 = smul.addr %s1124, 14
      %s1126 = smul.addr %s1125, 8
      %s1127 = scalar_lea.vmem %s61, %s1126
      %1129 = vst [vmem:[#allocation2] sm:$0xff] 0.0
      %1130 = vst [vmem:[#allocation2 + $0x8] sm:$0xff] 0.0
      %1131 = vst [vmem:[#allocation2 + $0x10] sm:$0xff] 0.0
      %1132 = vst [vmem:[#allocation2 + $0x18] sm:$0xff] 0.0
      %v1133 = vld [vmem:[%s1067] sm:$0xff]
      %v1134 = vld [vmem:[%s1067 + $0x8] sm:$0xff]
      %1135 = vst [vmem:[#allocation2 + $0x8] sm:$0xff] %v1133
      %1136 = vst [vmem:[#allocation2 + $0x10] sm:$0xff] %v1134
      %v1137 = vld [vmem:[#allocation2] sm:$0xff]
      %v1138 = vld [vmem:[#allocation2 + $0x8] sm:$0xff]
      %v1139 = vld [vmem:[#allocation2 + $0x10] sm:$0xff]
      %v1140 = vld [vmem:[#allocation2 + $0x18] sm:$0xff]
      %v1141 = vld [vmem:[%s53] ss:$8 sm:$0x3]
      %v1143 = vlaneseq
      %v1144 = vshrl.u32 %v1143, 7
      %v1145 = vsub.s32 0, %v1144
      %v1146 = vrot.slane %v1141, %v1145
      %v1147 = vlaneseq
      %v1148 = vshrl.u32 %v1147, 7
      %v1149 = vsub.s32 1, %v1148
      %v1150 = vrot.slane %v1141, %v1149
      %1151 = vrot.lane.b32.xlu0 %v1146, 55
      %v1152 = vpop.permute.xlu0 %1151
      %1153 = vrot.lane.b32.xlu0 %v1150, 55
      %v1154 = vpop.permute.xlu0 %1153
      %vm1155 = vcmask 449536
      %v1156 = vsel %vm1155, %v1152, %v1154
      %v1160 = vmul.f32 %v1137, %v1152
      %v1161 = vmul.f32 %v1138, %v1156
      %v1162 = vmul.f32 %v1139, %v1154
      %1166 = vrot.lane.b32.xlu0 %v1160, 73
      %v1167 = vpop.permute.xlu0 %1166
      %1168 = vrot.lane.b32.xlu0 %v1161, 73
      %v1169 = vpop.permute.xlu0 %1168
      %1170 = vrot.lane.b32.xlu0 %v1162, 73
      %v1171 = vpop.permute.xlu0 %1170
      %vm1172 = vcmask 596992
      %v1173 = vsel %vm1172, %v1167, %v1169
      %v1174 = vsel %vm1172, %v1169, %v1171
      %1177 = vst [vmem:[#allocation3] sm:$0xff] %v1173
      %1178 = vst [vmem:[#allocation3 + $0x8] sm:$0xff] %v1174
      %s1179 = scalar_lea.vmem %s53, 1
      %v1180 = vld [vmem:[%s1179] ss:$8 sm:$0x3]
      %v1182 = vlaneseq
      %v1183 = vshrl.u32 %v1182, 7
      %v1184 = vsub.s32 0, %v1183
      %v1185 = vrot.slane %v1180, %v1184
      %v1186 = vlaneseq
      %v1187 = vshrl.u32 %v1186, 7
      %v1188 = vsub.s32 1, %v1187
      %v1189 = vrot.slane %v1180, %v1188
      %1190 = vrot.lane.b32.xlu0 %v1185, 56
      %v1191 = vpop.permute.xlu0 %1190
      %1192 = vrot.lane.b32.xlu0 %v1189, 56
      %v1193 = vpop.permute.xlu0 %1192
      %vm1194 = vcmask 457728
      %v1195 = vsel %vm1194, %v1191, %v1193
      %v1199 = vmul.f32 %v1137, %v1191
      %v1200 = vmul.f32 %v1138, %v1195
      %v1201 = vmul.f32 %v1139, %v1193
      %1205 = vrot.lane.b32.xlu0 %v1199, 72
      %v1206 = vpop.permute.xlu0 %1205
      %1207 = vrot.lane.b32.xlu0 %v1200, 72
      %v1208 = vpop.permute.xlu0 %1207
      %1209 = vrot.lane.b32.xlu0 %v1201, 72
      %v1210 = vpop.permute.xlu0 %1209
      %vm1211 = vcmask 588800
      %v1212 = vsel %vm1211, %v1206, %v1208
      %v1213 = vsel %vm1211, %v1208, %v1210
      %1216 = vst [vmem:[#allocation3 + $0x10] sm:$0xff] %v1212
      %1217 = vst [vmem:[#allocation3 + $0x18] sm:$0xff] %v1213
      %s1218 = scalar_lea.vmem %s53, 2
      %v1219 = vld [vmem:[%s1218] ss:$8 sm:$0x3]
      %v1221 = vlaneseq
      %v1222 = vshrl.u32 %v1221, 7
      %v1223 = vsub.s32 0, %v1222
      %v1224 = vrot.slane %v1219, %v1223
      %v1225 = vlaneseq
      %v1226 = vshrl.u32 %v1225, 7
      %v1227 = vsub.s32 1, %v1226
      %v1228 = vrot.slane %v1219, %v1227
      %1229 = vrot.lane.b32.xlu0 %v1224, 57
      %v1230 = vpop.permute.xlu0 %1229
      %1231 = vrot.lane.b32.xlu0 %v1228, 57
      %v1232 = vpop.permute.xlu0 %1231
      %vm1233 = vcmask 465920
      %v1234 = vsel %vm1233, %v1230, %v1232
      %v1238 = vmul.f32 %v1137, %v1230
      %v1239 = vmul.f32 %v1138, %v1234
      %v1240 = vmul.f32 %v1139, %v1232
      %1244 = vrot.lane.b32.xlu0 %v1238, 71
      %v1245 = vpop.permute.xlu0 %1244
      %1246 = vrot.lane.b32.xlu0 %v1239, 71
      %v1247 = vpop.permute.xlu0 %1246
      %1248 = vrot.lane.b32.xlu0 %v1240, 71
      %v1249 = vpop.permute.xlu0 %1248
      %vm1250 = vcmask 580608
      %v1251 = vsel %vm1250, %v1245, %v1247
      %v1252 = vsel %vm1250, %v1247, %v1249
      %1255 = vst [vmem:[#allocation3 + $0x20] sm:$0xff] %v1251
      %1256 = vst [vmem:[#allocation3 + $0x28] sm:$0xff] %v1252
      %s1257 = scalar_lea.vmem %s53, 3
      %v1258 = vld [vmem:[%s1257] ss:$8 sm:$0x3]
      %v1260 = vlaneseq
      %v1261 = vshrl.u32 %v1260, 7
      %v1262 = vsub.s32 0, %v1261
      %v1263 = vrot.slane %v1258, %v1262
      %v1264 = vlaneseq
      %v1265 = vshrl.u32 %v1264, 7
      %v1266 = vsub.s32 1, %v1265
      %v1267 = vrot.slane %v1258, %v1266
      %1268 = vrot.lane.b32.xlu0 %v1263, 63
      %v1269 = vpop.permute.xlu0 %1268
      %1270 = vrot.lane.b32.xlu0 %v1267, 63
      %v1271 = vpop.permute.xlu0 %1270
      %vm1272 = vcmask 515072
      %v1273 = vsel %vm1272, %v1269, %v1271
      %v1277 = vmul.f32 %v1137, %v1269
      %v1278 = vmul.f32 %v1138, %v1273
      %v1279 = vmul.f32 %v1139, %v1271
      %1283 = vrot.lane.b32.xlu0 %v1277, 65
      %v1284 = vpop.permute.xlu0 %1283
      %1285 = vrot.lane.b32.xlu0 %v1278, 65
      %v1286 = vpop.permute.xlu0 %1285
      %1287 = vrot.lane.b32.xlu0 %v1279, 65
      %v1288 = vpop.permute.xlu0 %1287
      %vm1289 = vcmask 531456
      %v1290 = vsel %vm1289, %v1284, %v1286
      %v1291 = vsel %vm1289, %v1286, %v1288
      %1294 = vst [vmem:[#allocation3 + $0x30] sm:$0xff] %v1290
      %1295 = vst [vmem:[#allocation3 + $0x38] sm:$0xff] %v1291
      %s1296 = scalar_lea.vmem %s53, 4
      %v1297 = vld [vmem:[%s1296] ss:$8 sm:$0x3]
      %v1299 = vlaneseq
      %v1300 = vshrl.u32 %v1299, 7
      %v1301 = vsub.s32 0, %v1300
      %v1302 = vrot.slane %v1297, %v1301
      %v1303 = vlaneseq
      %v1304 = vshrl.u32 %v1303, 7
      %v1305 = vsub.s32 1, %v1304
      %v1306 = vrot.slane %v1297, %v1305
      %1307 = vrot.lane.b32.xlu0 %v1302, 64
      %v1308 = vpop.permute.xlu0 %1307
      %1309 = vrot.lane.b32.xlu0 %v1306, 64
      %v1310 = vpop.permute.xlu0 %1309
      %vm1311 = vcmask 523264
      %v1312 = vsel %vm1311, %v1308, %v1310
      %v1316 = vmul.f32 %v1137, %v1308
      %v1317 = vmul.f32 %v1138, %v1312
      %v1318 = vmul.f32 %v1139, %v1310
      %1322 = vrot.lane.b32.xlu0 %v1316, 64
      %v1323 = vpop.permute.xlu0 %1322
      %1324 = vrot.lane.b32.xlu0 %v1317, 64
      %v1325 = vpop.permute.xlu0 %1324
      %1326 = vrot.lane.b32.xlu0 %v1318, 64
      %v1327 = vpop.permute.xlu0 %1326
      %v1328 = vsel %vm1311, %v1323, %v1325
      %v1329 = vsel %vm1311, %v1325, %v1327
      %1332 = vst [vmem:[#allocation3 + $0x40] sm:$0xff] %v1328
      %1333 = vst [vmem:[#allocation3 + $0x48] sm:$0xff] %v1329
      %s1334 = scalar_lea.vmem %s53, 5
      %v1335 = vld [vmem:[%s1334] ss:$8 sm:$0x3]
      %v1337 = vlaneseq
      %v1338 = vshrl.u32 %v1337, 7
      %v1339 = vsub.s32 0, %v1338
      %v1340 = vrot.slane %v1335, %v1339
      %v1341 = vlaneseq
      %v1342 = vshrl.u32 %v1341, 7
      %v1343 = vsub.s32 1, %v1342
      %v1344 = vrot.slane %v1335, %v1343
      %1345 = vrot.lane.b32.xlu0 %v1340, 65
      %v1346 = vpop.permute.xlu0 %1345
      %1347 = vrot.lane.b32.xlu0 %v1344, 65
      %v1348 = vpop.permute.xlu0 %1347
      %v1349 = vsel %vm1289, %v1346, %v1348
      %v1353 = vmul.f32 %v1137, %v1346
      %v1354 = vmul.f32 %v1138, %v1349
      %v1355 = vmul.f32 %v1139, %v1348
      %1359 = vrot.lane.b32.xlu0 %v1353, 63
      %v1360 = vpop.permute.xlu0 %1359
      %1361 = vrot.lane.b32.xlu0 %v1354, 63
      %v1362 = vpop.permute.xlu0 %1361
      %1363 = vrot.lane.b32.xlu0 %v1355, 63
      %v1364 = vpop.permute.xlu0 %1363
      %v1365 = vsel %vm1272, %v1360, %v1362
      %v1366 = vsel %vm1272, %v1362, %v1364
      %1369 = vst [vmem:[#allocation3 + $0x50] sm:$0xff] %v1365
      %1370 = vst [vmem:[#allocation3 + $0x58] sm:$0xff] %v1366
      %s1371 = scalar_lea.vmem %s53, 6
      %v1372 = vld [vmem:[%s1371] ss:$8 sm:$0x3]
      %v1374 = vlaneseq
      %v1375 = vshrl.u32 %v1374, 7
      %v1376 = vsub.s32 0, %v1375
      %v1377 = vrot.slane %v1372, %v1376
      %v1378 = vlaneseq
      %v1379 = vshrl.u32 %v1378, 7
      %v1380 = vsub.s32 1, %v1379
      %v1381 = vrot.slane %v1372, %v1380
      %1382 = vrot.lane.b32.xlu0 %v1377, 71
      %v1383 = vpop.permute.xlu0 %1382
      %1384 = vrot.lane.b32.xlu0 %v1381, 71
      %v1385 = vpop.permute.xlu0 %1384
      %v1386 = vsel %vm1250, %v1383, %v1385
      %v1390 = vmul.f32 %v1137, %v1383
      %v1391 = vmul.f32 %v1138, %v1386
      %v1392 = vmul.f32 %v1139, %v1385
      %1396 = vrot.lane.b32.xlu0 %v1390, 57
      %v1397 = vpop.permute.xlu0 %1396
      %1398 = vrot.lane.b32.xlu0 %v1391, 57
      %v1399 = vpop.permute.xlu0 %1398
      %1400 = vrot.lane.b32.xlu0 %v1392, 57
      %v1401 = vpop.permute.xlu0 %1400
      %v1402 = vsel %vm1233, %v1397, %v1399
      %v1403 = vsel %vm1233, %v1399, %v1401
      %1406 = vst [vmem:[#allocation3 + $0x60] sm:$0xff] %v1402
      %1407 = vst [vmem:[#allocation3 + $0x68] sm:$0xff] %v1403
      %s1408 = scalar_lea.vmem %s53, 7
      %v1409 = vld [vmem:[%s1408] ss:$8 sm:$0x3]
      %v1411 = vlaneseq
      %v1412 = vshrl.u32 %v1411, 7
      %v1413 = vsub.s32 0, %v1412
      %v1414 = vrot.slane %v1409, %v1413
      %v1415 = vlaneseq
      %v1416 = vshrl.u32 %v1415, 7
      %v1417 = vsub.s32 1, %v1416
      %v1418 = vrot.slane %v1409, %v1417
      %1419 = vrot.lane.b32.xlu0 %v1414, 72
      %v1420 = vpop.permute.xlu0 %1419
      %1421 = vrot.lane.b32.xlu0 %v1418, 72
      %v1422 = vpop.permute.xlu0 %1421
      %v1423 = vsel %vm1211, %v1420, %v1422
      %v1427 = vmul.f32 %v1137, %v1420
      %v1428 = vmul.f32 %v1138, %v1423
      %v1429 = vmul.f32 %v1139, %v1422
      %1433 = vrot.lane.b32.xlu0 %v1427, 56
      %v1434 = vpop.permute.xlu0 %1433
      %1435 = vrot.lane.b32.xlu0 %v1428, 56
      %v1436 = vpop.permute.xlu0 %1435
      %1437 = vrot.lane.b32.xlu0 %v1429, 56
      %v1438 = vpop.permute.xlu0 %1437
      %v1439 = vsel %vm1194, %v1434, %v1436
      %v1440 = vsel %vm1194, %v1436, %v1438
      %1443 = vst [vmem:[#allocation3 + $0x70] sm:$0xff] %v1439
      %1444 = vst [vmem:[#allocation3 + $0x78] sm:$0xff] %v1440
      %s1445 = scalar_lea.vmem %s53, 16
      %v1446 = vld [vmem:[%s1445] ss:$8 sm:$0x3]
      %v1448 = vlaneseq
      %v1449 = vshrl.u32 %v1448, 7
      %v1450 = vsub.s32 0, %v1449
      %v1451 = vrot.slane %v1446, %v1450
      %v1452 = vlaneseq
      %v1453 = vshrl.u32 %v1452, 7
      %v1454 = vsub.s32 1, %v1453
      %v1455 = vrot.slane %v1446, %v1454
      %1456 = vrot.lane.b32.xlu0 %v1451, 73
      %v1457 = vpop.permute.xlu0 %1456
      %1458 = vrot.lane.b32.xlu0 %v1455, 73
      %v1459 = vpop.permute.xlu0 %1458
      %v1460 = vsel %vm1172, %v1457, %v1459
      %v1464 = vmul.f32 %v1137, %v1457
      %v1465 = vmul.f32 %v1138, %v1460
      %v1466 = vmul.f32 %v1139, %v1459
      %1470 = vrot.lane.b32.xlu0 %v1464, 55
      %v1471 = vpop.permute.xlu0 %1470
      %1472 = vrot.lane.b32.xlu0 %v1465, 55
      %v1473 = vpop.permute.xlu0 %1472
      %1474 = vrot.lane.b32.xlu0 %v1466, 55
      %v1475 = vpop.permute.xlu0 %1474
      %v1476 = vsel %vm1155, %v1471, %v1473
      %v1477 = vsel %vm1155, %v1473, %v1475
      %1480 = vst [vmem:[#allocation3 + $0x80] sm:$0xff] %v1476
      %1481 = vst [vmem:[#allocation3 + $0x88] sm:$0xff] %v1477
      %v1482 = vld [vmem:[%s53] ss:$8 sm:$0x3]
      %v1484 = vlaneseq
      %v1485 = vshrl.u32 %v1484, 7
      %v1486 = vsub.s32 0, %v1485
      %v1487 = vrot.slane %v1482, %v1486
      %v1488 = vlaneseq
      %v1489 = vshrl.u32 %v1488, 7
      %v1490 = vsub.s32 1, %v1489
      %v1491 = vrot.slane %v1482, %v1490
      %1492 = vrot.lane.b32.xlu0 %v1487, 119
      %v1493 = vpop.permute.xlu0 %1492
      %1494 = vrot.lane.b32.xlu0 %v1491, 119
      %v1495 = vpop.permute.xlu0 %1494
      %vm1496 = vcmask 973824
      %v1497 = vsel %vm1496, %v1493, %v1495
      %v1501 = vmul.f32 %v1137, %v1493
      %v1502 = vmul.f32 %v1138, %v1497
      %v1503 = vmul.f32 %v1139, %v1495
      %1507 = vrot.lane.b32.xlu0 %v1501, 9
      %v1508 = vpop.permute.xlu0 %1507
      %1509 = vrot.lane.b32.xlu0 %v1502, 9
      %v1510 = vpop.permute.xlu0 %1509
      %1511 = vrot.lane.b32.xlu0 %v1503, 9
      %v1512 = vpop.permute.xlu0 %1511
      %vm1513 = vcmask 72704
      %v1514 = vsel %vm1513, %v1508, %v1510
      %v1515 = vsel %vm1513, %v1510, %v1512
      %1518 = vst [vmem:[#allocation3 + $0x90] sm:$0xff] %v1514
      %1519 = vst [vmem:[#allocation3 + $0x98] sm:$0xff] %v1515
      %v1520 = vld [vmem:[%s1179] ss:$8 sm:$0x3]
      %v1522 = vlaneseq
      %v1523 = vshrl.u32 %v1522, 7
      %v1524 = vsub.s32 0, %v1523
      %v1525 = vrot.slane %v1520, %v1524
      %v1526 = vlaneseq
      %v1527 = vshrl.u32 %v1526, 7
      %v1528 = vsub.s32 1, %v1527
      %v1529 = vrot.slane %v1520, %v1528
      %1530 = vrot.lane.b32.xlu0 %v1525, 120
      %v1531 = vpop.permute.xlu0 %1530
      %1532 = vrot.lane.b32.xlu0 %v1529, 120
      %v1533 = vpop.permute.xlu0 %1532
      %vm1534 = vcmask 982016
      %v1535 = vsel %vm1534, %v1531, %v1533
      %v1539 = vmul.f32 %v1137, %v1531
      %v1540 = vmul.f32 %v1138, %v1535
      %v1541 = vmul.f32 %v1139, %v1533
      %1545 = vrot.lane.b32.xlu0 %v1539, 8
      %v1546 = vpop.permute.xlu0 %1545
      %1547 = vrot.lane.b32.xlu0 %v1540, 8
      %v1548 = vpop.permute.xlu0 %1547
      %1549 = vrot.lane.b32.xlu0 %v1541, 8
      %v1550 = vpop.permute.xlu0 %1549
      %vm1551 = vcmask 64512
      %v1552 = vsel %vm1551, %v1546, %v1548
      %v1553 = vsel %vm1551, %v1548, %v1550
      %1556 = vst [vmem:[#allocation3 + $0xa0] sm:$0xff] %v1552
      %1557 = vst [vmem:[#allocation3 + $0xa8] sm:$0xff] %v1553
      %v1558 = vld [vmem:[%s1218] ss:$8 sm:$0x3]
      %v1560 = vlaneseq
      %v1561 = vshrl.u32 %v1560, 7
      %v1562 = vsub.s32 0, %v1561
      %v1563 = vrot.slane %v1558, %v1562
      %v1564 = vlaneseq
      %v1565 = vshrl.u32 %v1564, 7
      %v1566 = vsub.s32 1, %v1565
      %v1567 = vrot.slane %v1558, %v1566
      %1568 = vrot.lane.b32.xlu0 %v1563, 121
      %v1569 = vpop.permute.xlu0 %1568
      %1570 = vrot.lane.b32.xlu0 %v1567, 121
      %v1571 = vpop.permute.xlu0 %1570
      %vm1572 = vcmask 990208
      %v1573 = vsel %vm1572, %v1569, %v1571
      %v1577 = vmul.f32 %v1137, %v1569
      %v1578 = vmul.f32 %v1138, %v1573
      %v1579 = vmul.f32 %v1139, %v1571
      %1583 = vrot.lane.b32.xlu0 %v1577, 7
      %v1584 = vpop.permute.xlu0 %1583
      %1585 = vrot.lane.b32.xlu0 %v1578, 7
      %v1586 = vpop.permute.xlu0 %1585
      %1587 = vrot.lane.b32.xlu0 %v1579, 7
      %v1588 = vpop.permute.xlu0 %1587
      %vm1589 = vcmask 56320
      %v1590 = vsel %vm1589, %v1584, %v1586
      %v1591 = vsel %vm1589, %v1586, %v1588
      %1594 = vst [vmem:[#allocation3 + $0xb0] sm:$0xff] %v1590
      %1595 = vst [vmem:[#allocation3 + $0xb8] sm:$0xff] %v1591
      %v1596 = vld [vmem:[%s1257] ss:$8 sm:$0x3]
      %v1598 = vlaneseq
      %v1599 = vshrl.u32 %v1598, 7
      %v1600 = vsub.s32 0, %v1599
      %v1601 = vrot.slane %v1596, %v1600
      %v1602 = vlaneseq
      %v1603 = vshrl.u32 %v1602, 7
      %v1604 = vsub.s32 1, %v1603
      %v1605 = vrot.slane %v1596, %v1604
      %1606 = vrot.lane.b32.xlu0 %v1601, 127
      %v1607 = vpop.permute.xlu0 %1606
      %1608 = vrot.lane.b32.xlu0 %v1605, 127
      %v1609 = vpop.permute.xlu0 %1608
      %vm1610 = vcmask 1039360
      %v1611 = vsel %vm1610, %v1607, %v1609
      %v1615 = vmul.f32 %v1137, %v1607
      %v1616 = vmul.f32 %v1138, %v1611
      %v1617 = vmul.f32 %v1139, %v1609
      %1621 = vrot.lane.b32.xlu0 %v1615, 1
      %v1622 = vpop.permute.xlu0 %1621
      %1623 = vrot.lane.b32.xlu0 %v1616, 1
      %v1624 = vpop.permute.xlu0 %1623
      %1625 = vrot.lane.b32.xlu0 %v1617, 1
      %v1626 = vpop.permute.xlu0 %1625
      %vm1627 = vcmask 7168
      %v1628 = vsel %vm1627, %v1622, %v1624
      %v1629 = vsel %vm1627, %v1624, %v1626
      %1632 = vst [vmem:[#allocation3 + $0xc0] sm:$0xff] %v1628
      %1633 = vst [vmem:[#allocation3 + $0xc8] sm:$0xff] %v1629
      %v1634 = vld [vmem:[%s1296] ss:$8 sm:$0x3]
      %v1636 = vlaneseq
      %v1637 = vshrl.u32 %v1636, 7
      %v1638 = vsub.s32 0, %v1637
      %v1639 = vrot.slane %v1634, %v1638
      %v1640 = vlaneseq
      %v1641 = vshrl.u32 %v1640, 7
      %v1642 = vsub.s32 1, %v1641
      %v1643 = vrot.slane %v1634, %v1642
      %v1646 = vmul.f32 %v1138, %v1639
      %v1647 = vmul.f32 %v1139, %v1643
      %1648 = vst [vmem:[#allocation3 + $0xd0] sm:$0xff] %v1646
      %1649 = vst [vmem:[#allocation3 + $0xd8] sm:$0xff] %v1647
      %v1650 = vld [vmem:[%s1334] ss:$8 sm:$0x3]
      %v1652 = vlaneseq
      %v1653 = vshrl.u32 %v1652, 7
      %v1654 = vsub.s32 0, %v1653
      %v1655 = vrot.slane %v1650, %v1654
      %v1656 = vlaneseq
      %v1657 = vshrl.u32 %v1656, 7
      %v1658 = vsub.s32 1, %v1657
      %v1659 = vrot.slane %v1650, %v1658
      %1660 = vrot.lane.b32.xlu0 %v1655, 1
      %v1661 = vpop.permute.xlu0 %1660
      %1662 = vrot.lane.b32.xlu0 %v1659, 1
      %v1663 = vpop.permute.xlu0 %1662
      %v1664 = vsel %vm1627, %v1661, %v1663
      %v1668 = vmul.f32 %v1138, %v1661
      %v1669 = vmul.f32 %v1139, %v1664
      %v1670 = vmul.f32 %v1140, %v1663
      %1674 = vrot.lane.b32.xlu0 %v1668, 127
      %v1675 = vpop.permute.xlu0 %1674
      %1676 = vrot.lane.b32.xlu0 %v1669, 127
      %v1677 = vpop.permute.xlu0 %1676
      %1678 = vrot.lane.b32.xlu0 %v1670, 127
      %v1679 = vpop.permute.xlu0 %1678
      %v1680 = vsel %vm1610, %v1675, %v1677
      %v1681 = vsel %vm1610, %v1677, %v1679
      %1684 = vst [vmem:[#allocation3 + $0xe0] sm:$0xff] %v1680
      %1685 = vst [vmem:[#allocation3 + $0xe8] sm:$0xff] %v1681
      %v1686 = vld [vmem:[%s1371] ss:$8 sm:$0x3]
      %v1688 = vlaneseq
      %v1689 = vshrl.u32 %v1688, 7
      %v1690 = vsub.s32 0, %v1689
      %v1691 = vrot.slane %v1686, %v1690
      %v1692 = vlaneseq
      %v1693 = vshrl.u32 %v1692, 7
      %v1694 = vsub.s32 1, %v1693
      %v1695 = vrot.slane %v1686, %v1694
      %1696 = vrot.lane.b32.xlu0 %v1691, 7
      %v1697 = vpop.permute.xlu0 %1696
      %1698 = vrot.lane.b32.xlu0 %v1695, 7
      %v1699 = vpop.permute.xlu0 %1698
      %v1700 = vsel %vm1589, %v1697, %v1699
      %v1704 = vmul.f32 %v1138, %v1697
      %v1705 = vmul.f32 %v1139, %v1700
      %v1706 = vmul.f32 %v1140, %v1699
      %1710 = vrot.lane.b32.xlu0 %v1704, 121
      %v1711 = vpop.permute.xlu0 %1710
      %1712 = vrot.lane.b32.xlu0 %v1705, 121
      %v1713 = vpop.permute.xlu0 %1712
      %1714 = vrot.lane.b32.xlu0 %v1706, 121
      %v1715 = vpop.permute.xlu0 %1714
      %v1716 = vsel %vm1572, %v1711, %v1713
      %v1717 = vsel %vm1572, %v1713, %v1715
      %1720 = vst [vmem:[#allocation3 + $0xf0] sm:$0xff] %v1716
      %1721 = vst [vmem:[#allocation3 + $0xf8] sm:$0xff] %v1717
      %v1722 = vld [vmem:[%s1408] ss:$8 sm:$0x3]
      %v1724 = vlaneseq
      %v1725 = vshrl.u32 %v1724, 7
      %v1726 = vsub.s32 0, %v1725
      %v1727 = vrot.slane %v1722, %v1726
      %v1728 = vlaneseq
      %v1729 = vshrl.u32 %v1728, 7
      %v1730 = vsub.s32 1, %v1729
      %v1731 = vrot.slane %v1722, %v1730
      %1732 = vrot.lane.b32.xlu0 %v1727, 8
      %v1733 = vpop.permute.xlu0 %1732
      %1734 = vrot.lane.b32.xlu0 %v1731, 8
      %v1735 = vpop.permute.xlu0 %1734
      %v1736 = vsel %vm1551, %v1733, %v1735
      %v1740 = vmul.f32 %v1138, %v1733
      %v1741 = vmul.f32 %v1139, %v1736
      %v1742 = vmul.f32 %v1140, %v1735
      %1746 = vrot.lane.b32.xlu0 %v1740, 120
      %v1747 = vpop.permute.xlu0 %1746
      %1748 = vrot.lane.b32.xlu0 %v1741, 120
      %v1749 = vpop.permute.xlu0 %1748
      %1750 = vrot.lane.b32.xlu0 %v1742, 120
      %v1751 = vpop.permute.xlu0 %1750
      %v1752 = vsel %vm1534, %v1747, %v1749
      %v1753 = vsel %vm1534, %v1749, %v1751
      %1756 = vst [vmem:[#allocation3 + $0x100] sm:$0xff] %v1752
      %1757 = vst [vmem:[#allocation3 + $0x108] sm:$0xff] %v1753
      %v1758 = vld [vmem:[%s1445] ss:$8 sm:$0x3]
      %v1760 = vlaneseq
      %v1761 = vshrl.u32 %v1760, 7
      %v1762 = vsub.s32 0, %v1761
      %v1763 = vrot.slane %v1758, %v1762
      %v1764 = vlaneseq
      %v1765 = vshrl.u32 %v1764, 7
      %v1766 = vsub.s32 1, %v1765
      %v1767 = vrot.slane %v1758, %v1766
      %1768 = vrot.lane.b32.xlu0 %v1763, 9
      %v1769 = vpop.permute.xlu0 %1768
      %1770 = vrot.lane.b32.xlu0 %v1767, 9
      %v1771 = vpop.permute.xlu0 %1770
      %v1772 = vsel %vm1513, %v1769, %v1771
      %v1776 = vmul.f32 %v1138, %v1769
      %v1777 = vmul.f32 %v1139, %v1772
      %v1778 = vmul.f32 %v1140, %v1771
      %1782 = vrot.lane.b32.xlu0 %v1776, 119
      %v1783 = vpop.permute.xlu0 %1782
      %1784 = vrot.lane.b32.xlu0 %v1777, 119
      %v1785 = vpop.permute.xlu0 %1784
      %1786 = vrot.lane.b32.xlu0 %v1778, 119
      %v1787 = vpop.permute.xlu0 %1786
      %v1788 = vsel %vm1496, %v1783, %v1785
      %v1789 = vsel %vm1496, %v1785, %v1787
      %1792 = vst [vmem:[#allocation3 + $0x110] sm:$0xff] %v1788
      %1793 = vst [vmem:[#allocation3 + $0x118] sm:$0xff] %v1789
      %v1794 = vld [vmem:[%s53] ss:$8 sm:$0x3]
      %v1796 = vlaneseq
      %v1797 = vshrl.u32 %v1796, 7
      %v1798 = vsub.s32 0, %v1797
      %v1799 = vrot.slane %v1794, %v1798
      %v1800 = vlaneseq
      %v1801 = vshrl.u32 %v1800, 7
      %v1802 = vsub.s32 1, %v1801
      %v1803 = vrot.slane %v1794, %v1802
      %1804 = vrot.lane.b32.xlu0 %v1799, 55
      %v1805 = vpop.permute.xlu0 %1804
      %1806 = vrot.lane.b32.xlu0 %v1803, 55
      %v1807 = vpop.permute.xlu0 %1806
      %v1808 = vsel %vm1155, %v1805, %v1807
      %v1812 = vmul.f32 %v1138, %v1805
      %v1813 = vmul.f32 %v1139, %v1808
      %v1814 = vmul.f32 %v1140, %v1807
      %1818 = vrot.lane.b32.xlu0 %v1812, 73
      %v1819 = vpop.permute.xlu0 %1818
      %1820 = vrot.lane.b32.xlu0 %v1813, 73
      %v1821 = vpop.permute.xlu0 %1820
      %1822 = vrot.lane.b32.xlu0 %v1814, 73
      %v1823 = vpop.permute.xlu0 %1822
      %v1824 = vsel %vm1172, %v1819, %v1821
      %v1825 = vsel %vm1172, %v1821, %v1823
      %1828 = vst [vmem:[#allocation3 + $0x120] sm:$0xff] %v1824
      %1829 = vst [vmem:[#allocation3 + $0x128] sm:$0xff] %v1825
      %v1830 = vld [vmem:[%s1179] ss:$8 sm:$0x3]
      %v1832 = vlaneseq
      %v1833 = vshrl.u32 %v1832, 7
      %v1834 = vsub.s32 0, %v1833
      %v1835 = vrot.slane %v1830, %v1834
      %v1836 = vlaneseq
      %v1837 = vshrl.u32 %v1836, 7
      %v1838 = vsub.s32 1, %v1837
      %v1839 = vrot.slane %v1830, %v1838
      %1840 = vrot.lane.b32.xlu0 %v1835, 56
      %v1841 = vpop.permute.xlu0 %1840
      %1842 = vrot.lane.b32.xlu0 %v1839, 56
      %v1843 = vpop.permute.xlu0 %1842
      %v1844 = vsel %vm1194, %v1841, %v1843
      %v1848 = vmul.f32 %v1138, %v1841
      %v1849 = vmul.f32 %v1139, %v1844
      %v1850 = vmul.f32 %v1140, %v1843
      %1854 = vrot.lane.b32.xlu0 %v1848, 72
      %v1855 = vpop.permute.xlu0 %1854
      %1856 = vrot.lane.b32.xlu0 %v1849, 72
      %v1857 = vpop.permute.xlu0 %1856
      %1858 = vrot.lane.b32.xlu0 %v1850, 72
      %v1859 = vpop.permute.xlu0 %1858
      %v1860 = vsel %vm1211, %v1855, %v1857
      %v1861 = vsel %vm1211, %v1857, %v1859
      %1864 = vst [vmem:[#allocation3 + $0x130] sm:$0xff] %v1860
      %1865 = vst [vmem:[#allocation3 + $0x138] sm:$0xff] %v1861
      %v1866 = vld [vmem:[%s1218] ss:$8 sm:$0x3]
      %v1868 = vlaneseq
      %v1869 = vshrl.u32 %v1868, 7
      %v1870 = vsub.s32 0, %v1869
      %v1871 = vrot.slane %v1866, %v1870
      %v1872 = vlaneseq
      %v1873 = vshrl.u32 %v1872, 7
      %v1874 = vsub.s32 1, %v1873
      %v1875 = vrot.slane %v1866, %v1874
      %1876 = vrot.lane.b32.xlu0 %v1871, 57
      %v1877 = vpop.permute.xlu0 %1876
      %1878 = vrot.lane.b32.xlu0 %v1875, 57
      %v1879 = vpop.permute.xlu0 %1878
      %v1880 = vsel %vm1233, %v1877, %v1879
      %v1884 = vmul.f32 %v1138, %v1877
      %v1885 = vmul.f32 %v1139, %v1880
      %v1886 = vmul.f32 %v1140, %v1879
      %1890 = vrot.lane.b32.xlu0 %v1884, 71
      %v1891 = vpop.permute.xlu0 %1890
      %1892 = vrot.lane.b32.xlu0 %v1885, 71
      %v1893 = vpop.permute.xlu0 %1892
      %1894 = vrot.lane.b32.xlu0 %v1886, 71
      %v1895 = vpop.permute.xlu0 %1894
      %v1896 = vsel %vm1250, %v1891, %v1893
      %v1897 = vsel %vm1250, %v1893, %v1895
      %1900 = vst [vmem:[#allocation3 + $0x140] sm:$0xff] %v1896
      %1901 = vst [vmem:[#allocation3 + $0x148] sm:$0xff] %v1897
      %v1902 = vld [vmem:[%s1257] ss:$8 sm:$0x3]
      %v1904 = vlaneseq
      %v1905 = vshrl.u32 %v1904, 7
      %v1906 = vsub.s32 0, %v1905
      %v1907 = vrot.slane %v1902, %v1906
      %v1908 = vlaneseq
      %v1909 = vshrl.u32 %v1908, 7
      %v1910 = vsub.s32 1, %v1909
      %v1911 = vrot.slane %v1902, %v1910
      %1912 = vrot.lane.b32.xlu0 %v1907, 63
      %v1913 = vpop.permute.xlu0 %1912
      %1914 = vrot.lane.b32.xlu0 %v1911, 63
      %v1915 = vpop.permute.xlu0 %1914
      %v1916 = vsel %vm1272, %v1913, %v1915
      %v1920 = vmul.f32 %v1138, %v1913
      %v1921 = vmul.f32 %v1139, %v1916
      %v1922 = vmul.f32 %v1140, %v1915
      %1926 = vrot.lane.b32.xlu0 %v1920, 65
      %v1927 = vpop.permute.xlu0 %1926
      %1928 = vrot.lane.b32.xlu0 %v1921, 65
      %v1929 = vpop.permute.xlu0 %1928
      %1930 = vrot.lane.b32.xlu0 %v1922, 65
      %v1931 = vpop.permute.xlu0 %1930
      %v1932 = vsel %vm1289, %v1927, %v1929
      %v1933 = vsel %vm1289, %v1929, %v1931
      %1936 = vst [vmem:[#allocation3 + $0x150] sm:$0xff] %v1932
      %1937 = vst [vmem:[#allocation3 + $0x158] sm:$0xff] %v1933
      %v1938 = vld [vmem:[%s1296] ss:$8 sm:$0x3]
      %v1940 = vlaneseq
      %v1941 = vshrl.u32 %v1940, 7
      %v1942 = vsub.s32 0, %v1941
      %v1943 = vrot.slane %v1938, %v1942
      %v1944 = vlaneseq
      %v1945 = vshrl.u32 %v1944, 7
      %v1946 = vsub.s32 1, %v1945
      %v1947 = vrot.slane %v1938, %v1946
      %1948 = vrot.lane.b32.xlu0 %v1943, 64
      %v1949 = vpop.permute.xlu0 %1948
      %1950 = vrot.lane.b32.xlu0 %v1947, 64
      %v1951 = vpop.permute.xlu0 %1950
      %v1952 = vsel %vm1311, %v1949, %v1951
      %v1956 = vmul.f32 %v1138, %v1949
      %v1957 = vmul.f32 %v1139, %v1952
      %v1958 = vmul.f32 %v1140, %v1951
      %1962 = vrot.lane.b32.xlu0 %v1956, 64
      %v1963 = vpop.permute.xlu0 %1962
      %1964 = vrot.lane.b32.xlu0 %v1957, 64
      %v1965 = vpop.permute.xlu0 %1964
      %1966 = vrot.lane.b32.xlu0 %v1958, 64
      %v1967 = vpop.permute.xlu0 %1966
      %v1968 = vsel %vm1311, %v1963, %v1965
      %v1969 = vsel %vm1311, %v1965, %v1967
      %1972 = vst [vmem:[#allocation3 + $0x160] sm:$0xff] %v1968
      %1973 = vst [vmem:[#allocation3 + $0x168] sm:$0xff] %v1969
      %v1974 = vld [vmem:[%s1334] ss:$8 sm:$0x3]
      %v1976 = vlaneseq
      %v1977 = vshrl.u32 %v1976, 7
      %v1978 = vsub.s32 0, %v1977
      %v1979 = vrot.slane %v1974, %v1978
      %v1980 = vlaneseq
      %v1981 = vshrl.u32 %v1980, 7
      %v1982 = vsub.s32 1, %v1981
      %v1983 = vrot.slane %v1974, %v1982
      %1984 = vrot.lane.b32.xlu0 %v1979, 65
      %v1985 = vpop.permute.xlu0 %1984
      %1986 = vrot.lane.b32.xlu0 %v1983, 65
      %v1987 = vpop.permute.xlu0 %1986
      %v1988 = vsel %vm1289, %v1985, %v1987
      %v1992 = vmul.f32 %v1138, %v1985
      %v1993 = vmul.f32 %v1139, %v1988
      %v1994 = vmul.f32 %v1140, %v1987
      %1998 = vrot.lane.b32.xlu0 %v1992, 63
      %v1999 = vpop.permute.xlu0 %1998
      %2000 = vrot.lane.b32.xlu0 %v1993, 63
      %v2001 = vpop.permute.xlu0 %2000
      %2002 = vrot.lane.b32.xlu0 %v1994, 63
      %v2003 = vpop.permute.xlu0 %2002
      %v2004 = vsel %vm1272, %v1999, %v2001
      %v2005 = vsel %vm1272, %v2001, %v2003
      %2008 = vst [vmem:[#allocation3 + $0x170] sm:$0xff] %v2004
      %2009 = vst [vmem:[#allocation3 + $0x178] sm:$0xff] %v2005
      %v2010 = vld [vmem:[%s1371] ss:$8 sm:$0x3]
      %v2012 = vlaneseq
      %v2013 = vshrl.u32 %v2012, 7
      %v2014 = vsub.s32 0, %v2013
      %v2015 = vrot.slane %v2010, %v2014
      %v2016 = vlaneseq
      %v2017 = vshrl.u32 %v2016, 7
      %v2018 = vsub.s32 1, %v2017
      %v2019 = vrot.slane %v2010, %v2018
      %2020 = vrot.lane.b32.xlu0 %v2015, 71
      %v2021 = vpop.permute.xlu0 %2020
      %2022 = vrot.lane.b32.xlu0 %v2019, 71
      %v2023 = vpop.permute.xlu0 %2022
      %v2024 = vsel %vm1250, %v2021, %v2023
      %v2028 = vmul.f32 %v1138, %v2021
      %v2029 = vmul.f32 %v1139, %v2024
      %v2030 = vmul.f32 %v1140, %v2023
      %2034 = vrot.lane.b32.xlu0 %v2028, 57
      %v2035 = vpop.permute.xlu0 %2034
      %2036 = vrot.lane.b32.xlu0 %v2029, 57
      %v2037 = vpop.permute.xlu0 %2036
      %2038 = vrot.lane.b32.xlu0 %v2030, 57
      %v2039 = vpop.permute.xlu0 %2038
      %v2040 = vsel %vm1233, %v2035, %v2037
      %v2041 = vsel %vm1233, %v2037, %v2039
      %2044 = vst [vmem:[#allocation3 + $0x180] sm:$0xff] %v2040
      %2045 = vst [vmem:[#allocation3 + $0x188] sm:$0xff] %v2041
      %v2046 = vld [vmem:[%s1408] ss:$8 sm:$0x3]
      %v2048 = vlaneseq
      %v2049 = vshrl.u32 %v2048, 7
      %v2050 = vsub.s32 0, %v2049
      %v2051 = vrot.slane %v2046, %v2050
      %v2052 = vlaneseq
      %v2053 = vshrl.u32 %v2052, 7
      %v2054 = vsub.s32 1, %v2053
      %v2055 = vrot.slane %v2046, %v2054
      %2056 = vrot.lane.b32.xlu0 %v2051, 72
      %v2057 = vpop.permute.xlu0 %2056
      %2058 = vrot.lane.b32.xlu0 %v2055, 72
      %v2059 = vpop.permute.xlu0 %2058
      %v2060 = vsel %vm1211, %v2057, %v2059
      %v2064 = vmul.f32 %v1138, %v2057
      %v2065 = vmul.f32 %v1139, %v2060
      %v2066 = vmul.f32 %v1140, %v2059
      %2070 = vrot.lane.b32.xlu0 %v2064, 56
      %v2071 = vpop.permute.xlu0 %2070
      %2072 = vrot.lane.b32.xlu0 %v2065, 56
      %v2073 = vpop.permute.xlu0 %2072
      %2074 = vrot.lane.b32.xlu0 %v2066, 56
      %v2075 = vpop.permute.xlu0 %2074
      %v2076 = vsel %vm1194, %v2071, %v2073
      %v2077 = vsel %vm1194, %v2073, %v2075
      %2080 = vst [vmem:[#allocation3 + $0x190] sm:$0xff] %v2076
      %2081 = vst [vmem:[#allocation3 + $0x198] sm:$0xff] %v2077
      %v2082 = vld [vmem:[%s1445] ss:$8 sm:$0x3]
      %v2084 = vlaneseq
      %v2085 = vshrl.u32 %v2084, 7
      %v2086 = vsub.s32 0, %v2085
      %v2087 = vrot.slane %v2082, %v2086
      %v2088 = vlaneseq
      %v2089 = vshrl.u32 %v2088, 7
      %v2090 = vsub.s32 1, %v2089
      %v2091 = vrot.slane %v2082, %v2090
      %2092 = vrot.lane.b32.xlu0 %v2087, 73
      %v2093 = vpop.permute.xlu0 %2092
      %2094 = vrot.lane.b32.xlu0 %v2091, 73
      %v2095 = vpop.permute.xlu0 %2094
      %v2096 = vsel %vm1172, %v2093, %v2095
      %v2100 = vmul.f32 %v1138, %v2093
      %v2101 = vmul.f32 %v1139, %v2096
      %v2102 = vmul.f32 %v1140, %v2095
      %2106 = vrot.lane.b32.xlu0 %v2100, 55
      %v2107 = vpop.permute.xlu0 %2106
      %2108 = vrot.lane.b32.xlu0 %v2101, 55
      %v2109 = vpop.permute.xlu0 %2108
      %2110 = vrot.lane.b32.xlu0 %v2102, 55
      %v2111 = vpop.permute.xlu0 %2110
      %v2112 = vsel %vm1155, %v2107, %v2109
      %v2113 = vsel %vm1155, %v2109, %v2111
      %2116 = vst [vmem:[#allocation3 + $0x1a0] sm:$0xff] %v2112
      %2117 = vst [vmem:[#allocation3 + $0x1a8] sm:$0xff] %v2113
      %v2118 = vld [vmem:[#allocation3] sm:$0xff]
      %v2119 = vld [vmem:[#allocation3 + $0x8] sm:$0xff]
      %v2120 = vld [vmem:[#allocation3 + $0x10] sm:$0xff]
      %v2121 = vld [vmem:[#allocation3 + $0x18] sm:$0xff]
      %v2122 = vld [vmem:[#allocation3 + $0x20] sm:$0xff]
      %v2123 = vld [vmem:[#allocation3 + $0x28] sm:$0xff]
      %v2124 = vld [vmem:[#allocation3 + $0x30] sm:$0xff]
      %v2125 = vld [vmem:[#allocation3 + $0x38] sm:$0xff]
      %v2126 = vld [vmem:[#allocation3 + $0x40] sm:$0xff]
      %v2127 = vld [vmem:[#allocation3 + $0x48] sm:$0xff]
      %v2128 = vld [vmem:[#allocation3 + $0x50] sm:$0xff]
      %v2129 = vld [vmem:[#allocation3 + $0x58] sm:$0xff]
      %v2130 = vld [vmem:[#allocation3 + $0x60] sm:$0xff]
      %v2131 = vld [vmem:[#allocation3 + $0x68] sm:$0xff]
      %v2132 = vld [vmem:[#allocation3 + $0x70] sm:$0xff]
      %v2133 = vld [vmem:[#allocation3 + $0x78] sm:$0xff]
      %v2134 = vld [vmem:[#allocation3 + $0x80] sm:$0xff]
      %v2135 = vld [vmem:[#allocation3 + $0x88] sm:$0xff]
      %v2136 = vld [vmem:[#allocation3 + $0x90] sm:$0xff]
      %v2137 = vld [vmem:[#allocation3 + $0x98] sm:$0xff]
      %v2138 = vld [vmem:[#allocation3 + $0xa0] sm:$0xff]
      %v2139 = vld [vmem:[#allocation3 + $0xa8] sm:$0xff]
      %v2140 = vld [vmem:[#allocation3 + $0xb0] sm:$0xff]
      %v2141 = vld [vmem:[#allocation3 + $0xb8] sm:$0xff]
      %v2142 = vld [vmem:[#allocation3 + $0xc0] sm:$0xff]
      %v2143 = vld [vmem:[#allocation3 + $0xc8] sm:$0xff]
      %v2144 = vld [vmem:[#allocation3 + $0xd0] sm:$0xff]
      %v2145 = vld [vmem:[#allocation3 + $0xd8] sm:$0xff]
      %v2146 = vld [vmem:[#allocation3 + $0xe0] sm:$0xff]
      %v2147 = vld [vmem:[#allocation3 + $0xe8] sm:$0xff]
      %v2148 = vld [vmem:[#allocation3 + $0xf0] sm:$0xff]
      %v2149 = vld [vmem:[#allocation3 + $0xf8] sm:$0xff]
      %v2150 = vld [vmem:[#allocation3 + $0x100] sm:$0xff]
      %v2151 = vld [vmem:[#allocation3 + $0x108] sm:$0xff]
      %v2152 = vld [vmem:[#allocation3 + $0x110] sm:$0xff]
      %v2153 = vld [vmem:[#allocation3 + $0x118] sm:$0xff]
      %v2154 = vld [vmem:[#allocation3 + $0x120] sm:$0xff]
      %v2155 = vld [vmem:[#allocation3 + $0x128] sm:$0xff]
      %v2156 = vld [vmem:[#allocation3 + $0x130] sm:$0xff]
      %v2157 = vld [vmem:[#allocation3 + $0x138] sm:$0xff]
      %v2158 = vld [vmem:[#allocation3 + $0x140] sm:$0xff]
      %v2159 = vld [vmem:[#allocation3 + $0x148] sm:$0xff]
      %v2160 = vld [vmem:[#allocation3 + $0x150] sm:$0xff]
      %v2161 = vld [vmem:[#allocation3 + $0x158] sm:$0xff]
      %v2162 = vld [vmem:[#allocation3 + $0x160] sm:$0xff]
      %v2163 = vld [vmem:[#allocation3 + $0x168] sm:$0xff]
      %v2164 = vld [vmem:[#allocation3 + $0x170] sm:$0xff]
      %v2165 = vld [vmem:[#allocation3 + $0x178] sm:$0xff]
      %v2166 = vld [vmem:[#allocation3 + $0x180] sm:$0xff]
      %v2167 = vld [vmem:[#allocation3 + $0x188] sm:$0xff]
      %v2168 = vld [vmem:[#allocation3 + $0x190] sm:$0xff]
      %v2169 = vld [vmem:[#allocation3 + $0x198] sm:$0xff]
      %v2170 = vld [vmem:[#allocation3 + $0x1a0] sm:$0xff]
      %v2171 = vld [vmem:[#allocation3 + $0x1a8] sm:$0xff]
      %v2172 = vpack.c.bf16 %v2120, %v2118
      %v2173 = vpack.c.bf16 %v2121, %v2119
      %v2174 = vpack.c.bf16 %v2124, %v2122
      %v2175 = vpack.c.bf16 %v2125, %v2123
      %v2176 = vpack.c.bf16 %v2128, %v2126
      %v2177 = vpack.c.bf16 %v2129, %v2127
      %v2178 = vpack.c.bf16 %v2132, %v2130
      %v2179 = vpack.c.bf16 %v2133, %v2131
      %v2180 = vpack.c.bf16 %v2136, %v2134
      %v2181 = vpack.c.bf16 %v2137, %v2135
      %v2182 = vpack.c.bf16 %v2140, %v2138
      %v2183 = vpack.c.bf16 %v2141, %v2139
      %v2184 = vpack.c.bf16 %v2144, %v2142
      %v2185 = vpack.c.bf16 %v2145, %v2143
      %v2186 = vpack.c.bf16 %v2148, %v2146
      %v2187 = vpack.c.bf16 %v2149, %v2147
      %v2188 = vpack.c.bf16 %v2152, %v2150
      %v2189 = vpack.c.bf16 %v2153, %v2151
      %v2190 = vpack.c.bf16 %v2156, %v2154
      %v2191 = vpack.c.bf16 %v2157, %v2155
      %v2192 = vpack.c.bf16 %v2160, %v2158
      %v2193 = vpack.c.bf16 %v2161, %v2159
      %v2194 = vpack.c.bf16 %v2164, %v2162
      %v2195 = vpack.c.bf16 %v2165, %v2163
      %v2196 = vpack.c.bf16 %v2168, %v2166
      %v2197 = vpack.c.bf16 %v2169, %v2167
      %v2198 = vpack.c.bf16 %v2170, %v2170
      %v2199 = vpack.c.bf16 %v2171, %v2171
      %v2200 = vld [vmem:[%s19] sm:$0xff]
      %v2201 = vld [vmem:[%s19 + $0x8] sm:$0xff]
      %v2202 = vld [vmem:[%s19 + $0x10] sm:$0xff]
      %v2203 = vld [vmem:[%s19 + $0x18] sm:$0xff]
      %v2204 = vld [vmem:[%s19 + $0x20] sm:$0xff]
      %v2205 = vld [vmem:[%s19 + $0x28] sm:$0xff]
      %v2206 = vld [vmem:[%s19 + $0x30] sm:$0xff]
      %v2207 = vld [vmem:[%s21] sm:$0xff]
      %v2208 = vld [vmem:[%s21 + $0x8] sm:$0xff]
      %v2209 = vld [vmem:[%s21 + $0x10] sm:$0xff]
      %v2210 = vld [vmem:[%s21 + $0x18] sm:$0xff]
      %v2211 = vld [vmem:[%s21 + $0x20] sm:$0xff]
      %v2212 = vld [vmem:[%s21 + $0x28] sm:$0xff]
      %v2213 = vld [vmem:[%s21 + $0x30] sm:$0xff]
      %2215 = vset.pattern.permute.xlu0 0
      %2216 = vperm.xlu0 %2215, %v2207
      %v2217 = vpop.permute.xlu0 %2216
      %2220 = vset.pattern.permute.xlu0 0
      %2221 = vperm.xlu0 %2220, %v2208
      %v2222 = vpop.permute.xlu0 %2221
      %2225 = vset.pattern.permute.xlu0 0
      %2226 = vperm.xlu0 %2225, %v2209
      %v2227 = vpop.permute.xlu0 %2226
      %2230 = vset.pattern.permute.xlu0 0
      %2231 = vperm.xlu0 %2230, %v2210
      %v2232 = vpop.permute.xlu0 %2231
      %2235 = vset.pattern.permute.xlu0 0
      %2236 = vperm.xlu0 %2235, %v2211
      %v2237 = vpop.permute.xlu0 %2236
      %2240 = vset.pattern.permute.xlu0 0
      %2241 = vperm.xlu0 %2240, %v2212
      %v2242 = vpop.permute.xlu0 %2241
      %2245 = vset.pattern.permute.xlu0 0
      %2246 = vperm.xlu0 %2245, %v2213
      %v2247 = vpop.permute.xlu0 %2246
      %v2256 = vunpack.c.l.b16 %v2200
      %v2257 = vunpack.c.h.b16 %v2200
      %v2258 = vunpack.c.l.b16 %v2201
      %v2259 = vunpack.c.h.b16 %v2201
      %v2260 = vunpack.c.l.b16 %v2202
      %v2261 = vunpack.c.h.b16 %v2202
      %v2262 = vunpack.c.l.b16 %v2203
      %v2263 = vunpack.c.h.b16 %v2203
      %v2264 = vunpack.c.l.b16 %v2204
      %v2265 = vunpack.c.h.b16 %v2204
      %v2266 = vunpack.c.l.b16 %v2205
      %v2267 = vunpack.c.h.b16 %v2205
      %v2268 = vunpack.c.l.b16 %v2206
      %v2269 = vunpack.c.h.b16 %v2206
      %v2270 = vpack.c.b16 %v2258, %v2256
      %v2271 = vpack.c.b16 %v2259, %v2257
      %v2272 = vpack.c.b16 %v2262, %v2260
      %v2273 = vpack.c.b16 %v2263, %v2261
      %v2274 = vpack.c.b16 %v2266, %v2264
      %v2275 = vpack.c.b16 %v2267, %v2265
      %v2276 = vpack.c.b16 %v2268, %v2268
      %v2277 = vpack.c.b16 %v2269, %v2269
      %vm2282 = vcmask 719872
      %v2284 = vsel %vm2282, %v2271, 0
      %v2287 = vsel %vm2282, %v2273, 0
      %v2290 = vsel %vm2282, %v2275, 0
      %v2293 = vsel %vm2282, %v2277, 0
      %vm2295 = vcmask 1043456
      %v2297 = vsel %vm2295, %v2198, 0
      %v2300 = vsel %vm2295, %v2199, 0
      %2302 = vmatprep.subr.bf16.mxu0 %v2173
      %2303 = vmatpush1.bf16.msra.mxu0 %v2172
      %2304 = vmatprep.subr.bf16.mxu0 %v2175
      %2305 = vmatpush1.bf16.msra.mxu0 %v2174
      %2306 = vmatprep.subr.bf16.mxu0 %v2177
      %2307 = vmatpush1.bf16.msra.mxu0 %v2176
      %2308 = vmatprep.subr.bf16.mxu0 %v2179
      %2309 = vmatpush1.bf16.msra.mxu0 %v2178
      %2310 = vmatprep.subr.bf16.mxu0 %v2181
      %2311 = vmatpush1.bf16.msra.mxu0 %v2180
      %2312 = vmatprep.subr.bf16.mxu0 %v2183
      %2313 = vmatpush1.bf16.msra.mxu0 %v2182
      %2314 = vmatprep.subr.bf16.mxu0 %v2185
      %2315 = vmatpush1.bf16.msra.mxu0 %v2184
      %2316 = vmatprep.subr.bf16.mxu0 %v2187
      %2317 = vmatpush1.bf16.msra.mxu0 %v2186
      %2318 = vmatprep.subr.bf16.mxu0 %v2189
      %2319 = vmatpush1.bf16.msra.mxu0 %v2188
      %2320 = vmatprep.subr.bf16.mxu0 %v2191
      %2321 = vmatpush1.bf16.msra.mxu0 %v2190
      %2322 = vmatprep.subr.bf16.mxu0 %v2193
      %2323 = vmatpush1.bf16.msra.mxu0 %v2192
      %2324 = vmatprep.subr.bf16.mxu0 %v2195
      %2325 = vmatpush1.bf16.msra.mxu0 %v2194
      %2326 = vmatprep.subr.bf16.mxu0 %v2197
      %2327 = vmatpush1.bf16.msra.mxu0 %v2196
      %2328 = vmatprep.subr.bf16.mxu0 %v2300
      %2329 = vmatpush1.bf16.msra.mxu0 %v2297
      %2330 = vmatprep.subr.bf16.mxu0 0
      %2331 = vmatpush1.bf16.msra.mxu0 0
      %2332 = vmatprep.subr.bf16.mxu0 0
      %2333 = vmatpush1.bf16.msra.mxu0 0
      %2334 = vmatprep.mubr.bf16.mxu0 %v2284
      %2335 = vmatmul.mubr.bf16.gmra.mrb[0].mxu0 %v2270
      %v2336 = vpop.f32.mrb[0].mxu0
      %v2337 = vadd.f32 %v2217, %v2336
      %v2338 = vpop.f32.mrb[0].mxu0
      %v2339 = vadd.f32 %v2217, %v2338
      %v2340 = vpop.f32.mrb[0].mxu0
      %v2341 = vadd.f32 %v2222, %v2340
      %v2342 = vpop.f32.mrb[0].mxu0
      %v2343 = vadd.f32 %v2222, %v2342
      %2344 = vmatprep.mubr.bf16.mxu0 %v2287
      %2345 = vmatmul.mubr.bf16.gmra.mrb[0].mxu0 %v2272
      %v2346 = vpop.f32.mrb[0].mxu0
      %v2347 = vadd.f32 %v2227, %v2346
      %v2348 = vpop.f32.mrb[0].mxu0
      %v2349 = vadd.f32 %v2227, %v2348
      %v2350 = vpop.f32.mrb[0].mxu0
      %v2351 = vadd.f32 %v2232, %v2350
      %v2352 = vpop.f32.mrb[0].mxu0
      %v2353 = vadd.f32 %v2232, %v2352
      %2354 = vmatprep.mubr.bf16.mxu0 %v2290
      %2355 = vmatmul.mubr.bf16.gmra.mrb[0].mxu0 %v2274
      %v2356 = vpop.f32.mrb[0].mxu0
      %v2357 = vadd.f32 %v2237, %v2356
      %v2358 = vpop.f32.mrb[0].mxu0
      %v2359 = vadd.f32 %v2237, %v2358
      %v2360 = vpop.f32.mrb[0].mxu0
      %v2361 = vadd.f32 %v2242, %v2360
      %v2362 = vpop.f32.mrb[0].mxu0
      %v2363 = vadd.f32 %v2242, %v2362
      %2364 = vmatprep.mubr.bf16.mxu0 %v2293
      %2365 = vmatmul.mubr.bf16.gmra.mrb[0].mxu0 %v2276
      %v2366 = vpop.f32.mrb[0].mxu0
      %v2367 = vadd.f32 %v2247, %v2366
      %v2368 = vpop.f32.mrb[0].mxu0
      %v2369 = vadd.f32 %v2247, %v2368
      %v2370 = vpop.f32.mrb[0].mxu0
      %v2371 = vpop.f32.mrb[0].mxu0
      %2372 = vdwg.mxu0
      %v2373 = vadd.f32 %v2337, %v2339
      %v2374 = vadd.f32 %v2373, %v2341
      %v2375 = vadd.f32 %v2374, %v2343
      %v2376 = vadd.f32 %v2375, %v2347
      %v2377 = vadd.f32 %v2376, %v2349
      %v2378 = vadd.f32 %v2377, %v2351
      %v2379 = vadd.f32 %v2378, %v2353
      %v2380 = vadd.f32 %v2379, %v2357
      %v2381 = vadd.f32 %v2380, %v2359
      %v2382 = vadd.f32 %v2381, %v2361
      %v2383 = vadd.f32 %v2382, %v2363
      %v2384 = vadd.f32 %v2383, %v2367
      %v2385 = vadd.f32 %v2384, %v2369
      %2386 = vadd.xlane.f32.xlu0 %v2385
      %v2387 = vpop.xlane.xlu0 %2386
      %v2388 = vrot.slane %v2387, 4
      %v2389 = vadd.f32 %v2387, %v2388
      %v2390 = vrot.slane %v2389, 2
      %v2391 = vadd.f32 %v2389, %v2390
      %v2392 = vrot.slane %v2391, 1
      %v2393 = vadd.f32 %v2391, %v2392
      %s2394 = vtos %v2393
      %v2395 = vrcp.pop 14336.0
      %s2396 = vtos %v2395
      %s2397 = smul.f32 %s2394, %s2396
      %v2398 = vstv %s2397
      %v2399 = vsub.f32 %v2337, %v2398
      %v2400 = vsub.f32 %v2339, %v2398
      %v2401 = vsub.f32 %v2341, %v2398
      %v2402 = vsub.f32 %v2343, %v2398
      %v2403 = vsub.f32 %v2347, %v2398
      %v2404 = vsub.f32 %v2349, %v2398
      %v2405 = vsub.f32 %v2351, %v2398
      %v2406 = vsub.f32 %v2353, %v2398
      %v2407 = vsub.f32 %v2357, %v2398
      %v2408 = vsub.f32 %v2359, %v2398
      %v2409 = vsub.f32 %v2361, %v2398
      %v2410 = vsub.f32 %v2363, %v2398
      %v2411 = vsub.f32 %v2367, %v2398
      %v2412 = vsub.f32 %v2369, %v2398
      %v2413 = vmul.f32 %v2399, %v2399
      %v2414 = vmul.f32 %v2400, %v2400
      %v2415 = vmul.f32 %v2401, %v2401
      %v2416 = vmul.f32 %v2402, %v2402
      %v2417 = vmul.f32 %v2403, %v2403
      %v2418 = vmul.f32 %v2404, %v2404
      %v2419 = vmul.f32 %v2405, %v2405
      %v2420 = vmul.f32 %v2406, %v2406
      %v2421 = vmul.f32 %v2407, %v2407
      %v2422 = vmul.f32 %v2408, %v2408
      %v2423 = vmul.f32 %v2409, %v2409
      %v2424 = vmul.f32 %v2410, %v2410
      %v2425 = vmul.f32 %v2411, %v2411
      %v2426 = vmul.f32 %v2412, %v2412
      %v2427 = vadd.f32 %v2413, %v2414
      %v2428 = vadd.f32 %v2427, %v2415
      %v2429 = vadd.f32 %v2428, %v2416
      %v2430 = vadd.f32 %v2429, %v2417
      %v2431 = vadd.f32 %v2430, %v2418
      %v2432 = vadd.f32 %v2431, %v2419
      %v2433 = vadd.f32 %v2432, %v2420
      %v2434 = vadd.f32 %v2433, %v2421
      %v2435 = vadd.f32 %v2434, %v2422
      %v2436 = vadd.f32 %v2435, %v2423
      %v2437 = vadd.f32 %v2436, %v2424
      %v2438 = vadd.f32 %v2437, %v2425
      %v2439 = vadd.f32 %v2438, %v2426
      %2440 = vadd.xlane.f32.xlu0 %v2439
      %v2441 = vpop.xlane.xlu0 %2440
      %v2442 = vrot.slane %v2441, 4
      %v2443 = vadd.f32 %v2441, %v2442
      %v2444 = vrot.slane %v2443, 2
      %v2445 = vadd.f32 %v2443, %v2444
      %v2446 = vrot.slane %v2445, 1
      %v2447 = vadd.f32 %v2445, %v2446
      %s2448 = vtos %v2447
      %v2449 = vrcp.pop 14336.0
      %s2450 = vtos %v2449
      %s2451 = smul.f32 %s2448, %s2450
      %s2452 = sadd.f32 %s2451, 1e-05
      %v2453 = vstv %s2452
      %v2454 = vrsqrt.pop %v2453
      %s2455 = vtos %v2454
      %v2456 = vstv %s2455
      %v2457 = vmul.f32 %v2399, %v2456
      %v2458 = vmul.f32 %v2400, %v2456
      %v2459 = vmul.f32 %v2401, %v2456
      %v2460 = vmul.f32 %v2402, %v2456
      %v2461 = vmul.f32 %v2403, %v2456
      %v2462 = vmul.f32 %v2404, %v2456
      %v2463 = vmul.f32 %v2405, %v2456
      %v2464 = vmul.f32 %v2406, %v2456
      %v2465 = vmul.f32 %v2407, %v2456
      %v2466 = vmul.f32 %v2408, %v2456
      %v2467 = vmul.f32 %v2409, %v2456
      %v2468 = vmul.f32 %v2410, %v2456
      %v2469 = vmul.f32 %v2411, %v2456
      %v2470 = vmul.f32 %v2412, %v2456
      %v2471 = vld [vmem:[%s23] sm:$0xff]
      %v2472 = vld [vmem:[%s23 + $0x8] sm:$0xff]
      %v2473 = vld [vmem:[%s23 + $0x10] sm:$0xff]
      %v2474 = vld [vmem:[%s23 + $0x18] sm:$0xff]
      %v2475 = vld [vmem:[%s23 + $0x20] sm:$0xff]
      %v2476 = vld [vmem:[%s23 + $0x28] sm:$0xff]
      %v2477 = vld [vmem:[%s23 + $0x30] sm:$0xff]
      %v2478 = vld [vmem:[%s23 + $0x38] sm:$0xff]
      %v2479 = vld [vmem:[%s23 + $0x40] sm:$0xff]
      %v2480 = vld [vmem:[%s23 + $0x48] sm:$0xff]
      %v2481 = vld [vmem:[%s23 + $0x50] sm:$0xff]
      %v2482 = vld [vmem:[%s23 + $0x58] sm:$0xff]
      %v2483 = vld [vmem:[%s23 + $0x60] sm:$0xff]
      %v2484 = vld [vmem:[%s23 + $0x68] sm:$0xff]
      %v2485 = vmul.f32 %v2457, %v2471
      %v2486 = vmul.f32 %v2458, %v2472
      %v2487 = vmul.f32 %v2459, %v2473
      %v2488 = vmul.f32 %v2460, %v2474
      %v2489 = vmul.f32 %v2461, %v2475
      %v2490 = vmul.f32 %v2462, %v2476
      %v2491 = vmul.f32 %v2463, %v2477
      %v2492 = vmul.f32 %v2464, %v2478
      %v2493 = vmul.f32 %v2465, %v2479
      %v2494 = vmul.f32 %v2466, %v2480
      %v2495 = vmul.f32 %v2467, %v2481
      %v2496 = vmul.f32 %v2468, %v2482
      %v2497 = vmul.f32 %v2469, %v2483
      %v2498 = vmul.f32 %v2470, %v2484
      %v2499 = vld [vmem:[%s25] sm:$0xff]
      %v2500 = vld [vmem:[%s25 + $0x8] sm:$0xff]
      %v2501 = vld [vmem:[%s25 + $0x10] sm:$0xff]
      %v2502 = vld [vmem:[%s25 + $0x18] sm:$0xff]
      %v2503 = vld [vmem:[%s25 + $0x20] sm:$0xff]
      %v2504 = vld [vmem:[%s25 + $0x28] sm:$0xff]
      %v2505 = vld [vmem:[%s25 + $0x30] sm:$0xff]
      %v2506 = vld [vmem:[%s25 + $0x38] sm:$0xff]
      %v2507 = vld [vmem:[%s25 + $0x40] sm:$0xff]
      %v2508 = vld [vmem:[%s25 + $0x48] sm:$0xff]
      %v2509 = vld [vmem:[%s25 + $0x50] sm:$0xff]
      %v2510 = vld [vmem:[%s25 + $0x58] sm:$0xff]
      %v2511 = vld [vmem:[%s25 + $0x60] sm:$0xff]
      %v2512 = vld [vmem:[%s25 + $0x68] sm:$0xff]
      %v2513 = vadd.f32 %v2485, %v2499
      %v2514 = vadd.f32 %v2486, %v2500
      %v2515 = vadd.f32 %v2487, %v2501
      %v2516 = vadd.f32 %v2488, %v2502
      %v2517 = vadd.f32 %v2489, %v2503
      %v2518 = vadd.f32 %v2490, %v2504
      %v2519 = vadd.f32 %v2491, %v2505
      %v2520 = vadd.f32 %v2492, %v2506
      %v2521 = vadd.f32 %v2493, %v2507
      %v2522 = vadd.f32 %v2494, %v2508
      %v2523 = vadd.f32 %v2495, %v2509
      %v2524 = vadd.f32 %v2496, %v2510
      %v2525 = vadd.f32 %v2497, %v2511
      %v2526 = vadd.f32 %v2498, %v2512
      %2527 = vst [vmem:[#allocation4] sm:$0xff] %v2513
      %2528 = vst [vmem:[#allocation4 + $0x8] sm:$0xff] %v2514
      %2529 = vst [vmem:[#allocation4 + $0x10] sm:$0xff] %v2515
      %2530 = vst [vmem:[#allocation4 + $0x18] sm:$0xff] %v2516
      %2531 = vst [vmem:[#allocation4 + $0x20] sm:$0xff] %v2517
      %2532 = vst [vmem:[#allocation4 + $0x28] sm:$0xff] %v2518
      %2533 = vst [vmem:[#allocation4 + $0x30] sm:$0xff] %v2519
      %2534 = vst [vmem:[#allocation4 + $0x38] sm:$0xff] %v2520
      %2535 = vst [vmem:[#allocation4 + $0x40] sm:$0xff] %v2521
      %2536 = vst [vmem:[#allocation4 + $0x48] sm:$0xff] %v2522
      %2537 = vst [vmem:[#allocation4 + $0x50] sm:$0xff] %v2523
      %2538 = vst [vmem:[#allocation4 + $0x58] sm:$0xff] %v2524
      %2539 = vst [vmem:[#allocation4 + $0x60] sm:$0xff] %v2525
      %2540 = vst [vmem:[#allocation4 + $0x68] sm:$0xff] %v2526
      %v2541 = vld [vmem:[%s1072] sm:$0xff]
      %v2542 = vld [vmem:[%s1072 + $0x8] sm:$0xff]
      %2543 = vst [vmem:[#allocation2 + $0x8] sm:$0xff] %v2541
      %2544 = vst [vmem:[#allocation2 + $0x10] sm:$0xff] %v2542
      %v2545 = vld [vmem:[#allocation2] sm:$0xff]
      %v2546 = vld [vmem:[#allocation2 + $0x8] sm:$0xff]
      %v2547 = vld [vmem:[#allocation2 + $0x10] sm:$0xff]
      %v2548 = vld [vmem:[#allocation2 + $0x18] sm:$0xff]
      %v2549 = vld [vmem:[%s53] ss:$8 sm:$0x3]
      %v2551 = vlaneseq
      %v2552 = vshrl.u32 %v2551, 7
      %v2553 = vsub.s32 0, %v2552
      %v2554 = vrot.slane %v2549, %v2553
      %v2555 = vlaneseq
      %v2556 = vshrl.u32 %v2555, 7
      %v2557 = vsub.s32 1, %v2556
      %v2558 = vrot.slane %v2549, %v2557
      %2559 = vrot.lane.b32.xlu0 %v2554, 55
      %v2560 = vpop.permute.xlu0 %2559
      %2561 = vrot.lane.b32.xlu0 %v2558, 55
      %v2562 = vpop.permute.xlu0 %2561
      %v2563 = vsel %vm1155, %v2560, %v2562
      %v2567 = vmul.f32 %v2545, %v2560
      %v2568 = vmul.f32 %v2546, %v2563
      %v2569 = vmul.f32 %v2547, %v2562
      %2573 = vrot.lane.b32.xlu0 %v2567, 73
      %v2574 = vpop.permute.xlu0 %2573
      %2575 = vrot.lane.b32.xlu0 %v2568, 73
      %v2576 = vpop.permute.xlu0 %2575
      %2577 = vrot.lane.b32.xlu0 %v2569, 73
      %v2578 = vpop.permute.xlu0 %2577
      %v2579 = vsel %vm1172, %v2574, %v2576
      %v2580 = vsel %vm1172, %v2576, %v2578
      %2583 = vst [vmem:[#allocation3] sm:$0xff] %v2579
      %2584 = vst [vmem:[#allocation3 + $0x8] sm:$0xff] %v2580
      %v2585 = vld [vmem:[%s1179] ss:$8 sm:$0x3]
      %v2587 = vlaneseq
      %v2588 = vshrl.u32 %v2587, 7
      %v2589 = vsub.s32 0, %v2588
      %v2590 = vrot.slane %v2585, %v2589
      %v2591 = vlaneseq
      %v2592 = vshrl.u32 %v2591, 7
      %v2593 = vsub.s32 1, %v2592
      %v2594 = vrot.slane %v2585, %v2593
      %2595 = vrot.lane.b32.xlu0 %v2590, 56
      %v2596 = vpop.permute.xlu0 %2595
      %2597 = vrot.lane.b32.xlu0 %v2594, 56
      %v2598 = vpop.permute.xlu0 %2597
      %v2599 = vsel %vm1194, %v2596, %v2598
      %v2603 = vmul.f32 %v2545, %v2596
      %v2604 = vmul.f32 %v2546, %v2599
      %v2605 = vmul.f32 %v2547, %v2598
      %2609 = vrot.lane.b32.xlu0 %v2603, 72
      %v2610 = vpop.permute.xlu0 %2609
      %2611 = vrot.lane.b32.xlu0 %v2604, 72
      %v2612 = vpop.permute.xlu0 %2611
      %2613 = vrot.lane.b32.xlu0 %v2605, 72
      %v2614 = vpop.permute.xlu0 %2613
      %v2615 = vsel %vm1211, %v2610, %v2612
      %v2616 = vsel %vm1211, %v2612, %v2614
      %2619 = vst [vmem:[#allocation3 + $0x10] sm:$0xff] %v2615
      %2620 = vst [vmem:[#allocation3 + $0x18] sm:$0xff] %v2616
      %v2621 = vld [vmem:[%s1218] ss:$8 sm:$0x3]
      %v2623 = vlaneseq
      %v2624 = vshrl.u32 %v2623, 7
      %v2625 = vsub.s32 0, %v2624
      %v2626 = vrot.slane %v2621, %v2625
      %v2627 = vlaneseq
      %v2628 = vshrl.u32 %v2627, 7
      %v2629 = vsub.s32 1, %v2628
      %v2630 = vrot.slane %v2621, %v2629
      %2631 = vrot.lane.b32.xlu0 %v2626, 57
      %v2632 = vpop.permute.xlu0 %2631
      %2633 = vrot.lane.b32.xlu0 %v2630, 57
      %v2634 = vpop.permute.xlu0 %2633
      %v2635 = vsel %vm1233, %v2632, %v2634
      %v2639 = vmul.f32 %v2545, %v2632
      %v2640 = vmul.f32 %v2546, %v2635
      %v2641 = vmul.f32 %v2547, %v2634
      %2645 = vrot.lane.b32.xlu0 %v2639, 71
      %v2646 = vpop.permute.xlu0 %2645
      %2647 = vrot.lane.b32.xlu0 %v2640, 71
      %v2648 = vpop.permute.xlu0 %2647
      %2649 = vrot.lane.b32.xlu0 %v2641, 71
      %v2650 = vpop.permute.xlu0 %2649
      %v2651 = vsel %vm1250, %v2646, %v2648
      %v2652 = vsel %vm1250, %v2648, %v2650
      %2655 = vst [vmem:[#allocation3 + $0x20] sm:$0xff] %v2651
      %2656 = vst [vmem:[#allocation3 + $0x28] sm:$0xff] %v2652
      %v2657 = vld [vmem:[%s1257] ss:$8 sm:$0x3]
      %v2659 = vlaneseq
      %v2660 = vshrl.u32 %v2659, 7
      %v2661 = vsub.s32 0, %v2660
      %v2662 = vrot.slane %v2657, %v2661
      %v2663 = vlaneseq
      %v2664 = vshrl.u32 %v2663, 7
      %v2665 = vsub.s32 1, %v2664
      %v2666 = vrot.slane %v2657, %v2665
      %2667 = vrot.lane.b32.xlu0 %v2662, 63
      %v2668 = vpop.permute.xlu0 %2667
      %2669 = vrot.lane.b32.xlu0 %v2666, 63
      %v2670 = vpop.permute.xlu0 %2669
      %v2671 = vsel %vm1272, %v2668, %v2670
      %v2675 = vmul.f32 %v2545, %v2668
      %v2676 = vmul.f32 %v2546, %v2671
      %v2677 = vmul.f32 %v2547, %v2670
      %2681 = vrot.lane.b32.xlu0 %v2675, 65
      %v2682 = vpop.permute.xlu0 %2681
      %2683 = vrot.lane.b32.xlu0 %v2676, 65
      %v2684 = vpop.permute.xlu0 %2683
      %2685 = vrot.lane.b32.xlu0 %v2677, 65
      %v2686 = vpop.permute.xlu0 %2685
      %v2687 = vsel %vm1289, %v2682, %v2684
      %v2688 = vsel %vm1289, %v2684, %v2686
      %2691 = vst [vmem:[#allocation3 + $0x30] sm:$0xff] %v2687
      %2692 = vst [vmem:[#allocation3 + $0x38] sm:$0xff] %v2688
      %v2693 = vld [vmem:[%s1296] ss:$8 sm:$0x3]
      %v2695 = vlaneseq
      %v2696 = vshrl.u32 %v2695, 7
      %v2697 = vsub.s32 0, %v2696
      %v2698 = vrot.slane %v2693, %v2697
      %v2699 = vlaneseq
      %v2700 = vshrl.u32 %v2699, 7
      %v2701 = vsub.s32 1, %v2700
      %v2702 = vrot.slane %v2693, %v2701
      %2703 = vrot.lane.b32.xlu0 %v2698, 64
      %v2704 = vpop.permute.xlu0 %2703
      %2705 = vrot.lane.b32.xlu0 %v2702, 64
      %v2706 = vpop.permute.xlu0 %2705
      %v2707 = vsel %vm1311, %v2704, %v2706
      %v2711 = vmul.f32 %v2545, %v2704
      %v2712 = vmul.f32 %v2546, %v2707
      %v2713 = vmul.f32 %v2547, %v2706
      %2717 = vrot.lane.b32.xlu0 %v2711, 64
      %v2718 = vpop.permute.xlu0 %2717
      %2719 = vrot.lane.b32.xlu0 %v2712, 64
      %v2720 = vpop.permute.xlu0 %2719
      %2721 = vrot.lane.b32.xlu0 %v2713, 64
      %v2722 = vpop.permute.xlu0 %2721
      %v2723 = vsel %vm1311, %v2718, %v2720
      %v2724 = vsel %vm1311, %v2720, %v2722
      %2727 = vst [vmem:[#allocation3 + $0x40] sm:$0xff] %v2723
      %2728 = vst [vmem:[#allocation3 + $0x48] sm:$0xff] %v2724
      %v2729 = vld [vmem:[%s1334] ss:$8 sm:$0x3]
      %v2731 = vlaneseq
      %v2732 = vshrl.u32 %v2731, 7
      %v2733 = vsub.s32 0, %v2732
      %v2734 = vrot.slane %v2729, %v2733
      %v2735 = vlaneseq
      %v2736 = vshrl.u32 %v2735, 7
      %v2737 = vsub.s32 1, %v2736
      %v2738 = vrot.slane %v2729, %v2737
      %2739 = vrot.lane.b32.xlu0 %v2734, 65
      %v2740 = vpop.permute.xlu0 %2739
      %2741 = vrot.lane.b32.xlu0 %v2738, 65
      %v2742 = vpop.permute.xlu0 %2741
      %v2743 = vsel %vm1289, %v2740, %v2742
      %v2747 = vmul.f32 %v2545, %v2740
      %v2748 = vmul.f32 %v2546, %v2743
      %v2749 = vmul.f32 %v2547, %v2742
      %2753 = vrot.lane.b32.xlu0 %v2747, 63
      %v2754 = vpop.permute.xlu0 %2753
      %2755 = vrot.lane.b32.xlu0 %v2748, 63
      %v2756 = vpop.permute.xlu0 %2755
      %2757 = vrot.lane.b32.xlu0 %v2749, 63
      %v2758 = vpop.permute.xlu0 %2757
      %v2759 = vsel %vm1272, %v2754, %v2756
      %v2760 = vsel %vm1272, %v2756, %v2758
      %2763 = vst [vmem:[#allocation3 + $0x50] sm:$0xff] %v2759
      %2764 = vst [vmem:[#allocation3 + $0x58] sm:$0xff] %v2760
      %v2765 = vld [vmem:[%s1371] ss:$8 sm:$0x3]
      %v2767 = vlaneseq
      %v2768 = vshrl.u32 %v2767, 7
      %v2769 = vsub.s32 0, %v2768
      %v2770 = vrot.slane %v2765, %v2769
      %v2771 = vlaneseq
      %v2772 = vshrl.u32 %v2771, 7
      %v2773 = vsub.s32 1, %v2772
      %v2774 = vrot.slane %v2765, %v2773
      %2775 = vrot.lane.b32.xlu0 %v2770, 71
      %v2776 = vpop.permute.xlu0 %2775
      %2777 = vrot.lane.b32.xlu0 %v2774, 71
      %v2778 = vpop.permute.xlu0 %2777
      %v2779 = vsel %vm1250, %v2776, %v2778
      %v2783 = vmul.f32 %v2545, %v2776
      %v2784 = vmul.f32 %v2546, %v2779
      %v2785 = vmul.f32 %v2547, %v2778
      %2789 = vrot.lane.b32.xlu0 %v2783, 57
      %v2790 = vpop.permute.xlu0 %2789
      %2791 = vrot.lane.b32.xlu0 %v2784, 57
      %v2792 = vpop.permute.xlu0 %2791
      %2793 = vrot.lane.b32.xlu0 %v2785, 57
      %v2794 = vpop.permute.xlu0 %2793
      %v2795 = vsel %vm1233, %v2790, %v2792
      %v2796 = vsel %vm1233, %v2792, %v2794
      %2799 = vst [vmem:[#allocation3 + $0x60] sm:$0xff] %v2795
      %2800 = vst [vmem:[#allocation3 + $0x68] sm:$0xff] %v2796
      %v2801 = vld [vmem:[%s1408] ss:$8 sm:$0x3]
      %v2803 = vlaneseq
      %v2804 = vshrl.u32 %v2803, 7
      %v2805 = vsub.s32 0, %v2804
      %v2806 = vrot.slane %v2801, %v2805
      %v2807 = vlaneseq
      %v2808 = vshrl.u32 %v2807, 7
      %v2809 = vsub.s32 1, %v2808
      %v2810 = vrot.slane %v2801, %v2809
      %2811 = vrot.lane.b32.xlu0 %v2806, 72
      %v2812 = vpop.permute.xlu0 %2811
      %2813 = vrot.lane.b32.xlu0 %v2810, 72
      %v2814 = vpop.permute.xlu0 %2813
      %v2815 = vsel %vm1211, %v2812, %v2814
      %v2819 = vmul.f32 %v2545, %v2812
      %v2820 = vmul.f32 %v2546, %v2815
      %v2821 = vmul.f32 %v2547, %v2814
      %2825 = vrot.lane.b32.xlu0 %v2819, 56
      %v2826 = vpop.permute.xlu0 %2825
      %2827 = vrot.lane.b32.xlu0 %v2820, 56
      %v2828 = vpop.permute.xlu0 %2827
      %2829 = vrot.lane.b32.xlu0 %v2821, 56
      %v2830 = vpop.permute.xlu0 %2829
      %v2831 = vsel %vm1194, %v2826, %v2828
      %v2832 = vsel %vm1194, %v2828, %v2830
      %2835 = vst [vmem:[#allocation3 + $0x70] sm:$0xff] %v2831
      %2836 = vst [vmem:[#allocation3 + $0x78] sm:$0xff] %v2832
      %v2837 = vld [vmem:[%s1445] ss:$8 sm:$0x3]
      %v2839 = vlaneseq
      %v2840 = vshrl.u32 %v2839, 7
      %v2841 = vsub.s32 0, %v2840
      %v2842 = vrot.slane %v2837, %v2841
      %v2843 = vlaneseq
      %v2844 = vshrl.u32 %v2843, 7
      %v2845 = vsub.s32 1, %v2844
      %v2846 = vrot.slane %v2837, %v2845
      %2847 = vrot.lane.b32.xlu0 %v2842, 73
      %v2848 = vpop.permute.xlu0 %2847
      %2849 = vrot.lane.b32.xlu0 %v2846, 73
      %v2850 = vpop.permute.xlu0 %2849
      %v2851 = vsel %vm1172, %v2848, %v2850
      %v2855 = vmul.f32 %v2545, %v2848
      %v2856 = vmul.f32 %v2546, %v2851
      %v2857 = vmul.f32 %v2547, %v2850
      %2861 = vrot.lane.b32.xlu0 %v2855, 55
      %v2862 = vpop.permute.xlu0 %2861
      %2863 = vrot.lane.b32.xlu0 %v2856, 55
      %v2864 = vpop.permute.xlu0 %2863
      %2865 = vrot.lane.b32.xlu0 %v2857, 55
      %v2866 = vpop.permute.xlu0 %2865
      %v2867 = vsel %vm1155, %v2862, %v2864
      %v2868 = vsel %vm1155, %v2864, %v2866
      %2871 = vst [vmem:[#allocation3 + $0x80] sm:$0xff] %v2867
      %2872 = vst [vmem:[#allocation3 + $0x88] sm:$0xff] %v2868
      %v2873 = vld [vmem:[%s53] ss:$8 sm:$0x3]
      %v2875 = vlaneseq
      %v2876 = vshrl.u32 %v2875, 7
      %v2877 = vsub.s32 0, %v2876
      %v2878 = vrot.slane %v2873, %v2877
      %v2879 = vlaneseq
      %v2880 = vshrl.u32 %v2879, 7
      %v2881 = vsub.s32 1, %v2880
      %v2882 = vrot.slane %v2873, %v2881
      %2883 = vrot.lane.b32.xlu0 %v2878, 119
      %v2884 = vpop.permute.xlu0 %2883
      %2885 = vrot.lane.b32.xlu0 %v2882, 119
      %v2886 = vpop.permute.xlu0 %2885
      %v2887 = vsel %vm1496, %v2884, %v2886
      %v2891 = vmul.f32 %v2545, %v2884
      %v2892 = vmul.f32 %v2546, %v2887
      %v2893 = vmul.f32 %v2547, %v2886
      %2897 = vrot.lane.b32.xlu0 %v2891, 9
      %v2898 = vpop.permute.xlu0 %2897
      %2899 = vrot.lane.b32.xlu0 %v2892, 9
      %v2900 = vpop.permute.xlu0 %2899
      %2901 = vrot.lane.b32.xlu0 %v2893, 9
      %v2902 = vpop.permute.xlu0 %2901
      %v2903 = vsel %vm1513, %v2898, %v2900
      %v2904 = vsel %vm1513, %v2900, %v2902
      %2907 = vst [vmem:[#allocation3 + $0x90] sm:$0xff] %v2903
      %2908 = vst [vmem:[#allocation3 + $0x98] sm:$0xff] %v2904
      %v2909 = vld [vmem:[%s1179] ss:$8 sm:$0x3]
      %v2911 = vlaneseq
      %v2912 = vshrl.u32 %v2911, 7
      %v2913 = vsub.s32 0, %v2912
      %v2914 = vrot.slane %v2909, %v2913
      %v2915 = vlaneseq
      %v2916 = vshrl.u32 %v2915, 7
      %v2917 = vsub.s32 1, %v2916
      %v2918 = vrot.slane %v2909, %v2917
      %2919 = vrot.lane.b32.xlu0 %v2914, 120
      %v2920 = vpop.permute.xlu0 %2919
      %2921 = vrot.lane.b32.xlu0 %v2918, 120
      %v2922 = vpop.permute.xlu0 %2921
      %v2923 = vsel %vm1534, %v2920, %v2922
      %v2927 = vmul.f32 %v2545, %v2920
      %v2928 = vmul.f32 %v2546, %v2923
      %v2929 = vmul.f32 %v2547, %v2922
      %2933 = vrot.lane.b32.xlu0 %v2927, 8
      %v2934 = vpop.permute.xlu0 %2933
      %2935 = vrot.lane.b32.xlu0 %v2928, 8
      %v2936 = vpop.permute.xlu0 %2935
      %2937 = vrot.lane.b32.xlu0 %v2929, 8
      %v2938 = vpop.permute.xlu0 %2937
      %v2939 = vsel %vm1551, %v2934, %v2936
      %v2940 = vsel %vm1551, %v2936, %v2938
      %2943 = vst [vmem:[#allocation3 + $0xa0] sm:$0xff] %v2939
      %2944 = vst [vmem:[#allocation3 + $0xa8] sm:$0xff] %v2940
      %v2945 = vld [vmem:[%s1218] ss:$8 sm:$0x3]
      %v2947 = vlaneseq
      %v2948 = vshrl.u32 %v2947, 7
      %v2949 = vsub.s32 0, %v2948
      %v2950 = vrot.slane %v2945, %v2949
      %v2951 = vlaneseq
      %v2952 = vshrl.u32 %v2951, 7
      %v2953 = vsub.s32 1, %v2952
      %v2954 = vrot.slane %v2945, %v2953
      %2955 = vrot.lane.b32.xlu0 %v2950, 121
      %v2956 = vpop.permute.xlu0 %2955
      %2957 = vrot.lane.b32.xlu0 %v2954, 121
      %v2958 = vpop.permute.xlu0 %2957
      %v2959 = vsel %vm1572, %v2956, %v2958
      %v2963 = vmul.f32 %v2545, %v2956
      %v2964 = vmul.f32 %v2546, %v2959
      %v2965 = vmul.f32 %v2547, %v2958
      %2969 = vrot.lane.b32.xlu0 %v2963, 7
      %v2970 = vpop.permute.xlu0 %2969
      %2971 = vrot.lane.b32.xlu0 %v2964, 7
      %v2972 = vpop.permute.xlu0 %2971
      %2973 = vrot.lane.b32.xlu0 %v2965, 7
      %v2974 = vpop.permute.xlu0 %2973
      %v2975 = vsel %vm1589, %v2970, %v2972
      %v2976 = vsel %vm1589, %v2972, %v2974
      %2979 = vst [vmem:[#allocation3 + $0xb0] sm:$0xff] %v2975
      %2980 = vst [vmem:[#allocation3 + $0xb8] sm:$0xff] %v2976
      %v2981 = vld [vmem:[%s1257] ss:$8 sm:$0x3]
      %v2983 = vlaneseq
      %v2984 = vshrl.u32 %v2983, 7
      %v2985 = vsub.s32 0, %v2984
      %v2986 = vrot.slane %v2981, %v2985
      %v2987 = vlaneseq
      %v2988 = vshrl.u32 %v2987, 7
      %v2989 = vsub.s32 1, %v2988
      %v2990 = vrot.slane %v2981, %v2989
      %2991 = vrot.lane.b32.xlu0 %v2986, 127
      %v2992 = vpop.permute.xlu0 %2991
      %2993 = vrot.lane.b32.xlu0 %v2990, 127
      %v2994 = vpop.permute.xlu0 %2993
      %v2995 = vsel %vm1610, %v2992, %v2994
      %v2999 = vmul.f32 %v2545, %v2992
      %v3000 = vmul.f32 %v2546, %v2995
      %v3001 = vmul.f32 %v2547, %v2994
      %3005 = vrot.lane.b32.xlu0 %v2999, 1
      %v3006 = vpop.permute.xlu0 %3005
      %3007 = vrot.lane.b32.xlu0 %v3000, 1
      %v3008 = vpop.permute.xlu0 %3007
      %3009 = vrot.lane.b32.xlu0 %v3001, 1
      %v3010 = vpop.permute.xlu0 %3009
      %v3011 = vsel %vm1627, %v3006, %v3008
      %v3012 = vsel %vm1627, %v3008, %v3010
      %3015 = vst [vmem:[#allocation3 + $0xc0] sm:$0xff] %v3011
      %3016 = vst [vmem:[#allocation3 + $0xc8] sm:$0xff] %v3012
      %v3017 = vld [vmem:[%s1296] ss:$8 sm:$0x3]
      %v3019 = vlaneseq
      %v3020 = vshrl.u32 %v3019, 7
      %v3021 = vsub.s32 0, %v3020
      %v3022 = vrot.slane %v3017, %v3021
      %v3023 = vlaneseq
      %v3024 = vshrl.u32 %v3023, 7
      %v3025 = vsub.s32 1, %v3024
      %v3026 = vrot.slane %v3017, %v3025
      %v3029 = vmul.f32 %v2546, %v3022
      %v3030 = vmul.f32 %v2547, %v3026
      %3031 = vst [vmem:[#allocation3 + $0xd0] sm:$0xff] %v3029
      %3032 = vst [vmem:[#allocation3 + $0xd8] sm:$0xff] %v3030
      %v3033 = vld [vmem:[%s1334] ss:$8 sm:$0x3]
      %v3035 = vlaneseq
      %v3036 = vshrl.u32 %v3035, 7
      %v3037 = vsub.s32 0, %v3036
      %v3038 = vrot.slane %v3033, %v3037
      %v3039 = vlaneseq
      %v3040 = vshrl.u32 %v3039, 7
      %v3041 = vsub.s32 1, %v3040
      %v3042 = vrot.slane %v3033, %v3041
      %3043 = vrot.lane.b32.xlu0 %v3038, 1
      %v3044 = vpop.permute.xlu0 %3043
      %3045 = vrot.lane.b32.xlu0 %v3042, 1
      %v3046 = vpop.permute.xlu0 %3045
      %v3047 = vsel %vm1627, %v3044, %v3046
      %v3051 = vmul.f32 %v2546, %v3044
      %v3052 = vmul.f32 %v2547, %v3047
      %v3053 = vmul.f32 %v2548, %v3046
      %3057 = vrot.lane.b32.xlu0 %v3051, 127
      %v3058 = vpop.permute.xlu0 %3057
      %3059 = vrot.lane.b32.xlu0 %v3052, 127
      %v3060 = vpop.permute.xlu0 %3059
      %3061 = vrot.lane.b32.xlu0 %v3053, 127
      %v3062 = vpop.permute.xlu0 %3061
      %v3063 = vsel %vm1610, %v3058, %v3060
      %v3064 = vsel %vm1610, %v3060, %v3062
      %3067 = vst [vmem:[#allocation3 + $0xe0] sm:$0xff] %v3063
      %3068 = vst [vmem:[#allocation3 + $0xe8] sm:$0xff] %v3064
      %v3069 = vld [vmem:[%s1371] ss:$8 sm:$0x3]
      %v3071 = vlaneseq
      %v3072 = vshrl.u32 %v3071, 7
      %v3073 = vsub.s32 0, %v3072
      %v3074 = vrot.slane %v3069, %v3073
      %v3075 = vlaneseq
      %v3076 = vshrl.u32 %v3075, 7
      %v3077 = vsub.s32 1, %v3076
      %v3078 = vrot.slane %v3069, %v3077
      %3079 = vrot.lane.b32.xlu0 %v3074, 7
      %v3080 = vpop.permute.xlu0 %3079
      %3081 = vrot.lane.b32.xlu0 %v3078, 7
      %v3082 = vpop.permute.xlu0 %3081
      %v3083 = vsel %vm1589, %v3080, %v3082
      %v3087 = vmul.f32 %v2546, %v3080
      %v3088 = vmul.f32 %v2547, %v3083
      %v3089 = vmul.f32 %v2548, %v3082
      %3093 = vrot.lane.b32.xlu0 %v3087, 121
      %v3094 = vpop.permute.xlu0 %3093
      %3095 = vrot.lane.b32.xlu0 %v3088, 121
      %v3096 = vpop.permute.xlu0 %3095
      %3097 = vrot.lane.b32.xlu0 %v3089, 121
      %v3098 = vpop.permute.xlu0 %3097
      %v3099 = vsel %vm1572, %v3094, %v3096
      %v3100 = vsel %vm1572, %v3096, %v3098
      %3103 = vst [vmem:[#allocation3 + $0xf0] sm:$0xff] %v3099
      %3104 = vst [vmem:[#allocation3 + $0xf8] sm:$0xff] %v3100
      %v3105 = vld [vmem:[%s1408] ss:$8 sm:$0x3]
      %v3107 = vlaneseq
      %v3108 = vshrl.u32 %v3107, 7
      %v3109 = vsub.s32 0, %v3108
      %v3110 = vrot.slane %v3105, %v3109
      %v3111 = vlaneseq
      %v3112 = vshrl.u32 %v3111, 7
      %v3113 = vsub.s32 1, %v3112
      %v3114 = vrot.slane %v3105, %v3113
      %3115 = vrot.lane.b32.xlu0 %v3110, 8
      %v3116 = vpop.permute.xlu0 %3115
      %3117 = vrot.lane.b32.xlu0 %v3114, 8
      %v3118 = vpop.permute.xlu0 %3117
      %v3119 = vsel %vm1551, %v3116, %v3118
      %v3123 = vmul.f32 %v2546, %v3116
      %v3124 = vmul.f32 %v2547, %v3119
      %v3125 = vmul.f32 %v2548, %v3118
      %3129 = vrot.lane.b32.xlu0 %v3123, 120
      %v3130 = vpop.permute.xlu0 %3129
      %3131 = vrot.lane.b32.xlu0 %v3124, 120
      %v3132 = vpop.permute.xlu0 %3131
      %3133 = vrot.lane.b32.xlu0 %v3125, 120
      %v3134 = vpop.permute.xlu0 %3133
      %v3135 = vsel %vm1534, %v3130, %v3132
      %v3136 = vsel %vm1534, %v3132, %v3134
      %3139 = vst [vmem:[#allocation3 + $0x100] sm:$0xff] %v3135
      %3140 = vst [vmem:[#allocation3 + $0x108] sm:$0xff] %v3136
      %v3141 = vld [vmem:[%s1445] ss:$8 sm:$0x3]
      %v3143 = vlaneseq
      %v3144 = vshrl.u32 %v3143, 7
      %v3145 = vsub.s32 0, %v3144
      %v3146 = vrot.slane %v3141, %v3145
      %v3147 = vlaneseq
      %v3148 = vshrl.u32 %v3147, 7
      %v3149 = vsub.s32 1, %v3148
      %v3150 = vrot.slane %v3141, %v3149
      %3151 = vrot.lane.b32.xlu0 %v3146, 9
      %v3152 = vpop.permute.xlu0 %3151
      %3153 = vrot.lane.b32.xlu0 %v3150, 9
      %v3154 = vpop.permute.xlu0 %3153
      %v3155 = vsel %vm1513, %v3152, %v3154
      %v3159 = vmul.f32 %v2546, %v3152
      %v3160 = vmul.f32 %v2547, %v3155
      %v3161 = vmul.f32 %v2548, %v3154
      %3165 = vrot.lane.b32.xlu0 %v3159, 119
      %v3166 = vpop.permute.xlu0 %3165
      %3167 = vrot.lane.b32.xlu0 %v3160, 119
      %v3168 = vpop.permute.xlu0 %3167
      %3169 = vrot.lane.b32.xlu0 %v3161, 119
      %v3170 = vpop.permute.xlu0 %3169
      %v3171 = vsel %vm1496, %v3166, %v3168
      %v3172 = vsel %vm1496, %v3168, %v3170
      %3175 = vst [vmem:[#allocation3 + $0x110] sm:$0xff] %v3171
      %3176 = vst [vmem:[#allocation3 + $0x118] sm:$0xff] %v3172
      %v3177 = vld [vmem:[%s53] ss:$8 sm:$0x3]
      %v3179 = vlaneseq
      %v3180 = vshrl.u32 %v3179, 7
      %v3181 = vsub.s32 0, %v3180
      %v3182 = vrot.slane %v3177, %v3181
      %v3183 = vlaneseq
      %v3184 = vshrl.u32 %v3183, 7
      %v3185 = vsub.s32 1, %v3184
      %v3186 = vrot.slane %v3177, %v3185
      %3187 = vrot.lane.b32.xlu0 %v3182, 55
      %v3188 = vpop.permute.xlu0 %3187
      %3189 = vrot.lane.b32.xlu0 %v3186, 55
      %v3190 = vpop.permute.xlu0 %3189
      %v3191 = vsel %vm1155, %v3188, %v3190
      %v3195 = vmul.f32 %v2546, %v3188
      %v3196 = vmul.f32 %v2547, %v3191
      %v3197 = vmul.f32 %v2548, %v3190
      %3201 = vrot.lane.b32.xlu0 %v3195, 73
      %v3202 = vpop.permute.xlu0 %3201
      %3203 = vrot.lane.b32.xlu0 %v3196, 73
      %v3204 = vpop.permute.xlu0 %3203
      %3205 = vrot.lane.b32.xlu0 %v3197, 73
      %v3206 = vpop.permute.xlu0 %3205
      %v3207 = vsel %vm1172, %v3202, %v3204
      %v3208 = vsel %vm1172, %v3204, %v3206
      %3211 = vst [vmem:[#allocation3 + $0x120] sm:$0xff] %v3207
      %3212 = vst [vmem:[#allocation3 + $0x128] sm:$0xff] %v3208
      %v3213 = vld [vmem:[%s1179] ss:$8 sm:$0x3]
      %v3215 = vlaneseq
      %v3216 = vshrl.u32 %v3215, 7
      %v3217 = vsub.s32 0, %v3216
      %v3218 = vrot.slane %v3213, %v3217
      %v3219 = vlaneseq
      %v3220 = vshrl.u32 %v3219, 7
      %v3221 = vsub.s32 1, %v3220
      %v3222 = vrot.slane %v3213, %v3221
      %3223 = vrot.lane.b32.xlu0 %v3218, 56
      %v3224 = vpop.permute.xlu0 %3223
      %3225 = vrot.lane.b32.xlu0 %v3222, 56
      %v3226 = vpop.permute.xlu0 %3225
      %v3227 = vsel %vm1194, %v3224, %v3226
      %v3231 = vmul.f32 %v2546, %v3224
      %v3232 = vmul.f32 %v2547, %v3227
      %v3233 = vmul.f32 %v2548, %v3226
      %3237 = vrot.lane.b32.xlu0 %v3231, 72
      %v3238 = vpop.permute.xlu0 %3237
      %3239 = vrot.lane.b32.xlu0 %v3232, 72
      %v3240 = vpop.permute.xlu0 %3239
      %3241 = vrot.lane.b32.xlu0 %v3233, 72
      %v3242 = vpop.permute.xlu0 %3241
      %v3243 = vsel %vm1211, %v3238, %v3240
      %v3244 = vsel %vm1211, %v3240, %v3242
      %3247 = vst [vmem:[#allocation3 + $0x130] sm:$0xff] %v3243
      %3248 = vst [vmem:[#allocation3 + $0x138] sm:$0xff] %v3244
      %v3249 = vld [vmem:[%s1218] ss:$8 sm:$0x3]
      %v3251 = vlaneseq
      %v3252 = vshrl.u32 %v3251, 7
      %v3253 = vsub.s32 0, %v3252
      %v3254 = vrot.slane %v3249, %v3253
      %v3255 = vlaneseq
      %v3256 = vshrl.u32 %v3255, 7
      %v3257 = vsub.s32 1, %v3256
      %v3258 = vrot.slane %v3249, %v3257
      %3259 = vrot.lane.b32.xlu0 %v3254, 57
      %v3260 = vpop.permute.xlu0 %3259
      %3261 = vrot.lane.b32.xlu0 %v3258, 57
      %v3262 = vpop.permute.xlu0 %3261
      %v3263 = vsel %vm1233, %v3260, %v3262
      %v3267 = vmul.f32 %v2546, %v3260
      %v3268 = vmul.f32 %v2547, %v3263
      %v3269 = vmul.f32 %v2548, %v3262
      %3273 = vrot.lane.b32.xlu0 %v3267, 71
      %v3274 = vpop.permute.xlu0 %3273
      %3275 = vrot.lane.b32.xlu0 %v3268, 71
      %v3276 = vpop.permute.xlu0 %3275
      %3277 = vrot.lane.b32.xlu0 %v3269, 71
      %v3278 = vpop.permute.xlu0 %3277
      %v3279 = vsel %vm1250, %v3274, %v3276
      %v3280 = vsel %vm1250, %v3276, %v3278
      %3283 = vst [vmem:[#allocation3 + $0x140] sm:$0xff] %v3279
      %3284 = vst [vmem:[#allocation3 + $0x148] sm:$0xff] %v3280
      %v3285 = vld [vmem:[%s1257] ss:$8 sm:$0x3]
      %v3287 = vlaneseq
      %v3288 = vshrl.u32 %v3287, 7
      %v3289 = vsub.s32 0, %v3288
      %v3290 = vrot.slane %v3285, %v3289
      %v3291 = vlaneseq
      %v3292 = vshrl.u32 %v3291, 7
      %v3293 = vsub.s32 1, %v3292
      %v3294 = vrot.slane %v3285, %v3293
      %3295 = vrot.lane.b32.xlu0 %v3290, 63
      %v3296 = vpop.permute.xlu0 %3295
      %3297 = vrot.lane.b32.xlu0 %v3294, 63
      %v3298 = vpop.permute.xlu0 %3297
      %v3299 = vsel %vm1272, %v3296, %v3298
      %v3303 = vmul.f32 %v2546, %v3296
      %v3304 = vmul.f32 %v2547, %v3299
      %v3305 = vmul.f32 %v2548, %v3298
      %3309 = vrot.lane.b32.xlu0 %v3303, 65
      %v3310 = vpop.permute.xlu0 %3309
      %3311 = vrot.lane.b32.xlu0 %v3304, 65
      %v3312 = vpop.permute.xlu0 %3311
      %3313 = vrot.lane.b32.xlu0 %v3305, 65
      %v3314 = vpop.permute.xlu0 %3313
      %v3315 = vsel %vm1289, %v3310, %v3312
      %v3316 = vsel %vm1289, %v3312, %v3314
      %3319 = vst [vmem:[#allocation3 + $0x150] sm:$0xff] %v3315
      %3320 = vst [vmem:[#allocation3 + $0x158] sm:$0xff] %v3316
      %v3321 = vld [vmem:[%s1296] ss:$8 sm:$0x3]
      %v3323 = vlaneseq
      %v3324 = vshrl.u32 %v3323, 7
      %v3325 = vsub.s32 0, %v3324
      %v3326 = vrot.slane %v3321, %v3325
      %v3327 = vlaneseq
      %v3328 = vshrl.u32 %v3327, 7
      %v3329 = vsub.s32 1, %v3328
      %v3330 = vrot.slane %v3321, %v3329
      %3331 = vrot.lane.b32.xlu0 %v3326, 64
      %v3332 = vpop.permute.xlu0 %3331
      %3333 = vrot.lane.b32.xlu0 %v3330, 64
      %v3334 = vpop.permute.xlu0 %3333
      %v3335 = vsel %vm1311, %v3332, %v3334
      %v3339 = vmul.f32 %v2546, %v3332
      %v3340 = vmul.f32 %v2547, %v3335
      %v3341 = vmul.f32 %v2548, %v3334
      %3345 = vrot.lane.b32.xlu0 %v3339, 64
      %v3346 = vpop.permute.xlu0 %3345
      %3347 = vrot.lane.b32.xlu0 %v3340, 64
      %v3348 = vpop.permute.xlu0 %3347
      %3349 = vrot.lane.b32.xlu0 %v3341, 64
      %v3350 = vpop.permute.xlu0 %3349
      %v3351 = vsel %vm1311, %v3346, %v3348
      %v3352 = vsel %vm1311, %v3348, %v3350
      %3355 = vst [vmem:[#allocation3 + $0x160] sm:$0xff] %v3351
      %3356 = vst [vmem:[#allocation3 + $0x168] sm:$0xff] %v3352
      %v3357 = vld [vmem:[%s1334] ss:$8 sm:$0x3]
      %v3359 = vlaneseq
      %v3360 = vshrl.u32 %v3359, 7
      %v3361 = vsub.s32 0, %v3360
      %v3362 = vrot.slane %v3357, %v3361
      %v3363 = vlaneseq
      %v3364 = vshrl.u32 %v3363, 7
      %v3365 = vsub.s32 1, %v3364
      %v3366 = vrot.slane %v3357, %v3365
      %3367 = vrot.lane.b32.xlu0 %v3362, 65
      %v3368 = vpop.permute.xlu0 %3367
      %3369 = vrot.lane.b32.xlu0 %v3366, 65
      %v3370 = vpop.permute.xlu0 %3369
      %v3371 = vsel %vm1289, %v3368, %v3370
      %v3375 = vmul.f32 %v2546, %v3368
      %v3376 = vmul.f32 %v2547, %v3371
      %v3377 = vmul.f32 %v2548, %v3370
      %3381 = vrot.lane.b32.xlu0 %v3375, 63
      %v3382 = vpop.permute.xlu0 %3381
      %3383 = vrot.lane.b32.xlu0 %v3376, 63
      %v3384 = vpop.permute.xlu0 %3383
      %3385 = vrot.lane.b32.xlu0 %v3377, 63
      %v3386 = vpop.permute.xlu0 %3385
      %v3387 = vsel %vm1272, %v3382, %v3384
      %v3388 = vsel %vm1272, %v3384, %v3386
      %3391 = vst [vmem:[#allocation3 + $0x170] sm:$0xff] %v3387
      %3392 = vst [vmem:[#allocation3 + $0x178] sm:$0xff] %v3388
      %v3393 = vld [vmem:[%s1371] ss:$8 sm:$0x3]
      %v3395 = vlaneseq
      %v3396 = vshrl.u32 %v3395, 7
      %v3397 = vsub.s32 0, %v3396
      %v3398 = vrot.slane %v3393, %v3397
      %v3399 = vlaneseq
      %v3400 = vshrl.u32 %v3399, 7
      %v3401 = vsub.s32 1, %v3400
      %v3402 = vrot.slane %v3393, %v3401
      %3403 = vrot.lane.b32.xlu0 %v3398, 71
      %v3404 = vpop.permute.xlu0 %3403
      %3405 = vrot.lane.b32.xlu0 %v3402, 71
      %v3406 = vpop.permute.xlu0 %3405
      %v3407 = vsel %vm1250, %v3404, %v3406
      %v3411 = vmul.f32 %v2546, %v3404
      %v3412 = vmul.f32 %v2547, %v3407
      %v3413 = vmul.f32 %v2548, %v3406
      %3417 = vrot.lane.b32.xlu0 %v3411, 57
      %v3418 = vpop.permute.xlu0 %3417
      %3419 = vrot.lane.b32.xlu0 %v3412, 57
      %v3420 = vpop.permute.xlu0 %3419
      %3421 = vrot.lane.b32.xlu0 %v3413, 57
      %v3422 = vpop.permute.xlu0 %3421
      %v3423 = vsel %vm1233, %v3418, %v3420
      %v3424 = vsel %vm1233, %v3420, %v3422
      %3427 = vst [vmem:[#allocation3 + $0x180] sm:$0xff] %v3423
      %3428 = vst [vmem:[#allocation3 + $0x188] sm:$0xff] %v3424
      %v3429 = vld [vmem:[%s1408] ss:$8 sm:$0x3]
      %v3431 = vlaneseq
      %v3432 = vshrl.u32 %v3431, 7
      %v3433 = vsub.s32 0, %v3432
      %v3434 = vrot.slane %v3429, %v3433
      %v3435 = vlaneseq
      %v3436 = vshrl.u32 %v3435, 7
      %v3437 = vsub.s32 1, %v3436
      %v3438 = vrot.slane %v3429, %v3437
      %3439 = vrot.lane.b32.xlu0 %v3434, 72
      %v3440 = vpop.permute.xlu0 %3439
      %3441 = vrot.lane.b32.xlu0 %v3438, 72
      %v3442 = vpop.permute.xlu0 %3441
      %v3443 = vsel %vm1211, %v3440, %v3442
      %v3447 = vmul.f32 %v2546, %v3440
      %v3448 = vmul.f32 %v2547, %v3443
      %v3449 = vmul.f32 %v2548, %v3442
      %3453 = vrot.lane.b32.xlu0 %v3447, 56
      %v3454 = vpop.permute.xlu0 %3453
      %3455 = vrot.lane.b32.xlu0 %v3448, 56
      %v3456 = vpop.permute.xlu0 %3455
      %3457 = vrot.lane.b32.xlu0 %v3449, 56
      %v3458 = vpop.permute.xlu0 %3457
      %v3459 = vsel %vm1194, %v3454, %v3456
      %v3460 = vsel %vm1194, %v3456, %v3458
      %3463 = vst [vmem:[#allocation3 + $0x190] sm:$0xff] %v3459
      %3464 = vst [vmem:[#allocation3 + $0x198] sm:$0xff] %v3460
      %v3465 = vld [vmem:[%s1445] ss:$8 sm:$0x3]
      %v3467 = vlaneseq
      %v3468 = vshrl.u32 %v3467, 7
      %v3469 = vsub.s32 0, %v3468
      %v3470 = vrot.slane %v3465, %v3469
      %v3471 = vlaneseq
      %v3472 = vshrl.u32 %v3471, 7
      %v3473 = vsub.s32 1, %v3472
      %v3474 = vrot.slane %v3465, %v3473
      %3475 = vrot.lane.b32.xlu0 %v3470, 73
      %v3476 = vpop.permute.xlu0 %3475
      %3477 = vrot.lane.b32.xlu0 %v3474, 73
      %v3478 = vpop.permute.xlu0 %3477
      %v3479 = vsel %vm1172, %v3476, %v3478
      %v3483 = vmul.f32 %v2546, %v3476
      %v3484 = vmul.f32 %v2547, %v3479
      %v3485 = vmul.f32 %v2548, %v3478
      %3489 = vrot.lane.b32.xlu0 %v3483, 55
      %v3490 = vpop.permute.xlu0 %3489
      %3491 = vrot.lane.b32.xlu0 %v3484, 55
      %v3492 = vpop.permute.xlu0 %3491
      %3493 = vrot.lane.b32.xlu0 %v3485, 55
      %v3494 = vpop.permute.xlu0 %3493
      %v3495 = vsel %vm1155, %v3490, %v3492
      %v3496 = vsel %vm1155, %v3492, %v3494
      %3499 = vst [vmem:[#allocation3 + $0x1a0] sm:$0xff] %v3495
      %3500 = vst [vmem:[#allocation3 + $0x1a8] sm:$0xff] %v3496
      %v3501 = vld [vmem:[#allocation3] sm:$0xff]
      %v3502 = vld [vmem:[#allocation3 + $0x8] sm:$0xff]
      %v3503 = vld [vmem:[#allocation3 + $0x10] sm:$0xff]
      %v3504 = vld [vmem:[#allocation3 + $0x18] sm:$0xff]
      %v3505 = vld [vmem:[#allocation3 + $0x20] sm:$0xff]
      %v3506 = vld [vmem:[#allocation3 + $0x28] sm:$0xff]
      %v3507 = vld [vmem:[#allocation3 + $0x30] sm:$0xff]
      %v3508 = vld [vmem:[#allocation3 + $0x38] sm:$0xff]
      %v3509 = vld [vmem:[#allocation3 + $0x40] sm:$0xff]
      %v3510 = vld [vmem:[#allocation3 + $0x48] sm:$0xff]
      %v3511 = vld [vmem:[#allocation3 + $0x50] sm:$0xff]
      %v3512 = vld [vmem:[#allocation3 + $0x58] sm:$0xff]
      %v3513 = vld [vmem:[#allocation3 + $0x60] sm:$0xff]
      %v3514 = vld [vmem:[#allocation3 + $0x68] sm:$0xff]
      %v3515 = vld [vmem:[#allocation3 + $0x70] sm:$0xff]
      %v3516 = vld [vmem:[#allocation3 + $0x78] sm:$0xff]
      %v3517 = vld [vmem:[#allocation3 + $0x80] sm:$0xff]
      %v3518 = vld [vmem:[#allocation3 + $0x88] sm:$0xff]
      %v3519 = vld [vmem:[#allocation3 + $0x90] sm:$0xff]
      %v3520 = vld [vmem:[#allocation3 + $0x98] sm:$0xff]
      %v3521 = vld [vmem:[#allocation3 + $0xa0] sm:$0xff]
      %v3522 = vld [vmem:[#allocation3 + $0xa8] sm:$0xff]
      %v3523 = vld [vmem:[#allocation3 + $0xb0] sm:$0xff]
      %v3524 = vld [vmem:[#allocation3 + $0xb8] sm:$0xff]
      %v3525 = vld [vmem:[#allocation3 + $0xc0] sm:$0xff]
      %v3526 = vld [vmem:[#allocation3 + $0xc8] sm:$0xff]
      %v3527 = vld [vmem:[#allocation3 + $0xd0] sm:$0xff]
      %v3528 = vld [vmem:[#allocation3 + $0xd8] sm:$0xff]
      %v3529 = vld [vmem:[#allocation3 + $0xe0] sm:$0xff]
      %v3530 = vld [vmem:[#allocation3 + $0xe8] sm:$0xff]
      %v3531 = vld [vmem:[#allocation3 + $0xf0] sm:$0xff]
      %v3532 = vld [vmem:[#allocation3 + $0xf8] sm:$0xff]
      %v3533 = vld [vmem:[#allocation3 + $0x100] sm:$0xff]
      %v3534 = vld [vmem:[#allocation3 + $0x108] sm:$0xff]
      %v3535 = vld [vmem:[#allocation3 + $0x110] sm:$0xff]
      %v3536 = vld [vmem:[#allocation3 + $0x118] sm:$0xff]
      %v3537 = vld [vmem:[#allocation3 + $0x120] sm:$0xff]
      %v3538 = vld [vmem:[#allocation3 + $0x128] sm:$0xff]
      %v3539 = vld [vmem:[#allocation3 + $0x130] sm:$0xff]
      %v3540 = vld [vmem:[#allocation3 + $0x138] sm:$0xff]
      %v3541 = vld [vmem:[#allocation3 + $0x140] sm:$0xff]
      %v3542 = vld [vmem:[#allocation3 + $0x148] sm:$0xff]
      %v3543 = vld [vmem:[#allocation3 + $0x150] sm:$0xff]
      %v3544 = vld [vmem:[#allocation3 + $0x158] sm:$0xff]
      %v3545 = vld [vmem:[#allocation3 + $0x160] sm:$0xff]
      %v3546 = vld [vmem:[#allocation3 + $0x168] sm:$0xff]
      %v3547 = vld [vmem:[#allocation3 + $0x170] sm:$0xff]
      %v3548 = vld [vmem:[#allocation3 + $0x178] sm:$0xff]
      %v3549 = vld [vmem:[#allocation3 + $0x180] sm:$0xff]
      %v3550 = vld [vmem:[#allocation3 + $0x188] sm:$0xff]
      %v3551 = vld [vmem:[#allocation3 + $0x190] sm:$0xff]
      %v3552 = vld [vmem:[#allocation3 + $0x198] sm:$0xff]
      %v3553 = vld [vmem:[#allocation3 + $0x1a0] sm:$0xff]
      %v3554 = vld [vmem:[#allocation3 + $0x1a8] sm:$0xff]
      %v3555 = vpack.c.bf16 %v3503, %v3501
      %v3556 = vpack.c.bf16 %v3504, %v3502
      %v3557 = vpack.c.bf16 %v3507, %v3505
      %v3558 = vpack.c.bf16 %v3508, %v3506
      %v3559 = vpack.c.bf16 %v3511, %v3509
      %v3560 = vpack.c.bf16 %v3512, %v3510
      %v3561 = vpack.c.bf16 %v3515, %v3513
      %v3562 = vpack.c.bf16 %v3516, %v3514
      %v3563 = vpack.c.bf16 %v3519, %v3517
      %v3564 = vpack.c.bf16 %v3520, %v3518
      %v3565 = vpack.c.bf16 %v3523, %v3521
      %v3566 = vpack.c.bf16 %v3524, %v3522
      %v3567 = vpack.c.bf16 %v3527, %v3525
      %v3568 = vpack.c.bf16 %v3528, %v3526
      %v3569 = vpack.c.bf16 %v3531, %v3529
      %v3570 = vpack.c.bf16 %v3532, %v3530
      %v3571 = vpack.c.bf16 %v3535, %v3533
      %v3572 = vpack.c.bf16 %v3536, %v3534
      %v3573 = vpack.c.bf16 %v3539, %v3537
      %v3574 = vpack.c.bf16 %v3540, %v3538
      %v3575 = vpack.c.bf16 %v3543, %v3541
      %v3576 = vpack.c.bf16 %v3544, %v3542
      %v3577 = vpack.c.bf16 %v3547, %v3545
      %v3578 = vpack.c.bf16 %v3548, %v3546
      %v3579 = vpack.c.bf16 %v3551, %v3549
      %v3580 = vpack.c.bf16 %v3552, %v3550
      %v3581 = vpack.c.bf16 %v3553, %v3553
      %v3582 = vpack.c.bf16 %v3554, %v3554
      %v3583 = vld [vmem:[%s27] sm:$0xff]
      %v3584 = vld [vmem:[%s27 + $0x8] sm:$0xff]
      %v3585 = vld [vmem:[%s27 + $0x10] sm:$0xff]
      %v3586 = vld [vmem:[%s27 + $0x18] sm:$0xff]
      %v3587 = vld [vmem:[%s29] sm:$0xff]
      %v3588 = vld [vmem:[%s29 + $0x8] sm:$0xff]
      %v3589 = vld [vmem:[%s29 + $0x10] sm:$0xff]
      %v3590 = vld [vmem:[%s29 + $0x18] sm:$0xff]
      %3592 = vset.pattern.permute.xlu0 0
      %3593 = vperm.xlu0 %3592, %v3587
      %v3594 = vpop.permute.xlu0 %3593
      %3597 = vset.pattern.permute.xlu0 0
      %3598 = vperm.xlu0 %3597, %v3588
      %v3599 = vpop.permute.xlu0 %3598
      %3602 = vset.pattern.permute.xlu0 0
      %3603 = vperm.xlu0 %3602, %v3589
      %v3604 = vpop.permute.xlu0 %3603
      %3607 = vset.pattern.permute.xlu0 0
      %3608 = vperm.xlu0 %3607, %v3590
      %v3609 = vpop.permute.xlu0 %3608
      %v3615 = vunpack.c.l.b16 %v3583
      %v3616 = vunpack.c.h.b16 %v3583
      %v3617 = vunpack.c.l.b16 %v3584
      %v3618 = vunpack.c.h.b16 %v3584
      %v3619 = vunpack.c.l.b16 %v3585
      %v3620 = vunpack.c.h.b16 %v3585
      %v3621 = vunpack.c.l.b16 %v3586
      %v3622 = vunpack.c.h.b16 %v3586
      %v3623 = vpack.c.b16 %v3617, %v3615
      %v3624 = vpack.c.b16 %v3618, %v3616
      %v3625 = vpack.c.b16 %v3621, %v3619
      %v3626 = vpack.c.b16 %v3622, %v3620
      %v3630 = vsel %vm2282, %v3624, 0
      %v3633 = vsel %vm2282, %v3626, 0
      %v3636 = vsel %vm2295, %v3581, 0
      %v3639 = vsel %vm2295, %v3582, 0
      %3641 = vmatprep.subr.bf16.mxu0 %v3556
      %3642 = vmatpush1.bf16.msra.mxu0 %v3555
      %3643 = vmatprep.subr.bf16.mxu0 %v3558
      %3644 = vmatpush1.bf16.msra.mxu0 %v3557
      %3645 = vmatprep.subr.bf16.mxu0 %v3560
      %3646 = vmatpush1.bf16.msra.mxu0 %v3559
      %3647 = vmatprep.subr.bf16.mxu0 %v3562
      %3648 = vmatpush1.bf16.msra.mxu0 %v3561
      %3649 = vmatprep.subr.bf16.mxu0 %v3564
      %3650 = vmatpush1.bf16.msra.mxu0 %v3563
      %3651 = vmatprep.subr.bf16.mxu0 %v3566
      %3652 = vmatpush1.bf16.msra.mxu0 %v3565
      %3653 = vmatprep.subr.bf16.mxu0 %v3568
      %3654 = vmatpush1.bf16.msra.mxu0 %v3567
      %3655 = vmatprep.subr.bf16.mxu0 %v3570
      %3656 = vmatpush1.bf16.msra.mxu0 %v3569
      %3657 = vmatprep.subr.bf16.mxu0 %v3572
      %3658 = vmatpush1.bf16.msra.mxu0 %v3571
      %3659 = vmatprep.subr.bf16.mxu0 %v3574
      %3660 = vmatpush1.bf16.msra.mxu0 %v3573
      %3661 = vmatprep.subr.bf16.mxu0 %v3576
      %3662 = vmatpush1.bf16.msra.mxu0 %v3575
      %3663 = vmatprep.subr.bf16.mxu0 %v3578
      %3664 = vmatpush1.bf16.msra.mxu0 %v3577
      %3665 = vmatprep.subr.bf16.mxu0 %v3580
      %3666 = vmatpush1.bf16.msra.mxu0 %v3579
      %3667 = vmatprep.subr.bf16.mxu0 %v3639
      %3668 = vmatpush1.bf16.msra.mxu0 %v3636
      %3669 = vmatprep.subr.bf16.mxu0 0
      %3670 = vmatpush1.bf16.msra.mxu0 0
      %3671 = vmatprep.subr.bf16.mxu0 0
      %3672 = vmatpush1.bf16.msra.mxu0 0
      %3673 = vmatprep.mubr.bf16.mxu0 %v3630
      %3674 = vmatmul.mubr.bf16.gmra.mrb[0].mxu0 %v3623
      %v3675 = vpop.f32.mrb[0].mxu0
      %v3676 = vadd.f32 %v3594, %v3675
      %v3677 = vpop.f32.mrb[0].mxu0
      %v3678 = vadd.f32 %v3594, %v3677
      %v3679 = vpop.f32.mrb[0].mxu0
      %v3680 = vadd.f32 %v3599, %v3679
      %v3681 = vpop.f32.mrb[0].mxu0
      %v3682 = vadd.f32 %v3599, %v3681
      %3683 = vmatprep.mubr.bf16.mxu0 %v3633
      %3684 = vmatmul.mubr.bf16.gmra.mrb[0].mxu0 %v3625
      %v3685 = vpop.f32.mrb[0].mxu0
      %v3686 = vadd.f32 %v3604, %v3685
      %v3687 = vpop.f32.mrb[0].mxu0
      %v3688 = vadd.f32 %v3604, %v3687
      %v3689 = vpop.f32.mrb[0].mxu0
      %v3690 = vadd.f32 %v3609, %v3689
      %v3691 = vpop.f32.mrb[0].mxu0
      %v3692 = vadd.f32 %v3609, %v3691
      %3693 = vdwg.mxu0
      %v3694 = vadd.f32 %v3676, %v3678
      %v3695 = vadd.f32 %v3694, %v3680
      %v3696 = vadd.f32 %v3695, %v3682
      %v3697 = vadd.f32 %v3696, %v3686
      %v3698 = vadd.f32 %v3697, %v3688
      %v3699 = vadd.f32 %v3698, %v3690
      %v3700 = vadd.f32 %v3699, %v3692
      %3701 = vadd.xlane.f32.xlu0 %v3700
      %v3702 = vpop.xlane.xlu0 %3701
      %v3703 = vrot.slane %v3702, 4
      %v3704 = vadd.f32 %v3702, %v3703
      %v3705 = vrot.slane %v3704, 2
      %v3706 = vadd.f32 %v3704, %v3705
      %v3707 = vrot.slane %v3706, 1
      %v3708 = vadd.f32 %v3706, %v3707
      %s3709 = vtos %v3708
      %v3710 = vrcp.pop 8192.0
      %s3711 = vtos %v3710
      %s3712 = smul.f32 %s3709, %s3711
      %v3713 = vstv %s3712
      %v3714 = vsub.f32 %v3676, %v3713
      %v3715 = vsub.f32 %v3678, %v3713
      %v3716 = vsub.f32 %v3680, %v3713
      %v3717 = vsub.f32 %v3682, %v3713
      %v3718 = vsub.f32 %v3686, %v3713
      %v3719 = vsub.f32 %v3688, %v3713
      %v3720 = vsub.f32 %v3690, %v3713
      %v3721 = vsub.f32 %v3692, %v3713
      %v3722 = vmul.f32 %v3714, %v3714
      %v3723 = vmul.f32 %v3715, %v3715
      %v3724 = vmul.f32 %v3716, %v3716
      %v3725 = vmul.f32 %v3717, %v3717
      %v3726 = vmul.f32 %v3718, %v3718
      %v3727 = vmul.f32 %v3719, %v3719
      %v3728 = vmul.f32 %v3720, %v3720
      %v3729 = vmul.f32 %v3721, %v3721
      %v3730 = vadd.f32 %v3722, %v3723
      %v3731 = vadd.f32 %v3730, %v3724
      %v3732 = vadd.f32 %v3731, %v3725
      %v3733 = vadd.f32 %v3732, %v3726
      %v3734 = vadd.f32 %v3733, %v3727
      %v3735 = vadd.f32 %v3734, %v3728
      %v3736 = vadd.f32 %v3735, %v3729
      %3737 = vadd.xlane.f32.xlu0 %v3736
      %v3738 = vpop.xlane.xlu0 %3737
      %v3739 = vrot.slane %v3738, 4
      %v3740 = vadd.f32 %v3738, %v3739
      %v3741 = vrot.slane %v3740, 2
      %v3742 = vadd.f32 %v3740, %v3741
      %v3743 = vrot.slane %v3742, 1
      %v3744 = vadd.f32 %v3742, %v3743
      %s3745 = vtos %v3744
      %v3746 = vrcp.pop 8192.0
      %s3747 = vtos %v3746
      %s3748 = smul.f32 %s3745, %s3747
      %s3749 = sadd.f32 %s3748, 1e-05
      %v3750 = vstv %s3749
      %v3751 = vrsqrt.pop %v3750
      %s3752 = vtos %v3751
      %v3753 = vstv %s3752
      %v3754 = vmul.f32 %v3714, %v3753
      %v3755 = vmul.f32 %v3715, %v3753
      %v3756 = vmul.f32 %v3716, %v3753
      %v3757 = vmul.f32 %v3717, %v3753
      %v3758 = vmul.f32 %v3718, %v3753
      %v3759 = vmul.f32 %v3719, %v3753
      %v3760 = vmul.f32 %v3720, %v3753
      %v3761 = vmul.f32 %v3721, %v3753
      %v3762 = vld [vmem:[%s31] sm:$0xff]
      %v3763 = vld [vmem:[%s31 + $0x8] sm:$0xff]
      %v3764 = vld [vmem:[%s31 + $0x10] sm:$0xff]
      %v3765 = vld [vmem:[%s31 + $0x18] sm:$0xff]
      %v3766 = vld [vmem:[%s31 + $0x20] sm:$0xff]
      %v3767 = vld [vmem:[%s31 + $0x28] sm:$0xff]
      %v3768 = vld [vmem:[%s31 + $0x30] sm:$0xff]
      %v3769 = vld [vmem:[%s31 + $0x38] sm:$0xff]
      %v3770 = vmul.f32 %v3754, %v3762
      %v3771 = vmul.f32 %v3755, %v3763
      %v3772 = vmul.f32 %v3756, %v3764
      %v3773 = vmul.f32 %v3757, %v3765
      %v3774 = vmul.f32 %v3758, %v3766
      %v3775 = vmul.f32 %v3759, %v3767
      %v3776 = vmul.f32 %v3760, %v3768
      %v3777 = vmul.f32 %v3761, %v3769
      %v3778 = vld [vmem:[%s33] sm:$0xff]
      %v3779 = vld [vmem:[%s33 + $0x8] sm:$0xff]
      %v3780 = vld [vmem:[%s33 + $0x10] sm:$0xff]
      %v3781 = vld [vmem:[%s33 + $0x18] sm:$0xff]
      %v3782 = vld [vmem:[%s33 + $0x20] sm:$0xff]
      %v3783 = vld [vmem:[%s33 + $0x28] sm:$0xff]
      %v3784 = vld [vmem:[%s33 + $0x30] sm:$0xff]
      %v3785 = vld [vmem:[%s33 + $0x38] sm:$0xff]
      %v3786 = vadd.f32 %v3770, %v3778
      %v3787 = vadd.f32 %v3771, %v3779
      %v3788 = vadd.f32 %v3772, %v3780
      %v3789 = vadd.f32 %v3773, %v3781
      %v3790 = vadd.f32 %v3774, %v3782
      %v3791 = vadd.f32 %v3775, %v3783
      %v3792 = vadd.f32 %v3776, %v3784
      %v3793 = vadd.f32 %v3777, %v3785
      %3794 = vst [vmem:[#allocation5] sm:$0xff] %v3786
      %3795 = vst [vmem:[#allocation5 + $0x8] sm:$0xff] %v3787
      %3796 = vst [vmem:[#allocation5 + $0x10] sm:$0xff] %v3788
      %3797 = vst [vmem:[#allocation5 + $0x18] sm:$0xff] %v3789
      %3798 = vst [vmem:[#allocation5 + $0x20] sm:$0xff] %v3790
      %3799 = vst [vmem:[#allocation5 + $0x28] sm:$0xff] %v3791
      %3800 = vst [vmem:[#allocation5 + $0x30] sm:$0xff] %v3792
      %3801 = vst [vmem:[#allocation5 + $0x38] sm:$0xff] %v3793
      %v3802 = vld [vmem:[%s1077] sm:$0xff]
      %v3803 = vld [vmem:[%s1077 + $0x8] sm:$0xff]
      %3804 = vst [vmem:[#allocation2 + $0x8] sm:$0xff] %v3802
      %3805 = vst [vmem:[#allocation2 + $0x10] sm:$0xff] %v3803
      %v3806 = vld [vmem:[#allocation2] sm:$0xff]
      %v3807 = vld [vmem:[#allocation2 + $0x8] sm:$0xff]
      %v3808 = vld [vmem:[#allocation2 + $0x10] sm:$0xff]
      %v3809 = vld [vmem:[#allocation2 + $0x18] sm:$0xff]
      %v3810 = vld [vmem:[%s53] ss:$8 sm:$0x3]
      %v3812 = vlaneseq
      %v3813 = vshrl.u32 %v3812, 7
      %v3814 = vsub.s32 0, %v3813
      %v3815 = vrot.slane %v3810, %v3814
      %v3816 = vlaneseq
      %v3817 = vshrl.u32 %v3816, 7
      %v3818 = vsub.s32 1, %v3817
      %v3819 = vrot.slane %v3810, %v3818
      %3820 = vrot.lane.b32.xlu0 %v3815, 55
      %v3821 = vpop.permute.xlu0 %3820
      %3822 = vrot.lane.b32.xlu0 %v3819, 55
      %v3823 = vpop.permute.xlu0 %3822
      %v3824 = vsel %vm1155, %v3821, %v3823
      %v3828 = vmul.f32 %v3806, %v3821
      %v3829 = vmul.f32 %v3807, %v3824
      %v3830 = vmul.f32 %v3808, %v3823
      %3834 = vrot.lane.b32.xlu0 %v3828, 73
      %v3835 = vpop.permute.xlu0 %3834
      %3836 = vrot.lane.b32.xlu0 %v3829, 73
      %v3837 = vpop.permute.xlu0 %3836
      %3838 = vrot.lane.b32.xlu0 %v3830, 73
      %v3839 = vpop.permute.xlu0 %3838
      %v3840 = vsel %vm1172, %v3835, %v3837
      %v3841 = vsel %vm1172, %v3837, %v3839
      %3844 = vst [vmem:[#allocation3] sm:$0xff] %v3840
      %3845 = vst [vmem:[#allocation3 + $0x8] sm:$0xff] %v3841
      %v3846 = vld [vmem:[%s1179] ss:$8 sm:$0x3]
      %v3848 = vlaneseq
      %v3849 = vshrl.u32 %v3848, 7
      %v3850 = vsub.s32 0, %v3849
      %v3851 = vrot.slane %v3846, %v3850
      %v3852 = vlaneseq
      %v3853 = vshrl.u32 %v3852, 7
      %v3854 = vsub.s32 1, %v3853
      %v3855 = vrot.slane %v3846, %v3854
      %3856 = vrot.lane.b32.xlu0 %v3851, 56
      %v3857 = vpop.permute.xlu0 %3856
      %3858 = vrot.lane.b32.xlu0 %v3855, 56
      %v3859 = vpop.permute.xlu0 %3858
      %v3860 = vsel %vm1194, %v3857, %v3859
      %v3864 = vmul.f32 %v3806, %v3857
      %v3865 = vmul.f32 %v3807, %v3860
      %v3866 = vmul.f32 %v3808, %v3859
      %3870 = vrot.lane.b32.xlu0 %v3864, 72
      %v3871 = vpop.permute.xlu0 %3870
      %3872 = vrot.lane.b32.xlu0 %v3865, 72
      %v3873 = vpop.permute.xlu0 %3872
      %3874 = vrot.lane.b32.xlu0 %v3866, 72
      %v3875 = vpop.permute.xlu0 %3874
      %v3876 = vsel %vm1211, %v3871, %v3873
      %v3877 = vsel %vm1211, %v3873, %v3875
      %3880 = vst [vmem:[#allocation3 + $0x10] sm:$0xff] %v3876
      %3881 = vst [vmem:[#allocation3 + $0x18] sm:$0xff] %v3877
      %v3882 = vld [vmem:[%s1218] ss:$8 sm:$0x3]
      %v3884 = vlaneseq
      %v3885 = vshrl.u32 %v3884, 7
      %v3886 = vsub.s32 0, %v3885
      %v3887 = vrot.slane %v3882, %v3886
      %v3888 = vlaneseq
      %v3889 = vshrl.u32 %v3888, 7
      %v3890 = vsub.s32 1, %v3889
      %v3891 = vrot.slane %v3882, %v3890
      %3892 = vrot.lane.b32.xlu0 %v3887, 57
      %v3893 = vpop.permute.xlu0 %3892
      %3894 = vrot.lane.b32.xlu0 %v3891, 57
      %v3895 = vpop.permute.xlu0 %3894
      %v3896 = vsel %vm1233, %v3893, %v3895
      %v3900 = vmul.f32 %v3806, %v3893
      %v3901 = vmul.f32 %v3807, %v3896
      %v3902 = vmul.f32 %v3808, %v3895
      %3906 = vrot.lane.b32.xlu0 %v3900, 71
      %v3907 = vpop.permute.xlu0 %3906
      %3908 = vrot.lane.b32.xlu0 %v3901, 71
      %v3909 = vpop.permute.xlu0 %3908
      %3910 = vrot.lane.b32.xlu0 %v3902, 71
      %v3911 = vpop.permute.xlu0 %3910
      %v3912 = vsel %vm1250, %v3907, %v3909
      %v3913 = vsel %vm1250, %v3909, %v3911
      %3916 = vst [vmem:[#allocation3 + $0x20] sm:$0xff] %v3912
      %3917 = vst [vmem:[#allocation3 + $0x28] sm:$0xff] %v3913
      %v3918 = vld [vmem:[%s1257] ss:$8 sm:$0x3]
      %v3920 = vlaneseq
      %v3921 = vshrl.u32 %v3920, 7
      %v3922 = vsub.s32 0, %v3921
      %v3923 = vrot.slane %v3918, %v3922
      %v3924 = vlaneseq
      %v3925 = vshrl.u32 %v3924, 7
      %v3926 = vsub.s32 1, %v3925
      %v3927 = vrot.slane %v3918, %v3926
      %3928 = vrot.lane.b32.xlu0 %v3923, 63
      %v3929 = vpop.permute.xlu0 %3928
      %3930 = vrot.lane.b32.xlu0 %v3927, 63
      %v3931 = vpop.permute.xlu0 %3930
      %v3932 = vsel %vm1272, %v3929, %v3931
      %v3936 = vmul.f32 %v3806, %v3929
      %v3937 = vmul.f32 %v3807, %v3932
      %v3938 = vmul.f32 %v3808, %v3931
      %3942 = vrot.lane.b32.xlu0 %v3936, 65
      %v3943 = vpop.permute.xlu0 %3942
      %3944 = vrot.lane.b32.xlu0 %v3937, 65
      %v3945 = vpop.permute.xlu0 %3944
      %3946 = vrot.lane.b32.xlu0 %v3938, 65
      %v3947 = vpop.permute.xlu0 %3946
      %v3948 = vsel %vm1289, %v3943, %v3945
      %v3949 = vsel %vm1289, %v3945, %v3947
      %3952 = vst [vmem:[#allocation3 + $0x30] sm:$0xff] %v3948
      %3953 = vst [vmem:[#allocation3 + $0x38] sm:$0xff] %v3949
      %v3954 = vld [vmem:[%s1296] ss:$8 sm:$0x3]
      %v3956 = vlaneseq
      %v3957 = vshrl.u32 %v3956, 7
      %v3958 = vsub.s32 0, %v3957
      %v3959 = vrot.slane %v3954, %v3958
      %v3960 = vlaneseq
      %v3961 = vshrl.u32 %v3960, 7
      %v3962 = vsub.s32 1, %v3961
      %v3963 = vrot.slane %v3954, %v3962
      %3964 = vrot.lane.b32.xlu0 %v3959, 64
      %v3965 = vpop.permute.xlu0 %3964
      %3966 = vrot.lane.b32.xlu0 %v3963, 64
      %v3967 = vpop.permute.xlu0 %3966
      %v3968 = vsel %vm1311, %v3965, %v3967
      %v3972 = vmul.f32 %v3806, %v3965
      %v3973 = vmul.f32 %v3807, %v3968
      %v3974 = vmul.f32 %v3808, %v3967
      %3978 = vrot.lane.b32.xlu0 %v3972, 64
      %v3979 = vpop.permute.xlu0 %3978
      %3980 = vrot.lane.b32.xlu0 %v3973, 64
      %v3981 = vpop.permute.xlu0 %3980
      %3982 = vrot.lane.b32.xlu0 %v3974, 64
      %v3983 = vpop.permute.xlu0 %3982
      %v3984 = vsel %vm1311, %v3979, %v3981
      %v3985 = vsel %vm1311, %v3981, %v3983
      %3988 = vst [vmem:[#allocation3 + $0x40] sm:$0xff] %v3984
      %3989 = vst [vmem:[#allocation3 + $0x48] sm:$0xff] %v3985
      %v3990 = vld [vmem:[%s1334] ss:$8 sm:$0x3]
      %v3992 = vlaneseq
      %v3993 = vshrl.u32 %v3992, 7
      %v3994 = vsub.s32 0, %v3993
      %v3995 = vrot.slane %v3990, %v3994
      %v3996 = vlaneseq
      %v3997 = vshrl.u32 %v3996, 7
      %v3998 = vsub.s32 1, %v3997
      %v3999 = vrot.slane %v3990, %v3998
      %4000 = vrot.lane.b32.xlu0 %v3995, 65
      %v4001 = vpop.permute.xlu0 %4000
      %4002 = vrot.lane.b32.xlu0 %v3999, 65
      %v4003 = vpop.permute.xlu0 %4002
      %v4004 = vsel %vm1289, %v4001, %v4003
      %v4008 = vmul.f32 %v3806, %v4001
      %v4009 = vmul.f32 %v3807, %v4004
      %v4010 = vmul.f32 %v3808, %v4003
      %4014 = vrot.lane.b32.xlu0 %v4008, 63
      %v4015 = vpop.permute.xlu0 %4014
      %4016 = vrot.lane.b32.xlu0 %v4009, 63
      %v4017 = vpop.permute.xlu0 %4016
      %4018 = vrot.lane.b32.xlu0 %v4010, 63
      %v4019 = vpop.permute.xlu0 %4018
      %v4020 = vsel %vm1272, %v4015, %v4017
      %v4021 = vsel %vm1272, %v4017, %v4019
      %4024 = vst [vmem:[#allocation3 + $0x50] sm:$0xff] %v4020
      %4025 = vst [vmem:[#allocation3 + $0x58] sm:$0xff] %v4021
      %v4026 = vld [vmem:[%s1371] ss:$8 sm:$0x3]
      %v4028 = vlaneseq
      %v4029 = vshrl.u32 %v4028, 7
      %v4030 = vsub.s32 0, %v4029
      %v4031 = vrot.slane %v4026, %v4030
      %v4032 = vlaneseq
      %v4033 = vshrl.u32 %v4032, 7
      %v4034 = vsub.s32 1, %v4033
      %v4035 = vrot.slane %v4026, %v4034
      %4036 = vrot.lane.b32.xlu0 %v4031, 71
      %v4037 = vpop.permute.xlu0 %4036
      %4038 = vrot.lane.b32.xlu0 %v4035, 71
      %v4039 = vpop.permute.xlu0 %4038
      %v4040 = vsel %vm1250, %v4037, %v4039
      %v4044 = vmul.f32 %v3806, %v4037
      %v4045 = vmul.f32 %v3807, %v4040
      %v4046 = vmul.f32 %v3808, %v4039
      %4050 = vrot.lane.b32.xlu0 %v4044, 57
      %v4051 = vpop.permute.xlu0 %4050
      %4052 = vrot.lane.b32.xlu0 %v4045, 57
      %v4053 = vpop.permute.xlu0 %4052
      %4054 = vrot.lane.b32.xlu0 %v4046, 57
      %v4055 = vpop.permute.xlu0 %4054
      %v4056 = vsel %vm1233, %v4051, %v4053
      %v4057 = vsel %vm1233, %v4053, %v4055
      %4060 = vst [vmem:[#allocation3 + $0x60] sm:$0xff] %v4056
      %4061 = vst [vmem:[#allocation3 + $0x68] sm:$0xff] %v4057
      %v4062 = vld [vmem:[%s1408] ss:$8 sm:$0x3]
      %v4064 = vlaneseq
      %v4065 = vshrl.u32 %v4064, 7
      %v4066 = vsub.s32 0, %v4065
      %v4067 = vrot.slane %v4062, %v4066
      %v4068 = vlaneseq
      %v4069 = vshrl.u32 %v4068, 7
      %v4070 = vsub.s32 1, %v4069
      %v4071 = vrot.slane %v4062, %v4070
      %4072 = vrot.lane.b32.xlu0 %v4067, 72
      %v4073 = vpop.permute.xlu0 %4072
      %4074 = vrot.lane.b32.xlu0 %v4071, 72
      %v4075 = vpop.permute.xlu0 %4074
      %v4076 = vsel %vm1211, %v4073, %v4075
      %v4080 = vmul.f32 %v3806, %v4073
      %v4081 = vmul.f32 %v3807, %v4076
      %v4082 = vmul.f32 %v3808, %v4075
      %4086 = vrot.lane.b32.xlu0 %v4080, 56
      %v4087 = vpop.permute.xlu0 %4086
      %4088 = vrot.lane.b32.xlu0 %v4081, 56
      %v4089 = vpop.permute.xlu0 %4088
      %4090 = vrot.lane.b32.xlu0 %v4082, 56
      %v4091 = vpop.permute.xlu0 %4090
      %v4092 = vsel %vm1194, %v4087, %v4089
      %v4093 = vsel %vm1194, %v4089, %v4091
      %4096 = vst [vmem:[#allocation3 + $0x70] sm:$0xff] %v4092
      %4097 = vst [vmem:[#allocation3 + $0x78] sm:$0xff] %v4093
      %v4098 = vld [vmem:[%s1445] ss:$8 sm:$0x3]
      %v4100 = vlaneseq
      %v4101 = vshrl.u32 %v4100, 7
      %v4102 = vsub.s32 0, %v4101
      %v4103 = vrot.slane %v4098, %v4102
      %v4104 = vlaneseq
      %v4105 = vshrl.u32 %v4104, 7
      %v4106 = vsub.s32 1, %v4105
      %v4107 = vrot.slane %v4098, %v4106
      %4108 = vrot.lane.b32.xlu0 %v4103, 73
      %v4109 = vpop.permute.xlu0 %4108
      %4110 = vrot.lane.b32.xlu0 %v4107, 73
      %v4111 = vpop.permute.xlu0 %4110
      %v4112 = vsel %vm1172, %v4109, %v4111
      %v4116 = vmul.f32 %v3806, %v4109
      %v4117 = vmul.f32 %v3807, %v4112
      %v4118 = vmul.f32 %v3808, %v4111
      %4122 = vrot.lane.b32.xlu0 %v4116, 55
      %v4123 = vpop.permute.xlu0 %4122
      %4124 = vrot.lane.b32.xlu0 %v4117, 55
      %v4125 = vpop.permute.xlu0 %4124
      %4126 = vrot.lane.b32.xlu0 %v4118, 55
      %v4127 = vpop.permute.xlu0 %4126
      %v4128 = vsel %vm1155, %v4123, %v4125
      %v4129 = vsel %vm1155, %v4125, %v4127
      %4132 = vst [vmem:[#allocation3 + $0x80] sm:$0xff] %v4128
      %4133 = vst [vmem:[#allocation3 + $0x88] sm:$0xff] %v4129
      %v4134 = vld [vmem:[%s53] ss:$8 sm:$0x3]
      %v4136 = vlaneseq
      %v4137 = vshrl.u32 %v4136, 7
      %v4138 = vsub.s32 0, %v4137
      %v4139 = vrot.slane %v4134, %v4138
      %v4140 = vlaneseq
      %v4141 = vshrl.u32 %v4140, 7
      %v4142 = vsub.s32 1, %v4141
      %v4143 = vrot.slane %v4134, %v4142
      %4144 = vrot.lane.b32.xlu0 %v4139, 119
      %v4145 = vpop.permute.xlu0 %4144
      %4146 = vrot.lane.b32.xlu0 %v4143, 119
      %v4147 = vpop.permute.xlu0 %4146
      %v4148 = vsel %vm1496, %v4145, %v4147
      %v4152 = vmul.f32 %v3806, %v4145
      %v4153 = vmul.f32 %v3807, %v4148
      %v4154 = vmul.f32 %v3808, %v4147
      %4158 = vrot.lane.b32.xlu0 %v4152, 9
      %v4159 = vpop.permute.xlu0 %4158
      %4160 = vrot.lane.b32.xlu0 %v4153, 9
      %v4161 = vpop.permute.xlu0 %4160
      %4162 = vrot.lane.b32.xlu0 %v4154, 9
      %v4163 = vpop.permute.xlu0 %4162
      %v4164 = vsel %vm1513, %v4159, %v4161
      %v4165 = vsel %vm1513, %v4161, %v4163
      %4168 = vst [vmem:[#allocation3 + $0x90] sm:$0xff] %v4164
      %4169 = vst [vmem:[#allocation3 + $0x98] sm:$0xff] %v4165
      %v4170 = vld [vmem:[%s1179] ss:$8 sm:$0x3]
      %v4172 = vlaneseq
      %v4173 = vshrl.u32 %v4172, 7
      %v4174 = vsub.s32 0, %v4173
      %v4175 = vrot.slane %v4170, %v4174
      %v4176 = vlaneseq
      %v4177 = vshrl.u32 %v4176, 7
      %v4178 = vsub.s32 1, %v4177
      %v4179 = vrot.slane %v4170, %v4178
      %4180 = vrot.lane.b32.xlu0 %v4175, 120
      %v4181 = vpop.permute.xlu0 %4180
      %4182 = vrot.lane.b32.xlu0 %v4179, 120
      %v4183 = vpop.permute.xlu0 %4182
      %v4184 = vsel %vm1534, %v4181, %v4183
      %v4188 = vmul.f32 %v3806, %v4181
      %v4189 = vmul.f32 %v3807, %v4184
      %v4190 = vmul.f32 %v3808, %v4183
      %4194 = vrot.lane.b32.xlu0 %v4188, 8
      %v4195 = vpop.permute.xlu0 %4194
      %4196 = vrot.lane.b32.xlu0 %v4189, 8
      %v4197 = vpop.permute.xlu0 %4196
      %4198 = vrot.lane.b32.xlu0 %v4190, 8
      %v4199 = vpop.permute.xlu0 %4198
      %v4200 = vsel %vm1551, %v4195, %v4197
      %v4201 = vsel %vm1551, %v4197, %v4199
      %4204 = vst [vmem:[#allocation3 + $0xa0] sm:$0xff] %v4200
      %4205 = vst [vmem:[#allocation3 + $0xa8] sm:$0xff] %v4201
      %v4206 = vld [vmem:[%s1218] ss:$8 sm:$0x3]
      %v4208 = vlaneseq
      %v4209 = vshrl.u32 %v4208, 7
      %v4210 = vsub.s32 0, %v4209
      %v4211 = vrot.slane %v4206, %v4210
      %v4212 = vlaneseq
      %v4213 = vshrl.u32 %v4212, 7
      %v4214 = vsub.s32 1, %v4213
      %v4215 = vrot.slane %v4206, %v4214
      %4216 = vrot.lane.b32.xlu0 %v4211, 121
      %v4217 = vpop.permute.xlu0 %4216
      %4218 = vrot.lane.b32.xlu0 %v4215, 121
      %v4219 = vpop.permute.xlu0 %4218
      %v4220 = vsel %vm1572, %v4217, %v4219
      %v4224 = vmul.f32 %v3806, %v4217
      %v4225 = vmul.f32 %v3807, %v4220
      %v4226 = vmul.f32 %v3808, %v4219
      %4230 = vrot.lane.b32.xlu0 %v4224, 7
      %v4231 = vpop.permute.xlu0 %4230
      %4232 = vrot.lane.b32.xlu0 %v4225, 7
      %v4233 = vpop.permute.xlu0 %4232
      %4234 = vrot.lane.b32.xlu0 %v4226, 7
      %v4235 = vpop.permute.xlu0 %4234
      %v4236 = vsel %vm1589, %v4231, %v4233
      %v4237 = vsel %vm1589, %v4233, %v4235
      %4240 = vst [vmem:[#allocation3 + $0xb0] sm:$0xff] %v4236
      %4241 = vst [vmem:[#allocation3 + $0xb8] sm:$0xff] %v4237
      %v4242 = vld [vmem:[%s1257] ss:$8 sm:$0x3]
      %v4244 = vlaneseq
      %v4245 = vshrl.u32 %v4244, 7
      %v4246 = vsub.s32 0, %v4245
      %v4247 = vrot.slane %v4242, %v4246
      %v4248 = vlaneseq
      %v4249 = vshrl.u32 %v4248, 7
      %v4250 = vsub.s32 1, %v4249
      %v4251 = vrot.slane %v4242, %v4250
      %4252 = vrot.lane.b32.xlu0 %v4247, 127
      %v4253 = vpop.permute.xlu0 %4252
      %4254 = vrot.lane.b32.xlu0 %v4251, 127
      %v4255 = vpop.permute.xlu0 %4254
      %v4256 = vsel %vm1610, %v4253, %v4255
      %v4260 = vmul.f32 %v3806, %v4253
      %v4261 = vmul.f32 %v3807, %v4256
      %v4262 = vmul.f32 %v3808, %v4255
      %4266 = vrot.lane.b32.xlu0 %v4260, 1
      %v4267 = vpop.permute.xlu0 %4266
      %4268 = vrot.lane.b32.xlu0 %v4261, 1
      %v4269 = vpop.permute.xlu0 %4268
      %4270 = vrot.lane.b32.xlu0 %v4262, 1
      %v4271 = vpop.permute.xlu0 %4270
      %v4272 = vsel %vm1627, %v4267, %v4269
      %v4273 = vsel %vm1627, %v4269, %v4271
      %4276 = vst [vmem:[#allocation3 + $0xc0] sm:$0xff] %v4272
      %4277 = vst [vmem:[#allocation3 + $0xc8] sm:$0xff] %v4273
      %v4278 = vld [vmem:[%s1296] ss:$8 sm:$0x3]
      %v4280 = vlaneseq
      %v4281 = vshrl.u32 %v4280, 7
      %v4282 = vsub.s32 0, %v4281
      %v4283 = vrot.slane %v4278, %v4282
      %v4284 = vlaneseq
      %v4285 = vshrl.u32 %v4284, 7
      %v4286 = vsub.s32 1, %v4285
      %v4287 = vrot.slane %v4278, %v4286
      %v4290 = vmul.f32 %v3807, %v4283
      %v4291 = vmul.f32 %v3808, %v4287
      %4292 = vst [vmem:[#allocation3 + $0xd0] sm:$0xff] %v4290
      %4293 = vst [vmem:[#allocation3 + $0xd8] sm:$0xff] %v4291
      %v4294 = vld [vmem:[%s1334] ss:$8 sm:$0x3]
      %v4296 = vlaneseq
      %v4297 = vshrl.u32 %v4296, 7
      %v4298 = vsub.s32 0, %v4297
      %v4299 = vrot.slane %v4294, %v4298
      %v4300 = vlaneseq
      %v4301 = vshrl.u32 %v4300, 7
      %v4302 = vsub.s32 1, %v4301
      %v4303 = vrot.slane %v4294, %v4302
      %4304 = vrot.lane.b32.xlu0 %v4299, 1
      %v4305 = vpop.permute.xlu0 %4304
      %4306 = vrot.lane.b32.xlu0 %v4303, 1
      %v4307 = vpop.permute.xlu0 %4306
      %v4308 = vsel %vm1627, %v4305, %v4307
      %v4312 = vmul.f32 %v3807, %v4305
      %v4313 = vmul.f32 %v3808, %v4308
      %v4314 = vmul.f32 %v3809, %v4307
      %4318 = vrot.lane.b32.xlu0 %v4312, 127
      %v4319 = vpop.permute.xlu0 %4318
      %4320 = vrot.lane.b32.xlu0 %v4313, 127
      %v4321 = vpop.permute.xlu0 %4320
      %4322 = vrot.lane.b32.xlu0 %v4314, 127
      %v4323 = vpop.permute.xlu0 %4322
      %v4324 = vsel %vm1610, %v4319, %v4321
      %v4325 = vsel %vm1610, %v4321, %v4323
      %4328 = vst [vmem:[#allocation3 + $0xe0] sm:$0xff] %v4324
      %4329 = vst [vmem:[#allocation3 + $0xe8] sm:$0xff] %v4325
      %v4330 = vld [vmem:[%s1371] ss:$8 sm:$0x3]
      %v4332 = vlaneseq
      %v4333 = vshrl.u32 %v4332, 7
      %v4334 = vsub.s32 0, %v4333
      %v4335 = vrot.slane %v4330, %v4334
      %v4336 = vlaneseq
      %v4337 = vshrl.u32 %v4336, 7
      %v4338 = vsub.s32 1, %v4337
      %v4339 = vrot.slane %v4330, %v4338
      %4340 = vrot.lane.b32.xlu0 %v4335, 7
      %v4341 = vpop.permute.xlu0 %4340
      %4342 = vrot.lane.b32.xlu0 %v4339, 7
      %v4343 = vpop.permute.xlu0 %4342
      %v4344 = vsel %vm1589, %v4341, %v4343
      %v4348 = vmul.f32 %v3807, %v4341
      %v4349 = vmul.f32 %v3808, %v4344
      %v4350 = vmul.f32 %v3809, %v4343
      %4354 = vrot.lane.b32.xlu0 %v4348, 121
      %v4355 = vpop.permute.xlu0 %4354
      %4356 = vrot.lane.b32.xlu0 %v4349, 121
      %v4357 = vpop.permute.xlu0 %4356
      %4358 = vrot.lane.b32.xlu0 %v4350, 121
      %v4359 = vpop.permute.xlu0 %4358
      %v4360 = vsel %vm1572, %v4355, %v4357
      %v4361 = vsel %vm1572, %v4357, %v4359
      %4364 = vst [vmem:[#allocation3 + $0xf0] sm:$0xff] %v4360
      %4365 = vst [vmem:[#allocation3 + $0xf8] sm:$0xff] %v4361
      %v4366 = vld [vmem:[%s1408] ss:$8 sm:$0x3]
      %v4368 = vlaneseq
      %v4369 = vshrl.u32 %v4368, 7
      %v4370 = vsub.s32 0, %v4369
      %v4371 = vrot.slane %v4366, %v4370
      %v4372 = vlaneseq
      %v4373 = vshrl.u32 %v4372, 7
      %v4374 = vsub.s32 1, %v4373
      %v4375 = vrot.slane %v4366, %v4374
      %4376 = vrot.lane.b32.xlu0 %v4371, 8
      %v4377 = vpop.permute.xlu0 %4376
      %4378 = vrot.lane.b32.xlu0 %v4375, 8
      %v4379 = vpop.permute.xlu0 %4378
      %v4380 = vsel %vm1551, %v4377, %v4379
      %v4384 = vmul.f32 %v3807, %v4377
      %v4385 = vmul.f32 %v3808, %v4380
      %v4386 = vmul.f32 %v3809, %v4379
      %4390 = vrot.lane.b32.xlu0 %v4384, 120
      %v4391 = vpop.permute.xlu0 %4390
      %4392 = vrot.lane.b32.xlu0 %v4385, 120
      %v4393 = vpop.permute.xlu0 %4392
      %4394 = vrot.lane.b32.xlu0 %v4386, 120
      %v4395 = vpop.permute.xlu0 %4394
      %v4396 = vsel %vm1534, %v4391, %v4393
      %v4397 = vsel %vm1534, %v4393, %v4395
      %4400 = vst [vmem:[#allocation3 + $0x100] sm:$0xff] %v4396
      %4401 = vst [vmem:[#allocation3 + $0x108] sm:$0xff] %v4397
      %v4402 = vld [vmem:[%s1445] ss:$8 sm:$0x3]
      %v4404 = vlaneseq
      %v4405 = vshrl.u32 %v4404, 7
      %v4406 = vsub.s32 0, %v4405
      %v4407 = vrot.slane %v4402, %v4406
      %v4408 = vlaneseq
      %v4409 = vshrl.u32 %v4408, 7
      %v4410 = vsub.s32 1, %v4409
      %v4411 = vrot.slane %v4402, %v4410
      %4412 = vrot.lane.b32.xlu0 %v4407, 9
      %v4413 = vpop.permute.xlu0 %4412
      %4414 = vrot.lane.b32.xlu0 %v4411, 9
      %v4415 = vpop.permute.xlu0 %4414
      %v4416 = vsel %vm1513, %v4413, %v4415
      %v4420 = vmul.f32 %v3807, %v4413
      %v4421 = vmul.f32 %v3808, %v4416
      %v4422 = vmul.f32 %v3809, %v4415
      %4426 = vrot.lane.b32.xlu0 %v4420, 119
      %v4427 = vpop.permute.xlu0 %4426
      %4428 = vrot.lane.b32.xlu0 %v4421, 119
      %v4429 = vpop.permute.xlu0 %4428
      %4430 = vrot.lane.b32.xlu0 %v4422, 119
      %v4431 = vpop.permute.xlu0 %4430
      %v4432 = vsel %vm1496, %v4427, %v4429
      %v4433 = vsel %vm1496, %v4429, %v4431
      %4436 = vst [vmem:[#allocation3 + $0x110] sm:$0xff] %v4432
      %4437 = vst [vmem:[#allocation3 + $0x118] sm:$0xff] %v4433
      %v4438 = vld [vmem:[%s53] ss:$8 sm:$0x3]
      %v4440 = vlaneseq
      %v4441 = vshrl.u32 %v4440, 7
      %v4442 = vsub.s32 0, %v4441
      %v4443 = vrot.slane %v4438, %v4442
      %v4444 = vlaneseq
      %v4445 = vshrl.u32 %v4444, 7
      %v4446 = vsub.s32 1, %v4445
      %v4447 = vrot.slane %v4438, %v4446
      %4448 = vrot.lane.b32.xlu0 %v4443, 55
      %v4449 = vpop.permute.xlu0 %4448
      %4450 = vrot.lane.b32.xlu0 %v4447, 55
      %v4451 = vpop.permute.xlu0 %4450
      %v4452 = vsel %vm1155, %v4449, %v4451
      %v4456 = vmul.f32 %v3807, %v4449
      %v4457 = vmul.f32 %v3808, %v4452
      %v4458 = vmul.f32 %v3809, %v4451
      %4462 = vrot.lane.b32.xlu0 %v4456, 73
      %v4463 = vpop.permute.xlu0 %4462
      %4464 = vrot.lane.b32.xlu0 %v4457, 73
      %v4465 = vpop.permute.xlu0 %4464
      %4466 = vrot.lane.b32.xlu0 %v4458, 73
      %v4467 = vpop.permute.xlu0 %4466
      %v4468 = vsel %vm1172, %v4463, %v4465
      %v4469 = vsel %vm1172, %v4465, %v4467
      %4472 = vst [vmem:[#allocation3 + $0x120] sm:$0xff] %v4468
      %4473 = vst [vmem:[#allocation3 + $0x128] sm:$0xff] %v4469
      %v4474 = vld [vmem:[%s1179] ss:$8 sm:$0x3]
      %v4476 = vlaneseq
      %v4477 = vshrl.u32 %v4476, 7
      %v4478 = vsub.s32 0, %v4477
      %v4479 = vrot.slane %v4474, %v4478
      %v4480 = vlaneseq
      %v4481 = vshrl.u32 %v4480, 7
      %v4482 = vsub.s32 1, %v4481
      %v4483 = vrot.slane %v4474, %v4482
      %4484 = vrot.lane.b32.xlu0 %v4479, 56
      %v4485 = vpop.permute.xlu0 %4484
      %4486 = vrot.lane.b32.xlu0 %v4483, 56
      %v4487 = vpop.permute.xlu0 %4486
      %v4488 = vsel %vm1194, %v4485, %v4487
      %v4492 = vmul.f32 %v3807, %v4485
      %v4493 = vmul.f32 %v3808, %v4488
      %v4494 = vmul.f32 %v3809, %v4487
      %4498 = vrot.lane.b32.xlu0 %v4492, 72
      %v4499 = vpop.permute.xlu0 %4498
      %4500 = vrot.lane.b32.xlu0 %v4493, 72
      %v4501 = vpop.permute.xlu0 %4500
      %4502 = vrot.lane.b32.xlu0 %v4494, 72
      %v4503 = vpop.permute.xlu0 %4502
      %v4504 = vsel %vm1211, %v4499, %v4501
      %v4505 = vsel %vm1211, %v4501, %v4503
      %4508 = vst [vmem:[#allocation3 + $0x130] sm:$0xff] %v4504
      %4509 = vst [vmem:[#allocation3 + $0x138] sm:$0xff] %v4505
      %v4510 = vld [vmem:[%s1218] ss:$8 sm:$0x3]
      %v4512 = vlaneseq
      %v4513 = vshrl.u32 %v4512, 7
      %v4514 = vsub.s32 0, %v4513
      %v4515 = vrot.slane %v4510, %v4514
      %v4516 = vlaneseq
      %v4517 = vshrl.u32 %v4516, 7
      %v4518 = vsub.s32 1, %v4517
      %v4519 = vrot.slane %v4510, %v4518
      %4520 = vrot.lane.b32.xlu0 %v4515, 57
      %v4521 = vpop.permute.xlu0 %4520
      %4522 = vrot.lane.b32.xlu0 %v4519, 57
      %v4523 = vpop.permute.xlu0 %4522
      %v4524 = vsel %vm1233, %v4521, %v4523
      %v4528 = vmul.f32 %v3807, %v4521
      %v4529 = vmul.f32 %v3808, %v4524
      %v4530 = vmul.f32 %v3809, %v4523
      %4534 = vrot.lane.b32.xlu0 %v4528, 71
      %v4535 = vpop.permute.xlu0 %4534
      %4536 = vrot.lane.b32.xlu0 %v4529, 71
      %v4537 = vpop.permute.xlu0 %4536
      %4538 = vrot.lane.b32.xlu0 %v4530, 71
      %v4539 = vpop.permute.xlu0 %4538
      %v4540 = vsel %vm1250, %v4535, %v4537
      %v4541 = vsel %vm1250, %v4537, %v4539
      %4544 = vst [vmem:[#allocation3 + $0x140] sm:$0xff] %v4540
      %4545 = vst [vmem:[#allocation3 + $0x148] sm:$0xff] %v4541
      %v4546 = vld [vmem:[%s1257] ss:$8 sm:$0x3]
      %v4548 = vlaneseq
      %v4549 = vshrl.u32 %v4548, 7
      %v4550 = vsub.s32 0, %v4549
      %v4551 = vrot.slane %v4546, %v4550
      %v4552 = vlaneseq
      %v4553 = vshrl.u32 %v4552, 7
      %v4554 = vsub.s32 1, %v4553
      %v4555 = vrot.slane %v4546, %v4554
      %4556 = vrot.lane.b32.xlu0 %v4551, 63
      %v4557 = vpop.permute.xlu0 %4556
      %4558 = vrot.lane.b32.xlu0 %v4555, 63
      %v4559 = vpop.permute.xlu0 %4558
      %v4560 = vsel %vm1272, %v4557, %v4559
      %v4564 = vmul.f32 %v3807, %v4557
      %v4565 = vmul.f32 %v3808, %v4560
      %v4566 = vmul.f32 %v3809, %v4559
      %4570 = vrot.lane.b32.xlu0 %v4564, 65
      %v4571 = vpop.permute.xlu0 %4570
      %4572 = vrot.lane.b32.xlu0 %v4565, 65
      %v4573 = vpop.permute.xlu0 %4572
      %4574 = vrot.lane.b32.xlu0 %v4566, 65
      %v4575 = vpop.permute.xlu0 %4574
      %v4576 = vsel %vm1289, %v4571, %v4573
      %v4577 = vsel %vm1289, %v4573, %v4575
      %4580 = vst [vmem:[#allocation3 + $0x150] sm:$0xff] %v4576
      %4581 = vst [vmem:[#allocation3 + $0x158] sm:$0xff] %v4577
      %v4582 = vld [vmem:[%s1296] ss:$8 sm:$0x3]
      %v4584 = vlaneseq
      %v4585 = vshrl.u32 %v4584, 7
      %v4586 = vsub.s32 0, %v4585
      %v4587 = vrot.slane %v4582, %v4586
      %v4588 = vlaneseq
      %v4589 = vshrl.u32 %v4588, 7
      %v4590 = vsub.s32 1, %v4589
      %v4591 = vrot.slane %v4582, %v4590
      %4592 = vrot.lane.b32.xlu0 %v4587, 64
      %v4593 = vpop.permute.xlu0 %4592
      %4594 = vrot.lane.b32.xlu0 %v4591, 64
      %v4595 = vpop.permute.xlu0 %4594
      %v4596 = vsel %vm1311, %v4593, %v4595
      %v4600 = vmul.f32 %v3807, %v4593
      %v4601 = vmul.f32 %v3808, %v4596
      %v4602 = vmul.f32 %v3809, %v4595
      %4606 = vrot.lane.b32.xlu0 %v4600, 64
      %v4607 = vpop.permute.xlu0 %4606
      %4608 = vrot.lane.b32.xlu0 %v4601, 64
      %v4609 = vpop.permute.xlu0 %4608
      %4610 = vrot.lane.b32.xlu0 %v4602, 64
      %v4611 = vpop.permute.xlu0 %4610
      %v4612 = vsel %vm1311, %v4607, %v4609
      %v4613 = vsel %vm1311, %v4609, %v4611
      %4616 = vst [vmem:[#allocation3 + $0x160] sm:$0xff] %v4612
      %4617 = vst [vmem:[#allocation3 + $0x168] sm:$0xff] %v4613
      %v4618 = vld [vmem:[%s1334] ss:$8 sm:$0x3]
      %v4620 = vlaneseq
      %v4621 = vshrl.u32 %v4620, 7
      %v4622 = vsub.s32 0, %v4621
      %v4623 = vrot.slane %v4618, %v4622
      %v4624 = vlaneseq
      %v4625 = vshrl.u32 %v4624, 7
      %v4626 = vsub.s32 1, %v4625
      %v4627 = vrot.slane %v4618, %v4626
      %4628 = vrot.lane.b32.xlu0 %v4623, 65
      %v4629 = vpop.permute.xlu0 %4628
      %4630 = vrot.lane.b32.xlu0 %v4627, 65
      %v4631 = vpop.permute.xlu0 %4630
      %v4632 = vsel %vm1289, %v4629, %v4631
      %v4636 = vmul.f32 %v3807, %v4629
      %v4637 = vmul.f32 %v3808, %v4632
      %v4638 = vmul.f32 %v3809, %v4631
      %4642 = vrot.lane.b32.xlu0 %v4636, 63
      %v4643 = vpop.permute.xlu0 %4642
      %4644 = vrot.lane.b32.xlu0 %v4637, 63
      %v4645 = vpop.permute.xlu0 %4644
      %4646 = vrot.lane.b32.xlu0 %v4638, 63
      %v4647 = vpop.permute.xlu0 %4646
      %v4648 = vsel %vm1272, %v4643, %v4645
      %v4649 = vsel %vm1272, %v4645, %v4647
      %4652 = vst [vmem:[#allocation3 + $0x170] sm:$0xff] %v4648
      %4653 = vst [vmem:[#allocation3 + $0x178] sm:$0xff] %v4649
      %v4654 = vld [vmem:[%s1371] ss:$8 sm:$0x3]
      %v4656 = vlaneseq
      %v4657 = vshrl.u32 %v4656, 7
      %v4658 = vsub.s32 0, %v4657
      %v4659 = vrot.slane %v4654, %v4658
      %v4660 = vlaneseq
      %v4661 = vshrl.u32 %v4660, 7
      %v4662 = vsub.s32 1, %v4661
      %v4663 = vrot.slane %v4654, %v4662
      %4664 = vrot.lane.b32.xlu0 %v4659, 71
      %v4665 = vpop.permute.xlu0 %4664
      %4666 = vrot.lane.b32.xlu0 %v4663, 71
      %v4667 = vpop.permute.xlu0 %4666
      %v4668 = vsel %vm1250, %v4665, %v4667
      %v4672 = vmul.f32 %v3807, %v4665
      %v4673 = vmul.f32 %v3808, %v4668
      %v4674 = vmul.f32 %v3809, %v4667
      %4678 = vrot.lane.b32.xlu0 %v4672, 57
      %v4679 = vpop.permute.xlu0 %4678
      %4680 = vrot.lane.b32.xlu0 %v4673, 57
      %v4681 = vpop.permute.xlu0 %4680
      %4682 = vrot.lane.b32.xlu0 %v4674, 57
      %v4683 = vpop.permute.xlu0 %4682
      %v4684 = vsel %vm1233, %v4679, %v4681
      %v4685 = vsel %vm1233, %v4681, %v4683
      %4688 = vst [vmem:[#allocation3 + $0x180] sm:$0xff] %v4684
      %4689 = vst [vmem:[#allocation3 + $0x188] sm:$0xff] %v4685
      %v4690 = vld [vmem:[%s1408] ss:$8 sm:$0x3]
      %v4692 = vlaneseq
      %v4693 = vshrl.u32 %v4692, 7
      %v4694 = vsub.s32 0, %v4693
      %v4695 = vrot.slane %v4690, %v4694
      %v4696 = vlaneseq
      %v4697 = vshrl.u32 %v4696, 7
      %v4698 = vsub.s32 1, %v4697
      %v4699 = vrot.slane %v4690, %v4698
      %4700 = vrot.lane.b32.xlu0 %v4695, 72
      %v4701 = vpop.permute.xlu0 %4700
      %4702 = vrot.lane.b32.xlu0 %v4699, 72
      %v4703 = vpop.permute.xlu0 %4702
      %v4704 = vsel %vm1211, %v4701, %v4703
      %v4708 = vmul.f32 %v3807, %v4701
      %v4709 = vmul.f32 %v3808, %v4704
      %v4710 = vmul.f32 %v3809, %v4703
      %4714 = vrot.lane.b32.xlu0 %v4708, 56
      %v4715 = vpop.permute.xlu0 %4714
      %4716 = vrot.lane.b32.xlu0 %v4709, 56
      %v4717 = vpop.permute.xlu0 %4716
      %4718 = vrot.lane.b32.xlu0 %v4710, 56
      %v4719 = vpop.permute.xlu0 %4718
      %v4720 = vsel %vm1194, %v4715, %v4717
      %v4721 = vsel %vm1194, %v4717, %v4719
      %4724 = vst [vmem:[#allocation3 + $0x190] sm:$0xff] %v4720
      %4725 = vst [vmem:[#allocation3 + $0x198] sm:$0xff] %v4721
      %v4726 = vld [vmem:[%s1445] ss:$8 sm:$0x3]
      %v4728 = vlaneseq
      %v4729 = vshrl.u32 %v4728, 7
      %v4730 = vsub.s32 0, %v4729
      %v4731 = vrot.slane %v4726, %v4730
      %v4732 = vlaneseq
      %v4733 = vshrl.u32 %v4732, 7
      %v4734 = vsub.s32 1, %v4733
      %v4735 = vrot.slane %v4726, %v4734
      %4736 = vrot.lane.b32.xlu0 %v4731, 73
      %v4737 = vpop.permute.xlu0 %4736
      %4738 = vrot.lane.b32.xlu0 %v4735, 73
      %v4739 = vpop.permute.xlu0 %4738
      %v4740 = vsel %vm1172, %v4737, %v4739
      %v4744 = vmul.f32 %v3807, %v4737
      %v4745 = vmul.f32 %v3808, %v4740
      %v4746 = vmul.f32 %v3809, %v4739
      %4750 = vrot.lane.b32.xlu0 %v4744, 55
      %v4751 = vpop.permute.xlu0 %4750
      %4752 = vrot.lane.b32.xlu0 %v4745, 55
      %v4753 = vpop.permute.xlu0 %4752
      %4754 = vrot.lane.b32.xlu0 %v4746, 55
      %v4755 = vpop.permute.xlu0 %4754
      %v4756 = vsel %vm1155, %v4751, %v4753
      %v4757 = vsel %vm1155, %v4753, %v4755
      %4760 = vst [vmem:[#allocation3 + $0x1a0] sm:$0xff] %v4756
      %4761 = vst [vmem:[#allocation3 + $0x1a8] sm:$0xff] %v4757
      %v4762 = vld [vmem:[#allocation3] sm:$0xff]
      %v4763 = vld [vmem:[#allocation3 + $0x8] sm:$0xff]
      %v4764 = vld [vmem:[#allocation3 + $0x10] sm:$0xff]
      %v4765 = vld [vmem:[#allocation3 + $0x18] sm:$0xff]
      %v4766 = vld [vmem:[#allocation3 + $0x20] sm:$0xff]
      %v4767 = vld [vmem:[#allocation3 + $0x28] sm:$0xff]
      %v4768 = vld [vmem:[#allocation3 + $0x30] sm:$0xff]
      %v4769 = vld [vmem:[#allocation3 + $0x38] sm:$0xff]
      %v4770 = vld [vmem:[#allocation3 + $0x40] sm:$0xff]
      %v4771 = vld [vmem:[#allocation3 + $0x48] sm:$0xff]
      %v4772 = vld [vmem:[#allocation3 + $0x50] sm:$0xff]
      %v4773 = vld [vmem:[#allocation3 + $0x58] sm:$0xff]
      %v4774 = vld [vmem:[#allocation3 + $0x60] sm:$0xff]
      %v4775 = vld [vmem:[#allocation3 + $0x68] sm:$0xff]
      %v4776 = vld [vmem:[#allocation3 + $0x70] sm:$0xff]
      %v4777 = vld [vmem:[#allocation3 + $0x78] sm:$0xff]
      %v4778 = vld [vmem:[#allocation3 + $0x80] sm:$0xff]
      %v4779 = vld [vmem:[#allocation3 + $0x88] sm:$0xff]
      %v4780 = vld [vmem:[#allocation3 + $0x90] sm:$0xff]
      %v4781 = vld [vmem:[#allocation3 + $0x98] sm:$0xff]
      %v4782 = vld [vmem:[#allocation3 + $0xa0] sm:$0xff]
      %v4783 = vld [vmem:[#allocation3 + $0xa8] sm:$0xff]
      %v4784 = vld [vmem:[#allocation3 + $0xb0] sm:$0xff]
      %v4785 = vld [vmem:[#allocation3 + $0xb8] sm:$0xff]
      %v4786 = vld [vmem:[#allocation3 + $0xc0] sm:$0xff]
      %v4787 = vld [vmem:[#allocation3 + $0xc8] sm:$0xff]
      %v4788 = vld [vmem:[#allocation3 + $0xd0] sm:$0xff]
      %v4789 = vld [vmem:[#allocation3 + $0xd8] sm:$0xff]
      %v4790 = vld [vmem:[#allocation3 + $0xe0] sm:$0xff]
      %v4791 = vld [vmem:[#allocation3 + $0xe8] sm:$0xff]
      %v4792 = vld [vmem:[#allocation3 + $0xf0] sm:$0xff]
      %v4793 = vld [vmem:[#allocation3 + $0xf8] sm:$0xff]
      %v4794 = vld [vmem:[#allocation3 + $0x100] sm:$0xff]
      %v4795 = vld [vmem:[#allocation3 + $0x108] sm:$0xff]
      %v4796 = vld [vmem:[#allocation3 + $0x110] sm:$0xff]
      %v4797 = vld [vmem:[#allocation3 + $0x118] sm:$0xff]
      %v4798 = vld [vmem:[#allocation3 + $0x120] sm:$0xff]
      %v4799 = vld [vmem:[#allocation3 + $0x128] sm:$0xff]
      %v4800 = vld [vmem:[#allocation3 + $0x130] sm:$0xff]
      %v4801 = vld [vmem:[#allocation3 + $0x138] sm:$0xff]
      %v4802 = vld [vmem:[#allocation3 + $0x140] sm:$0xff]
      %v4803 = vld [vmem:[#allocation3 + $0x148] sm:$0xff]
      %v4804 = vld [vmem:[#allocation3 + $0x150] sm:$0xff]
      %v4805 = vld [vmem:[#allocation3 + $0x158] sm:$0xff]
      %v4806 = vld [vmem:[#allocation3 + $0x160] sm:$0xff]
      %v4807 = vld [vmem:[#allocation3 + $0x168] sm:$0xff]
      %v4808 = vld [vmem:[#allocation3 + $0x170] sm:$0xff]
      %v4809 = vld [vmem:[#allocation3 + $0x178] sm:$0xff]
      %v4810 = vld [vmem:[#allocation3 + $0x180] sm:$0xff]
      %v4811 = vld [vmem:[#allocation3 + $0x188] sm:$0xff]
      %v4812 = vld [vmem:[#allocation3 + $0x190] sm:$0xff]
      %v4813 = vld [vmem:[#allocation3 + $0x198] sm:$0xff]
      %v4814 = vld [vmem:[#allocation3 + $0x1a0] sm:$0xff]
      %v4815 = vld [vmem:[#allocation3 + $0x1a8] sm:$0xff]
      %v4816 = vpack.c.bf16 %v4764, %v4762
      %v4817 = vpack.c.bf16 %v4765, %v4763
      %v4818 = vpack.c.bf16 %v4768, %v4766
      %v4819 = vpack.c.bf16 %v4769, %v4767
      %v4820 = vpack.c.bf16 %v4772, %v4770
      %v4821 = vpack.c.bf16 %v4773, %v4771
      %v4822 = vpack.c.bf16 %v4776, %v4774
      %v4823 = vpack.c.bf16 %v4777, %v4775
      %v4824 = vpack.c.bf16 %v4780, %v4778
      %v4825 = vpack.c.bf16 %v4781, %v4779
      %v4826 = vpack.c.bf16 %v4784, %v4782
      %v4827 = vpack.c.bf16 %v4785, %v4783
      %v4828 = vpack.c.bf16 %v4788, %v4786
      %v4829 = vpack.c.bf16 %v4789, %v4787
      %v4830 = vpack.c.bf16 %v4792, %v4790
      %v4831 = vpack.c.bf16 %v4793, %v4791
      %v4832 = vpack.c.bf16 %v4796, %v4794
      %v4833 = vpack.c.bf16 %v4797, %v4795
      %v4834 = vpack.c.bf16 %v4800, %v4798
      %v4835 = vpack.c.bf16 %v4801, %v4799
      %v4836 = vpack.c.bf16 %v4804, %v4802
      %v4837 = vpack.c.bf16 %v4805, %v4803
      %v4838 = vpack.c.bf16 %v4808, %v4806
      %v4839 = vpack.c.bf16 %v4809, %v4807
      %v4840 = vpack.c.bf16 %v4812, %v4810
      %v4841 = vpack.c.bf16 %v4813, %v4811
      %v4842 = vpack.c.bf16 %v4814, %v4814
      %v4843 = vpack.c.bf16 %v4815, %v4815
      %v4844 = vld [vmem:[%s35] sm:$0xff]
      %v4845 = vld [vmem:[%s35 + $0x8] sm:$0xff]
      %v4846 = vld [vmem:[%s35 + $0x10] sm:$0xff]
      %v4847 = vld [vmem:[%s37] sm:$0xff]
      %v4848 = vld [vmem:[%s37 + $0x8] sm:$0xff]
      %v4849 = vld [vmem:[%s37 + $0x10] sm:$0xff]
      %4851 = vset.pattern.permute.xlu0 0
      %4852 = vperm.xlu0 %4851, %v4847
      %v4853 = vpop.permute.xlu0 %4852
      %4856 = vset.pattern.permute.xlu0 0
      %4857 = vperm.xlu0 %4856, %v4848
      %v4858 = vpop.permute.xlu0 %4857
      %4861 = vset.pattern.permute.xlu0 0
      %4862 = vperm.xlu0 %4861, %v4849
      %v4863 = vpop.permute.xlu0 %4862
      %v4868 = vunpack.c.l.b16 %v4844
      %v4869 = vunpack.c.h.b16 %v4844
      %v4870 = vunpack.c.l.b16 %v4845
      %v4871 = vunpack.c.h.b16 %v4845
      %v4872 = vunpack.c.l.b16 %v4846
      %v4873 = vunpack.c.h.b16 %v4846
      %v4874 = vpack.c.b16 %v4870, %v4868
      %v4875 = vpack.c.b16 %v4871, %v4869
      %v4876 = vpack.c.b16 %v4872, %v4872
      %v4877 = vpack.c.b16 %v4873, %v4873
      %v4881 = vsel %vm2282, %v4875, 0
      %v4884 = vsel %vm2282, %v4877, 0
      %v4887 = vsel %vm2295, %v4842, 0
      %v4890 = vsel %vm2295, %v4843, 0
      %4892 = vmatprep.subr.bf16.mxu0 %v4817
      %4893 = vmatpush1.bf16.msra.mxu0 %v4816
      %4894 = vmatprep.subr.bf16.mxu0 %v4819
      %4895 = vmatpush1.bf16.msra.mxu0 %v4818
      %4896 = vmatprep.subr.bf16.mxu0 %v4821
      %4897 = vmatpush1.bf16.msra.mxu0 %v4820
      %4898 = vmatprep.subr.bf16.mxu0 %v4823
      %4899 = vmatpush1.bf16.msra.mxu0 %v4822
      %4900 = vmatprep.subr.bf16.mxu0 %v4825
      %4901 = vmatpush1.bf16.msra.mxu0 %v4824
      %4902 = vmatprep.subr.bf16.mxu0 %v4827
      %4903 = vmatpush1.bf16.msra.mxu0 %v4826
      %4904 = vmatprep.subr.bf16.mxu0 %v4829
      %4905 = vmatpush1.bf16.msra.mxu0 %v4828
      %4906 = vmatprep.subr.bf16.mxu0 %v4831
      %4907 = vmatpush1.bf16.msra.mxu0 %v4830
      %4908 = vmatprep.subr.bf16.mxu0 %v4833
      %4909 = vmatpush1.bf16.msra.mxu0 %v4832
      %4910 = vmatprep.subr.bf16.mxu0 %v4835
      %4911 = vmatpush1.bf16.msra.mxu0 %v4834
      %4912 = vmatprep.subr.bf16.mxu0 %v4837
      %4913 = vmatpush1.bf16.msra.mxu0 %v4836
      %4914 = vmatprep.subr.bf16.mxu0 %v4839
      %4915 = vmatpush1.bf16.msra.mxu0 %v4838
      %4916 = vmatprep.subr.bf16.mxu0 %v4841
      %4917 = vmatpush1.bf16.msra.mxu0 %v4840
      %4918 = vmatprep.subr.bf16.mxu0 %v4890
      %4919 = vmatpush1.bf16.msra.mxu0 %v4887
      %4920 = vmatprep.subr.bf16.mxu0 0
      %4921 = vmatpush1.bf16.msra.mxu0 0
      %4922 = vmatprep.subr.bf16.mxu0 0
      %4923 = vmatpush1.bf16.msra.mxu0 0
      %4924 = vmatprep.mubr.bf16.mxu0 %v4881
      %4925 = vmatmul.mubr.bf16.gmra.mrb[0].mxu0 %v4874
      %v4926 = vpop.f32.mrb[0].mxu0
      %v4927 = vadd.f32 %v4853, %v4926
      %v4928 = vpop.f32.mrb[0].mxu0
      %v4929 = vadd.f32 %v4853, %v4928
      %v4930 = vpop.f32.mrb[0].mxu0
      %v4931 = vadd.f32 %v4858, %v4930
      %v4932 = vpop.f32.mrb[0].mxu0
      %v4933 = vadd.f32 %v4858, %v4932
      %4934 = vmatprep.mubr.bf16.mxu0 %v4884
      %4935 = vmatmul.mubr.bf16.gmra.mrb[0].mxu0 %v4876
      %v4936 = vpop.f32.mrb[0].mxu0
      %v4937 = vadd.f32 %v4863, %v4936
      %v4938 = vpop.f32.mrb[0].mxu0
      %v4939 = vadd.f32 %v4863, %v4938
      %v4940 = vpop.f32.mrb[0].mxu0
      %v4941 = vpop.f32.mrb[0].mxu0
      %4942 = vdwg.mxu0
      %v4943 = vadd.f32 %v4927, %v4929
      %v4944 = vadd.f32 %v4943, %v4931
      %v4945 = vadd.f32 %v4944, %v4933
      %v4946 = vadd.f32 %v4945, %v4937
      %v4947 = vadd.f32 %v4946, %v4939
      %4948 = vadd.xlane.f32.xlu0 %v4947
      %v4949 = vpop.xlane.xlu0 %4948
      %v4950 = vrot.slane %v4949, 4
      %v4951 = vadd.f32 %v4949, %v4950
      %v4952 = vrot.slane %v4951, 2
      %v4953 = vadd.f32 %v4951, %v4952
      %v4954 = vrot.slane %v4953, 1
      %v4955 = vadd.f32 %v4953, %v4954
      %s4956 = vtos %v4955
      %v4957 = vrcp.pop 6144.0
      %s4958 = vtos %v4957
      %s4959 = smul.f32 %s4956, %s4958
      %v4960 = vstv %s4959
      %v4961 = vsub.f32 %v4927, %v4960
      %v4962 = vsub.f32 %v4929, %v4960
      %v4963 = vsub.f32 %v4931, %v4960
      %v4964 = vsub.f32 %v4933, %v4960
      %v4965 = vsub.f32 %v4937, %v4960
      %v4966 = vsub.f32 %v4939, %v4960
      %v4967 = vmul.f32 %v4961, %v4961
      %v4968 = vmul.f32 %v4962, %v4962
      %v4969 = vmul.f32 %v4963, %v4963
      %v4970 = vmul.f32 %v4964, %v4964
      %v4971 = vmul.f32 %v4965, %v4965
      %v4972 = vmul.f32 %v4966, %v4966
      %v4973 = vadd.f32 %v4967, %v4968
      %v4974 = vadd.f32 %v4973, %v4969
      %v4975 = vadd.f32 %v4974, %v4970
      %v4976 = vadd.f32 %v4975, %v4971
      %v4977 = vadd.f32 %v4976, %v4972
      %4978 = vadd.xlane.f32.xlu0 %v4977
      %v4979 = vpop.xlane.xlu0 %4978
      %v4980 = vrot.slane %v4979, 4
      %v4981 = vadd.f32 %v4979, %v4980
      %v4982 = vrot.slane %v4981, 2
      %v4983 = vadd.f32 %v4981, %v4982
      %v4984 = vrot.slane %v4983, 1
      %v4985 = vadd.f32 %v4983, %v4984
      %s4986 = vtos %v4985
      %v4987 = vrcp.pop 6144.0
      %s4988 = vtos %v4987
      %s4989 = smul.f32 %s4986, %s4988
      %s4990 = sadd.f32 %s4989, 1e-05
      %v4991 = vstv %s4990
      %v4992 = vrsqrt.pop %v4991
      %s4993 = vtos %v4992
      %v4994 = vstv %s4993
      %v4995 = vmul.f32 %v4961, %v4994
      %v4996 = vmul.f32 %v4962, %v4994
      %v4997 = vmul.f32 %v4963, %v4994
      %v4998 = vmul.f32 %v4964, %v4994
      %v4999 = vmul.f32 %v4965, %v4994
      %v5000 = vmul.f32 %v4966, %v4994
      %v5001 = vld [vmem:[%s39] sm:$0xff]
      %v5002 = vld [vmem:[%s39 + $0x8] sm:$0xff]
      %v5003 = vld [vmem:[%s39 + $0x10] sm:$0xff]
      %v5004 = vld [vmem:[%s39 + $0x18] sm:$0xff]
      %v5005 = vld [vmem:[%s39 + $0x20] sm:$0xff]
      %v5006 = vld [vmem:[%s39 + $0x28] sm:$0xff]
      %v5007 = vmul.f32 %v4995, %v5001
      %v5008 = vmul.f32 %v4996, %v5002
      %v5009 = vmul.f32 %v4997, %v5003
      %v5010 = vmul.f32 %v4998, %v5004
      %v5011 = vmul.f32 %v4999, %v5005
      %v5012 = vmul.f32 %v5000, %v5006
      %v5013 = vld [vmem:[%s41] sm:$0xff]
      %v5014 = vld [vmem:[%s41 + $0x8] sm:$0xff]
      %v5015 = vld [vmem:[%s41 + $0x10] sm:$0xff]
      %v5016 = vld [vmem:[%s41 + $0x18] sm:$0xff]
      %v5017 = vld [vmem:[%s41 + $0x20] sm:$0xff]
      %v5018 = vld [vmem:[%s41 + $0x28] sm:$0xff]
      %v5019 = vadd.f32 %v5007, %v5013
      %v5020 = vadd.f32 %v5008, %v5014
      %v5021 = vadd.f32 %v5009, %v5015
      %v5022 = vadd.f32 %v5010, %v5016
      %v5023 = vadd.f32 %v5011, %v5017
      %v5024 = vadd.f32 %v5012, %v5018
      %5025 = vst [vmem:[#allocation6] sm:$0xff] %v5019
      %5026 = vst [vmem:[#allocation6 + $0x8] sm:$0xff] %v5020
      %5027 = vst [vmem:[#allocation6 + $0x10] sm:$0xff] %v5021
      %5028 = vst [vmem:[#allocation6 + $0x18] sm:$0xff] %v5022
      %5029 = vst [vmem:[#allocation6 + $0x20] sm:$0xff] %v5023
      %5030 = vst [vmem:[#allocation6 + $0x28] sm:$0xff] %v5024
      %v5031 = vld [vmem:[#allocation4] sm:$0xff]
      %v5032 = vld [vmem:[#allocation4 + $0x8] sm:$0xff]
      %v5033 = vld [vmem:[#allocation5] sm:$0xff]
      %v5034 = vld [vmem:[#allocation5 + $0x8] sm:$0xff]
      %v5035 = vadd.f32 %v5031, %v5033
      %v5036 = vadd.f32 %v5032, %v5034
      %v5037 = vmul.f32 %v5035, 0.5
      %v5038 = vmul.f32 %v5036, 0.5
      %v5039 = vtanh.pop %v5037
      %v5040 = vtanh.pop %v5038
      %v5041 = vmul.f32 %v5039, 0.5
      %v5042 = vmul.f32 %v5040, 0.5
      %v5043 = vadd.f32 %v5041, 0.5
      %v5044 = vadd.f32 %v5042, 0.5
      %v5045 = vld [vmem:[#allocation4 + $0x10] sm:$0xff]
      %v5046 = vld [vmem:[#allocation4 + $0x18] sm:$0xff]
      %v5047 = vld [vmem:[#allocation5 + $0x10] sm:$0xff]
      %v5048 = vld [vmem:[#allocation5 + $0x18] sm:$0xff]
      %v5049 = vadd.f32 %v5045, %v5047
      %v5050 = vadd.f32 %v5046, %v5048
      %v5051 = vadd.f32 %v5049, 1.0
      %v5052 = vadd.f32 %v5050, 1.0
      %v5053 = vmul.f32 %v5051, 0.5
      %v5054 = vmul.f32 %v5052, 0.5
      %v5055 = vtanh.pop %v5053
      %v5056 = vtanh.pop %v5054
      %v5057 = vmul.f32 %v5055, 0.5
      %v5058 = vmul.f32 %v5056, 0.5
      %v5059 = vadd.f32 %v5057, 0.5
      %v5060 = vadd.f32 %v5058, 0.5
      %v5061 = vld [vmem:[#allocation4 + $0x20] sm:$0xff]
      %v5062 = vld [vmem:[#allocation4 + $0x28] sm:$0xff]
      %v5063 = vld [vmem:[#allocation5 + $0x20] sm:$0xff]
      %v5064 = vld [vmem:[#allocation5 + $0x28] sm:$0xff]
      %v5065 = vadd.f32 %v5061, %v5063
      %v5066 = vadd.f32 %v5062, %v5064
      %v5067 = vtanh.pop %v5065
      %v5068 = vtanh.pop %v5066
      %v5069 = vmul.f32 %v5043, %v5067
      %v5070 = vmul.f32 %v5044, %v5068
      %v5071 = vld [vmem:[%s1082] sm:$0xff]
      %v5072 = vld [vmem:[%s1082 + $0x8] sm:$0xff]
      %v5073 = vld [vmem:[%s1087] sm:$0xff]
      %v5074 = vld [vmem:[%s1087 + $0x8] sm:$0xff]
      %v5075 = vld [vmem:[%s1092] sm:$0xff]
      %v5076 = vld [vmem:[%s1092 + $0x8] sm:$0xff]
      %v5077 = vmul.f32 %v5071, %v5059
      %v5078 = vmul.f32 %v5072, %v5060
      %v5079 = vmul.f32 %v5073, %v5059
      %v5080 = vmul.f32 %v5074, %v5060
      %v5081 = vmul.f32 %v5075, %v5059
      %v5082 = vmul.f32 %v5076, %v5060
      %v5083 = vmax.f32 %v5077, %v5079
      %v5084 = vmax.f32 %v5078, %v5080
      %v5085 = vmax.f32 %v5083, %v5081
      %v5086 = vmax.f32 %v5084, %v5082
      %v5087 = vsub.f32 %v5077, %v5085
      %v5088 = vsub.f32 %v5078, %v5086
      %v5089 = vmul.f32 %v5087, 1.442695
      %v5090 = vpow.pop %v5089
      %v5091 = vmul.f32 %v5088, 1.442695
      %v5092 = vpow.pop %v5091
      %v5093 = vsub.f32 %v5079, %v5085
      %v5094 = vsub.f32 %v5080, %v5086
      %v5095 = vmul.f32 %v5093, 1.442695
      %v5096 = vpow.pop %v5095
      %v5097 = vmul.f32 %v5094, 1.442695
      %v5098 = vpow.pop %v5097
      %v5099 = vsub.f32 %v5081, %v5085
      %v5100 = vsub.f32 %v5082, %v5086
      %v5101 = vmul.f32 %v5099, 1.442695
      %v5102 = vpow.pop %v5101
      %v5103 = vmul.f32 %v5100, 1.442695
      %v5104 = vpow.pop %v5103
      %v5105 = vadd.f32 %v5090, %v5096
      %v5106 = vadd.f32 %v5092, %v5098
      %v5107 = vadd.f32 %v5105, %v5102
      %v5108 = vadd.f32 %v5106, %v5104
      %v5109 = vmul.f32 %v5090, %v5071
      %v5110 = vmul.f32 %v5092, %v5072
      %v5111 = vmul.f32 %v5096, %v5073
      %v5112 = vmul.f32 %v5098, %v5074
      %v5113 = vadd.f32 %v5109, %v5111
      %v5114 = vadd.f32 %v5110, %v5112
      %v5115 = vmul.f32 %v5102, %v5075
      %v5116 = vmul.f32 %v5104, %v5076
      %v5117 = vadd.f32 %v5113, %v5115
      %v5118 = vadd.f32 %v5114, %v5116
      %v5119 = vrcp.pop %v5107
      %v5120 = vmul.f32 %v5117, %v5119
      %v5121 = vrcp.pop %v5108
      %v5122 = vmul.f32 %v5118, %v5121
      %v5123 = vmul.f32 %v5059, %v5120
      %v5124 = vmul.f32 %v5060, %v5122
      %v5125 = vadd.f32 %v5069, %v5123
      %v5126 = vadd.f32 %v5070, %v5124
      %v5127 = vld [vmem:[#allocation4 + $0x30] sm:$0xff]
      %v5128 = vld [vmem:[#allocation4 + $0x38] sm:$0xff]
      %v5129 = vld [vmem:[#allocation6] sm:$0xff]
      %v5130 = vld [vmem:[#allocation6 + $0x8] sm:$0xff]
      %v5131 = vadd.f32 %v5127, %v5129
      %v5132 = vadd.f32 %v5128, %v5130
      %v5133 = vmul.f32 %v5131, 0.5
      %v5134 = vmul.f32 %v5132, 0.5
      %v5135 = vtanh.pop %v5133
      %v5136 = vtanh.pop %v5134
      %v5137 = vmul.f32 %v5135, 0.5
      %v5138 = vmul.f32 %v5136, 0.5
      %v5139 = vadd.f32 %v5137, 0.5
      %v5140 = vadd.f32 %v5138, 0.5
      %v5141 = vld [vmem:[#allocation4 + $0x40] sm:$0xff]
      %v5142 = vld [vmem:[#allocation4 + $0x48] sm:$0xff]
      %v5143 = vld [vmem:[#allocation6 + $0x10] sm:$0xff]
      %v5144 = vld [vmem:[#allocation6 + $0x18] sm:$0xff]
      %v5145 = vadd.f32 %v5141, %v5143
      %v5146 = vadd.f32 %v5142, %v5144
      %v5147 = vadd.f32 %v5145, 1.0
      %v5148 = vadd.f32 %v5146, 1.0
      %v5149 = vmul.f32 %v5147, 0.5
      %v5150 = vmul.f32 %v5148, 0.5
      %v5151 = vtanh.pop %v5149
      %v5152 = vtanh.pop %v5150
      %v5153 = vmul.f32 %v5151, 0.5
      %v5154 = vmul.f32 %v5152, 0.5
      %v5155 = vadd.f32 %v5153, 0.5
      %v5156 = vadd.f32 %v5154, 0.5
      %v5157 = vld [vmem:[#allocation4 + $0x50] sm:$0xff]
      %v5158 = vld [vmem:[#allocation4 + $0x58] sm:$0xff]
      %v5159 = vld [vmem:[#allocation6 + $0x20] sm:$0xff]
      %v5160 = vld [vmem:[#allocation6 + $0x28] sm:$0xff]
      %v5161 = vadd.f32 %v5157, %v5159
      %v5162 = vadd.f32 %v5158, %v5160
      %v5163 = vtanh.pop %v5161
      %v5164 = vtanh.pop %v5162
      %v5165 = vmul.f32 %v5139, %v5163
      %v5166 = vmul.f32 %v5140, %v5164
      %v5167 = vld [vmem:[%s1097] sm:$0xff]
      %v5168 = vld [vmem:[%s1097 + $0x8] sm:$0xff]
      %v5169 = vld [vmem:[%s1102] sm:$0xff]
      %v5170 = vld [vmem:[%s1102 + $0x8] sm:$0xff]
      %v5171 = vld [vmem:[%s1107] sm:$0xff]
      %v5172 = vld [vmem:[%s1107 + $0x8] sm:$0xff]
      %v5173 = vmul.f32 %v5167, %v5155
      %v5174 = vmul.f32 %v5168, %v5156
      %v5175 = vmul.f32 %v5169, %v5155
      %v5176 = vmul.f32 %v5170, %v5156
      %v5177 = vmul.f32 %v5171, %v5155
      %v5178 = vmul.f32 %v5172, %v5156
      %v5179 = vmax.f32 %v5173, %v5175
      %v5180 = vmax.f32 %v5174, %v5176
      %v5181 = vmax.f32 %v5179, %v5177
      %v5182 = vmax.f32 %v5180, %v5178
      %v5183 = vsub.f32 %v5173, %v5181
      %v5184 = vsub.f32 %v5174, %v5182
      %v5185 = vmul.f32 %v5183, 1.442695
      %v5186 = vpow.pop %v5185
      %v5187 = vmul.f32 %v5184, 1.442695
      %v5188 = vpow.pop %v5187
      %v5189 = vsub.f32 %v5175, %v5181
      %v5190 = vsub.f32 %v5176, %v5182
      %v5191 = vmul.f32 %v5189, 1.442695
      %v5192 = vpow.pop %v5191
      %v5193 = vmul.f32 %v5190, 1.442695
      %v5194 = vpow.pop %v5193
      %v5195 = vsub.f32 %v5177, %v5181
      %v5196 = vsub.f32 %v5178, %v5182
      %v5197 = vmul.f32 %v5195, 1.442695
      %v5198 = vpow.pop %v5197
      %v5199 = vmul.f32 %v5196, 1.442695
      %v5200 = vpow.pop %v5199
      %v5201 = vadd.f32 %v5186, %v5192
      %v5202 = vadd.f32 %v5188, %v5194
      %v5203 = vadd.f32 %v5201, %v5198
      %v5204 = vadd.f32 %v5202, %v5200
      %v5205 = vmul.f32 %v5186, %v5167
      %v5206 = vmul.f32 %v5188, %v5168
      %v5207 = vmul.f32 %v5192, %v5169
      %v5208 = vmul.f32 %v5194, %v5170
      %v5209 = vadd.f32 %v5205, %v5207
      %v5210 = vadd.f32 %v5206, %v5208
      %v5211 = vmul.f32 %v5198, %v5171
      %v5212 = vmul.f32 %v5200, %v5172
      %v5213 = vadd.f32 %v5209, %v5211
      %v5214 = vadd.f32 %v5210, %v5212
      %v5215 = vrcp.pop %v5203
      %v5216 = vmul.f32 %v5213, %v5215
      %v5217 = vrcp.pop %v5204
      %v5218 = vmul.f32 %v5214, %v5217
      %v5219 = vmul.f32 %v5155, %v5216
      %v5220 = vmul.f32 %v5156, %v5218
      %v5221 = vadd.f32 %v5165, %v5219
      %v5222 = vadd.f32 %v5166, %v5220
      %5223 = vst [vmem:[%s1127] sm:$0xff] %v5043
      %5224 = vst [vmem:[%s1127 + $0x8] sm:$0xff] %v5044
      %5225 = vst [vmem:[%s1127 + $0x10] sm:$0xff] %v5059
      %5226 = vst [vmem:[%s1127 + $0x18] sm:$0xff] %v5060
      %5227 = vst [vmem:[%s1127 + $0x20] sm:$0xff] %v5067
      %5228 = vst [vmem:[%s1127 + $0x28] sm:$0xff] %v5068
      %5229 = vst [vmem:[%s1127 + $0x30] sm:$0xff] %v5139
      %5230 = vst [vmem:[%s1127 + $0x38] sm:$0xff] %v5140
      %5231 = vst [vmem:[%s1127 + $0x40] sm:$0xff] %v5155
      %5232 = vst [vmem:[%s1127 + $0x48] sm:$0xff] %v5156
      %5233 = vst [vmem:[%s1127 + $0x50] sm:$0xff] %v5163
      %5234 = vst [vmem:[%s1127 + $0x58] sm:$0xff] %v5164
      %5235 = vst [vmem:[%s1117] sm:$0xff] %v5125
      %5236 = vst [vmem:[%s1117 + $0x8] sm:$0xff] %v5126
      %5237 = vst [vmem:[%s1122] sm:$0xff] %v5221
      %5238 = vst [vmem:[%s1122 + $0x8] sm:$0xff] %v5222
      %5239 = vst [vmem:[#allocation2 + $0x8] sm:$0xff] %v5125
      %5240 = vst [vmem:[#allocation2 + $0x10] sm:$0xff] %v5126
      %v5241 = vld [vmem:[#allocation2] sm:$0xff]
      %v5242 = vld [vmem:[#allocation2 + $0x8] sm:$0xff]
      %v5243 = vld [vmem:[#allocation2 + $0x10] sm:$0xff]
      %v5244 = vld [vmem:[#allocation2 + $0x18] sm:$0xff]
      %v5245 = vld [vmem:[%s53] ss:$8 sm:$0x3]
      %v5247 = vlaneseq
      %v5248 = vshrl.u32 %v5247, 7
      %v5249 = vsub.s32 0, %v5248
      %v5250 = vrot.slane %v5245, %v5249
      %v5251 = vlaneseq
      %v5252 = vshrl.u32 %v5251, 7
      %v5253 = vsub.s32 1, %v5252
      %v5254 = vrot.slane %v5245, %v5253
      %5255 = vrot.lane.b32.xlu0 %v5250, 55
      %v5256 = vpop.permute.xlu0 %5255
      %5257 = vrot.lane.b32.xlu0 %v5254, 55
      %v5258 = vpop.permute.xlu0 %5257
      %v5259 = vsel %vm1155, %v5256, %v5258
      %v5263 = vmul.f32 %v5241, %v5256
      %v5264 = vmul.f32 %v5242, %v5259
      %v5265 = vmul.f32 %v5243, %v5258
      %5269 = vrot.lane.b32.xlu0 %v5263, 73
      %v5270 = vpop.permute.xlu0 %5269
      %5271 = vrot.lane.b32.xlu0 %v5264, 73
      %v5272 = vpop.permute.xlu0 %5271
      %5273 = vrot.lane.b32.xlu0 %v5265, 73
      %v5274 = vpop.permute.xlu0 %5273
      %v5275 = vsel %vm1172, %v5270, %v5272
      %v5276 = vsel %vm1172, %v5272, %v5274
      %5279 = vst [vmem:[#allocation3] sm:$0xff] %v5275
      %5280 = vst [vmem:[#allocation3 + $0x8] sm:$0xff] %v5276
      %v5281 = vld [vmem:[%s1179] ss:$8 sm:$0x3]
      %v5283 = vlaneseq
      %v5284 = vshrl.u32 %v5283, 7
      %v5285 = vsub.s32 0, %v5284
      %v5286 = vrot.slane %v5281, %v5285
      %v5287 = vlaneseq
      %v5288 = vshrl.u32 %v5287, 7
      %v5289 = vsub.s32 1, %v5288
      %v5290 = vrot.slane %v5281, %v5289
      %5291 = vrot.lane.b32.xlu0 %v5286, 56
      %v5292 = vpop.permute.xlu0 %5291
      %5293 = vrot.lane.b32.xlu0 %v5290, 56
      %v5294 = vpop.permute.xlu0 %5293
      %v5295 = vsel %vm1194, %v5292, %v5294
      %v5299 = vmul.f32 %v5241, %v5292
      %v5300 = vmul.f32 %v5242, %v5295
      %v5301 = vmul.f32 %v5243, %v5294
      %5305 = vrot.lane.b32.xlu0 %v5299, 72
      %v5306 = vpop.permute.xlu0 %5305
      %5307 = vrot.lane.b32.xlu0 %v5300, 72
      %v5308 = vpop.permute.xlu0 %5307
      %5309 = vrot.lane.b32.xlu0 %v5301, 72
      %v5310 = vpop.permute.xlu0 %5309
      %v5311 = vsel %vm1211, %v5306, %v5308
      %v5312 = vsel %vm1211, %v5308, %v5310
      %5315 = vst [vmem:[#allocation3 + $0x10] sm:$0xff] %v5311
      %5316 = vst [vmem:[#allocation3 + $0x18] sm:$0xff] %v5312
      %v5317 = vld [vmem:[%s1218] ss:$8 sm:$0x3]
      %v5319 = vlaneseq
      %v5320 = vshrl.u32 %v5319, 7
      %v5321 = vsub.s32 0, %v5320
      %v5322 = vrot.slane %v5317, %v5321
      %v5323 = vlaneseq
      %v5324 = vshrl.u32 %v5323, 7
      %v5325 = vsub.s32 1, %v5324
      %v5326 = vrot.slane %v5317, %v5325
      %5327 = vrot.lane.b32.xlu0 %v5322, 57
      %v5328 = vpop.permute.xlu0 %5327
      %5329 = vrot.lane.b32.xlu0 %v5326, 57
      %v5330 = vpop.permute.xlu0 %5329
      %v5331 = vsel %vm1233, %v5328, %v5330
      %v5335 = vmul.f32 %v5241, %v5328
      %v5336 = vmul.f32 %v5242, %v5331
      %v5337 = vmul.f32 %v5243, %v5330
      %5341 = vrot.lane.b32.xlu0 %v5335, 71
      %v5342 = vpop.permute.xlu0 %5341
      %5343 = vrot.lane.b32.xlu0 %v5336, 71
      %v5344 = vpop.permute.xlu0 %5343
      %5345 = vrot.lane.b32.xlu0 %v5337, 71
      %v5346 = vpop.permute.xlu0 %5345
      %v5347 = vsel %vm1250, %v5342, %v5344
      %v5348 = vsel %vm1250, %v5344, %v5346
      %5351 = vst [vmem:[#allocation3 + $0x20] sm:$0xff] %v5347
      %5352 = vst [vmem:[#allocation3 + $0x28] sm:$0xff] %v5348
      %v5353 = vld [vmem:[%s1257] ss:$8 sm:$0x3]
      %v5355 = vlaneseq
      %v5356 = vshrl.u32 %v5355, 7
      %v5357 = vsub.s32 0, %v5356
      %v5358 = vrot.slane %v5353, %v5357
      %v5359 = vlaneseq
      %v5360 = vshrl.u32 %v5359, 7
      %v5361 = vsub.s32 1, %v5360
      %v5362 = vrot.slane %v5353, %v5361
      %5363 = vrot.lane.b32.xlu0 %v5358, 63
      %v5364 = vpop.permute.xlu0 %5363
      %5365 = vrot.lane.b32.xlu0 %v5362, 63
      %v5366 = vpop.permute.xlu0 %5365
      %v5367 = vsel %vm1272, %v5364, %v5366
      %v5371 = vmul.f32 %v5241, %v5364
      %v5372 = vmul.f32 %v5242, %v5367
      %v5373 = vmul.f32 %v5243, %v5366
      %5377 = vrot.lane.b32.xlu0 %v5371, 65
      %v5378 = vpop.permute.xlu0 %5377
      %5379 = vrot.lane.b32.xlu0 %v5372, 65
      %v5380 = vpop.permute.xlu0 %5379
      %5381 = vrot.lane.b32.xlu0 %v5373, 65
      %v5382 = vpop.permute.xlu0 %5381
      %v5383 = vsel %vm1289, %v5378, %v5380
      %v5384 = vsel %vm1289, %v5380, %v5382
      %5387 = vst [vmem:[#allocation3 + $0x30] sm:$0xff] %v5383
      %5388 = vst [vmem:[#allocation3 + $0x38] sm:$0xff] %v5384
      %v5389 = vld [vmem:[%s1296] ss:$8 sm:$0x3]
      %v5391 = vlaneseq
      %v5392 = vshrl.u32 %v5391, 7
      %v5393 = vsub.s32 0, %v5392
      %v5394 = vrot.slane %v5389, %v5393
      %v5395 = vlaneseq
      %v5396 = vshrl.u32 %v5395, 7
      %v5397 = vsub.s32 1, %v5396
      %v5398 = vrot.slane %v5389, %v5397
      %5399 = vrot.lane.b32.xlu0 %v5394, 64
      %v5400 = vpop.permute.xlu0 %5399
      %5401 = vrot.lane.b32.xlu0 %v5398, 64
      %v5402 = vpop.permute.xlu0 %5401
      %v5403 = vsel %vm1311, %v5400, %v5402
      %v5407 = vmul.f32 %v5241, %v5400
      %v5408 = vmul.f32 %v5242, %v5403
      %v5409 = vmul.f32 %v5243, %v5402
      %5413 = vrot.lane.b32.xlu0 %v5407, 64
      %v5414 = vpop.permute.xlu0 %5413
      %5415 = vrot.lane.b32.xlu0 %v5408, 64
      %v5416 = vpop.permute.xlu0 %5415
      %5417 = vrot.lane.b32.xlu0 %v5409, 64
      %v5418 = vpop.permute.xlu0 %5417
      %v5419 = vsel %vm1311, %v5414, %v5416
      %v5420 = vsel %vm1311, %v5416, %v5418
      %5423 = vst [vmem:[#allocation3 + $0x40] sm:$0xff] %v5419
      %5424 = vst [vmem:[#allocation3 + $0x48] sm:$0xff] %v5420
      %v5425 = vld [vmem:[%s1334] ss:$8 sm:$0x3]
      %v5427 = vlaneseq
      %v5428 = vshrl.u32 %v5427, 7
      %v5429 = vsub.s32 0, %v5428
      %v5430 = vrot.slane %v5425, %v5429
      %v5431 = vlaneseq
      %v5432 = vshrl.u32 %v5431, 7
      %v5433 = vsub.s32 1, %v5432
      %v5434 = vrot.slane %v5425, %v5433
      %5435 = vrot.lane.b32.xlu0 %v5430, 65
      %v5436 = vpop.permute.xlu0 %5435
      %5437 = vrot.lane.b32.xlu0 %v5434, 65
      %v5438 = vpop.permute.xlu0 %5437
      %v5439 = vsel %vm1289, %v5436, %v5438
      %v5443 = vmul.f32 %v5241, %v5436
      %v5444 = vmul.f32 %v5242, %v5439
      %v5445 = vmul.f32 %v5243, %v5438
      %5449 = vrot.lane.b32.xlu0 %v5443, 63
      %v5450 = vpop.permute.xlu0 %5449
      %5451 = vrot.lane.b32.xlu0 %v5444, 63
      %v5452 = vpop.permute.xlu0 %5451
      %5453 = vrot.lane.b32.xlu0 %v5445, 63
      %v5454 = vpop.permute.xlu0 %5453
      %v5455 = vsel %vm1272, %v5450, %v5452
      %v5456 = vsel %vm1272, %v5452, %v5454
      %5459 = vst [vmem:[#allocation3 + $0x50] sm:$0xff] %v5455
      %5460 = vst [vmem:[#allocation3 + $0x58] sm:$0xff] %v5456
      %v5461 = vld [vmem:[%s1371] ss:$8 sm:$0x3]
      %v5463 = vlaneseq
      %v5464 = vshrl.u32 %v5463, 7
      %v5465 = vsub.s32 0, %v5464
      %v5466 = vrot.slane %v5461, %v5465
      %v5467 = vlaneseq
      %v5468 = vshrl.u32 %v5467, 7
      %v5469 = vsub.s32 1, %v5468
      %v5470 = vrot.slane %v5461, %v5469
      %5471 = vrot.lane.b32.xlu0 %v5466, 71
      %v5472 = vpop.permute.xlu0 %5471
      %5473 = vrot.lane.b32.xlu0 %v5470, 71
      %v5474 = vpop.permute.xlu0 %5473
      %v5475 = vsel %vm1250, %v5472, %v5474
      %v5479 = vmul.f32 %v5241, %v5472
      %v5480 = vmul.f32 %v5242, %v5475
      %v5481 = vmul.f32 %v5243, %v5474
      %5485 = vrot.lane.b32.xlu0 %v5479, 57
      %v5486 = vpop.permute.xlu0 %5485
      %5487 = vrot.lane.b32.xlu0 %v5480, 57
      %v5488 = vpop.permute.xlu0 %5487
      %5489 = vrot.lane.b32.xlu0 %v5481, 57
      %v5490 = vpop.permute.xlu0 %5489
      %v5491 = vsel %vm1233, %v5486, %v5488
      %v5492 = vsel %vm1233, %v5488, %v5490
      %5495 = vst [vmem:[#allocation3 + $0x60] sm:$0xff] %v5491
      %5496 = vst [vmem:[#allocation3 + $0x68] sm:$0xff] %v5492
      %v5497 = vld [vmem:[%s1408] ss:$8 sm:$0x3]
      %v5499 = vlaneseq
      %v5500 = vshrl.u32 %v5499, 7
      %v5501 = vsub.s32 0, %v5500
      %v5502 = vrot.slane %v5497, %v5501
      %v5503 = vlaneseq
      %v5504 = vshrl.u32 %v5503, 7
      %v5505 = vsub.s32 1, %v5504
      %v5506 = vrot.slane %v5497, %v5505
      %5507 = vrot.lane.b32.xlu0 %v5502, 72
      %v5508 = vpop.permute.xlu0 %5507
      %5509 = vrot.lane.b32.xlu0 %v5506, 72
      %v5510 = vpop.permute.xlu0 %5509
      %v5511 = vsel %vm1211, %v5508, %v5510
      %v5515 = vmul.f32 %v5241, %v5508
      %v5516 = vmul.f32 %v5242, %v5511
      %v5517 = vmul.f32 %v5243, %v5510
      %5521 = vrot.lane.b32.xlu0 %v5515, 56
      %v5522 = vpop.permute.xlu0 %5521
      %5523 = vrot.lane.b32.xlu0 %v5516, 56
      %v5524 = vpop.permute.xlu0 %5523
      %5525 = vrot.lane.b32.xlu0 %v5517, 56
      %v5526 = vpop.permute.xlu0 %5525
      %v5527 = vsel %vm1194, %v5522, %v5524
      %v5528 = vsel %vm1194, %v5524, %v5526
      %5531 = vst [vmem:[#allocation3 + $0x70] sm:$0xff] %v5527
      %5532 = vst [vmem:[#allocation3 + $0x78] sm:$0xff] %v5528
      %v5533 = vld [vmem:[%s1445] ss:$8 sm:$0x3]
      %v5535 = vlaneseq
      %v5536 = vshrl.u32 %v5535, 7
      %v5537 = vsub.s32 0, %v5536
      %v5538 = vrot.slane %v5533, %v5537
      %v5539 = vlaneseq
      %v5540 = vshrl.u32 %v5539, 7
      %v5541 = vsub.s32 1, %v5540
      %v5542 = vrot.slane %v5533, %v5541
      %5543 = vrot.lane.b32.xlu0 %v5538, 73
      %v5544 = vpop.permute.xlu0 %5543
      %5545 = vrot.lane.b32.xlu0 %v5542, 73
      %v5546 = vpop.permute.xlu0 %5545
      %v5547 = vsel %vm1172, %v5544, %v5546
      %v5551 = vmul.f32 %v5241, %v5544
      %v5552 = vmul.f32 %v5242, %v5547
      %v5553 = vmul.f32 %v5243, %v5546
      %5557 = vrot.lane.b32.xlu0 %v5551, 55
      %v5558 = vpop.permute.xlu0 %5557
      %5559 = vrot.lane.b32.xlu0 %v5552, 55
      %v5560 = vpop.permute.xlu0 %5559
      %5561 = vrot.lane.b32.xlu0 %v5553, 55
      %v5562 = vpop.permute.xlu0 %5561
      %v5563 = vsel %vm1155, %v5558, %v5560
      %v5564 = vsel %vm1155, %v5560, %v5562
      %5567 = vst [vmem:[#allocation3 + $0x80] sm:$0xff] %v5563
      %5568 = vst [vmem:[#allocation3 + $0x88] sm:$0xff] %v5564
      %v5569 = vld [vmem:[%s53] ss:$8 sm:$0x3]
      %v5571 = vlaneseq
      %v5572 = vshrl.u32 %v5571, 7
      %v5573 = vsub.s32 0, %v5572
      %v5574 = vrot.slane %v5569, %v5573
      %v5575 = vlaneseq
      %v5576 = vshrl.u32 %v5575, 7
      %v5577 = vsub.s32 1, %v5576
      %v5578 = vrot.slane %v5569, %v5577
      %5579 = vrot.lane.b32.xlu0 %v5574, 119
      %v5580 = vpop.permute.xlu0 %5579
      %5581 = vrot.lane.b32.xlu0 %v5578, 119
      %v5582 = vpop.permute.xlu0 %5581
      %v5583 = vsel %vm1496, %v5580, %v5582
      %v5587 = vmul.f32 %v5241, %v5580
      %v5588 = vmul.f32 %v5242, %v5583
      %v5589 = vmul.f32 %v5243, %v5582
      %5593 = vrot.lane.b32.xlu0 %v5587, 9
      %v5594 = vpop.permute.xlu0 %5593
      %5595 = vrot.lane.b32.xlu0 %v5588, 9
      %v5596 = vpop.permute.xlu0 %5595
      %5597 = vrot.lane.b32.xlu0 %v5589, 9
      %v5598 = vpop.permute.xlu0 %5597
      %v5599 = vsel %vm1513, %v5594, %v5596
      %v5600 = vsel %vm1513, %v5596, %v5598
      %5603 = vst [vmem:[#allocation3 + $0x90] sm:$0xff] %v5599
      %5604 = vst [vmem:[#allocation3 + $0x98] sm:$0xff] %v5600
      %v5605 = vld [vmem:[%s1179] ss:$8 sm:$0x3]
      %v5607 = vlaneseq
      %v5608 = vshrl.u32 %v5607, 7
      %v5609 = vsub.s32 0, %v5608
      %v5610 = vrot.slane %v5605, %v5609
      %v5611 = vlaneseq
      %v5612 = vshrl.u32 %v5611, 7
      %v5613 = vsub.s32 1, %v5612
      %v5614 = vrot.slane %v5605, %v5613
      %5615 = vrot.lane.b32.xlu0 %v5610, 120
      %v5616 = vpop.permute.xlu0 %5615
      %5617 = vrot.lane.b32.xlu0 %v5614, 120
      %v5618 = vpop.permute.xlu0 %5617
      %v5619 = vsel %vm1534, %v5616, %v5618
      %v5623 = vmul.f32 %v5241, %v5616
      %v5624 = vmul.f32 %v5242, %v5619
      %v5625 = vmul.f32 %v5243, %v5618
      %5629 = vrot.lane.b32.xlu0 %v5623, 8
      %v5630 = vpop.permute.xlu0 %5629
      %5631 = vrot.lane.b32.xlu0 %v5624, 8
      %v5632 = vpop.permute.xlu0 %5631
      %5633 = vrot.lane.b32.xlu0 %v5625, 8
      %v5634 = vpop.permute.xlu0 %5633
      %v5635 = vsel %vm1551, %v5630, %v5632
      %v5636 = vsel %vm1551, %v5632, %v5634
      %5639 = vst [vmem:[#allocation3 + $0xa0] sm:$0xff] %v5635
      %5640 = vst [vmem:[#allocation3 + $0xa8] sm:$0xff] %v5636
      %v5641 = vld [vmem:[%s1218] ss:$8 sm:$0x3]
      %v5643 = vlaneseq
      %v5644 = vshrl.u32 %v5643, 7
      %v5645 = vsub.s32 0, %v5644
      %v5646 = vrot.slane %v5641, %v5645
      %v5647 = vlaneseq
      %v5648 = vshrl.u32 %v5647, 7
      %v5649 = vsub.s32 1, %v5648
      %v5650 = vrot.slane %v5641, %v5649
      %5651 = vrot.lane.b32.xlu0 %v5646, 121
      %v5652 = vpop.permute.xlu0 %5651
      %5653 = vrot.lane.b32.xlu0 %v5650, 121
      %v5654 = vpop.permute.xlu0 %5653
      %v5655 = vsel %vm1572, %v5652, %v5654
      %v5659 = vmul.f32 %v5241, %v5652
      %v5660 = vmul.f32 %v5242, %v5655
      %v5661 = vmul.f32 %v5243, %v5654
      %5665 = vrot.lane.b32.xlu0 %v5659, 7
      %v5666 = vpop.permute.xlu0 %5665
      %5667 = vrot.lane.b32.xlu0 %v5660, 7
      %v5668 = vpop.permute.xlu0 %5667
      %5669 = vrot.lane.b32.xlu0 %v5661, 7
      %v5670 = vpop.permute.xlu0 %5669
      %v5671 = vsel %vm1589, %v5666, %v5668
      %v5672 = vsel %vm1589, %v5668, %v5670
      %5675 = vst [vmem:[#allocation3 + $0xb0] sm:$0xff] %v5671
      %5676 = vst [vmem:[#allocation3 + $0xb8] sm:$0xff] %v5672
      %v5677 = vld [vmem:[%s1257] ss:$8 sm:$0x3]
      %v5679 = vlaneseq
      %v5680 = vshrl.u32 %v5679, 7
      %v5681 = vsub.s32 0, %v5680
      %v5682 = vrot.slane %v5677, %v5681
      %v5683 = vlaneseq
      %v5684 = vshrl.u32 %v5683, 7
      %v5685 = vsub.s32 1, %v5684
      %v5686 = vrot.slane %v5677, %v5685
      %5687 = vrot.lane.b32.xlu0 %v5682, 127
      %v5688 = vpop.permute.xlu0 %5687
      %5689 = vrot.lane.b32.xlu0 %v5686, 127
      %v5690 = vpop.permute.xlu0 %5689
      %v5691 = vsel %vm1610, %v5688, %v5690
      %v5695 = vmul.f32 %v5241, %v5688
      %v5696 = vmul.f32 %v5242, %v5691
      %v5697 = vmul.f32 %v5243, %v5690
      %5701 = vrot.lane.b32.xlu0 %v5695, 1
      %v5702 = vpop.permute.xlu0 %5701
      %5703 = vrot.lane.b32.xlu0 %v5696, 1
      %v5704 = vpop.permute.xlu0 %5703
      %5705 = vrot.lane.b32.xlu0 %v5697, 1
      %v5706 = vpop.permute.xlu0 %5705
      %v5707 = vsel %vm1627, %v5702, %v5704
      %v5708 = vsel %vm1627, %v5704, %v5706
      %5711 = vst [vmem:[#allocation3 + $0xc0] sm:$0xff] %v5707
      %5712 = vst [vmem:[#allocation3 + $0xc8] sm:$0xff] %v5708
      %v5713 = vld [vmem:[%s1296] ss:$8 sm:$0x3]
      %v5715 = vlaneseq
      %v5716 = vshrl.u32 %v5715, 7
      %v5717 = vsub.s32 0, %v5716
      %v5718 = vrot.slane %v5713, %v5717
      %v5719 = vlaneseq
      %v5720 = vshrl.u32 %v5719, 7
      %v5721 = vsub.s32 1, %v5720
      %v5722 = vrot.slane %v5713, %v5721
      %v5725 = vmul.f32 %v5242, %v5718
      %v5726 = vmul.f32 %v5243, %v5722
      %5727 = vst [vmem:[#allocation3 + $0xd0] sm:$0xff] %v5725
      %5728 = vst [vmem:[#allocation3 + $0xd8] sm:$0xff] %v5726
      %v5729 = vld [vmem:[%s1334] ss:$8 sm:$0x3]
      %v5731 = vlaneseq
      %v5732 = vshrl.u32 %v5731, 7
      %v5733 = vsub.s32 0, %v5732
      %v5734 = vrot.slane %v5729, %v5733
      %v5735 = vlaneseq
      %v5736 = vshrl.u32 %v5735, 7
      %v5737 = vsub.s32 1, %v5736
      %v5738 = vrot.slane %v5729, %v5737
      %5739 = vrot.lane.b32.xlu0 %v5734, 1
      %v5740 = vpop.permute.xlu0 %5739
      %5741 = vrot.lane.b32.xlu0 %v5738, 1
      %v5742 = vpop.permute.xlu0 %5741
      %v5743 = vsel %vm1627, %v5740, %v5742
      %v5747 = vmul.f32 %v5242, %v5740
      %v5748 = vmul.f32 %v5243, %v5743
      %v5749 = vmul.f32 %v5244, %v5742
      %5753 = vrot.lane.b32.xlu0 %v5747, 127
      %v5754 = vpop.permute.xlu0 %5753
      %5755 = vrot.lane.b32.xlu0 %v5748, 127
      %v5756 = vpop.permute.xlu0 %5755
      %5757 = vrot.lane.b32.xlu0 %v5749, 127
      %v5758 = vpop.permute.xlu0 %5757
      %v5759 = vsel %vm1610, %v5754, %v5756
      %v5760 = vsel %vm1610, %v5756, %v5758
      %5763 = vst [vmem:[#allocation3 + $0xe0] sm:$0xff] %v5759
      %5764 = vst [vmem:[#allocation3 + $0xe8] sm:$0xff] %v5760
      %v5765 = vld [vmem:[%s1371] ss:$8 sm:$0x3]
      %v5767 = vlaneseq
      %v5768 = vshrl.u32 %v5767, 7
      %v5769 = vsub.s32 0, %v5768
      %v5770 = vrot.slane %v5765, %v5769
      %v5771 = vlaneseq
      %v5772 = vshrl.u32 %v5771, 7
      %v5773 = vsub.s32 1, %v5772
      %v5774 = vrot.slane %v5765, %v5773
      %5775 = vrot.lane.b32.xlu0 %v5770, 7
      %v5776 = vpop.permute.xlu0 %5775
      %5777 = vrot.lane.b32.xlu0 %v5774, 7
      %v5778 = vpop.permute.xlu0 %5777
      %v5779 = vsel %vm1589, %v5776, %v5778
      %v5783 = vmul.f32 %v5242, %v5776
      %v5784 = vmul.f32 %v5243, %v5779
      %v5785 = vmul.f32 %v5244, %v5778
      %5789 = vrot.lane.b32.xlu0 %v5783, 121
      %v5790 = vpop.permute.xlu0 %5789
      %5791 = vrot.lane.b32.xlu0 %v5784, 121
      %v5792 = vpop.permute.xlu0 %5791
      %5793 = vrot.lane.b32.xlu0 %v5785, 121
      %v5794 = vpop.permute.xlu0 %5793
      %v5795 = vsel %vm1572, %v5790, %v5792
      %v5796 = vsel %vm1572, %v5792, %v5794
      %5799 = vst [vmem:[#allocation3 + $0xf0] sm:$0xff] %v5795
      %5800 = vst [vmem:[#allocation3 + $0xf8] sm:$0xff] %v5796
      %v5801 = vld [vmem:[%s1408] ss:$8 sm:$0x3]
      %v5803 = vlaneseq
      %v5804 = vshrl.u32 %v5803, 7
      %v5805 = vsub.s32 0, %v5804
      %v5806 = vrot.slane %v5801, %v5805
      %v5807 = vlaneseq
      %v5808 = vshrl.u32 %v5807, 7
      %v5809 = vsub.s32 1, %v5808
      %v5810 = vrot.slane %v5801, %v5809
      %5811 = vrot.lane.b32.xlu0 %v5806, 8
      %v5812 = vpop.permute.xlu0 %5811
      %5813 = vrot.lane.b32.xlu0 %v5810, 8
      %v5814 = vpop.permute.xlu0 %5813
      %v5815 = vsel %vm1551, %v5812, %v5814
      %v5819 = vmul.f32 %v5242, %v5812
      %v5820 = vmul.f32 %v5243, %v5815
      %v5821 = vmul.f32 %v5244, %v5814
      %5825 = vrot.lane.b32.xlu0 %v5819, 120
      %v5826 = vpop.permute.xlu0 %5825
      %5827 = vrot.lane.b32.xlu0 %v5820, 120
      %v5828 = vpop.permute.xlu0 %5827
      %5829 = vrot.lane.b32.xlu0 %v5821, 120
      %v5830 = vpop.permute.xlu0 %5829
      %v5831 = vsel %vm1534, %v5826, %v5828
      %v5832 = vsel %vm1534, %v5828, %v5830
      %5835 = vst [vmem:[#allocation3 + $0x100] sm:$0xff] %v5831
      %5836 = vst [vmem:[#allocation3 + $0x108] sm:$0xff] %v5832
      %v5837 = vld [vmem:[%s1445] ss:$8 sm:$0x3]
      %v5839 = vlaneseq
      %v5840 = vshrl.u32 %v5839, 7
      %v5841 = vsub.s32 0, %v5840
      %v5842 = vrot.slane %v5837, %v5841
      %v5843 = vlaneseq
      %v5844 = vshrl.u32 %v5843, 7
      %v5845 = vsub.s32 1, %v5844
      %v5846 = vrot.slane %v5837, %v5845
      %5847 = vrot.lane.b32.xlu0 %v5842, 9
      %v5848 = vpop.permute.xlu0 %5847
      %5849 = vrot.lane.b32.xlu0 %v5846, 9
      %v5850 = vpop.permute.xlu0 %5849
      %v5851 = vsel %vm1513, %v5848, %v5850
      %v5855 = vmul.f32 %v5242, %v5848
      %v5856 = vmul.f32 %v5243, %v5851
      %v5857 = vmul.f32 %v5244, %v5850
      %5861 = vrot.lane.b32.xlu0 %v5855, 119
      %v5862 = vpop.permute.xlu0 %5861
      %5863 = vrot.lane.b32.xlu0 %v5856, 119
      %v5864 = vpop.permute.xlu0 %5863
      %5865 = vrot.lane.b32.xlu0 %v5857, 119
      %v5866 = vpop.permute.xlu0 %5865
      %v5867 = vsel %vm1496, %v5862, %v5864
      %v5868 = vsel %vm1496, %v5864, %v5866
      %5871 = vst [vmem:[#allocation3 + $0x110] sm:$0xff] %v5867
      %5872 = vst [vmem:[#allocation3 + $0x118] sm:$0xff] %v5868
      %v5873 = vld [vmem:[%s53] ss:$8 sm:$0x3]
      %v5875 = vlaneseq
      %v5876 = vshrl.u32 %v5875, 7
      %v5877 = vsub.s32 0, %v5876
      %v5878 = vrot.slane %v5873, %v5877
      %v5879 = vlaneseq
      %v5880 = vshrl.u32 %v5879, 7
      %v5881 = vsub.s32 1, %v5880
      %v5882 = vrot.slane %v5873, %v5881
      %5883 = vrot.lane.b32.xlu0 %v5878, 55
      %v5884 = vpop.permute.xlu0 %5883
      %5885 = vrot.lane.b32.xlu0 %v5882, 55
      %v5886 = vpop.permute.xlu0 %5885
      %v5887 = vsel %vm1155, %v5884, %v5886
      %v5891 = vmul.f32 %v5242, %v5884
      %v5892 = vmul.f32 %v5243, %v5887
      %v5893 = vmul.f32 %v5244, %v5886
      %5897 = vrot.lane.b32.xlu0 %v5891, 73
      %v5898 = vpop.permute.xlu0 %5897
      %5899 = vrot.lane.b32.xlu0 %v5892, 73
      %v5900 = vpop.permute.xlu0 %5899
      %5901 = vrot.lane.b32.xlu0 %v5893, 73
      %v5902 = vpop.permute.xlu0 %5901
      %v5903 = vsel %vm1172, %v5898, %v5900
      %v5904 = vsel %vm1172, %v5900, %v5902
      %5907 = vst [vmem:[#allocation3 + $0x120] sm:$0xff] %v5903
      %5908 = vst [vmem:[#allocation3 + $0x128] sm:$0xff] %v5904
      %v5909 = vld [vmem:[%s1179] ss:$8 sm:$0x3]
      %v5911 = vlaneseq
      %v5912 = vshrl.u32 %v5911, 7
      %v5913 = vsub.s32 0, %v5912
      %v5914 = vrot.slane %v5909, %v5913
      %v5915 = vlaneseq
      %v5916 = vshrl.u32 %v5915, 7
      %v5917 = vsub.s32 1, %v5916
      %v5918 = vrot.slane %v5909, %v5917
      %5919 = vrot.lane.b32.xlu0 %v5914, 56
      %v5920 = vpop.permute.xlu0 %5919
      %5921 = vrot.lane.b32.xlu0 %v5918, 56
      %v5922 = vpop.permute.xlu0 %5921
      %v5923 = vsel %vm1194, %v5920, %v5922
      %v5927 = vmul.f32 %v5242, %v5920
      %v5928 = vmul.f32 %v5243, %v5923
      %v5929 = vmul.f32 %v5244, %v5922
      %5933 = vrot.lane.b32.xlu0 %v5927, 72
      %v5934 = vpop.permute.xlu0 %5933
      %5935 = vrot.lane.b32.xlu0 %v5928, 72
      %v5936 = vpop.permute.xlu0 %5935
      %5937 = vrot.lane.b32.xlu0 %v5929, 72
      %v5938 = vpop.permute.xlu0 %5937
      %v5939 = vsel %vm1211, %v5934, %v5936
      %v5940 = vsel %vm1211, %v5936, %v5938
      %5943 = vst [vmem:[#allocation3 + $0x130] sm:$0xff] %v5939
      %5944 = vst [vmem:[#allocation3 + $0x138] sm:$0xff] %v5940
      %v5945 = vld [vmem:[%s1218] ss:$8 sm:$0x3]
      %v5947 = vlaneseq
      %v5948 = vshrl.u32 %v5947, 7
      %v5949 = vsub.s32 0, %v5948
      %v5950 = vrot.slane %v5945, %v5949
      %v5951 = vlaneseq
      %v5952 = vshrl.u32 %v5951, 7
      %v5953 = vsub.s32 1, %v5952
      %v5954 = vrot.slane %v5945, %v5953
      %5955 = vrot.lane.b32.xlu0 %v5950, 57
      %v5956 = vpop.permute.xlu0 %5955
      %5957 = vrot.lane.b32.xlu0 %v5954, 57
      %v5958 = vpop.permute.xlu0 %5957
      %v5959 = vsel %vm1233, %v5956, %v5958
      %v5963 = vmul.f32 %v5242, %v5956
      %v5964 = vmul.f32 %v5243, %v5959
      %v5965 = vmul.f32 %v5244, %v5958
      %5969 = vrot.lane.b32.xlu0 %v5963, 71
      %v5970 = vpop.permute.xlu0 %5969
      %5971 = vrot.lane.b32.xlu0 %v5964, 71
      %v5972 = vpop.permute.xlu0 %5971
      %5973 = vrot.lane.b32.xlu0 %v5965, 71
      %v5974 = vpop.permute.xlu0 %5973
      %v5975 = vsel %vm1250, %v5970, %v5972
      %v5976 = vsel %vm1250, %v5972, %v5974
      %5979 = vst [vmem:[#allocation3 + $0x140] sm:$0xff] %v5975
      %5980 = vst [vmem:[#allocation3 + $0x148] sm:$0xff] %v5976
      %v5981 = vld [vmem:[%s1257] ss:$8 sm:$0x3]
      %v5983 = vlaneseq
      %v5984 = vshrl.u32 %v5983, 7
      %v5985 = vsub.s32 0, %v5984
      %v5986 = vrot.slane %v5981, %v5985
      %v5987 = vlaneseq
      %v5988 = vshrl.u32 %v5987, 7
      %v5989 = vsub.s32 1, %v5988
      %v5990 = vrot.slane %v5981, %v5989
      %5991 = vrot.lane.b32.xlu0 %v5986, 63
      %v5992 = vpop.permute.xlu0 %5991
      %5993 = vrot.lane.b32.xlu0 %v5990, 63
      %v5994 = vpop.permute.xlu0 %5993
      %v5995 = vsel %vm1272, %v5992, %v5994
      %v5999 = vmul.f32 %v5242, %v5992
      %v6000 = vmul.f32 %v5243, %v5995
      %v6001 = vmul.f32 %v5244, %v5994
      %6005 = vrot.lane.b32.xlu0 %v5999, 65
      %v6006 = vpop.permute.xlu0 %6005
      %6007 = vrot.lane.b32.xlu0 %v6000, 65
      %v6008 = vpop.permute.xlu0 %6007
      %6009 = vrot.lane.b32.xlu0 %v6001, 65
      %v6010 = vpop.permute.xlu0 %6009
      %v6011 = vsel %vm1289, %v6006, %v6008
      %v6012 = vsel %vm1289, %v6008, %v6010
      %6015 = vst [vmem:[#allocation3 + $0x150] sm:$0xff] %v6011
      %6016 = vst [vmem:[#allocation3 + $0x158] sm:$0xff] %v6012
      %v6017 = vld [vmem:[%s1296] ss:$8 sm:$0x3]
      %v6019 = vlaneseq
      %v6020 = vshrl.u32 %v6019, 7
      %v6021 = vsub.s32 0, %v6020
      %v6022 = vrot.slane %v6017, %v6021
      %v6023 = vlaneseq
      %v6024 = vshrl.u32 %v6023, 7
      %v6025 = vsub.s32 1, %v6024
      %v6026 = vrot.slane %v6017, %v6025
      %6027 = vrot.lane.b32.xlu0 %v6022, 64
      %v6028 = vpop.permute.xlu0 %6027
      %6029 = vrot.lane.b32.xlu0 %v6026, 64
      %v6030 = vpop.permute.xlu0 %6029
      %v6031 = vsel %vm1311, %v6028, %v6030
      %v6035 = vmul.f32 %v5242, %v6028
      %v6036 = vmul.f32 %v5243, %v6031
      %v6037 = vmul.f32 %v5244, %v6030
      %6041 = vrot.lane.b32.xlu0 %v6035, 64
      %v6042 = vpop.permute.xlu0 %6041
      %6043 = vrot.lane.b32.xlu0 %v6036, 64
      %v6044 = vpop.permute.xlu0 %6043
      %6045 = vrot.lane.b32.xlu0 %v6037, 64
      %v6046 = vpop.permute.xlu0 %6045
      %v6047 = vsel %vm1311, %v6042, %v6044
      %v6048 = vsel %vm1311, %v6044, %v6046
      %6051 = vst [vmem:[#allocation3 + $0x160] sm:$0xff] %v6047
      %6052 = vst [vmem:[#allocation3 + $0x168] sm:$0xff] %v6048
      %v6053 = vld [vmem:[%s1334] ss:$8 sm:$0x3]
      %v6055 = vlaneseq
      %v6056 = vshrl.u32 %v6055, 7
      %v6057 = vsub.s32 0, %v6056
      %v6058 = vrot.slane %v6053, %v6057
      %v6059 = vlaneseq
      %v6060 = vshrl.u32 %v6059, 7
      %v6061 = vsub.s32 1, %v6060
      %v6062 = vrot.slane %v6053, %v6061
      %6063 = vrot.lane.b32.xlu0 %v6058, 65
      %v6064 = vpop.permute.xlu0 %6063
      %6065 = vrot.lane.b32.xlu0 %v6062, 65
      %v6066 = vpop.permute.xlu0 %6065
      %v6067 = vsel %vm1289, %v6064, %v6066
      %v6071 = vmul.f32 %v5242, %v6064
      %v6072 = vmul.f32 %v5243, %v6067
      %v6073 = vmul.f32 %v5244, %v6066
      %6077 = vrot.lane.b32.xlu0 %v6071, 63
      %v6078 = vpop.permute.xlu0 %6077
      %6079 = vrot.lane.b32.xlu0 %v6072, 63
      %v6080 = vpop.permute.xlu0 %6079
      %6081 = vrot.lane.b32.xlu0 %v6073, 63
      %v6082 = vpop.permute.xlu0 %6081
      %v6083 = vsel %vm1272, %v6078, %v6080
      %v6084 = vsel %vm1272, %v6080, %v6082
      %6087 = vst [vmem:[#allocation3 + $0x170] sm:$0xff] %v6083
      %6088 = vst [vmem:[#allocation3 + $0x178] sm:$0xff] %v6084
      %v6089 = vld [vmem:[%s1371] ss:$8 sm:$0x3]
      %v6091 = vlaneseq
      %v6092 = vshrl.u32 %v6091, 7
      %v6093 = vsub.s32 0, %v6092
      %v6094 = vrot.slane %v6089, %v6093
      %v6095 = vlaneseq
      %v6096 = vshrl.u32 %v6095, 7
      %v6097 = vsub.s32 1, %v6096
      %v6098 = vrot.slane %v6089, %v6097
      %6099 = vrot.lane.b32.xlu0 %v6094, 71
      %v6100 = vpop.permute.xlu0 %6099
      %6101 = vrot.lane.b32.xlu0 %v6098, 71
      %v6102 = vpop.permute.xlu0 %6101
      %v6103 = vsel %vm1250, %v6100, %v6102
      %v6107 = vmul.f32 %v5242, %v6100
      %v6108 = vmul.f32 %v5243, %v6103
      %v6109 = vmul.f32 %v5244, %v6102
      %6113 = vrot.lane.b32.xlu0 %v6107, 57
      %v6114 = vpop.permute.xlu0 %6113
      %6115 = vrot.lane.b32.xlu0 %v6108, 57
      %v6116 = vpop.permute.xlu0 %6115
      %6117 = vrot.lane.b32.xlu0 %v6109, 57
      %v6118 = vpop.permute.xlu0 %6117
      %v6119 = vsel %vm1233, %v6114, %v6116
      %v6120 = vsel %vm1233, %v6116, %v6118
      %6123 = vst [vmem:[#allocation3 + $0x180] sm:$0xff] %v6119
      %6124 = vst [vmem:[#allocation3 + $0x188] sm:$0xff] %v6120
      %v6125 = vld [vmem:[%s1408] ss:$8 sm:$0x3]
      %v6127 = vlaneseq
      %v6128 = vshrl.u32 %v6127, 7
      %v6129 = vsub.s32 0, %v6128
      %v6130 = vrot.slane %v6125, %v6129
      %v6131 = vlaneseq
      %v6132 = vshrl.u32 %v6131, 7
      %v6133 = vsub.s32 1, %v6132
      %v6134 = vrot.slane %v6125, %v6133
      %6135 = vrot.lane.b32.xlu0 %v6130, 72
      %v6136 = vpop.permute.xlu0 %6135
      %6137 = vrot.lane.b32.xlu0 %v6134, 72
      %v6138 = vpop.permute.xlu0 %6137
      %v6139 = vsel %vm1211, %v6136, %v6138
      %v6143 = vmul.f32 %v5242, %v6136
      %v6144 = vmul.f32 %v5243, %v6139
      %v6145 = vmul.f32 %v5244, %v6138
      %6149 = vrot.lane.b32.xlu0 %v6143, 56
      %v6150 = vpop.permute.xlu0 %6149
      %6151 = vrot.lane.b32.xlu0 %v6144, 56
      %v6152 = vpop.permute.xlu0 %6151
      %6153 = vrot.lane.b32.xlu0 %v6145, 56
      %v6154 = vpop.permute.xlu0 %6153
      %v6155 = vsel %vm1194, %v6150, %v6152
      %v6156 = vsel %vm1194, %v6152, %v6154
      %6159 = vst [vmem:[#allocation3 + $0x190] sm:$0xff] %v6155
      %6160 = vst [vmem:[#allocation3 + $0x198] sm:$0xff] %v6156
      %v6161 = vld [vmem:[%s1445] ss:$8 sm:$0x3]
      %v6163 = vlaneseq
      %v6164 = vshrl.u32 %v6163, 7
      %v6165 = vsub.s32 0, %v6164
      %v6166 = vrot.slane %v6161, %v6165
      %v6167 = vlaneseq
      %v6168 = vshrl.u32 %v6167, 7
      %v6169 = vsub.s32 1, %v6168
      %v6170 = vrot.slane %v6161, %v6169
      %6171 = vrot.lane.b32.xlu0 %v6166, 73
      %v6172 = vpop.permute.xlu0 %6171
      %6173 = vrot.lane.b32.xlu0 %v6170, 73
      %v6174 = vpop.permute.xlu0 %6173
      %v6175 = vsel %vm1172, %v6172, %v6174
      %v6179 = vmul.f32 %v5242, %v6172
      %v6180 = vmul.f32 %v5243, %v6175
      %v6181 = vmul.f32 %v5244, %v6174
      %6185 = vrot.lane.b32.xlu0 %v6179, 55
      %v6186 = vpop.permute.xlu0 %6185
      %6187 = vrot.lane.b32.xlu0 %v6180, 55
      %v6188 = vpop.permute.xlu0 %6187
      %6189 = vrot.lane.b32.xlu0 %v6181, 55
      %v6190 = vpop.permute.xlu0 %6189
      %v6191 = vsel %vm1155, %v6186, %v6188
      %v6192 = vsel %vm1155, %v6188, %v6190
      %6195 = vst [vmem:[#allocation3 + $0x1a0] sm:$0xff] %v6191
      %6196 = vst [vmem:[#allocation3 + $0x1a8] sm:$0xff] %v6192
      %v6197 = vld [vmem:[#allocation3] sm:$0xff]
      %v6198 = vld [vmem:[#allocation3 + $0x8] sm:$0xff]
      %v6199 = vld [vmem:[#allocation3 + $0x10] sm:$0xff]
      %v6200 = vld [vmem:[#allocation3 + $0x18] sm:$0xff]
      %v6201 = vld [vmem:[#allocation3 + $0x20] sm:$0xff]
      %v6202 = vld [vmem:[#allocation3 + $0x28] sm:$0xff]
      %v6203 = vld [vmem:[#allocation3 + $0x30] sm:$0xff]
      %v6204 = vld [vmem:[#allocation3 + $0x38] sm:$0xff]
      %v6205 = vld [vmem:[#allocation3 + $0x40] sm:$0xff]
      %v6206 = vld [vmem:[#allocation3 + $0x48] sm:$0xff]
      %v6207 = vld [vmem:[#allocation3 + $0x50] sm:$0xff]
      %v6208 = vld [vmem:[#allocation3 + $0x58] sm:$0xff]
      %v6209 = vld [vmem:[#allocation3 + $0x60] sm:$0xff]
      %v6210 = vld [vmem:[#allocation3 + $0x68] sm:$0xff]
      %v6211 = vld [vmem:[#allocation3 + $0x70] sm:$0xff]
      %v6212 = vld [vmem:[#allocation3 + $0x78] sm:$0xff]
      %v6213 = vld [vmem:[#allocation3 + $0x80] sm:$0xff]
      %v6214 = vld [vmem:[#allocation3 + $0x88] sm:$0xff]
      %v6215 = vld [vmem:[#allocation3 + $0x90] sm:$0xff]
      %v6216 = vld [vmem:[#allocation3 + $0x98] sm:$0xff]
      %v6217 = vld [vmem:[#allocation3 + $0xa0] sm:$0xff]
      %v6218 = vld [vmem:[#allocation3 + $0xa8] sm:$0xff]
      %v6219 = vld [vmem:[#allocation3 + $0xb0] sm:$0xff]
      %v6220 = vld [vmem:[#allocation3 + $0xb8] sm:$0xff]
      %v6221 = vld [vmem:[#allocation3 + $0xc0] sm:$0xff]
      %v6222 = vld [vmem:[#allocation3 + $0xc8] sm:$0xff]
      %v6223 = vld [vmem:[#allocation3 + $0xd0] sm:$0xff]
      %v6224 = vld [vmem:[#allocation3 + $0xd8] sm:$0xff]
      %v6225 = vld [vmem:[#allocation3 + $0xe0] sm:$0xff]
      %v6226 = vld [vmem:[#allocation3 + $0xe8] sm:$0xff]
      %v6227 = vld [vmem:[#allocation3 + $0xf0] sm:$0xff]
      %v6228 = vld [vmem:[#allocation3 + $0xf8] sm:$0xff]
      %v6229 = vld [vmem:[#allocation3 + $0x100] sm:$0xff]
      %v6230 = vld [vmem:[#allocation3 + $0x108] sm:$0xff]
      %v6231 = vld [vmem:[#allocation3 + $0x110] sm:$0xff]
      %v6232 = vld [vmem:[#allocation3 + $0x118] sm:$0xff]
      %v6233 = vld [vmem:[#allocation3 + $0x120] sm:$0xff]
      %v6234 = vld [vmem:[#allocation3 + $0x128] sm:$0xff]
      %v6235 = vld [vmem:[#allocation3 + $0x130] sm:$0xff]
      %v6236 = vld [vmem:[#allocation3 + $0x138] sm:$0xff]
      %v6237 = vld [vmem:[#allocation3 + $0x140] sm:$0xff]
      %v6238 = vld [vmem:[#allocation3 + $0x148] sm:$0xff]
      %v6239 = vld [vmem:[#allocation3 + $0x150] sm:$0xff]
      %v6240 = vld [vmem:[#allocation3 + $0x158] sm:$0xff]
      %v6241 = vld [vmem:[#allocation3 + $0x160] sm:$0xff]
      %v6242 = vld [vmem:[#allocation3 + $0x168] sm:$0xff]
      %v6243 = vld [vmem:[#allocation3 + $0x170] sm:$0xff]
      %v6244 = vld [vmem:[#allocation3 + $0x178] sm:$0xff]
      %v6245 = vld [vmem:[#allocation3 + $0x180] sm:$0xff]
      %v6246 = vld [vmem:[#allocation3 + $0x188] sm:$0xff]
      %v6247 = vld [vmem:[#allocation3 + $0x190] sm:$0xff]
      %v6248 = vld [vmem:[#allocation3 + $0x198] sm:$0xff]
      %v6249 = vld [vmem:[#allocation3 + $0x1a0] sm:$0xff]
      %v6250 = vld [vmem:[#allocation3 + $0x1a8] sm:$0xff]
      %v6251 = vpack.c.bf16 %v6199, %v6197
      %v6252 = vpack.c.bf16 %v6200, %v6198
      %v6253 = vpack.c.bf16 %v6203, %v6201
      %v6254 = vpack.c.bf16 %v6204, %v6202
      %v6255 = vpack.c.bf16 %v6207, %v6205
      %v6256 = vpack.c.bf16 %v6208, %v6206
      %v6257 = vpack.c.bf16 %v6211, %v6209
      %v6258 = vpack.c.bf16 %v6212, %v6210
      %v6259 = vpack.c.bf16 %v6215, %v6213
      %v6260 = vpack.c.bf16 %v6216, %v6214
      %v6261 = vpack.c.bf16 %v6219, %v6217
      %v6262 = vpack.c.bf16 %v6220, %v6218
      %v6263 = vpack.c.bf16 %v6223, %v6221
      %v6264 = vpack.c.bf16 %v6224, %v6222
      %v6265 = vpack.c.bf16 %v6227, %v6225
      %v6266 = vpack.c.bf16 %v6228, %v6226
      %v6267 = vpack.c.bf16 %v6231, %v6229
      %v6268 = vpack.c.bf16 %v6232, %v6230
      %v6269 = vpack.c.bf16 %v6235, %v6233
      %v6270 = vpack.c.bf16 %v6236, %v6234
      %v6271 = vpack.c.bf16 %v6239, %v6237
      %v6272 = vpack.c.bf16 %v6240, %v6238
      %v6273 = vpack.c.bf16 %v6243, %v6241
      %v6274 = vpack.c.bf16 %v6244, %v6242
      %v6275 = vpack.c.bf16 %v6247, %v6245
      %v6276 = vpack.c.bf16 %v6248, %v6246
      %v6277 = vpack.c.bf16 %v6249, %v6249
      %v6278 = vpack.c.bf16 %v6250, %v6250
      %v6279 = vld [vmem:[%s43] sm:$0xff]
      %v6280 = vld [vmem:[%s43 + $0x8] sm:$0xff]
      %6281 = vst [vmem:[#allocation2 + $0x8] sm:$0xff] %v5221
      %6282 = vst [vmem:[#allocation2 + $0x10] sm:$0xff] %v5222
      %v6283 = vld [vmem:[#allocation2] sm:$0xff]
      %v6284 = vld [vmem:[#allocation2 + $0x8] sm:$0xff]
      %v6285 = vld [vmem:[#allocation2 + $0x10] sm:$0xff]
      %v6286 = vld [vmem:[#allocation2 + $0x18] sm:$0xff]
      %v6287 = vld [vmem:[%s53] ss:$8 sm:$0x3]
      %v6289 = vlaneseq
      %v6290 = vshrl.u32 %v6289, 7
      %v6291 = vsub.s32 0, %v6290
      %v6292 = vrot.slane %v6287, %v6291
      %v6293 = vlaneseq
      %v6294 = vshrl.u32 %v6293, 7
      %v6295 = vsub.s32 1, %v6294
      %v6296 = vrot.slane %v6287, %v6295
      %6297 = vrot.lane.b32.xlu0 %v6292, 55
      %v6298 = vpop.permute.xlu0 %6297
      %6299 = vrot.lane.b32.xlu0 %v6296, 55
      %v6300 = vpop.permute.xlu0 %6299
      %v6301 = vsel %vm1155, %v6298, %v6300
      %v6305 = vmul.f32 %v6283, %v6298
      %v6306 = vmul.f32 %v6284, %v6301
      %v6307 = vmul.f32 %v6285, %v6300
      %6311 = vrot.lane.b32.xlu0 %v6305, 73
      %v6312 = vpop.permute.xlu0 %6311
      %6313 = vrot.lane.b32.xlu0 %v6306, 73
      %v6314 = vpop.permute.xlu0 %6313
      %6315 = vrot.lane.b32.xlu0 %v6307, 73
      %v6316 = vpop.permute.xlu0 %6315
      %v6317 = vsel %vm1172, %v6312, %v6314
      %v6318 = vsel %vm1172, %v6314, %v6316
      %6321 = vst [vmem:[#allocation3] sm:$0xff] %v6317
      %6322 = vst [vmem:[#allocation3 + $0x8] sm:$0xff] %v6318
      %v6323 = vld [vmem:[%s1179] ss:$8 sm:$0x3]
      %v6325 = vlaneseq
      %v6326 = vshrl.u32 %v6325, 7
      %v6327 = vsub.s32 0, %v6326
      %v6328 = vrot.slane %v6323, %v6327
      %v6329 = vlaneseq
      %v6330 = vshrl.u32 %v6329, 7
      %v6331 = vsub.s32 1, %v6330
      %v6332 = vrot.slane %v6323, %v6331
      %6333 = vrot.lane.b32.xlu0 %v6328, 56
      %v6334 = vpop.permute.xlu0 %6333
      %6335 = vrot.lane.b32.xlu0 %v6332, 56
      %v6336 = vpop.permute.xlu0 %6335
      %v6337 = vsel %vm1194, %v6334, %v6336
      %v6341 = vmul.f32 %v6283, %v6334
      %v6342 = vmul.f32 %v6284, %v6337
      %v6343 = vmul.f32 %v6285, %v6336
      %6347 = vrot.lane.b32.xlu0 %v6341, 72
      %v6348 = vpop.permute.xlu0 %6347
      %6349 = vrot.lane.b32.xlu0 %v6342, 72
      %v6350 = vpop.permute.xlu0 %6349
      %6351 = vrot.lane.b32.xlu0 %v6343, 72
      %v6352 = vpop.permute.xlu0 %6351
      %v6353 = vsel %vm1211, %v6348, %v6350
      %v6354 = vsel %vm1211, %v6350, %v6352
      %6357 = vst [vmem:[#allocation3 + $0x10] sm:$0xff] %v6353
      %6358 = vst [vmem:[#allocation3 + $0x18] sm:$0xff] %v6354
      %v6359 = vld [vmem:[%s1218] ss:$8 sm:$0x3]
      %v6361 = vlaneseq
      %v6362 = vshrl.u32 %v6361, 7
      %v6363 = vsub.s32 0, %v6362
      %v6364 = vrot.slane %v6359, %v6363
      %v6365 = vlaneseq
      %v6366 = vshrl.u32 %v6365, 7
      %v6367 = vsub.s32 1, %v6366
      %v6368 = vrot.slane %v6359, %v6367
      %6369 = vrot.lane.b32.xlu0 %v6364, 57
      %v6370 = vpop.permute.xlu0 %6369
      %6371 = vrot.lane.b32.xlu0 %v6368, 57
      %v6372 = vpop.permute.xlu0 %6371
      %v6373 = vsel %vm1233, %v6370, %v6372
      %v6377 = vmul.f32 %v6283, %v6370
      %v6378 = vmul.f32 %v6284, %v6373
      %v6379 = vmul.f32 %v6285, %v6372
      %6383 = vrot.lane.b32.xlu0 %v6377, 71
      %v6384 = vpop.permute.xlu0 %6383
      %6385 = vrot.lane.b32.xlu0 %v6378, 71
      %v6386 = vpop.permute.xlu0 %6385
      %6387 = vrot.lane.b32.xlu0 %v6379, 71
      %v6388 = vpop.permute.xlu0 %6387
      %v6389 = vsel %vm1250, %v6384, %v6386
      %v6390 = vsel %vm1250, %v6386, %v6388
      %6393 = vst [vmem:[#allocation3 + $0x20] sm:$0xff] %v6389
      %6394 = vst [vmem:[#allocation3 + $0x28] sm:$0xff] %v6390
      %v6395 = vld [vmem:[%s1257] ss:$8 sm:$0x3]
      %v6397 = vlaneseq
      %v6398 = vshrl.u32 %v6397, 7
      %v6399 = vsub.s32 0, %v6398
      %v6400 = vrot.slane %v6395, %v6399
      %v6401 = vlaneseq
      %v6402 = vshrl.u32 %v6401, 7
      %v6403 = vsub.s32 1, %v6402
      %v6404 = vrot.slane %v6395, %v6403
      %6405 = vrot.lane.b32.xlu0 %v6400, 63
      %v6406 = vpop.permute.xlu0 %6405
      %6407 = vrot.lane.b32.xlu0 %v6404, 63
      %v6408 = vpop.permute.xlu0 %6407
      %v6409 = vsel %vm1272, %v6406, %v6408
      %v6413 = vmul.f32 %v6283, %v6406
      %v6414 = vmul.f32 %v6284, %v6409
      %v6415 = vmul.f32 %v6285, %v6408
      %6419 = vrot.lane.b32.xlu0 %v6413, 65
      %v6420 = vpop.permute.xlu0 %6419
      %6421 = vrot.lane.b32.xlu0 %v6414, 65
      %v6422 = vpop.permute.xlu0 %6421
      %6423 = vrot.lane.b32.xlu0 %v6415, 65
      %v6424 = vpop.permute.xlu0 %6423
      %v6425 = vsel %vm1289, %v6420, %v6422
      %v6426 = vsel %vm1289, %v6422, %v6424
      %6429 = vst [vmem:[#allocation3 + $0x30] sm:$0xff] %v6425
      %6430 = vst [vmem:[#allocation3 + $0x38] sm:$0xff] %v6426
      %v6431 = vld [vmem:[%s1296] ss:$8 sm:$0x3]
      %v6433 = vlaneseq
      %v6434 = vshrl.u32 %v6433, 7
      %v6435 = vsub.s32 0, %v6434
      %v6436 = vrot.slane %v6431, %v6435
      %v6437 = vlaneseq
      %v6438 = vshrl.u32 %v6437, 7
      %v6439 = vsub.s32 1, %v6438
      %v6440 = vrot.slane %v6431, %v6439
      %6441 = vrot.lane.b32.xlu0 %v6436, 64
      %v6442 = vpop.permute.xlu0 %6441
      %6443 = vrot.lane.b32.xlu0 %v6440, 64
      %v6444 = vpop.permute.xlu0 %6443
      %v6445 = vsel %vm1311, %v6442, %v6444
      %v6449 = vmul.f32 %v6283, %v6442
      %v6450 = vmul.f32 %v6284, %v6445
      %v6451 = vmul.f32 %v6285, %v6444
      %6455 = vrot.lane.b32.xlu0 %v6449, 64
      %v6456 = vpop.permute.xlu0 %6455
      %6457 = vrot.lane.b32.xlu0 %v6450, 64
      %v6458 = vpop.permute.xlu0 %6457
      %6459 = vrot.lane.b32.xlu0 %v6451, 64
      %v6460 = vpop.permute.xlu0 %6459
      %v6461 = vsel %vm1311, %v6456, %v6458
      %v6462 = vsel %vm1311, %v6458, %v6460
      %6465 = vst [vmem:[#allocation3 + $0x40] sm:$0xff] %v6461
      %6466 = vst [vmem:[#allocation3 + $0x48] sm:$0xff] %v6462
      %v6467 = vld [vmem:[%s1334] ss:$8 sm:$0x3]
      %v6469 = vlaneseq
      %v6470 = vshrl.u32 %v6469, 7
      %v6471 = vsub.s32 0, %v6470
      %v6472 = vrot.slane %v6467, %v6471
      %v6473 = vlaneseq
      %v6474 = vshrl.u32 %v6473, 7
      %v6475 = vsub.s32 1, %v6474
      %v6476 = vrot.slane %v6467, %v6475
      %6477 = vrot.lane.b32.xlu0 %v6472, 65
      %v6478 = vpop.permute.xlu0 %6477
      %6479 = vrot.lane.b32.xlu0 %v6476, 65
      %v6480 = vpop.permute.xlu0 %6479
      %v6481 = vsel %vm1289, %v6478, %v6480
      %v6485 = vmul.f32 %v6283, %v6478
      %v6486 = vmul.f32 %v6284, %v6481
      %v6487 = vmul.f32 %v6285, %v6480
      %6491 = vrot.lane.b32.xlu0 %v6485, 63
      %v6492 = vpop.permute.xlu0 %6491
      %6493 = vrot.lane.b32.xlu0 %v6486, 63
      %v6494 = vpop.permute.xlu0 %6493
      %6495 = vrot.lane.b32.xlu0 %v6487, 63
      %v6496 = vpop.permute.xlu0 %6495
      %v6497 = vsel %vm1272, %v6492, %v6494
      %v6498 = vsel %vm1272, %v6494, %v6496
      %6501 = vst [vmem:[#allocation3 + $0x50] sm:$0xff] %v6497
      %6502 = vst [vmem:[#allocation3 + $0x58] sm:$0xff] %v6498
      %v6503 = vld [vmem:[%s1371] ss:$8 sm:$0x3]
      %v6505 = vlaneseq
      %v6506 = vshrl.u32 %v6505, 7
      %v6507 = vsub.s32 0, %v6506
      %v6508 = vrot.slane %v6503, %v6507
      %v6509 = vlaneseq
      %v6510 = vshrl.u32 %v6509, 7
      %v6511 = vsub.s32 1, %v6510
      %v6512 = vrot.slane %v6503, %v6511
      %6513 = vrot.lane.b32.xlu0 %v6508, 71
      %v6514 = vpop.permute.xlu0 %6513
      %6515 = vrot.lane.b32.xlu0 %v6512, 71
      %v6516 = vpop.permute.xlu0 %6515
      %v6517 = vsel %vm1250, %v6514, %v6516
      %v6521 = vmul.f32 %v6283, %v6514
      %v6522 = vmul.f32 %v6284, %v6517
      %v6523 = vmul.f32 %v6285, %v6516
      %6527 = vrot.lane.b32.xlu0 %v6521, 57
      %v6528 = vpop.permute.xlu0 %6527
      %6529 = vrot.lane.b32.xlu0 %v6522, 57
      %v6530 = vpop.permute.xlu0 %6529
      %6531 = vrot.lane.b32.xlu0 %v6523, 57
      %v6532 = vpop.permute.xlu0 %6531
      %v6533 = vsel %vm1233, %v6528, %v6530
      %v6534 = vsel %vm1233, %v6530, %v6532
      %6537 = vst [vmem:[#allocation3 + $0x60] sm:$0xff] %v6533
      %6538 = vst [vmem:[#allocation3 + $0x68] sm:$0xff] %v6534
      %v6539 = vld [vmem:[%s1408] ss:$8 sm:$0x3]
      %v6541 = vlaneseq
      %v6542 = vshrl.u32 %v6541, 7
      %v6543 = vsub.s32 0, %v6542
      %v6544 = vrot.slane %v6539, %v6543
      %v6545 = vlaneseq
      %v6546 = vshrl.u32 %v6545, 7
      %v6547 = vsub.s32 1, %v6546
      %v6548 = vrot.slane %v6539, %v6547
      %6549 = vrot.lane.b32.xlu0 %v6544, 72
      %v6550 = vpop.permute.xlu0 %6549
      %6551 = vrot.lane.b32.xlu0 %v6548, 72
      %v6552 = vpop.permute.xlu0 %6551
      %v6553 = vsel %vm1211, %v6550, %v6552
      %v6557 = vmul.f32 %v6283, %v6550
      %v6558 = vmul.f32 %v6284, %v6553
      %v6559 = vmul.f32 %v6285, %v6552
      %6563 = vrot.lane.b32.xlu0 %v6557, 56
      %v6564 = vpop.permute.xlu0 %6563
      %6565 = vrot.lane.b32.xlu0 %v6558, 56
      %v6566 = vpop.permute.xlu0 %6565
      %6567 = vrot.lane.b32.xlu0 %v6559, 56
      %v6568 = vpop.permute.xlu0 %6567
      %v6569 = vsel %vm1194, %v6564, %v6566
      %v6570 = vsel %vm1194, %v6566, %v6568
      %6573 = vst [vmem:[#allocation3 + $0x70] sm:$0xff] %v6569
      %6574 = vst [vmem:[#allocation3 + $0x78] sm:$0xff] %v6570
      %v6575 = vld [vmem:[%s1445] ss:$8 sm:$0x3]
      %v6577 = vlaneseq
      %v6578 = vshrl.u32 %v6577, 7
      %v6579 = vsub.s32 0, %v6578
      %v6580 = vrot.slane %v6575, %v6579
      %v6581 = vlaneseq
      %v6582 = vshrl.u32 %v6581, 7
      %v6583 = vsub.s32 1, %v6582
      %v6584 = vrot.slane %v6575, %v6583
      %6585 = vrot.lane.b32.xlu0 %v6580, 73
      %v6586 = vpop.permute.xlu0 %6585
      %6587 = vrot.lane.b32.xlu0 %v6584, 73
      %v6588 = vpop.permute.xlu0 %6587
      %v6589 = vsel %vm1172, %v6586, %v6588
      %v6593 = vmul.f32 %v6283, %v6586
      %v6594 = vmul.f32 %v6284, %v6589
      %v6595 = vmul.f32 %v6285, %v6588
      %6599 = vrot.lane.b32.xlu0 %v6593, 55
      %v6600 = vpop.permute.xlu0 %6599
      %6601 = vrot.lane.b32.xlu0 %v6594, 55
      %v6602 = vpop.permute.xlu0 %6601
      %6603 = vrot.lane.b32.xlu0 %v6595, 55
      %v6604 = vpop.permute.xlu0 %6603
      %v6605 = vsel %vm1155, %v6600, %v6602
      %v6606 = vsel %vm1155, %v6602, %v6604
      %6609 = vst [vmem:[#allocation3 + $0x80] sm:$0xff] %v6605
      %6610 = vst [vmem:[#allocation3 + $0x88] sm:$0xff] %v6606
      %v6611 = vld [vmem:[%s53] ss:$8 sm:$0x3]
      %v6613 = vlaneseq
      %v6614 = vshrl.u32 %v6613, 7
      %v6615 = vsub.s32 0, %v6614
      %v6616 = vrot.slane %v6611, %v6615
      %v6617 = vlaneseq
      %v6618 = vshrl.u32 %v6617, 7
      %v6619 = vsub.s32 1, %v6618
      %v6620 = vrot.slane %v6611, %v6619
      %6621 = vrot.lane.b32.xlu0 %v6616, 119
      %v6622 = vpop.permute.xlu0 %6621
      %6623 = vrot.lane.b32.xlu0 %v6620, 119
      %v6624 = vpop.permute.xlu0 %6623
      %v6625 = vsel %vm1496, %v6622, %v6624
      %v6629 = vmul.f32 %v6283, %v6622
      %v6630 = vmul.f32 %v6284, %v6625
      %v6631 = vmul.f32 %v6285, %v6624
      %6635 = vrot.lane.b32.xlu0 %v6629, 9
      %v6636 = vpop.permute.xlu0 %6635
      %6637 = vrot.lane.b32.xlu0 %v6630, 9
      %v6638 = vpop.permute.xlu0 %6637
      %6639 = vrot.lane.b32.xlu0 %v6631, 9
      %v6640 = vpop.permute.xlu0 %6639
      %v6641 = vsel %vm1513, %v6636, %v6638
      %v6642 = vsel %vm1513, %v6638, %v6640
      %6645 = vst [vmem:[#allocation3 + $0x90] sm:$0xff] %v6641
      %6646 = vst [vmem:[#allocation3 + $0x98] sm:$0xff] %v6642
      %v6647 = vld [vmem:[%s1179] ss:$8 sm:$0x3]
      %v6649 = vlaneseq
      %v6650 = vshrl.u32 %v6649, 7
      %v6651 = vsub.s32 0, %v6650
      %v6652 = vrot.slane %v6647, %v6651
      %v6653 = vlaneseq
      %v6654 = vshrl.u32 %v6653, 7
      %v6655 = vsub.s32 1, %v6654
      %v6656 = vrot.slane %v6647, %v6655
      %6657 = vrot.lane.b32.xlu0 %v6652, 120
      %v6658 = vpop.permute.xlu0 %6657
      %6659 = vrot.lane.b32.xlu0 %v6656, 120
      %v6660 = vpop.permute.xlu0 %6659
      %v6661 = vsel %vm1534, %v6658, %v6660
      %v6665 = vmul.f32 %v6283, %v6658
      %v6666 = vmul.f32 %v6284, %v6661
      %v6667 = vmul.f32 %v6285, %v6660
      %6671 = vrot.lane.b32.xlu0 %v6665, 8
      %v6672 = vpop.permute.xlu0 %6671
      %6673 = vrot.lane.b32.xlu0 %v6666, 8
      %v6674 = vpop.permute.xlu0 %6673
      %6675 = vrot.lane.b32.xlu0 %v6667, 8
      %v6676 = vpop.permute.xlu0 %6675
      %v6677 = vsel %vm1551, %v6672, %v6674
      %v6678 = vsel %vm1551, %v6674, %v6676
      %6681 = vst [vmem:[#allocation3 + $0xa0] sm:$0xff] %v6677
      %6682 = vst [vmem:[#allocation3 + $0xa8] sm:$0xff] %v6678
      %v6683 = vld [vmem:[%s1218] ss:$8 sm:$0x3]
      %v6685 = vlaneseq
      %v6686 = vshrl.u32 %v6685, 7
      %v6687 = vsub.s32 0, %v6686
      %v6688 = vrot.slane %v6683, %v6687
      %v6689 = vlaneseq
      %v6690 = vshrl.u32 %v6689, 7
      %v6691 = vsub.s32 1, %v6690
      %v6692 = vrot.slane %v6683, %v6691
      %6693 = vrot.lane.b32.xlu0 %v6688, 121
      %v6694 = vpop.permute.xlu0 %6693
      %6695 = vrot.lane.b32.xlu0 %v6692, 121
      %v6696 = vpop.permute.xlu0 %6695
      %v6697 = vsel %vm1572, %v6694, %v6696
      %v6701 = vmul.f32 %v6283, %v6694
      %v6702 = vmul.f32 %v6284, %v6697
      %v6703 = vmul.f32 %v6285, %v6696
      %6707 = vrot.lane.b32.xlu0 %v6701, 7
      %v6708 = vpop.permute.xlu0 %6707
      %6709 = vrot.lane.b32.xlu0 %v6702, 7
      %v6710 = vpop.permute.xlu0 %6709
      %6711 = vrot.lane.b32.xlu0 %v6703, 7
      %v6712 = vpop.permute.xlu0 %6711
      %v6713 = vsel %vm1589, %v6708, %v6710
      %v6714 = vsel %vm1589, %v6710, %v6712
      %6717 = vst [vmem:[#allocation3 + $0xb0] sm:$0xff] %v6713
      %6718 = vst [vmem:[#allocation3 + $0xb8] sm:$0xff] %v6714
      %v6719 = vld [vmem:[%s1257] ss:$8 sm:$0x3]
      %v6721 = vlaneseq
      %v6722 = vshrl.u32 %v6721, 7
      %v6723 = vsub.s32 0, %v6722
      %v6724 = vrot.slane %v6719, %v6723
      %v6725 = vlaneseq
      %v6726 = vshrl.u32 %v6725, 7
      %v6727 = vsub.s32 1, %v6726
      %v6728 = vrot.slane %v6719, %v6727
      %6729 = vrot.lane.b32.xlu0 %v6724, 127
      %v6730 = vpop.permute.xlu0 %6729
      %6731 = vrot.lane.b32.xlu0 %v6728, 127
      %v6732 = vpop.permute.xlu0 %6731
      %v6733 = vsel %vm1610, %v6730, %v6732
      %v6737 = vmul.f32 %v6283, %v6730
      %v6738 = vmul.f32 %v6284, %v6733
      %v6739 = vmul.f32 %v6285, %v6732
      %6743 = vrot.lane.b32.xlu0 %v6737, 1
      %v6744 = vpop.permute.xlu0 %6743
      %6745 = vrot.lane.b32.xlu0 %v6738, 1
      %v6746 = vpop.permute.xlu0 %6745
      %6747 = vrot.lane.b32.xlu0 %v6739, 1
      %v6748 = vpop.permute.xlu0 %6747
      %v6749 = vsel %vm1627, %v6744, %v6746
      %v6750 = vsel %vm1627, %v6746, %v6748
      %6753 = vst [vmem:[#allocation3 + $0xc0] sm:$0xff] %v6749
      %6754 = vst [vmem:[#allocation3 + $0xc8] sm:$0xff] %v6750
      %v6755 = vld [vmem:[%s1296] ss:$8 sm:$0x3]
      %v6757 = vlaneseq
      %v6758 = vshrl.u32 %v6757, 7
      %v6759 = vsub.s32 0, %v6758
      %v6760 = vrot.slane %v6755, %v6759
      %v6761 = vlaneseq
      %v6762 = vshrl.u32 %v6761, 7
      %v6763 = vsub.s32 1, %v6762
      %v6764 = vrot.slane %v6755, %v6763
      %v6767 = vmul.f32 %v6284, %v6760
      %v6768 = vmul.f32 %v6285, %v6764
      %6769 = vst [vmem:[#allocation3 + $0xd0] sm:$0xff] %v6767
      %6770 = vst [vmem:[#allocation3 + $0xd8] sm:$0xff] %v6768
      %v6771 = vld [vmem:[%s1334] ss:$8 sm:$0x3]
      %v6773 = vlaneseq
      %v6774 = vshrl.u32 %v6773, 7
      %v6775 = vsub.s32 0, %v6774
      %v6776 = vrot.slane %v6771, %v6775
      %v6777 = vlaneseq
      %v6778 = vshrl.u32 %v6777, 7
      %v6779 = vsub.s32 1, %v6778
      %v6780 = vrot.slane %v6771, %v6779
      %6781 = vrot.lane.b32.xlu0 %v6776, 1
      %v6782 = vpop.permute.xlu0 %6781
      %6783 = vrot.lane.b32.xlu0 %v6780, 1
      %v6784 = vpop.permute.xlu0 %6783
      %v6785 = vsel %vm1627, %v6782, %v6784
      %v6789 = vmul.f32 %v6284, %v6782
      %v6790 = vmul.f32 %v6285, %v6785
      %v6791 = vmul.f32 %v6286, %v6784
      %6795 = vrot.lane.b32.xlu0 %v6789, 127
      %v6796 = vpop.permute.xlu0 %6795
      %6797 = vrot.lane.b32.xlu0 %v6790, 127
      %v6798 = vpop.permute.xlu0 %6797
      %6799 = vrot.lane.b32.xlu0 %v6791, 127
      %v6800 = vpop.permute.xlu0 %6799
      %v6801 = vsel %vm1610, %v6796, %v6798
      %v6802 = vsel %vm1610, %v6798, %v6800
      %6805 = vst [vmem:[#allocation3 + $0xe0] sm:$0xff] %v6801
      %6806 = vst [vmem:[#allocation3 + $0xe8] sm:$0xff] %v6802
      %v6807 = vld [vmem:[%s1371] ss:$8 sm:$0x3]
      %v6809 = vlaneseq
      %v6810 = vshrl.u32 %v6809, 7
      %v6811 = vsub.s32 0, %v6810
      %v6812 = vrot.slane %v6807, %v6811
      %v6813 = vlaneseq
      %v6814 = vshrl.u32 %v6813, 7
      %v6815 = vsub.s32 1, %v6814
      %v6816 = vrot.slane %v6807, %v6815
      %6817 = vrot.lane.b32.xlu0 %v6812, 7
      %v6818 = vpop.permute.xlu0 %6817
      %6819 = vrot.lane.b32.xlu0 %v6816, 7
      %v6820 = vpop.permute.xlu0 %6819
      %v6821 = vsel %vm1589, %v6818, %v6820
      %v6825 = vmul.f32 %v6284, %v6818
      %v6826 = vmul.f32 %v6285, %v6821
      %v6827 = vmul.f32 %v6286, %v6820
      %6831 = vrot.lane.b32.xlu0 %v6825, 121
      %v6832 = vpop.permute.xlu0 %6831
      %6833 = vrot.lane.b32.xlu0 %v6826, 121
      %v6834 = vpop.permute.xlu0 %6833
      %6835 = vrot.lane.b32.xlu0 %v6827, 121
      %v6836 = vpop.permute.xlu0 %6835
      %v6837 = vsel %vm1572, %v6832, %v6834
      %v6838 = vsel %vm1572, %v6834, %v6836
      %6841 = vst [vmem:[#allocation3 + $0xf0] sm:$0xff] %v6837
      %6842 = vst [vmem:[#allocation3 + $0xf8] sm:$0xff] %v6838
      %v6843 = vld [vmem:[%s1408] ss:$8 sm:$0x3]
      %v6845 = vlaneseq
      %v6846 = vshrl.u32 %v6845, 7
      %v6847 = vsub.s32 0, %v6846
      %v6848 = vrot.slane %v6843, %v6847
      %v6849 = vlaneseq
      %v6850 = vshrl.u32 %v6849, 7
      %v6851 = vsub.s32 1, %v6850
      %v6852 = vrot.slane %v6843, %v6851
      %6853 = vrot.lane.b32.xlu0 %v6848, 8
      %v6854 = vpop.permute.xlu0 %6853
      %6855 = vrot.lane.b32.xlu0 %v6852, 8
      %v6856 = vpop.permute.xlu0 %6855
      %v6857 = vsel %vm1551, %v6854, %v6856
      %v6861 = vmul.f32 %v6284, %v6854
      %v6862 = vmul.f32 %v6285, %v6857
      %v6863 = vmul.f32 %v6286, %v6856
      %6867 = vrot.lane.b32.xlu0 %v6861, 120
      %v6868 = vpop.permute.xlu0 %6867
      %6869 = vrot.lane.b32.xlu0 %v6862, 120
      %v6870 = vpop.permute.xlu0 %6869
      %6871 = vrot.lane.b32.xlu0 %v6863, 120
      %v6872 = vpop.permute.xlu0 %6871
      %v6873 = vsel %vm1534, %v6868, %v6870
      %v6874 = vsel %vm1534, %v6870, %v6872
      %6877 = vst [vmem:[#allocation3 + $0x100] sm:$0xff] %v6873
      %6878 = vst [vmem:[#allocation3 + $0x108] sm:$0xff] %v6874
      %v6879 = vld [vmem:[%s1445] ss:$8 sm:$0x3]
      %v6881 = vlaneseq
      %v6882 = vshrl.u32 %v6881, 7
      %v6883 = vsub.s32 0, %v6882
      %v6884 = vrot.slane %v6879, %v6883
      %v6885 = vlaneseq
      %v6886 = vshrl.u32 %v6885, 7
      %v6887 = vsub.s32 1, %v6886
      %v6888 = vrot.slane %v6879, %v6887
      %6889 = vrot.lane.b32.xlu0 %v6884, 9
      %v6890 = vpop.permute.xlu0 %6889
      %6891 = vrot.lane.b32.xlu0 %v6888, 9
      %v6892 = vpop.permute.xlu0 %6891
      %v6893 = vsel %vm1513, %v6890, %v6892
      %v6897 = vmul.f32 %v6284, %v6890
      %v6898 = vmul.f32 %v6285, %v6893
      %v6899 = vmul.f32 %v6286, %v6892
      %6903 = vrot.lane.b32.xlu0 %v6897, 119
      %v6904 = vpop.permute.xlu0 %6903
      %6905 = vrot.lane.b32.xlu0 %v6898, 119
      %v6906 = vpop.permute.xlu0 %6905
      %6907 = vrot.lane.b32.xlu0 %v6899, 119
      %v6908 = vpop.permute.xlu0 %6907
      %v6909 = vsel %vm1496, %v6904, %v6906
      %v6910 = vsel %vm1496, %v6906, %v6908
      %6913 = vst [vmem:[#allocation3 + $0x110] sm:$0xff] %v6909
      %6914 = vst [vmem:[#allocation3 + $0x118] sm:$0xff] %v6910
      %v6915 = vld [vmem:[%s53] ss:$8 sm:$0x3]
      %v6917 = vlaneseq
      %v6918 = vshrl.u32 %v6917, 7
      %v6919 = vsub.s32 0, %v6918
      %v6920 = vrot.slane %v6915, %v6919
      %v6921 = vlaneseq
      %v6922 = vshrl.u32 %v6921, 7
      %v6923 = vsub.s32 1, %v6922
      %v6924 = vrot.slane %v6915, %v6923
      %6925 = vrot.lane.b32.xlu0 %v6920, 55
      %v6926 = vpop.permute.xlu0 %6925
      %6927 = vrot.lane.b32.xlu0 %v6924, 55
      %v6928 = vpop.permute.xlu0 %6927
      %v6929 = vsel %vm1155, %v6926, %v6928
      %v6933 = vmul.f32 %v6284, %v6926
      %v6934 = vmul.f32 %v6285, %v6929
      %v6935 = vmul.f32 %v6286, %v6928
      %6939 = vrot.lane.b32.xlu0 %v6933, 73
      %v6940 = vpop.permute.xlu0 %6939
      %6941 = vrot.lane.b32.xlu0 %v6934, 73
      %v6942 = vpop.permute.xlu0 %6941
      %6943 = vrot.lane.b32.xlu0 %v6935, 73
      %v6944 = vpop.permute.xlu0 %6943
      %v6945 = vsel %vm1172, %v6940, %v6942
      %v6946 = vsel %vm1172, %v6942, %v6944
      %6949 = vst [vmem:[#allocation3 + $0x120] sm:$0xff] %v6945
      %6950 = vst [vmem:[#allocation3 + $0x128] sm:$0xff] %v6946
      %v6951 = vld [vmem:[%s1179] ss:$8 sm:$0x3]
      %v6953 = vlaneseq
      %v6954 = vshrl.u32 %v6953, 7
      %v6955 = vsub.s32 0, %v6954
      %v6956 = vrot.slane %v6951, %v6955
      %v6957 = vlaneseq
      %v6958 = vshrl.u32 %v6957, 7
      %v6959 = vsub.s32 1, %v6958
      %v6960 = vrot.slane %v6951, %v6959
      %6961 = vrot.lane.b32.xlu0 %v6956, 56
      %v6962 = vpop.permute.xlu0 %6961
      %6963 = vrot.lane.b32.xlu0 %v6960, 56
      %v6964 = vpop.permute.xlu0 %6963
      %v6965 = vsel %vm1194, %v6962, %v6964
      %v6969 = vmul.f32 %v6284, %v6962
      %v6970 = vmul.f32 %v6285, %v6965
      %v6971 = vmul.f32 %v6286, %v6964
      %6975 = vrot.lane.b32.xlu0 %v6969, 72
      %v6976 = vpop.permute.xlu0 %6975
      %6977 = vrot.lane.b32.xlu0 %v6970, 72
      %v6978 = vpop.permute.xlu0 %6977
      %6979 = vrot.lane.b32.xlu0 %v6971, 72
      %v6980 = vpop.permute.xlu0 %6979
      %v6981 = vsel %vm1211, %v6976, %v6978
      %v6982 = vsel %vm1211, %v6978, %v6980
      %6985 = vst [vmem:[#allocation3 + $0x130] sm:$0xff] %v6981
      %6986 = vst [vmem:[#allocation3 + $0x138] sm:$0xff] %v6982
      %v6987 = vld [vmem:[%s1218] ss:$8 sm:$0x3]
      %v6989 = vlaneseq
      %v6990 = vshrl.u32 %v6989, 7
      %v6991 = vsub.s32 0, %v6990
      %v6992 = vrot.slane %v6987, %v6991
      %v6993 = vlaneseq
      %v6994 = vshrl.u32 %v6993, 7
      %v6995 = vsub.s32 1, %v6994
      %v6996 = vrot.slane %v6987, %v6995
      %6997 = vrot.lane.b32.xlu0 %v6992, 57
      %v6998 = vpop.permute.xlu0 %6997
      %6999 = vrot.lane.b32.xlu0 %v6996, 57
      %v7000 = vpop.permute.xlu0 %6999
      %v7001 = vsel %vm1233, %v6998, %v7000
      %v7005 = vmul.f32 %v6284, %v6998
      %v7006 = vmul.f32 %v6285, %v7001
      %v7007 = vmul.f32 %v6286, %v7000
      %7011 = vrot.lane.b32.xlu0 %v7005, 71
      %v7012 = vpop.permute.xlu0 %7011
      %7013 = vrot.lane.b32.xlu0 %v7006, 71
      %v7014 = vpop.permute.xlu0 %7013
      %7015 = vrot.lane.b32.xlu0 %v7007, 71
      %v7016 = vpop.permute.xlu0 %7015
      %v7017 = vsel %vm1250, %v7012, %v7014
      %v7018 = vsel %vm1250, %v7014, %v7016
      %7021 = vst [vmem:[#allocation3 + $0x140] sm:$0xff] %v7017
      %7022 = vst [vmem:[#allocation3 + $0x148] sm:$0xff] %v7018
      %v7023 = vld [vmem:[%s1257] ss:$8 sm:$0x3]
      %v7025 = vlaneseq
      %v7026 = vshrl.u32 %v7025, 7
      %v7027 = vsub.s32 0, %v7026
      %v7028 = vrot.slane %v7023, %v7027
      %v7029 = vlaneseq
      %v7030 = vshrl.u32 %v7029, 7
      %v7031 = vsub.s32 1, %v7030
      %v7032 = vrot.slane %v7023, %v7031
      %7033 = vrot.lane.b32.xlu0 %v7028, 63
      %v7034 = vpop.permute.xlu0 %7033
      %7035 = vrot.lane.b32.xlu0 %v7032, 63
      %v7036 = vpop.permute.xlu0 %7035
      %v7037 = vsel %vm1272, %v7034, %v7036
      %v7041 = vmul.f32 %v6284, %v7034
      %v7042 = vmul.f32 %v6285, %v7037
      %v7043 = vmul.f32 %v6286, %v7036
      %7047 = vrot.lane.b32.xlu0 %v7041, 65
      %v7048 = vpop.permute.xlu0 %7047
      %7049 = vrot.lane.b32.xlu0 %v7042, 65
      %v7050 = vpop.permute.xlu0 %7049
      %7051 = vrot.lane.b32.xlu0 %v7043, 65
      %v7052 = vpop.permute.xlu0 %7051
      %v7053 = vsel %vm1289, %v7048, %v7050
      %v7054 = vsel %vm1289, %v7050, %v7052
      %7057 = vst [vmem:[#allocation3 + $0x150] sm:$0xff] %v7053
      %7058 = vst [vmem:[#allocation3 + $0x158] sm:$0xff] %v7054
      %v7059 = vld [vmem:[%s1296] ss:$8 sm:$0x3]
      %v7061 = vlaneseq
      %v7062 = vshrl.u32 %v7061, 7
      %v7063 = vsub.s32 0, %v7062
      %v7064 = vrot.slane %v7059, %v7063
      %v7065 = vlaneseq
      %v7066 = vshrl.u32 %v7065, 7
      %v7067 = vsub.s32 1, %v7066
      %v7068 = vrot.slane %v7059, %v7067
      %7069 = vrot.lane.b32.xlu0 %v7064, 64
      %v7070 = vpop.permute.xlu0 %7069
      %7071 = vrot.lane.b32.xlu0 %v7068, 64
      %v7072 = vpop.permute.xlu0 %7071
      %v7073 = vsel %vm1311, %v7070, %v7072
      %v7077 = vmul.f32 %v6284, %v7070
      %v7078 = vmul.f32 %v6285, %v7073
      %v7079 = vmul.f32 %v6286, %v7072
      %7083 = vrot.lane.b32.xlu0 %v7077, 64
      %v7084 = vpop.permute.xlu0 %7083
      %7085 = vrot.lane.b32.xlu0 %v7078, 64
      %v7086 = vpop.permute.xlu0 %7085
      %7087 = vrot.lane.b32.xlu0 %v7079, 64
      %v7088 = vpop.permute.xlu0 %7087
      %v7089 = vsel %vm1311, %v7084, %v7086
      %v7090 = vsel %vm1311, %v7086, %v7088
      %7093 = vst [vmem:[#allocation3 + $0x160] sm:$0xff] %v7089
      %7094 = vst [vmem:[#allocation3 + $0x168] sm:$0xff] %v7090
      %v7095 = vld [vmem:[%s1334] ss:$8 sm:$0x3]
      %v7097 = vlaneseq
      %v7098 = vshrl.u32 %v7097, 7
      %v7099 = vsub.s32 0, %v7098
      %v7100 = vrot.slane %v7095, %v7099
      %v7101 = vlaneseq
      %v7102 = vshrl.u32 %v7101, 7
      %v7103 = vsub.s32 1, %v7102
      %v7104 = vrot.slane %v7095, %v7103
      %7105 = vrot.lane.b32.xlu0 %v7100, 65
      %v7106 = vpop.permute.xlu0 %7105
      %7107 = vrot.lane.b32.xlu0 %v7104, 65
      %v7108 = vpop.permute.xlu0 %7107
      %v7109 = vsel %vm1289, %v7106, %v7108
      %v7113 = vmul.f32 %v6284, %v7106
      %v7114 = vmul.f32 %v6285, %v7109
      %v7115 = vmul.f32 %v6286, %v7108
      %7119 = vrot.lane.b32.xlu0 %v7113, 63
      %v7120 = vpop.permute.xlu0 %7119
      %7121 = vrot.lane.b32.xlu0 %v7114, 63
      %v7122 = vpop.permute.xlu0 %7121
      %7123 = vrot.lane.b32.xlu0 %v7115, 63
      %v7124 = vpop.permute.xlu0 %7123
      %v7125 = vsel %vm1272, %v7120, %v7122
      %v7126 = vsel %vm1272, %v7122, %v7124
      %7129 = vst [vmem:[#allocation3 + $0x170] sm:$0xff] %v7125
      %7130 = vst [vmem:[#allocation3 + $0x178] sm:$0xff] %v7126
      %v7131 = vld [vmem:[%s1371] ss:$8 sm:$0x3]
      %v7133 = vlaneseq
      %v7134 = vshrl.u32 %v7133, 7
      %v7135 = vsub.s32 0, %v7134
      %v7136 = vrot.slane %v7131, %v7135
      %v7137 = vlaneseq
      %v7138 = vshrl.u32 %v7137, 7
      %v7139 = vsub.s32 1, %v7138
      %v7140 = vrot.slane %v7131, %v7139
      %7141 = vrot.lane.b32.xlu0 %v7136, 71
      %v7142 = vpop.permute.xlu0 %7141
      %7143 = vrot.lane.b32.xlu0 %v7140, 71
      %v7144 = vpop.permute.xlu0 %7143
      %v7145 = vsel %vm1250, %v7142, %v7144
      %v7149 = vmul.f32 %v6284, %v7142
      %v7150 = vmul.f32 %v6285, %v7145
      %v7151 = vmul.f32 %v6286, %v7144
      %7155 = vrot.lane.b32.xlu0 %v7149, 57
      %v7156 = vpop.permute.xlu0 %7155
      %7157 = vrot.lane.b32.xlu0 %v7150, 57
      %v7158 = vpop.permute.xlu0 %7157
      %7159 = vrot.lane.b32.xlu0 %v7151, 57
      %v7160 = vpop.permute.xlu0 %7159
      %v7161 = vsel %vm1233, %v7156, %v7158
      %v7162 = vsel %vm1233, %v7158, %v7160
      %7165 = vst [vmem:[#allocation3 + $0x180] sm:$0xff] %v7161
      %7166 = vst [vmem:[#allocation3 + $0x188] sm:$0xff] %v7162
      %v7167 = vld [vmem:[%s1408] ss:$8 sm:$0x3]
      %v7169 = vlaneseq
      %v7170 = vshrl.u32 %v7169, 7
      %v7171 = vsub.s32 0, %v7170
      %v7172 = vrot.slane %v7167, %v7171
      %v7173 = vlaneseq
      %v7174 = vshrl.u32 %v7173, 7
      %v7175 = vsub.s32 1, %v7174
      %v7176 = vrot.slane %v7167, %v7175
      %7177 = vrot.lane.b32.xlu0 %v7172, 72
      %v7178 = vpop.permute.xlu0 %7177
      %7179 = vrot.lane.b32.xlu0 %v7176, 72
      %v7180 = vpop.permute.xlu0 %7179
      %v7181 = vsel %vm1211, %v7178, %v7180
      %v7185 = vmul.f32 %v6284, %v7178
      %v7186 = vmul.f32 %v6285, %v7181
      %v7187 = vmul.f32 %v6286, %v7180
      %7191 = vrot.lane.b32.xlu0 %v7185, 56
      %v7192 = vpop.permute.xlu0 %7191
      %7193 = vrot.lane.b32.xlu0 %v7186, 56
      %v7194 = vpop.permute.xlu0 %7193
      %7195 = vrot.lane.b32.xlu0 %v7187, 56
      %v7196 = vpop.permute.xlu0 %7195
      %v7197 = vsel %vm1194, %v7192, %v7194
      %v7198 = vsel %vm1194, %v7194, %v7196
      %7201 = vst [vmem:[#allocation3 + $0x190] sm:$0xff] %v7197
      %7202 = vst [vmem:[#allocation3 + $0x198] sm:$0xff] %v7198
      %v7203 = vld [vmem:[%s1445] ss:$8 sm:$0x3]
      %v7205 = vlaneseq
      %v7206 = vshrl.u32 %v7205, 7
      %v7207 = vsub.s32 0, %v7206
      %v7208 = vrot.slane %v7203, %v7207
      %v7209 = vlaneseq
      %v7210 = vshrl.u32 %v7209, 7
      %v7211 = vsub.s32 1, %v7210
      %v7212 = vrot.slane %v7203, %v7211
      %7213 = vrot.lane.b32.xlu0 %v7208, 73
      %v7214 = vpop.permute.xlu0 %7213
      %7215 = vrot.lane.b32.xlu0 %v7212, 73
      %v7216 = vpop.permute.xlu0 %7215
      %v7217 = vsel %vm1172, %v7214, %v7216
      %v7221 = vmul.f32 %v6284, %v7214
      %v7222 = vmul.f32 %v6285, %v7217
      %v7223 = vmul.f32 %v6286, %v7216
      %7227 = vrot.lane.b32.xlu0 %v7221, 55
      %v7228 = vpop.permute.xlu0 %7227
      %7229 = vrot.lane.b32.xlu0 %v7222, 55
      %v7230 = vpop.permute.xlu0 %7229
      %7231 = vrot.lane.b32.xlu0 %v7223, 55
      %v7232 = vpop.permute.xlu0 %7231
      %v7233 = vsel %vm1155, %v7228, %v7230
      %v7234 = vsel %vm1155, %v7230, %v7232
      %7237 = vst [vmem:[#allocation3 + $0x1a0] sm:$0xff] %v7233
      %7238 = vst [vmem:[#allocation3 + $0x1a8] sm:$0xff] %v7234
      %v7239 = vld [vmem:[#allocation3] sm:$0xff]
      %v7240 = vld [vmem:[#allocation3 + $0x8] sm:$0xff]
      %v7241 = vld [vmem:[#allocation3 + $0x10] sm:$0xff]
      %v7242 = vld [vmem:[#allocation3 + $0x18] sm:$0xff]
      %v7243 = vld [vmem:[#allocation3 + $0x20] sm:$0xff]
      %v7244 = vld [vmem:[#allocation3 + $0x28] sm:$0xff]
      %v7245 = vld [vmem:[#allocation3 + $0x30] sm:$0xff]
      %v7246 = vld [vmem:[#allocation3 + $0x38] sm:$0xff]
      %v7247 = vld [vmem:[#allocation3 + $0x40] sm:$0xff]
      %v7248 = vld [vmem:[#allocation3 + $0x48] sm:$0xff]
      %v7249 = vld [vmem:[#allocation3 + $0x50] sm:$0xff]
      %v7250 = vld [vmem:[#allocation3 + $0x58] sm:$0xff]
      %v7251 = vld [vmem:[#allocation3 + $0x60] sm:$0xff]
      %v7252 = vld [vmem:[#allocation3 + $0x68] sm:$0xff]
      %v7253 = vld [vmem:[#allocation3 + $0x70] sm:$0xff]
      %v7254 = vld [vmem:[#allocation3 + $0x78] sm:$0xff]
      %v7255 = vld [vmem:[#allocation3 + $0x80] sm:$0xff]
      %v7256 = vld [vmem:[#allocation3 + $0x88] sm:$0xff]
      %v7257 = vld [vmem:[#allocation3 + $0x90] sm:$0xff]
      %v7258 = vld [vmem:[#allocation3 + $0x98] sm:$0xff]
      %v7259 = vld [vmem:[#allocation3 + $0xa0] sm:$0xff]
      %v7260 = vld [vmem:[#allocation3 + $0xa8] sm:$0xff]
      %v7261 = vld [vmem:[#allocation3 + $0xb0] sm:$0xff]
      %v7262 = vld [vmem:[#allocation3 + $0xb8] sm:$0xff]
      %v7263 = vld [vmem:[#allocation3 + $0xc0] sm:$0xff]
      %v7264 = vld [vmem:[#allocation3 + $0xc8] sm:$0xff]
      %v7265 = vld [vmem:[#allocation3 + $0xd0] sm:$0xff]
      %v7266 = vld [vmem:[#allocation3 + $0xd8] sm:$0xff]
      %v7267 = vld [vmem:[#allocation3 + $0xe0] sm:$0xff]
      %v7268 = vld [vmem:[#allocation3 + $0xe8] sm:$0xff]
      %v7269 = vld [vmem:[#allocation3 + $0xf0] sm:$0xff]
      %v7270 = vld [vmem:[#allocation3 + $0xf8] sm:$0xff]
      %v7271 = vld [vmem:[#allocation3 + $0x100] sm:$0xff]
      %v7272 = vld [vmem:[#allocation3 + $0x108] sm:$0xff]
      %v7273 = vld [vmem:[#allocation3 + $0x110] sm:$0xff]
      %v7274 = vld [vmem:[#allocation3 + $0x118] sm:$0xff]
      %v7275 = vld [vmem:[#allocation3 + $0x120] sm:$0xff]
      %v7276 = vld [vmem:[#allocation3 + $0x128] sm:$0xff]
      %v7277 = vld [vmem:[#allocation3 + $0x130] sm:$0xff]
      %v7278 = vld [vmem:[#allocation3 + $0x138] sm:$0xff]
      %v7279 = vld [vmem:[#allocation3 + $0x140] sm:$0xff]
      %v7280 = vld [vmem:[#allocation3 + $0x148] sm:$0xff]
      %v7281 = vld [vmem:[#allocation3 + $0x150] sm:$0xff]
      %v7282 = vld [vmem:[#allocation3 + $0x158] sm:$0xff]
      %v7283 = vld [vmem:[#allocation3 + $0x160] sm:$0xff]
      %v7284 = vld [vmem:[#allocation3 + $0x168] sm:$0xff]
      %v7285 = vld [vmem:[#allocation3 + $0x170] sm:$0xff]
      %v7286 = vld [vmem:[#allocation3 + $0x178] sm:$0xff]
      %v7287 = vld [vmem:[#allocation3 + $0x180] sm:$0xff]
      %v7288 = vld [vmem:[#allocation3 + $0x188] sm:$0xff]
      %v7289 = vld [vmem:[#allocation3 + $0x190] sm:$0xff]
      %v7290 = vld [vmem:[#allocation3 + $0x198] sm:$0xff]
      %v7291 = vld [vmem:[#allocation3 + $0x1a0] sm:$0xff]
      %v7292 = vld [vmem:[#allocation3 + $0x1a8] sm:$0xff]
      %v7293 = vpack.c.bf16 %v7241, %v7239
      %v7294 = vpack.c.bf16 %v7242, %v7240
      %v7295 = vpack.c.bf16 %v7245, %v7243
      %v7296 = vpack.c.bf16 %v7246, %v7244
      %v7297 = vpack.c.bf16 %v7249, %v7247
      %v7298 = vpack.c.bf16 %v7250, %v7248
      %v7299 = vpack.c.bf16 %v7253, %v7251
      %v7300 = vpack.c.bf16 %v7254, %v7252
      %v7301 = vpack.c.bf16 %v7257, %v7255
      %v7302 = vpack.c.bf16 %v7258, %v7256
      %v7303 = vpack.c.bf16 %v7261, %v7259
      %v7304 = vpack.c.bf16 %v7262, %v7260
      %v7305 = vpack.c.bf16 %v7265, %v7263
      %v7306 = vpack.c.bf16 %v7266, %v7264
      %v7307 = vpack.c.bf16 %v7269, %v7267
      %v7308 = vpack.c.bf16 %v7270, %v7268
      %v7309 = vpack.c.bf16 %v7273, %v7271
      %v7310 = vpack.c.bf16 %v7274, %v7272
      %v7311 = vpack.c.bf16 %v7277, %v7275
      %v7312 = vpack.c.bf16 %v7278, %v7276
      %v7313 = vpack.c.bf16 %v7281, %v7279
      %v7314 = vpack.c.bf16 %v7282, %v7280
      %v7315 = vpack.c.bf16 %v7285, %v7283
      %v7316 = vpack.c.bf16 %v7286, %v7284
      %v7317 = vpack.c.bf16 %v7289, %v7287
      %v7318 = vpack.c.bf16 %v7290, %v7288
      %v7319 = vpack.c.bf16 %v7291, %v7291
      %v7320 = vpack.c.bf16 %v7292, %v7292
      %v7321 = vld [vmem:[%s45] sm:$0xff]
      %v7322 = vld [vmem:[%s45 + $0x8] sm:$0xff]
      %v7325 = vunpack.c.l.b16 %v7321
      %v7326 = vunpack.c.h.b16 %v7321
      %v7327 = vunpack.c.l.b16 %v7322
      %v7328 = vunpack.c.h.b16 %v7322
      %v7329 = vpack.c.b16 %v7327, %v7325
      %v7330 = vpack.c.b16 %v7328, %v7326
      %v7333 = vsel %vm2282, %v7330, 0
      %v7336 = vsel %vm2295, %v7319, 0
      %v7339 = vsel %vm2295, %v7320, 0
      %7341 = vmatprep.subr.bf16.mxu0 %v7294
      %7342 = vmatpush1.bf16.msra.mxu0 %v7293
      %7343 = vmatprep.subr.bf16.mxu0 %v7296
      %7344 = vmatpush1.bf16.msra.mxu0 %v7295
      %7345 = vmatprep.subr.bf16.mxu0 %v7298
      %7346 = vmatpush1.bf16.msra.mxu0 %v7297
      %7347 = vmatprep.subr.bf16.mxu0 %v7300
      %7348 = vmatpush1.bf16.msra.mxu0 %v7299
      %7349 = vmatprep.subr.bf16.mxu0 %v7302
      %7350 = vmatpush1.bf16.msra.mxu0 %v7301
      %7351 = vmatprep.subr.bf16.mxu0 %v7304
      %7352 = vmatpush1.bf16.msra.mxu0 %v7303
      %7353 = vmatprep.subr.bf16.mxu0 %v7306
      %7354 = vmatpush1.bf16.msra.mxu0 %v7305
      %7355 = vmatprep.subr.bf16.mxu0 %v7308
      %7356 = vmatpush1.bf16.msra.mxu0 %v7307
      %7357 = vmatprep.subr.bf16.mxu0 %v7310
      %7358 = vmatpush1.bf16.msra.mxu0 %v7309
      %7359 = vmatprep.subr.bf16.mxu0 %v7312
      %7360 = vmatpush1.bf16.msra.mxu0 %v7311
      %7361 = vmatprep.subr.bf16.mxu0 %v7314
      %7362 = vmatpush1.bf16.msra.mxu0 %v7313
      %7363 = vmatprep.subr.bf16.mxu0 %v7316
      %7364 = vmatpush1.bf16.msra.mxu0 %v7315
      %7365 = vmatprep.subr.bf16.mxu0 %v7318
      %7366 = vmatpush1.bf16.msra.mxu0 %v7317
      %7367 = vmatprep.subr.bf16.mxu0 %v7339
      %7368 = vmatpush1.bf16.msra.mxu0 %v7336
      %7369 = vmatprep.subr.bf16.mxu0 0
      %7370 = vmatpush1.bf16.msra.mxu0 0
      %7371 = vmatprep.subr.bf16.mxu0 0
      %7372 = vmatpush1.bf16.msra.mxu0 0
      %7373 = vmatprep.mubr.bf16.mxu0 %v7333
      %7374 = vmatmul.mubr.bf16.gmra.mrb[0].mxu0 %v7329
      %v7375 = vpop.f32.mrb[0].mxu0
      %v7376 = vadd.f32 0.0, %v7375
      %v7377 = vpop.f32.mrb[0].mxu0
      %v7378 = vadd.f32 0.0, %v7377
      %v7379 = vpop.f32.mrb[0].mxu0
      %v7380 = vadd.f32 0.0, %v7379
      %v7381 = vpop.f32.mrb[0].mxu0
      %v7382 = vadd.f32 0.0, %v7381
      %7383 = vdwg.mxu0
      %v7386 = vunpack.c.l.b16 %v6279
      %v7387 = vunpack.c.h.b16 %v6279
      %v7388 = vunpack.c.l.b16 %v6280
      %v7389 = vunpack.c.h.b16 %v6280
      %v7390 = vpack.c.b16 %v7388, %v7386
      %v7391 = vpack.c.b16 %v7389, %v7387
      %v7394 = vsel %vm2282, %v7391, 0
      %v7397 = vsel %vm2295, %v6277, 0
      %v7400 = vsel %vm2295, %v6278, 0
      %7402 = vmatprep.subr.bf16.mxu0 %v6252
      %7403 = vmatpush1.bf16.msra.mxu0 %v6251
      %7404 = vmatprep.subr.bf16.mxu0 %v6254
      %7405 = vmatpush1.bf16.msra.mxu0 %v6253
      %7406 = vmatprep.subr.bf16.mxu0 %v6256
      %7407 = vmatpush1.bf16.msra.mxu0 %v6255
      %7408 = vmatprep.subr.bf16.mxu0 %v6258
      %7409 = vmatpush1.bf16.msra.mxu0 %v6257
      %7410 = vmatprep.subr.bf16.mxu0 %v6260
      %7411 = vmatpush1.bf16.msra.mxu0 %v6259
      %7412 = vmatprep.subr.bf16.mxu0 %v6262
      %7413 = vmatpush1.bf16.msra.mxu0 %v6261
      %7414 = vmatprep.subr.bf16.mxu0 %v6264
      %7415 = vmatpush1.bf16.msra.mxu0 %v6263
      %7416 = vmatprep.subr.bf16.mxu0 %v6266
      %7417 = vmatpush1.bf16.msra.mxu0 %v6265
      %7418 = vmatprep.subr.bf16.mxu0 %v6268
      %7419 = vmatpush1.bf16.msra.mxu0 %v6267
      %7420 = vmatprep.subr.bf16.mxu0 %v6270
      %7421 = vmatpush1.bf16.msra.mxu0 %v6269
      %7422 = vmatprep.subr.bf16.mxu0 %v6272
      %7423 = vmatpush1.bf16.msra.mxu0 %v6271
      %7424 = vmatprep.subr.bf16.mxu0 %v6274
      %7425 = vmatpush1.bf16.msra.mxu0 %v6273
      %7426 = vmatprep.subr.bf16.mxu0 %v6276
      %7427 = vmatpush1.bf16.msra.mxu0 %v6275
      %7428 = vmatprep.subr.bf16.mxu0 %v7400
      %7429 = vmatpush1.bf16.msra.mxu0 %v7397
      %7430 = vmatprep.subr.bf16.mxu0 0
      %7431 = vmatpush1.bf16.msra.mxu0 0
      %7432 = vmatprep.subr.bf16.mxu0 0
      %7433 = vmatpush1.bf16.msra.mxu0 0
      %7434 = vmatprep.mubr.bf16.mxu0 %v7394
      %7435 = vmatmul.mubr.bf16.gmra.mrb[0].mxu0 %v7390
      %v7436 = vpop.f32.mrb[0].mxu0
      %v7437 = vadd.f32 %v7376, %v7436
      %v7438 = vpop.f32.mrb[0].mxu0
      %v7439 = vadd.f32 %v7378, %v7438
      %v7440 = vpop.f32.mrb[0].mxu0
      %v7441 = vadd.f32 %v7380, %v7440
      %v7442 = vpop.f32.mrb[0].mxu0
      %v7443 = vadd.f32 %v7382, %v7442
      %7444 = vdwg.mxu0
      %v7445 = vld [vmem:[%s47] sm:$0xff]
      %v7446 = vld [vmem:[%s47 + $0x8] sm:$0xff]
      %7448 = vset.pattern.permute.xlu0 0
      %7449 = vperm.xlu0 %7448, %v7445
      %v7450 = vpop.permute.xlu0 %7449
      %7453 = vset.pattern.permute.xlu0 0
      %7454 = vperm.xlu0 %7453, %v7446
      %v7455 = vpop.permute.xlu0 %7454
      %v7457 = vadd.f32 %v7437, %v7450
      %v7458 = vadd.f32 %v7439, %v7450
      %v7459 = vadd.f32 %v7441, %v7455
      %v7460 = vadd.f32 %v7443, %v7455
      %v7461 = vadd.f32 %v7457, %v7458
      %7462 = vadd.xlane.f32.xlu0 %v7461
      %v7463 = vpop.xlane.xlu0 %7462
      %v7464 = vrot.slane %v7463, 4
      %v7465 = vadd.f32 %v7463, %v7464
      %v7466 = vrot.slane %v7465, 2
      %v7467 = vadd.f32 %v7465, %v7466
      %v7468 = vrot.slane %v7467, 1
      %v7469 = vadd.f32 %v7467, %v7468
      %s7470 = vtos %v7469
      %v7471 = vrcp.pop 2048.0
      %s7472 = vtos %v7471
      %s7473 = smul.f32 %s7470, %s7472
      %v7474 = vstv %s7473
      %v7475 = vsub.f32 %v7457, %v7474
      %v7476 = vsub.f32 %v7458, %v7474
      %v7477 = vmul.f32 %v7475, %v7475
      %v7478 = vmul.f32 %v7476, %v7476
      %v7479 = vadd.f32 %v7477, %v7478
      %7480 = vadd.xlane.f32.xlu0 %v7479
      %v7481 = vpop.xlane.xlu0 %7480
      %v7482 = vrot.slane %v7481, 4
      %v7483 = vadd.f32 %v7481, %v7482
      %v7484 = vrot.slane %v7483, 2
      %v7485 = vadd.f32 %v7483, %v7484
      %v7486 = vrot.slane %v7485, 1
      %v7487 = vadd.f32 %v7485, %v7486
      %s7488 = vtos %v7487
      %v7489 = vrcp.pop 2048.0
      %s7490 = vtos %v7489
      %s7491 = smul.f32 %s7488, %s7490
      %s7492 = sadd.f32 %s7491, 1e-05
      %v7493 = vstv %s7492
      %v7494 = vrsqrt.pop %v7493
      %s7495 = vtos %v7494
      %v7496 = vstv %s7495
      %v7497 = vmul.f32 %v7475, %v7496
      %v7498 = vmul.f32 %v7476, %v7496
      %v7499 = vld [vmem:[%s49] sm:$0xff]
      %v7500 = vld [vmem:[%s49 + $0x8] sm:$0xff]
      %v7501 = vmul.f32 %v7497, %v7499
      %v7502 = vmul.f32 %v7498, %v7500
      %v7503 = vld [vmem:[%s51] sm:$0xff]
      %v7504 = vld [vmem:[%s51 + $0x8] sm:$0xff]
      %v7505 = vadd.f32 %v7501, %v7503
      %v7506 = vadd.f32 %v7502, %v7504
      %v7507 = vld [vmem:[#allocation4 + $0x60] sm:$0xff]
      %v7508 = vld [vmem:[#allocation4 + $0x68] sm:$0xff]
      %v7509 = vld [vmem:[#allocation5 + $0x30] sm:$0xff]
      %v7510 = vld [vmem:[#allocation5 + $0x38] sm:$0xff]
      %v7511 = vadd.f32 %v7507, %v7509
      %v7512 = vadd.f32 %v7508, %v7510
      %v7513 = vadd.f32 %v7511, %v7505
      %v7514 = vadd.f32 %v7512, %v7506
      %v7515 = vmul.f32 %v7513, 0.5
      %v7516 = vmul.f32 %v7514, 0.5
      %v7517 = vtanh.pop %v7515
      %v7518 = vtanh.pop %v7516
      %v7519 = vmul.f32 %v7517, 0.5
      %v7520 = vmul.f32 %v7518, 0.5
      %v7521 = vadd.f32 %v7519, 0.5
      %v7522 = vadd.f32 %v7520, 0.5
      %7523 = vst [vmem:[%s1127 + $0x60] sm:$0xff] %v7521
      %7524 = vst [vmem:[%s1127 + $0x68] sm:$0xff] %v7522
      %v7525 = vtanh.pop %v7459
      %v7526 = vtanh.pop %v7460
      %v7527 = vmul.f32 %v7521, %v7525
      %v7528 = vmul.f32 %v7522, %v7526
      %7529 = vst [vmem:[%s1112] sm:$0xff] %v7527
      %7530 = vst [vmem:[%s1112 + $0x8] sm:$0xff] %v7528
      %p7531 = scmp.lt.s32.totalorder %s73, 1
      %s7532 = scalar_select %p7531, %s73, 1
      %s7533 = smul.addr %s7532, 2
      %s7534 = smul.addr %s7533, 8
      %s7535 = scalar_lea.vmem %s55, %s7534
      %p7536 = scmp.lt.s32.totalorder %s73, 1
      %s7537 = scalar_select %p7536, %s73, 1
      %s7538 = smul.addr %s7537, 2
      %s7539 = smul.addr %s7538, 8
      %s7540 = scalar_lea.vmem %s57, %s7539
      %p7541 = scmp.lt.s32.totalorder %s73, 1
      %s7542 = scalar_select %p7541, %s73, 1
      %s7543 = smul.addr %s7542, 2
      %s7544 = smul.addr %s7543, 8
      %s7545 = scalar_lea.vmem %s59, %s7544
      %p7546 = scmp.lt.s32.totalorder %s73, 1
      %s7547 = scalar_select %p7546, %s73, 1
      %s7548 = smul.addr %s7547, 14
      %s7549 = smul.addr %s7548, 8
      %s7550 = scalar_lea.vmem %s61, %s7549
      // Predicated region
      $region129: #{stam_cell_forward.1} parent=127 // pred_check
        %p7551 = pneg %p703
      $region130: #{stam_cell_forward.1} parent=127 // pred_check_branch
        %7553 = sbr.rel (%p7551) target = $region132
      $region131: #{stam_cell_forward.1} parent=127 // pred_region
        _
      $region132: #{stam_cell_forward.1} parent=127 // pred_fallthru
        _
      // Predicated region
      $region133: #{stam_cell_forward.1} parent=127 // pred_check
        %p7554 = pneg %p729
      $region134: #{stam_cell_forward.1} parent=127 // pred_check_branch
        %7556 = sbr.rel (%p7554) target = $region136
      $region135: #{stam_cell_forward.1} parent=127 // pred_region
        _
      $region136: #{stam_cell_forward.1} parent=127 // pred_fallthru
        _
      // Predicated region
      $region137: #{stam_cell_forward.1} parent=127 // pred_check
        %p7557 = pneg %p755
      $region138: #{stam_cell_forward.1} parent=127 // pred_check_branch
        %7559 = sbr.rel (%p7557) target = $region140
      $region139: #{stam_cell_forward.1} parent=127 // pred_region
        _
      $region140: #{stam_cell_forward.1} parent=127 // pred_fallthru
        _
      // Predicated region
      $region141: #{stam_cell_forward.1} parent=127 // pred_check
        %p7560 = pneg %p781
      $region142: #{stam_cell_forward.1} parent=127 // pred_check_branch
        %7562 = sbr.rel (%p7560) target = $region144
      $region143: #{stam_cell_forward.1} parent=127 // pred_region
        _
      $region144: #{stam_cell_forward.1} parent=127 // pred_fallthru
        _
    $region128: #{stam_cell_forward.1} parent=5 // pred_fallthru
      _
    %p7563 = scmp.le.s32.totalorder 2, %s68
    // Predicated region
    $region145: #{stam_cell_forward.1} parent=5 // pred_check
      %p7564 = pneg %p7563
    $region146: #{stam_cell_forward.1} parent=5 // pred_check_branch
      %7566 = sbr.rel (%p7564) target = $region148
    $region147: #{stam_cell_forward.1} parent=5 // pred_region
      %s7567 = ssub.s32 %s68, 2
      // Predicated region
      $region149: #{stam_cell_forward.1} parent=147 // pred_check
        %p7568 = pneg %p709
      $region150: #{stam_cell_forward.1} parent=147 // pred_check_branch
        %7570 = sbr.rel (%p7568) target = $region152
      $region151: #{stam_cell_forward.1} parent=147 // pred_region
        %p7571 = scmp.lt.s32.totalorder %s74, 1
        %s7572 = scalar_select %p7571, %s74, 1
        %s7573 = smul.addr %s7572, 2
        %s7574 = smul.addr %s7573, 8
        %s7575 = scalar_lea.vmem %s55, %s7574
      $region152: #{stam_cell_forward.1} parent=147 // pred_fallthru
        _
      // Predicated region
      $region153: #{stam_cell_forward.1} parent=147 // pred_check
        %p7576 = pneg %p735
      $region154: #{stam_cell_forward.1} parent=147 // pred_check_branch
        %7578 = sbr.rel (%p7576) target = $region156
      $region155: #{stam_cell_forward.1} parent=147 // pred_region
        %p7579 = scmp.lt.s32.totalorder %s74, 1
        %s7580 = scalar_select %p7579, %s74, 1
        %s7581 = smul.addr %s7580, 2
        %s7582 = smul.addr %s7581, 8
        %s7583 = scalar_lea.vmem %s57, %s7582
      $region156: #{stam_cell_forward.1} parent=147 // pred_fallthru
        _
      // Predicated region
      $region157: #{stam_cell_forward.1} parent=147 // pred_check
        %p7584 = pneg %p761
      $region158: #{stam_cell_forward.1} parent=147 // pred_check_branch
        %7586 = sbr.rel (%p7584) target = $region160
      $region159: #{stam_cell_forward.1} parent=147 // pred_region
        %p7587 = scmp.lt.s32.totalorder %s74, 1
        %s7588 = scalar_select %p7587, %s74, 1
        %s7589 = smul.addr %s7588, 2
        %s7590 = smul.addr %s7589, 8
        %s7591 = scalar_lea.vmem %s59, %s7590
      $region160: #{stam_cell_forward.1} parent=147 // pred_fallthru
        _
      // Predicated region
      $region161: #{stam_cell_forward.1} parent=147 // pred_check
        %p7592 = pneg %p787
      $region162: #{stam_cell_forward.1} parent=147 // pred_check_branch
        %7594 = sbr.rel (%p7592) target = $region164
      $region163: #{stam_cell_forward.1} parent=147 // pred_region
        %p7595 = scmp.lt.s32.totalorder %s74, 1
        %s7596 = scalar_select %p7595, %s74, 1
        %s7597 = smul.addr %s7596, 14
        %s7598 = smul.addr %s7597, 8
        %s7599 = scalar_lea.vmem %s61, %s7598
      $region164: #{stam_cell_forward.1} parent=147 // pred_fallthru
        _
    $region148: #{stam_cell_forward.1} parent=5 // pred_fallthru
      _
  $region6: #{stam_cell_forward.1} parent=0 // loop_footer
    %s72 = sadd.s32 1, %s68
  $region7: #{stam_cell_forward.1} parent=0 // loop_footer_branch
    %67 = sbr.rel target = $region3
  $region8: #{stam_cell_forward.1} parent=0 // loop_exit
    _

</llo_original>
